<compile_context>
chip_gen: v7x
topology: tpu7x:2x2x1
jax: 0.10.0
libtpu: 0.0.40
codegen_flags: <defaults>
</compile_context>

<pallas_src>
import functools
import math

import jax
import jax.numpy as jnp
from jax.experimental import pallas as pl
from jax.experimental.pallas import tpu as pltpu

# ----------------------------- small synthetic config -----------------------------
FEAT_DIM = 4            # person backbone channel dim (NCHW C)
SCENE_FEAT_DIM = 32     # == MCAN HIDDEN_SIZE == (stub) BERT hidden size
HIDDEN = SCENE_FEAT_DIM
NUM_HEADS = 4
HEAD_DIM = HIDDEN // NUM_HEADS
FF_SIZE = 64
NUM_DISCRETE = 8
NUM_CONT = 3
VOCAB = 50
CLS_FEAT_DIM = 2 * SCENE_FEAT_DIM
LN_EPS = 1e-6
NUM_LAYERS = 1          # synthetic layer count for MCA encoder/decoder and CMA
ROW_TILE = 256          # row tile for the flattened (N, H) kernels


# ================================ Pallas kernels ================================

def _linear_kernel(x_ref, w_ref, b_ref, o_ref):
    """Row-tiled linear: (tr, Din) @ (Din, Dout) + b."""
    y = jnp.dot(x_ref[...].astype(jnp.bfloat16), w_ref[...],
                preferred_element_type=jnp.float32) + b_ref[...]
    o_ref[...] = y.astype(o_ref.dtype)


def pallas_linear(x2d, w_bf16, b_row):
    n, din = x2d.shape
    dout = w_bf16.shape[1]
    tr = n if n <= ROW_TILE else ROW_TILE
    return pl.pallas_call(
        _linear_kernel,
        out_shape=jax.ShapeDtypeStruct((n, dout), jnp.float32),
        grid=(pl.cdiv(n, tr),),
        in_specs=[
            pl.BlockSpec((tr, din), lambda i: (i, 0)),
            pl.BlockSpec((din, dout), lambda i: (0, 0)),
            pl.BlockSpec((1, dout), lambda i: (0, 0)),
        ],
        out_specs=pl.BlockSpec((tr, dout), lambda i: (i, 0)),
        compiler_params=pltpu.CompilerParams(dimension_semantics=("parallel",)),
    )(x2d, w_bf16, b_row)


def _mha_ln_kernel(q_ref, kv_ref, mask_ref,
                   wq_ref, wk_ref, wv_ref, bq_ref, bk_ref, bv_ref,
                   wm_ref, bm_ref, g_ref, b_ref,
                   o_ref, *, nh, scale, eps):
    """Fused MCAN MHAtt sub-layer for one batch element:
       LayerNorm(q_in + merge(concat_h softmax(q_h k_h^T / sqrt(dh) + bias) v_h))."""
    xq = q_ref[0]                                   # (Lq, H) f32 (residual base)
    xkv = kv_ref[0]                                 # (Lk, H) f32
    bias = (1.0 - mask_ref[0]) * (-1e9)             # (1, Lk); 0 where valid, -1e9 on pad
    xq_b = xq.astype(jnp.bfloat16)
    xkv_b = xkv.astype(jnp.bfloat16)

    acc = jnp.zeros_like(xq)                        # (Lq, H) f32 merged-heads accumulator
    for h in range(nh):                             # static unroll over heads
        qh = jnp.dot(xq_b, wq_ref[h], preferred_element_type=jnp.float32) + bq_ref[h]
        kh = jnp.dot(xkv_b, wk_ref[h], preferred_element_type=jnp.float32) + bk_ref[h]
        vh = jnp.dot(xkv_b, wv_ref[h], preferred_element_type=jnp.float32) + bv_ref[h]
        s = jnp.dot(qh.astype(jnp.bfloat16), kh.astype(jnp.bfloat16).T,
                    preferred_element_type=jnp.float32) * scale + bias      # (Lq, Lk)
        s = s - jnp.max(s, axis=-1, keepdims=True)
        p = jnp.exp(s)
        p = p * pl.reciprocal(jnp.sum(p, axis=-1, keepdims=True), approx=True)
        oh = jnp.dot(p.astype(jnp.bfloat16), vh.astype(jnp.bfloat16),
                     preferred_element_type=jnp.float32)                    # (Lq, dh)
        acc = acc + jnp.dot(oh.astype(jnp.bfloat16), wm_ref[h],
                            preferred_element_type=jnp.float32)             # (Lq, H)

    y = xq + acc + bm_ref[...]                      # residual + merge bias
    mu = jnp.mean(y, axis=-1, keepdims=True)
    var = jnp.mean((y - mu) ** 2, axis=-1, keepdims=True)
    yn = (y - mu) * jax.lax.rsqrt(var + eps)
    o_ref[0] = (yn * g_ref[...] + b_ref[...]).astype(o_ref.dtype)


def pallas_mha_ln(mh, ln, q_in, kv_in, mask3):
    """q_in: (B, Lq, H) residual/query stream; kv_in: (B, Lk, H); mask3: (B, 1, Lk) 1=valid."""
    B, Lq, H = q_in.shape
    Lk = kv_in.shape[1]
    nh, dh = NUM_HEADS, HEAD_DIM
    scale = 1.0 / math.sqrt(dh)
    kernel = functools.partial(_mha_ln_kernel, nh=nh, scale=scale, eps=LN_EPS)
    return pl.pallas_call(
        kernel,
        out_shape=jax.ShapeDtypeStruct((B, Lq, H), jnp.float32),
        grid=(B,),
        in_specs=[
            pl.BlockSpec((1, Lq, H), lambda b: (b, 0, 0)),
            pl.BlockSpec((1, Lk, H), lambda b: (b, 0, 0)),
            pl.BlockSpec((1, 1, Lk), lambda b: (b, 0, 0)),
            pl.BlockSpec((nh, H, dh), lambda b: (0, 0, 0)),   # wq (per-head)
            pl.BlockSpec((nh, H, dh), lambda b: (0, 0, 0)),   # wk
            pl.BlockSpec((nh, H, dh), lambda b: (0, 0, 0)),   # wv
            pl.BlockSpec((nh, 1, dh), lambda b: (0, 0, 0)),   # bq
            pl.BlockSpec((nh, 1, dh), lambda b: (0, 0, 0)),   # bk
            pl.BlockSpec((nh, 1, dh), lambda b: (0, 0, 0)),   # bv
            pl.BlockSpec((nh, dh, H), lambda b: (0, 0, 0)),   # wm (per-head block)
            pl.BlockSpec((1, H), lambda b: (0, 0)),           # bm
            pl.BlockSpec((1, H), lambda b: (0, 0)),           # LN gamma
            pl.BlockSpec((1, H), lambda b: (0, 0)),           # LN beta
        ],
        out_specs=pl.BlockSpec((1, Lq, H), lambda b: (b, 0, 0)),
        compiler_params=pltpu.CompilerParams(dimension_semantics=("parallel",)),
    )(q_in, kv_in, mask3, mh["wq"], mh["wk"], mh["wv"], mh["bq"], mh["bk"], mh["bv"],
      mh["wm"], mh["bm"], ln["g"], ln["b"])


def _ffn_ln_kernel(x_ref, w1_ref, b1_ref, w2_ref, b2_ref, g_ref, b_ref, o_ref, *, eps):
    """Fused FFN sub-layer: LayerNorm(x + W2(relu(W1 x + b1)) + b2). FF stays in VMEM."""
    x = x_ref[...]                                           # (tr, H) f32
    h = jnp.dot(x.astype(jnp.bfloat16), w1_ref[...],
                preferred_element_type=jnp.float32) + b1_ref[...]
    h = jnp.maximum(h, 0.0)
    y = jnp.dot(h.astype(jnp.bfloat16), w2_ref[...],
                preferred_element_type=jnp.float32) + b2_ref[...]
    y = x + y
    mu = jnp.mean(y, axis=-1, keepdims=True)
    var = jnp.mean((y - mu) ** 2, axis=-1, keepdims=True)
    yn = (y - mu) * jax.lax.rsqrt(var + eps)
    o_ref[...] = (yn * g_ref[...] + b_ref[...]).astype(o_ref.dtype)


def pallas_ffn_ln(fp, ln, x):
    B, L, H = x.shape
    n = B * L
    ff = fp["w1"].shape[1]
    tr = n if n <= ROW_TILE else ROW_TILE
    out = pl.pallas_call(
        functools.partial(_ffn_ln_kernel, eps=LN_EPS),
        out_shape=jax.ShapeDtypeStruct((n, H), jnp.float32),
        grid=(pl.cdiv(n, tr),),
        in_specs=[
            pl.BlockSpec((tr, H), lambda i: (i, 0)),
            pl.BlockSpec((H, ff), lambda i: (0, 0)),
            pl.BlockSpec((1, ff), lambda i: (0, 0)),
            pl.BlockSpec((ff, H), lambda i: (0, 0)),
            pl.BlockSpec((1, H), lambda i: (0, 0)),
            pl.BlockSpec((1, H), lambda i: (0, 0)),
            pl.BlockSpec((1, H), lambda i: (0, 0)),
        ],
        out_specs=pl.BlockSpec((tr, H), lambda i: (i, 0)),
        compiler_params=pltpu.CompilerParams(dimension_semantics=("parallel",)),
    )(x.reshape(n, H), fp["w1"], fp["b1"], fp["w2"], fp["b2"], ln["g"], ln["b"])
    return out.reshape(B, L, H)


def _head_kernel(fin_ref, scene_ref, wc_ref, bc_ref, wd_ref, bd_ref,
                 cont_ref, disc_ref, *, d):
    avg = jnp.mean(fin_ref[...], axis=1)          # (B, D)  == fin_person_feat.mean(dim=1)
    scene = scene_ref[...]                        # (B, D)  == inp_scene_feat[:, 0, :]
    # concat([avg, scene]) @ W  ==  avg @ W[:d] + scene @ W[d:]
    cont = (jnp.dot(avg, wc_ref[:d, :], preferred_element_type=jnp.float32)
            + jnp.dot(scene, wc_ref[d:, :], preferred_element_type=jnp.float32)
            + bc_ref[...])
    disc = (jnp.dot(avg, wd_ref[:d, :], preferred_element_type=jnp.float32)
            + jnp.dot(scene, wd_ref[d:, :], preferred_element_type=jnp.float32)
            + bd_ref[...])
    cont_ref[...] = jax.nn.sigmoid(cont).astype(cont_ref.dtype)
    disc_ref[...] = disc.astype(disc_ref.dtype)


def pallas_head(fin_feat, scene_cls, wc, bc, wd, bd):
    b, np_, d = fin_feat.shape
    nc = wc.shape[1]
    nd = wd.shape[1]
    return pl.pallas_call(
        functools.partial(_head_kernel, d=d),
        out_shape=(jax.ShapeDtypeStruct((b, nc), jnp.float32),
                   jax.ShapeDtypeStruct((b, nd), jnp.float32)),
        grid=(1,),
        in_specs=[
            pl.BlockSpec((b, np_, d), lambda i: (0, 0, 0)),
            pl.BlockSpec((b, d), lambda i: (0, 0)),
            pl.BlockSpec((2 * d, nc), lambda i: (0, 0)),
            pl.BlockSpec((1, nc), lambda i: (0, 0)),
            pl.BlockSpec((2 * d, nd), lambda i: (0, 0)),
            pl.BlockSpec((1, nd), lambda i: (0, 0)),
        ],
        out_specs=(pl.BlockSpec((b, nc), lambda i: (0, 0)),
                   pl.BlockSpec((b, nd), lambda i: (0, 0))),
        compiler_params=pltpu.CompilerParams(dimension_semantics=("arbitrary",)),
    )(fin_feat, scene_cls, wc, bc, wd, bd)


# ================================ transformer blocks ================================

def sa_layer(lp, x, x_mask3):
    # MCAN SA: x = LN(x + MHAtt(x,x,x,mask)); x = LN(x + FFN(x))   (dropout = identity)
    x = pallas_mha_ln(lp["mh"], lp["ln1"], x, x, x_mask3)
    x = pallas_ffn_ln(lp["ffn"], lp["ln2"], x)
    return x


def sga_layer(lp, y, x, y_mask3, x_mask3):
    # MCAN SGA: self-attn on y, guided attention y->x, FFN (each with residual+LN).
    y = pallas_mha_ln(lp["mh1"], lp["ln1"], y, y, y_mask3)
    y = pallas_mha_ln(lp["mh2"], lp["ln2"], y, x, x_mask3)
    y = pallas_ffn_ln(lp["ffn"], lp["ln3"], y)
    return y


# ================================ full forward ================================

def forward(params, image_data, inp_scene_feat, input_ids, text_mask):
    # input_ids / text_mask: (B, 1, L) -> squeeze(1)
    input_ids = input_ids[:, 0, :]
    tmask = text_mask[:, 0, :].astype(jnp.float32)            # (B, L), 1 = valid token

    # TODO(synk): frozen pretrained BertModel has no in-script equivalent; stubbed by a
    #             deterministic embedding lookup producing text_feat (B, L, HIDDEN).
    text_feat = params["bert_emb"][input_ids]                  # (B, L, H)
    text_mask3 = tmask[:, None, :]                             # (B, 1, L), consumed in-kernel

    # TODO(synk): person_model_option is an externally supplied backbone; treated as
    #             identity on pre-extracted NCHW feature maps image_data.
    B, C, Hh, Ww = image_data.shape
    hw = Hh * Ww
    person_tok = image_data.reshape(B, C, hw).transpose(0, 2, 1)       # (B, HW, feat_dim)
    person = pallas_linear(person_tok.reshape(-1, C),
                           params["fm_w"], params["fm_b"]).reshape(B, hw, HIDDEN)

    ones_person = jnp.ones((B, 1, hw), jnp.float32)            # "None" mask for person tokens

    # MCA: SA encoder on text, SGA decoder on person guided by text.
    x = text_feat
    for lp in params["enc"]:
        x = sa_layer(lp, x, text_mask3)
    y = person
    for lp in params["dec"]:
        y = sga_layer(lp, y, x, ones_person, text_mask3)
    mca_feat = y                                               # (B, HW, H)

    # text_guided_feat = inp_person_feat + mca_feat
    text_guided = person + mca_feat

    # TODO(synk): CMA (img_2_img_attention) source not provided; modeled as an MCAN
    #             SGA-style cross-attention stack refining text_guided w.r.t. person.
    z = text_guided
    for lp in params["cma"]:
        z = sga_layer(lp, z, person, ones_person, ones_person)
    fin_person_feat = z                                        # (B, HW, H)

    scene_cls = inp_scene_feat[:, 0, :]                        # (B, scene_feat_dim)

    logits_cont, logits_discrete = pallas_head(
        fin_person_feat, scene_cls,
        params["cls_cont_w"], params["cls_cont_b"],
        params["cls_disc_w"], params["cls_disc_b"])
    return logits_cont, logits_discrete


# ================================ parameter init ================================

def init_params(key):
    keys = iter(jax.random.split(key, 128))

    def lin(din, dout):
        w = jax.random.normal(next(keys), (din, dout), jnp.float32) * 0.02
        return w, jnp.zeros((dout,), jnp.float32)

    nh, dh = NUM_HEADS, HEAD_DIM

    def mh_p():
        wq, bq = lin(HIDDEN, HIDDEN)
        wk, bk = lin(HIDDEN, HIDDEN)
        wv, bv = lin(HIDDEN, HIDDEN)
        wm, bm = lin(HIDDEN, HIDDEN)
        return {
            # pre-split per head for the fused kernel; bf16 for MXU-native matmuls
            "wq": wq.reshape(HIDDEN, nh, dh).transpose(1, 0, 2).astype(jnp.bfloat16),
            "wk": wk.reshape(HIDDEN, nh, dh).transpose(1, 0, 2).astype(jnp.bfloat16),
            "wv": wv.reshape(HIDDEN, nh, dh).transpose(1, 0, 2).astype(jnp.bfloat16),
            "bq": bq.reshape(nh, 1, dh),
            "bk": bk.reshape(nh, 1, dh),
            "bv": bv.reshape(nh, 1, dh),
            "wm": wm.reshape(nh, dh, HIDDEN).astype(jnp.bfloat16),
            "bm": bm.reshape(1, HIDDEN),
        }

    def ln_p():
        return {"g": jnp.ones((1, HIDDEN), jnp.float32),
                "b": jnp.zeros((1, HIDDEN), jnp.float32)}

    def ffn_p():
        w1, b1 = lin(HIDDEN, FF_SIZE)
        w2, b2 = lin(FF_SIZE, HIDDEN)
        return {"w1": w1.astype(jnp.bfloat16), "b1": b1.reshape(1, FF_SIZE),
                "w2": w2.astype(jnp.bfloat16), "b2": b2.reshape(1, HIDDEN)}

    def sa_p():
        return {"mh": mh_p(), "ln1": ln_p(), "ffn": ffn_p(), "ln2": ln_p()}

    def sga_p():
        return {"mh1": mh_p(), "ln1": ln_p(), "mh2": mh_p(), "ln2": ln_p(),
                "ffn": ffn_p(), "ln3": ln_p()}

    fm_w, fm_b = lin(FEAT_DIM, SCENE_FEAT_DIM)
    cc_w, cc_b = lin(CLS_FEAT_DIM, NUM_CONT)
    cd_w, cd_b = lin(CLS_FEAT_DIM, NUM_DISCRETE)

    return {
        "bert_emb": jax.random.normal(next(keys), (VOCAB, HIDDEN), jnp.float32) * 0.02,
        "fm_w": fm_w.astype(jnp.bfloat16), "fm_b": fm_b.reshape(1, SCENE_FEAT_DIM),
        "enc": [sa_p() for _ in range(NUM_LAYERS)],
        "dec": [sga_p() for _ in range(NUM_LAYERS)],
        "cma": [sga_p() for _ in range(NUM_LAYERS)],
        "cls_cont_w": cc_w, "cls_cont_b": cc_b.reshape(1, NUM_CONT),
        "cls_disc_w": cd_w, "cls_disc_b": cd_b.reshape(1, NUM_DISCRETE),
    }


# ================================ main ================================

if __name__ == "__main__":
    key = jax.random.PRNGKey(0)
    kp, k1, k2, k3 = jax.random.split(key, 4)
    params = init_params(kp)

    B, L = 2, 8
    Himg = Wimg = 4
    image_data = jax.random.normal(k1, (B, FEAT_DIM, Himg, Wimg), jnp.float32)      # NCHW
    inp_scene_feat = jax.random.normal(k2, (B, 4, SCENE_FEAT_DIM), jnp.float32)
    input_ids = jax.random.randint(k3, (B, 1, L), 0, VOCAB, dtype=jnp.int32)
    text_mask = jnp.ones((B, 1, L), jnp.float32).at[1, 0, 6:].set(0.0)              # pad tail of batch 1

    fwd = jax.jit(forward)
    logits_cont, logits_discrete = fwd(params, image_data, inp_scene_feat, input_ids, text_mask)
    jax.block_until_ready((logits_cont, logits_discrete))

    assert logits_cont.shape == (B, NUM_CONT)
    assert logits_discrete.shape == (B, NUM_DISCRETE)
    assert bool(jnp.all(jnp.isfinite(logits_cont))) and bool(jnp.all(jnp.isfinite(logits_discrete)))
    assert bool(jnp.all(logits_cont >= 0.0)) and bool(jnp.all(logits_cont <= 1.0))
    print("KERNEL_OK")
</pallas_src>

<mosaic_0001>
module attributes {stable_mosaic.version = 11 : i64} {
  func.func @_linear_kernel(%arg0: i32, %arg1: memref<32x4xf32, #tpu.memory_space<vmem>>, %arg2: memref<4x32xbf16, #tpu.memory_space<vmem>>, %arg3: memref<1x32xf32, #tpu.memory_space<vmem>>, %arg4: memref<32x32xf32, #tpu.memory_space<vmem>>) attributes {dimension_semantics = [#tpu.dimension_semantics<parallel>], iteration_bounds = array<i64: 1>, scalar_prefetch = 0 : i64, scratch_operands = 0 : i64, tpu.core_type = #tpu.core_type<tc>, window_params = [{transform_indices = @transform_0, window_bounds = array<i64: 32, 4>}, {pipeline_mode = #tpu.pipeline_mode<synchronous>, transform_indices = @transform_1, window_bounds = array<i64: 4, 32>}, {pipeline_mode = #tpu.pipeline_mode<synchronous>, transform_indices = @transform_2, window_bounds = array<i64: 1, 32>}, {transform_indices = @transform_3, window_bounds = array<i64: 32, 32>}]} {
    %c0 = arith.constant 0 : index
    %c0_0 = arith.constant 0 : index
    %0 = vector.load %arg1[%c0, %c0_0] : memref<32x4xf32, #tpu.memory_space<vmem>>, vector<32x4xf32>
    %1 = arith.truncf %0 : vector<32x4xf32> to vector<32x4xbf16>
    %c0_1 = arith.constant 0 : index
    %c0_2 = arith.constant 0 : index
    %2 = vector.load %arg2[%c0_1, %c0_2] : memref<4x32xbf16, #tpu.memory_space<vmem>>, vector<4x32xbf16>
    %cst = arith.constant dense<0.000000e+00> : vector<32x32xf32>
    %3 = tpu.matmul %1, %2, %cst {dimension_numbers = #tpu.dot_dimension_numbers<[1], [0], [0], [1], [0, 0, 1, 1], [], []>} : vector<32x4xbf16>, vector<4x32xbf16>, vector<32x32xf32> -> vector<32x32xf32>
    %c0_3 = arith.constant 0 : index
    %c0_4 = arith.constant 0 : index
    %4 = vector.load %arg3[%c0_3, %c0_4] : memref<1x32xf32, #tpu.memory_space<vmem>>, vector<1x32xf32>
    %5 = vector.broadcast %4 : vector<1x32xf32> to vector<32x32xf32>
    %6 = arith.addf %3, %5 : vector<32x32xf32>
    %c0_5 = arith.constant 0 : index
    %c0_6 = arith.constant 0 : index
    %7 = vector.load %arg4[%c0_5, %c0_6] : memref<32x32xf32, #tpu.memory_space<vmem>>, vector<32x32xf32>
    tpu.vector_store %arg4[%c0_5, %c0_6], %6 {strides = array<i32>} : memref<32x32xf32, #tpu.memory_space<vmem>>, vector<32x32xf32>,
    return
  }
  func.func @transform_0(%arg0: i32) -> (i32, i32) {
    %c0_i32 = arith.constant 0 : i32
    %c0_i32_0 = arith.constant 0 : i32
    return %arg0, %c0_i32 : i32, i32
  }
  func.func @transform_1(%arg0: i32) -> (i32, i32) {
    %c0_i32 = arith.constant 0 : i32
    %c0_i32_0 = arith.constant 0 : i32
    %c0_i32_1 = arith.constant 0 : i32
    return %c0_i32, %c0_i32_0 : i32, i32
  }
  func.func @transform_2(%arg0: i32) -> (i32, i32) {
    %c0_i32 = arith.constant 0 : i32
    %c0_i32_0 = arith.constant 0 : i32
    %c0_i32_1 = arith.constant 0 : i32
    return %c0_i32, %c0_i32_0 : i32, i32
  }
  func.func @transform_3(%arg0: i32) -> (i32, i32) {
    %c0_i32 = arith.constant 0 : i32
    %c0_i32_0 = arith.constant 0 : i32
    return %arg0, %c0_i32 : i32, i32
  }
}

module attributes {stable_mosaic.version = 11 : i64} {
  func.func @_mha_ln_kernel(%arg0: i32, %arg1: memref<1x16x32xf32, #tpu.memory_space<vmem>>, %arg2: memref<1x16x32xf32, #tpu.memory_space<vmem>>, %arg3: memref<1x1x16xf32, #tpu.memory_space<vmem>>, %arg4: memref<4x32x8xbf16, #tpu.memory_space<vmem>>, %arg5: memref<4x32x8xbf16, #tpu.memory_space<vmem>>, %arg6: memref<4x32x8xbf16, #tpu.memory_space<vmem>>, %arg7: memref<4x1x8xf32, #tpu.memory_space<vmem>>, %arg8: memref<4x1x8xf32, #tpu.memory_space<vmem>>, %arg9: memref<4x1x8xf32, #tpu.memory_space<vmem>>, %arg10: memref<4x8x32xbf16, #tpu.memory_space<vmem>>, %arg11: memref<1x32xf32, #tpu.memory_space<vmem>>, %arg12: memref<1x32xf32, #tpu.memory_space<vmem>>, %arg13: memref<1x32xf32, #tpu.memory_space<vmem>>, %arg14: memref<1x16x32xf32, #tpu.memory_space<vmem>>) attributes {dimension_semantics = [#tpu.dimension_semantics<parallel>], iteration_bounds = array<i64: 2>, scalar_prefetch = 0 : i64, scratch_operands = 0 : i64, tpu.core_type = #tpu.core_type<tc>, window_params = [{transform_indices = @transform_0, window_bounds = array<i64: 1, 16, 32>}, {transform_indices = @transform_1, window_bounds = array<i64: 1, 16, 32>}, {transform_indices = @transform_2, window_bounds = array<i64: 1, 1, 16>}, {pipeline_mode = #tpu.pipeline_mode<synchronous>, transform_indices = @transform_3, window_bounds = array<i64: 4, 32, 8>}, {pipeline_mode = #tpu.pipeline_mode<synchronous>, transform_indices = @transform_4, window_bounds = array<i64: 4, 32, 8>}, {pipeline_mode = #tpu.pipeline_mode<synchronous>, transform_indices = @transform_5, window_bounds = array<i64: 4, 32, 8>}, {pipeline_mode = #tpu.pipeline_mode<synchronous>, transform_indices = @transform_6, window_bounds = array<i64: 4, 1, 8>}, {pipeline_mode = #tpu.pipeline_mode<synchronous>, transform_indices = @transform_7, window_bounds = array<i64: 4, 1, 8>}, {pipeline_mode = #tpu.pipeline_mode<synchronous>, transform_indices = @transform_8, window_bounds = array<i64: 4, 1, 8>}, {pipeline_mode = #tpu.pipeline_mode<synchronous>, transform_indices = @transform_9, window_bounds = array<i64: 4, 8, 32>}, {pipeline_mode = #tpu.pipeline_mode<synchronous>, transform_indices = @transform_10, window_bounds = array<i64: 1, 32>}, {pipeline_mode = #tpu.pipeline_mode<synchronous>, transform_indices = @transform_11, window_bounds = array<i64: 1, 32>}, {pipeline_mode = #tpu.pipeline_mode<synchronous>, transform_indices = @transform_12, window_bounds = array<i64: 1, 32>}, {transform_indices = @transform_13, window_bounds = array<i64: 1, 16, 32>}]} {
    %c0 = arith.constant 0 : index
    %c0_0 = arith.constant 0 : index
    %c0_1 = arith.constant 0 : index
    %0 = vector.load %arg1[%c0, %c0_0, %c0_1] : memref<1x16x32xf32, #tpu.memory_space<vmem>>, vector<1x16x32xf32>
    %1 = vector.shape_cast %0 : vector<1x16x32xf32> to vector<16x32xf32>
    %c0_2 = arith.constant 0 : index
    %c0_3 = arith.constant 0 : index
    %c0_4 = arith.constant 0 : index
    %2 = vector.load %arg2[%c0_2, %c0_3, %c0_4] : memref<1x16x32xf32, #tpu.memory_space<vmem>>, vector<1x16x32xf32>
    %3 = vector.shape_cast %2 : vector<1x16x32xf32> to vector<16x32xf32>
    %c0_5 = arith.constant 0 : index
    %c0_6 = arith.constant 0 : index
    %c0_7 = arith.constant 0 : index
    %4 = vector.load %arg3[%c0_5, %c0_6, %c0_7] : memref<1x1x16xf32, #tpu.memory_space<vmem>>, vector<1x1x16xf32>
    %5 = vector.shape_cast %4 : vector<1x1x16xf32> to vector<1x16xf32>
    %cst = arith.constant 1.000000e+00 : f32
    %6 = vector.broadcast %cst : f32 to vector<1x16xf32>
    %7 = arith.subf %6, %5 : vector<1x16xf32>
    %cst_8 = arith.constant -1.000000e+09 : f32
    %8 = vector.broadcast %cst_8 : f32 to vector<1x16xf32>
    %9 = arith.mulf %7, %8 : vector<1x16xf32>
    %10 = arith.truncf %1 : vector<16x32xf32> to vector<16x32xbf16>
    %11 = arith.truncf %3 : vector<16x32xf32> to vector<16x32xbf16>
    %cst_9 = arith.constant 0.000000e+00 : f32
    %12 = vector.broadcast %cst_9 : f32 to vector<16x32xf32>
    %c0_10 = arith.constant 0 : index
    %c0_11 = arith.constant 0 : index
    %c0_12 = arith.constant 0 : index
    %13 = vector.load %arg4[%c0_10, %c0_11, %c0_12] : memref<4x32x8xbf16, #tpu.memory_space<vmem>>, vector<1x32x8xbf16>
    %14 = vector.shape_cast %13 : vector<1x32x8xbf16> to vector<32x8xbf16>
    %cst_13 = arith.constant dense<0.000000e+00> : vector<16x8xf32>
    %15 = tpu.matmul %10, %14, %cst_13 {dimension_numbers = #tpu.dot_dimension_numbers<[1], [0], [0], [1], [0, 0, 1, 1], [], []>} : vector<16x32xbf16>, vector<32x8xbf16>, vector<16x8xf32> -> vector<16x8xf32>
    %c0_14 = arith.constant 0 : index
    %c0_15 = arith.constant 0 : index
    %c0_16 = arith.constant 0 : index
    %16 = vector.load %arg7[%c0_14, %c0_15, %c0_16] : memref<4x1x8xf32, #tpu.memory_space<vmem>>, vector<1x1x8xf32>
    %17 = vector.shape_cast %16 : vector<1x1x8xf32> to vector<1x8xf32>
    %18 = vector.broadcast %17 : vector<1x8xf32> to vector<16x8xf32>
    %19 = arith.addf %15, %18 : vector<16x8xf32>
    %c0_17 = arith.constant 0 : index
    %c0_18 = arith.constant 0 : index
    %c0_19 = arith.constant 0 : index
    %20 = vector.load %arg5[%c0_17, %c0_18, %c0_19] : memref<4x32x8xbf16, #tpu.memory_space<vmem>>, vector<1x32x8xbf16>
    %21 = vector.shape_cast %20 : vector<1x32x8xbf16> to vector<32x8xbf16>
    %cst_20 = arith.constant dense<0.000000e+00> : vector<16x8xf32>
    %22 = tpu.matmul %11, %21, %cst_20 {dimension_numbers = #tpu.dot_dimension_numbers<[1], [0], [0], [1], [0, 0, 1, 1], [], []>} : vector<16x32xbf16>, vector<32x8xbf16>, vector<16x8xf32> -> vector<16x8xf32>
    %c0_21 = arith.constant 0 : index
    %c0_22 = arith.constant 0 : index
    %c0_23 = arith.constant 0 : index
    %23 = vector.load %arg8[%c0_21, %c0_22, %c0_23] : memref<4x1x8xf32, #tpu.memory_space<vmem>>, vector<1x1x8xf32>
    %24 = vector.shape_cast %23 : vector<1x1x8xf32> to vector<1x8xf32>
    %25 = vector.broadcast %24 : vector<1x8xf32> to vector<16x8xf32>
    %26 = arith.addf %22, %25 : vector<16x8xf32>
    %c0_24 = arith.constant 0 : index
    %c0_25 = arith.constant 0 : index
    %c0_26 = arith.constant 0 : index
    %27 = vector.load %arg6[%c0_24, %c0_25, %c0_26] : memref<4x32x8xbf16, #tpu.memory_space<vmem>>, vector<1x32x8xbf16>
    %28 = vector.shape_cast %27 : vector<1x32x8xbf16> to vector<32x8xbf16>
    %cst_27 = arith.constant dense<0.000000e+00> : vector<16x8xf32>
    %29 = tpu.matmul %11, %28, %cst_27 {dimension_numbers = #tpu.dot_dimension_numbers<[1], [0], [0], [1], [0, 0, 1, 1], [], []>} : vector<16x32xbf16>, vector<32x8xbf16>, vector<16x8xf32> -> vector<16x8xf32>
    %c0_28 = arith.constant 0 : index
    %c0_29 = arith.constant 0 : index
    %c0_30 = arith.constant 0 : index
    %30 = vector.load %arg9[%c0_28, %c0_29, %c0_30] : memref<4x1x8xf32, #tpu.memory_space<vmem>>, vector<1x1x8xf32>
    %31 = vector.shape_cast %30 : vector<1x1x8xf32> to vector<1x8xf32>
    %32 = vector.broadcast %31 : vector<1x8xf32> to vector<16x8xf32>
    %33 = arith.addf %29, %32 : vector<16x8xf32>
    %34 = arith.truncf %19 : vector<16x8xf32> to vector<16x8xbf16>
    %35 = arith.truncf %26 : vector<16x8xf32> to vector<16x8xbf16>
    %36 = tpu.transpose %35, [1, 0] : vector<16x8xbf16> -> vector<8x16xbf16>
    %cst_31 = arith.constant dense<0.000000e+00> : vector<16x16xf32>
    %37 = tpu.matmul %34, %36, %cst_31 {dimension_numbers = #tpu.dot_dimension_numbers<[1], [0], [0], [1], [0, 0, 1, 1], [], []>} : vector<16x8xbf16>, vector<8x16xbf16>, vector<16x16xf32> -> vector<16x16xf32>
    %cst_32 = arith.constant 0.353553385 : f32
    %38 = vector.broadcast %cst_32 : f32 to vector<16x16xf32>
    %39 = arith.mulf %37, %38 : vector<16x16xf32>
    %40 = vector.broadcast %9 : vector<1x16xf32> to vector<16x16xf32>
    %41 = arith.addf %39, %40 : vector<16x16xf32>
    %cst_33 = arith.constant dense<0xFF800000> : vector<16xf32>
    %42 = vector.multi_reduction <maximumf>, %41, %cst_33 [1] : vector<16x16xf32> to vector<16xf32>
    %43 = vector.shape_cast %42 : vector<16xf32> to vector<16x1xf32>
    %44 = vector.broadcast %43 : vector<16x1xf32> to vector<16x16xf32>
    %45 = arith.subf %41, %44 : vector<16x16xf32>
    %46 = math.exp %45 : vector<16x16xf32>
    %cst_34 = arith.constant dense<0.000000e+00> : vector<16xf32>
    %47 = vector.multi_reduction <add>, %46, %cst_34 [1] : vector<16x16xf32> to vector<16xf32>
    %48 = vector.shape_cast %47 : vector<16xf32> to vector<16x1xf32>
    %49 = tpu.reciprocal %48 {approx = true} : vector<16x1xf32> -> vector<16x1xf32>
    %50 = vector.broadcast %49 : vector<16x1xf32> to vector<16x16xf32>
    %51 = arith.mulf %46, %50 : vector<16x16xf32>
    %52 = arith.truncf %51 : vector<16x16xf32> to vector<16x16xbf16>
    %53 = arith.truncf %33 : vector<16x8xf32> to vector<16x8xbf16>
    %cst_35 = arith.constant dense<0.000000e+00> : vector<16x8xf32>
    %54 = tpu.matmul %52, %53, %cst_35 {dimension_numbers = #tpu.dot_dimension_numbers<[1], [0], [0], [1], [0, 0, 1, 1], [], []>} : vector<16x16xbf16>, vector<16x8xbf16>, vector<16x8xf32> -> vector<16x8xf32>
    %55 = arith.truncf %54 : vector<16x8xf32> to vector<16x8xbf16>
    %c0_36 = arith.constant 0 : index
    %c0_37 = arith.constant 0 : index
    %c0_38 = arith.constant 0 : index
    %56 = vector.load %arg10[%c0_36, %c0_37, %c0_38] : memref<4x8x32xbf16, #tpu.memory_space<vmem>>, vector<1x8x32xbf16>
    %57 = vector.shape_cast %56 : vector<1x8x32xbf16> to vector<8x32xbf16>
    %cst_39 = arith.constant dense<0.000000e+00> : vector<16x32xf32>
    %58 = tpu.matmul %55, %57, %cst_39 {dimension_numbers = #tpu.dot_dimension_numbers<[1], [0], [0], [1], [0, 0, 1, 1], [], []>} : vector<16x8xbf16>, vector<8x32xbf16>, vector<16x32xf32> -> vector<16x32xf32>
    %59 = arith.addf %12, %58 : vector<16x32xf32>
    %c1 = arith.constant 1 : index
    %c0_40 = arith.constant 0 : index
    %c0_41 = arith.constant 0 : index
    %60 = vector.load %arg4[%c1, %c0_40, %c0_41] : memref<4x32x8xbf16, #tpu.memory_space<vmem>>, vector<1x32x8xbf16>
    %61 = vector.shape_cast %60 : vector<1x32x8xbf16> to vector<32x8xbf16>
    %cst_42 = arith.constant dense<0.000000e+00> : vector<16x8xf32>
    %62 = tpu.matmul %10, %61, %cst_42 {dimension_numbers = #tpu.dot_dimension_numbers<[1], [0], [0], [1], [0, 0, 1, 1], [], []>} : vector<16x32xbf16>, vector<32x8xbf16>, vector<16x8xf32> -> vector<16x8xf32>
    %c1_43 = arith.constant 1 : index
    %c0_44 = arith.constant 0 : index
    %c0_45 = arith.constant 0 : index
    %63 = vector.load %arg7[%c1_43, %c0_44, %c0_45] : memref<4x1x8xf32, #tpu.memory_space<vmem>>, vector<1x1x8xf32>
    %64 = vector.shape_cast %63 : vector<1x1x8xf32> to vector<1x8xf32>
    %65 = vector.broadcast %64 : vector<1x8xf32> to vector<16x8xf32>
    %66 = arith.addf %62, %65 : vector<16x8xf32>
    %c1_46 = arith.constant 1 : index
    %c0_47 = arith.constant 0 : index
    %c0_48 = arith.constant 0 : index
    %67 = vector.load %arg5[%c1_46, %c0_47, %c0_48] : memref<4x32x8xbf16, #tpu.memory_space<vmem>>, vector<1x32x8xbf16>
    %68 = vector.shape_cast %67 : vector<1x32x8xbf16> to vector<32x8xbf16>
    %cst_49 = arith.constant dense<0.000000e+00> : vector<16x8xf32>
    %69 = tpu.matmul %11, %68, %cst_49 {dimension_numbers = #tpu.dot_dimension_numbers<[1], [0], [0], [1], [0, 0, 1, 1], [], []>} : vector<16x32xbf16>, vector<32x8xbf16>, vector<16x8xf32> -> vector<16x8xf32>
    %c1_50 = arith.constant 1 : index
    %c0_51 = arith.constant 0 : index
    %c0_52 = arith.constant 0 : index
    %70 = vector.load %arg8[%c1_50, %c0_51, %c0_52] : memref<4x1x8xf32, #tpu.memory_space<vmem>>, vector<1x1x8xf32>
    %71 = vector.shape_cast %70 : vector<1x1x8xf32> to vector<1x8xf32>
    %72 = vector.broadcast %71 : vector<1x8xf32> to vector<16x8xf32>
    %73 = arith.addf %69, %72 : vector<16x8xf32>
    %c1_53 = arith.constant 1 : index
    %c0_54 = arith.constant 0 : index
    %c0_55 = arith.constant 0 : index
    %74 = vector.load %arg6[%c1_53, %c0_54, %c0_55] : memref<4x32x8xbf16, #tpu.memory_space<vmem>>, vector<1x32x8xbf16>
    %75 = vector.shape_cast %74 : vector<1x32x8xbf16> to vector<32x8xbf16>
    %cst_56 = arith.constant dense<0.000000e+00> : vector<16x8xf32>
    %76 = tpu.matmul %11, %75, %cst_56 {dimension_numbers = #tpu.dot_dimension_numbers<[1], [0], [0], [1], [0, 0, 1, 1], [], []>} : vector<16x32xbf16>, vector<32x8xbf16>, vector<16x8xf32> -> vector<16x8xf32>
    %c1_57 = arith.constant 1 : index
    %c0_58 = arith.constant 0 : index
    %c0_59 = arith.constant 0 : index
    %77 = vector.load %arg9[%c1_57, %c0_58, %c0_59] : memref<4x1x8xf32, #tpu.memory_space<vmem>>, vector<1x1x8xf32>
    %78 = vector.shape_cast %77 : vector<1x1x8xf32> to vector<1x8xf32>
    %79 = vector.broadcast %78 : vector<1x8xf32> to vector<16x8xf32>
    %80 = arith.addf %76, %79 : vector<16x8xf32>
    %81 = arith.truncf %66 : vector<16x8xf32> to vector<16x8xbf16>
    %82 = arith.truncf %73 : vector<16x8xf32> to vector<16x8xbf16>
    %83 = tpu.transpose %82, [1, 0] : vector<16x8xbf16> -> vector<8x16xbf16>
    %cst_60 = arith.constant dense<0.000000e+00> : vector<16x16xf32>
    %84 = tpu.matmul %81, %83, %cst_60 {dimension_numbers = #tpu.dot_dimension_numbers<[1], [0], [0], [1], [0, 0, 1, 1], [], []>} : vector<16x8xbf16>, vector<8x16xbf16>, vector<16x16xf32> -> vector<16x16xf32>
    %cst_61 = arith.constant 0.353553385 : f32
    %85 = vector.broadcast %cst_61 : f32 to vector<16x16xf32>
    %86 = arith.mulf %84, %85 : vector<16x16xf32>
    %87 = vector.broadcast %9 : vector<1x16xf32> to vector<16x16xf32>
    %88 = arith.addf %86, %87 : vector<16x16xf32>
    %cst_62 = arith.constant dense<0xFF800000> : vector<16xf32>
    %89 = vector.multi_reduction <maximumf>, %88, %cst_62 [1] : vector<16x16xf32> to vector<16xf32>
    %90 = vector.shape_cast %89 : vector<16xf32> to vector<16x1xf32>
    %91 = vector.broadcast %90 : vector<16x1xf32> to vector<16x16xf32>
    %92 = arith.subf %88, %91 : vector<16x16xf32>
    %93 = math.exp %92 : vector<16x16xf32>
    %cst_63 = arith.constant dense<0.000000e+00> : vector<16xf32>
    %94 = vector.multi_reduction <add>, %93, %cst_63 [1] : vector<16x16xf32> to vector<16xf32>
    %95 = vector.shape_cast %94 : vector<16xf32> to vector<16x1xf32>
    %96 = tpu.reciprocal %95 {approx = true} : vector<16x1xf32> -> vector<16x1xf32>
    %97 = vector.broadcast %96 : vector<16x1xf32> to vector<16x16xf32>
    %98 = arith.mulf %93, %97 : vector<16x16xf32>
    %99 = arith.truncf %98 : vector<16x16xf32> to vector<16x16xbf16>
    %100 = arith.truncf %80 : vector<16x8xf32> to vector<16x8xbf16>
    %cst_64 = arith.constant dense<0.000000e+00> : vector<16x8xf32>
    %101 = tpu.matmul %99, %100, %cst_64 {dimension_numbers = #tpu.dot_dimension_numbers<[1], [0], [0], [1], [0, 0, 1, 1], [], []>} : vector<16x16xbf16>, vector<16x8xbf16>, vector<16x8xf32> -> vector<16x8xf32>
    %102 = arith.truncf %101 : vector<16x8xf32> to vector<16x8xbf16>
    %c1_65 = arith.constant 1 : index
    %c0_66 = arith.constant 0 : index
    %c0_67 = arith.constant 0 : index
    %103 = vector.load %arg10[%c1_65, %c0_66, %c0_67] : memref<4x8x32xbf16, #tpu.memory_space<vmem>>, vector<1x8x32xbf16>
    %104 = vector.shape_cast %103 : vector<1x8x32xbf16> to vector<8x32xbf16>
    %cst_68 = arith.constant dense<0.000000e+00> : vector<16x32xf32>
    %105 = tpu.matmul %102, %104, %cst_68 {dimension_numbers = #tpu.dot_dimension_numbers<[1], [0], [0], [1], [0, 0, 1, 1], [], []>} : vector<16x8xbf16>, vector<8x32xbf16>, vector<16x32xf32> -> vector<16x32xf32>
    %106 = arith.addf %59, %105 : vector<16x32xf32>
    %c2 = arith.constant 2 : index
    %c0_69 = arith.constant 0 : index
    %c0_70 = arith.constant 0 : index
    %107 = vector.load %arg4[%c2, %c0_69, %c0_70] : memref<4x32x8xbf16, #tpu.memory_space<vmem>>, vector<1x32x8xbf16>
    %108 = vector.shape_cast %107 : vector<1x32x8xbf16> to vector<32x8xbf16>
    %cst_71 = arith.constant dense<0.000000e+00> : vector<16x8xf32>
    %109 = tpu.matmul %10, %108, %cst_71 {dimension_numbers = #tpu.dot_dimension_numbers<[1], [0], [0], [1], [0, 0, 1, 1], [], []>} : vector<16x32xbf16>, vector<32x8xbf16>, vector<16x8xf32> -> vector<16x8xf32>
    %c2_72 = arith.constant 2 : index
    %c0_73 = arith.constant 0 : index
    %c0_74 = arith.constant 0 : index
    %110 = vector.load %arg7[%c2_72, %c0_73, %c0_74] : memref<4x1x8xf32, #tpu.memory_space<vmem>>, vector<1x1x8xf32>
    %111 = vector.shape_cast %110 : vector<1x1x8xf32> to vector<1x8xf32>
    %112 = vector.broadcast %111 : vector<1x8xf32> to vector<16x8xf32>
    %113 = arith.addf %109, %112 : vector<16x8xf32>
    %c2_75 = arith.constant 2 : index
    %c0_76 = arith.constant 0 : index
    %c0_77 = arith.constant 0 : index
    %114 = vector.load %arg5[%c2_75, %c0_76, %c0_77] : memref<4x32x8xbf16, #tpu.memory_space<vmem>>, vector<1x32x8xbf16>
    %115 = vector.shape_cast %114 : vector<1x32x8xbf16> to vector<32x8xbf16>
    %cst_78 = arith.constant dense<0.000000e+00> : vector<16x8xf32>
    %116 = tpu.matmul %11, %115, %cst_78 {dimension_numbers = #tpu.dot_dimension_numbers<[1], [0], [0], [1], [0, 0, 1, 1], [], []>} : vector<16x32xbf16>, vector<32x8xbf16>, vector<16x8xf32> -> vector<16x8xf32>
    %c2_79 = arith.constant 2 : index
    %c0_80 = arith.constant 0 : index
    %c0_81 = arith.constant 0 : index
    %117 = vector.load %arg8[%c2_79, %c0_80, %c0_81] : memref<4x1x8xf32, #tpu.memory_space<vmem>>, vector<1x1x8xf32>
    %118 = vector.shape_cast %117 : vector<1x1x8xf32> to vector<1x8xf32>
    %119 = vector.broadcast %118 : vector<1x8xf32> to vector<16x8xf32>
    %120 = arith.addf %116, %119 : vector<16x8xf32>
    %c2_82 = arith.constant 2 : index
    %c0_83 = arith.constant 0 : index
    %c0_84 = arith.constant 0 : index
    %121 = vector.load %arg6[%c2_82, %c0_83, %c0_84] : memref<4x32x8xbf16, #tpu.memory_space<vmem>>, vector<1x32x8xbf16>
    %122 = vector.shape_cast %121 : vector<1x32x8xbf16> to vector<32x8xbf16>
    %cst_85 = arith.constant dense<0.000000e+00> : vector<16x8xf32>
    %123 = tpu.matmul %11, %122, %cst_85 {dimension_numbers = #tpu.dot_dimension_numbers<[1], [0], [0], [1], [0, 0, 1, 1], [], []>} : vector<16x32xbf16>, vector<32x8xbf16>, vector<16x8xf32> -> vector<16x8xf32>
    %c2_86 = arith.constant 2 : index
    %c0_87 = arith.constant 0 : index
    %c0_88 = arith.constant 0 : index
    %124 = vector.load %arg9[%c2_86, %c0_87, %c0_88] : memref<4x1x8xf32, #tpu.memory_space<vmem>>, vector<1x1x8xf32>
    %125 = vector.shape_cast %124 : vector<1x1x8xf32> to vector<1x8xf32>
    %126 = vector.broadcast %125 : vector<1x8xf32> to vector<16x8xf32>
    %127 = arith.addf %123, %126 : vector<16x8xf32>
    %128 = arith.truncf %113 : vector<16x8xf32> to vector<16x8xbf16>
    %129 = arith.truncf %120 : vector<16x8xf32> to vector<16x8xbf16>
    %130 = tpu.transpose %129, [1, 0] : vector<16x8xbf16> -> vector<8x16xbf16>
    %cst_89 = arith.constant dense<0.000000e+00> : vector<16x16xf32>
    %131 = tpu.matmul %128, %130, %cst_89 {dimension_numbers = #tpu.dot_dimension_numbers<[1], [0], [0], [1], [0, 0, 1, 1], [], []>} : vector<16x8xbf16>, vector<8x16xbf16>, vector<16x16xf32> -> vector<16x16xf32>
    %cst_90 = arith.constant 0.353553385 : f32
    %132 = vector.broadcast %cst_90 : f32 to vector<16x16xf32>
    %133 = arith.mulf %131, %132 : vector<16x16xf32>
    %134 = vector.broadcast %9 : vector<1x16xf32> to vector<16x16xf32>
    %135 = arith.addf %133, %134 : vector<16x16xf32>
    %cst_91 = arith.constant dense<0xFF800000> : vector<16xf32>
    %136 = vector.multi_reduction <maximumf>, %135, %cst_91 [1] : vector<16x16xf32> to vector<16xf32>
    %137 = vector.shape_cast %136 : vector<16xf32> to vector<16x1xf32>
    %138 = vector.broadcast %137 : vector<16x1xf32> to vector<16x16xf32>
    %139 = arith.subf %135, %138 : vector<16x16xf32>
    %140 = math.exp %139 : vector<16x16xf32>
    %cst_92 = arith.constant dense<0.000000e+00> : vector<16xf32>
    %141 = vector.multi_reduction <add>, %140, %cst_92 [1] : vector<16x16xf32> to vector<16xf32>
    %142 = vector.shape_cast %141 : vector<16xf32> to vector<16x1xf32>
    %143 = tpu.reciprocal %142 {approx = true} : vector<16x1xf32> -> vector<16x1xf32>
    %144 = vector.broadcast %143 : vector<16x1xf32> to vector<16x16xf32>
    %145 = arith.mulf %140, %144 : vector<16x16xf32>
    %146 = arith.truncf %145 : vector<16x16xf32> to vector<16x16xbf16>
    %147 = arith.truncf %127 : vector<16x8xf32> to vector<16x8xbf16>
    %cst_93 = arith.constant dense<0.000000e+00> : vector<16x8xf32>
    %148 = tpu.matmul %146, %147, %cst_93 {dimension_numbers = #tpu.dot_dimension_numbers<[1], [0], [0], [1], [0, 0, 1, 1], [], []>} : vector<16x16xbf16>, vector<16x8xbf16>, vector<16x8xf32> -> vector<16x8xf32>
    %149 = arith.truncf %148 : vector<16x8xf32> to vector<16x8xbf16>
    %c2_94 = arith.constant 2 : index
    %c0_95 = arith.constant 0 : index
    %c0_96 = arith.constant 0 : index
    %150 = vector.load %arg10[%c2_94, %c0_95, %c0_96] : memref<4x8x32xbf16, #tpu.memory_space<vmem>>, vector<1x8x32xbf16>
    %151 = vector.shape_cast %150 : vector<1x8x32xbf16> to vector<8x32xbf16>
    %cst_97 = arith.constant dense<0.000000e+00> : vector<16x32xf32>
    %152 = tpu.matmul %149, %151, %cst_97 {dimension_numbers = #tpu.dot_dimension_numbers<[1], [0], [0], [1], [0, 0, 1, 1], [], []>} : vector<16x8xbf16>, vector<8x32xbf16>, vector<16x32xf32> -> vector<16x32xf32>
    %153 = arith.addf %106, %152 : vector<16x32xf32>
    %c3 = arith.constant 3 : index
    %c0_98 = arith.constant 0 : index
    %c0_99 = arith.constant 0 : index
    %154 = vector.load %arg4[%c3, %c0_98, %c0_99] : memref<4x32x8xbf16, #tpu.memory_space<vmem>>, vector<1x32x8xbf16>
    %155 = vector.shape_cast %154 : vector<1x32x8xbf16> to vector<32x8xbf16>
    %cst_100 = arith.constant dense<0.000000e+00> : vector<16x8xf32>
    %156 = tpu.matmul %10, %155, %cst_100 {dimension_numbers = #tpu.dot_dimension_numbers<[1], [0], [0], [1], [0, 0, 1, 1], [], []>} : vector<16x32xbf16>, vector<32x8xbf16>, vector<16x8xf32> -> vector<16x8xf32>
    %c3_101 = arith.constant 3 : index
    %c0_102 = arith.constant 0 : index
    %c0_103 = arith.constant 0 : index
    %157 = vector.load %arg7[%c3_101, %c0_102, %c0_103] : memref<4x1x8xf32, #tpu.memory_space<vmem>>, vector<1x1x8xf32>
    %158 = vector.shape_cast %157 : vector<1x1x8xf32> to vector<1x8xf32>
    %159 = vector.broadcast %158 : vector<1x8xf32> to vector<16x8xf32>
    %160 = arith.addf %156, %159 : vector<16x8xf32>
    %c3_104 = arith.constant 3 : index
    %c0_105 = arith.constant 0 : index
    %c0_106 = arith.constant 0 : index
    %161 = vector.load %arg5[%c3_104, %c0_105, %c0_106] : memref<4x32x8xbf16, #tpu.memory_space<vmem>>, vector<1x32x8xbf16>
    %162 = vector.shape_cast %161 : vector<1x32x8xbf16> to vector<32x8xbf16>
    %cst_107 = arith.constant dense<0.000000e+00> : vector<16x8xf32>
    %163 = tpu.matmul %11, %162, %cst_107 {dimension_numbers = #tpu.dot_dimension_numbers<[1], [0], [0], [1], [0, 0, 1, 1], [], []>} : vector<16x32xbf16>, vector<32x8xbf16>, vector<16x8xf32> -> vector<16x8xf32>
    %c3_108 = arith.constant 3 : index
    %c0_109 = arith.constant 0 : index
    %c0_110 = arith.constant 0 : index
    %164 = vector.load %arg8[%c3_108, %c0_109, %c0_110] : memref<4x1x8xf32, #tpu.memory_space<vmem>>, vector<1x1x8xf32>
    %165 = vector.shape_cast %164 : vector<1x1x8xf32> to vector<1x8xf32>
    %166 = vector.broadcast %165 : vector<1x8xf32> to vector<16x8xf32>
    %167 = arith.addf %163, %166 : vector<16x8xf32>
    %c3_111 = arith.constant 3 : index
    %c0_112 = arith.constant 0 : index
    %c0_113 = arith.constant 0 : index
    %168 = vector.load %arg6[%c3_111, %c0_112, %c0_113] : memref<4x32x8xbf16, #tpu.memory_space<vmem>>, vector<1x32x8xbf16>
    %169 = vector.shape_cast %168 : vector<1x32x8xbf16> to vector<32x8xbf16>
    %cst_114 = arith.constant dense<0.000000e+00> : vector<16x8xf32>
    %170 = tpu.matmul %11, %169, %cst_114 {dimension_numbers = #tpu.dot_dimension_numbers<[1], [0], [0], [1], [0, 0, 1, 1], [], []>} : vector<16x32xbf16>, vector<32x8xbf16>, vector<16x8xf32> -> vector<16x8xf32>
    %c3_115 = arith.constant 3 : index
    %c0_116 = arith.constant 0 : index
    %c0_117 = arith.constant 0 : index
    %171 = vector.load %arg9[%c3_115, %c0_116, %c0_117] : memref<4x1x8xf32, #tpu.memory_space<vmem>>, vector<1x1x8xf32>
    %172 = vector.shape_cast %171 : vector<1x1x8xf32> to vector<1x8xf32>
    %173 = vector.broadcast %172 : vector<1x8xf32> to vector<16x8xf32>
    %174 = arith.addf %170, %173 : vector<16x8xf32>
    %175 = arith.truncf %160 : vector<16x8xf32> to vector<16x8xbf16>
    %176 = arith.truncf %167 : vector<16x8xf32> to vector<16x8xbf16>
    %177 = tpu.transpose %176, [1, 0] : vector<16x8xbf16> -> vector<8x16xbf16>
    %cst_118 = arith.constant dense<0.000000e+00> : vector<16x16xf32>
    %178 = tpu.matmul %175, %177, %cst_118 {dimension_numbers = #tpu.dot_dimension_numbers<[1], [0], [0], [1], [0, 0, 1, 1], [], []>} : vector<16x8xbf16>, vector<8x16xbf16>, vector<16x16xf32> -> vector<16x16xf32>
    %cst_119 = arith.constant 0.353553385 : f32
    %179 = vector.broadcast %cst_119 : f32 to vector<16x16xf32>
    %180 = arith.mulf %178, %179 : vector<16x16xf32>
    %181 = vector.broadcast %9 : vector<1x16xf32> to vector<16x16xf32>
    %182 = arith.addf %180, %181 : vector<16x16xf32>
    %cst_120 = arith.constant dense<0xFF800000> : vector<16xf32>
    %183 = vector.multi_reduction <maximumf>, %182, %cst_120 [1] : vector<16x16xf32> to vector<16xf32>
    %184 = vector.shape_cast %183 : vector<16xf32> to vector<16x1xf32>
    %185 = vector.broadcast %184 : vector<16x1xf32> to vector<16x16xf32>
    %186 = arith.subf %182, %185 : vector<16x16xf32>
    %187 = math.exp %186 : vector<16x16xf32>
    %cst_121 = arith.constant dense<0.000000e+00> : vector<16xf32>
    %188 = vector.multi_reduction <add>, %187, %cst_121 [1] : vector<16x16xf32> to vector<16xf32>
    %189 = vector.shape_cast %188 : vector<16xf32> to vector<16x1xf32>
    %190 = tpu.reciprocal %189 {approx = true} : vector<16x1xf32> -> vector<16x1xf32>
    %191 = vector.broadcast %190 : vector<16x1xf32> to vector<16x16xf32>
    %192 = arith.mulf %187, %191 : vector<16x16xf32>
    %193 = arith.truncf %192 : vector<16x16xf32> to vector<16x16xbf16>
    %194 = arith.truncf %174 : vector<16x8xf32> to vector<16x8xbf16>
    %cst_122 = arith.constant dense<0.000000e+00> : vector<16x8xf32>
    %195 = tpu.matmul %193, %194, %cst_122 {dimension_numbers = #tpu.dot_dimension_numbers<[1], [0], [0], [1], [0, 0, 1, 1], [], []>} : vector<16x16xbf16>, vector<16x8xbf16>, vector<16x8xf32> -> vector<16x8xf32>
    %196 = arith.truncf %195 : vector<16x8xf32> to vector<16x8xbf16>
    %c3_123 = arith.constant 3 : index
    %c0_124 = arith.constant 0 : index
    %c0_125 = arith.constant 0 : index
    %197 = vector.load %arg10[%c3_123, %c0_124, %c0_125] : memref<4x8x32xbf16, #tpu.memory_space<vmem>>, vector<1x8x32xbf16>
    %198 = vector.shape_cast %197 : vector<1x8x32xbf16> to vector<8x32xbf16>
    %cst_126 = arith.constant dense<0.000000e+00> : vector<16x32xf32>
    %199 = tpu.matmul %196, %198, %cst_126 {dimension_numbers = #tpu.dot_dimension_numbers<[1], [0], [0], [1], [0, 0, 1, 1], [], []>} : vector<16x8xbf16>, vector<8x32xbf16>, vector<16x32xf32> -> vector<16x32xf32>
    %200 = arith.addf %153, %199 : vector<16x32xf32>
    %201 = arith.addf %1, %200 : vector<16x32xf32>
    %c0_127 = arith.constant 0 : index
    %c0_128 = arith.constant 0 : index
    %202 = vector.load %arg11[%c0_127, %c0_128] : memref<1x32xf32, #tpu.memory_space<vmem>>, vector<1x32xf32>
    %203 = vector.broadcast %202 : vector<1x32xf32> to vector<16x32xf32>
    %204 = arith.addf %201, %203 : vector<16x32xf32>
    %cst_129 = arith.constant dense<0.000000e+00> : vector<16xf32>
    %205 = vector.multi_reduction <add>, %204, %cst_129 [1] : vector<16x32xf32> to vector<16xf32>
    %206 = vector.shape_cast %205 : vector<16xf32> to vector<16x1xf32>
    %cst_130 = arith.constant 3.200000e+01 : f32
    %207 = vector.broadcast %cst_130 : f32 to vector<16x1xf32>
    %208 = arith.divf %206, %207 : vector<16x1xf32>
    %209 = vector.broadcast %208 : vector<16x1xf32> to vector<16x32xf32>
    %210 = arith.subf %204, %209 : vector<16x32xf32>
    %211 = arith.mulf %210, %210 : vector<16x32xf32>
    %cst_131 = arith.constant dense<0.000000e+00> : vector<16xf32>
    %212 = vector.multi_reduction <add>, %211, %cst_131 [1] : vector<16x32xf32> to vector<16xf32>
    %213 = vector.shape_cast %212 : vector<16xf32> to vector<16x1xf32>
    %cst_132 = arith.constant 3.200000e+01 : f32
    %214 = vector.broadcast %cst_132 : f32 to vector<16x1xf32>
    %215 = arith.divf %213, %214 : vector<16x1xf32>
    %216 = vector.broadcast %208 : vector<16x1xf32> to vector<16x32xf32>
    %217 = arith.subf %204, %216 : vector<16x32xf32>
    %cst_133 = arith.constant 9.99999997E-7 : f32
    %218 = vector.broadcast %cst_133 : f32 to vector<16x1xf32>
    %219 = arith.addf %215, %218 : vector<16x1xf32>
    %220 = math.rsqrt %219 : vector<16x1xf32>
    %221 = vector.broadcast %220 : vector<16x1xf32> to vector<16x32xf32>
    %222 = arith.mulf %217, %221 : vector<16x32xf32>
    %c0_134 = arith.constant 0 : index
    %c0_135 = arith.constant 0 : index
    %223 = vector.load %arg12[%c0_134, %c0_135] : memref<1x32xf32, #tpu.memory_space<vmem>>, vector<1x32xf32>
    %224 = vector.broadcast %223 : vector<1x32xf32> to vector<16x32xf32>
    %225 = arith.mulf %222, %224 : vector<16x32xf32>
    %c0_136 = arith.constant 0 : index
    %c0_137 = arith.constant 0 : index
    %226 = vector.load %arg13[%c0_136, %c0_137] : memref<1x32xf32, #tpu.memory_space<vmem>>, vector<1x32xf32>
    %227 = vector.broadcast %226 : vector<1x32xf32> to vector<16x32xf32>
    %228 = arith.addf %225, %227 : vector<16x32xf32>
    %c0_138 = arith.constant 0 : index
    %c0_139 = arith.constant 0 : index
    %c0_140 = arith.constant 0 : index
    %229 = vector.load %arg14[%c0_138, %c0_139, %c0_140] : memref<1x16x32xf32, #tpu.memory_space<vmem>>, vector<1x16x32xf32>
    %230 = vector.shape_cast %229 : vector<1x16x32xf32> to vector<16x32xf32>
    %231 = vector.shape_cast %228 : vector<16x32xf32> to vector<1x16x32xf32>
    tpu.vector_store %arg14[%c0_138, %c0_139, %c0_140], %231 {strides = array<i32>} : memref<1x16x32xf32, #tpu.memory_space<vmem>>, vector<1x16x32xf32>,
    return
  }
  func.func @transform_0(%arg0: i32) -> (i32, i32, i32) {
    %c0_i32 = arith.constant 0 : i32
    %c0_i32_0 = arith.constant 0 : i32
    %c0_i32_1 = arith.constant 0 : i32
    return %arg0, %c0_i32, %c0_i32_0 : i32, i32, i32
  }
  func.func @transform_1(%arg0: i32) -> (i32, i32, i32) {
    %c0_i32 = arith.constant 0 : i32
    %c0_i32_0 = arith.constant 0 : i32
    %c0_i32_1 = arith.constant 0 : i32
    return %arg0, %c0_i32, %c0_i32_0 : i32, i32, i32
  }
  func.func @transform_2(%arg0: i32) -> (i32, i32, i32) {
    %c0_i32 = arith.constant 0 : i32
    %c0_i32_0 = arith.constant 0 : i32
    %c0_i32_1 = arith.constant 0 : i32
    return %arg0, %c0_i32, %c0_i32_0 : i32, i32, i32
  }
  func.func @transform_3(%arg0: i32) -> (i32, i32, i32) {
    %c0_i32 = arith.constant 0 : i32
    %c0_i32_0 = arith.constant 0 : i32
    %c0_i32_1 = arith.constant 0 : i32
    %c0_i32_2 = arith.constant 0 : i32
    return %c0_i32, %c0_i32_0, %c0_i32_1 : i32, i32, i32
  }
  func.func @transform_4(%arg0: i32) -> (i32, i32, i32) {
    %c0_i32 = arith.constant 0 : i32
    %c0_i32_0 = arith.constant 0 : i32
    %c0_i32_1 = arith.constant 0 : i32
    %c0_i32_2 = arith.constant 0 : i32
    return %c0_i32, %c0_i32_0, %c0_i32_1 : i32, i32, i32
  }
  func.func @transform_5(%arg0: i32) -> (i32, i32, i32) {
    %c0_i32 = arith.constant 0 : i32
    %c0_i32_0 = arith.constant 0 : i32
    %c0_i32_1 = arith.constant 0 : i32
    %c0_i32_2 = arith.constant 0 : i32
    return %c0_i32, %c0_i32_0, %c0_i32_1 : i32, i32, i32
  }
  func.func @transform_6(%arg0: i32) -> (i32, i32, i32) {
    %c0_i32 = arith.constant 0 : i32
    %c0_i32_0 = arith.constant 0 : i32
    %c0_i32_1 = arith.constant 0 : i32
    %c0_i32_2 = arith.constant 0 : i32
    return %c0_i32, %c0_i32_0, %c0_i32_1 : i32, i32, i32
  }
  func.func @transform_7(%arg0: i32) -> (i32, i32, i32) {
    %c0_i32 = arith.constant 0 : i32
    %c0_i32_0 = arith.constant 0 : i32
    %c0_i32_1 = arith.constant 0 : i32
    %c0_i32_2 = arith.constant 0 : i32
    return %c0_i32, %c0_i32_0, %c0_i32_1 : i32, i32, i32
  }
  func.func @transform_8(%arg0: i32) -> (i32, i32, i32) {
    %c0_i32 = arith.constant 0 : i32
    %c0_i32_0 = arith.constant 0 : i32
    %c0_i32_1 = arith.constant 0 : i32
    %c0_i32_2 = arith.constant 0 : i32
    return %c0_i32, %c0_i32_0, %c0_i32_1 : i32, i32, i32
  }
  func.func @transform_9(%arg0: i32) -> (i32, i32, i32) {
    %c0_i32 = arith.constant 0 : i32
    %c0_i32_0 = arith.constant 0 : i32
    %c0_i32_1 = arith.constant 0 : i32
    %c0_i32_2 = arith.constant 0 : i32
    return %c0_i32, %c0_i32_0, %c0_i32_1 : i32, i32, i32
  }
  func.func @transform_10(%arg0: i32) -> (i32, i32) {
    %c0_i32 = arith.constant 0 : i32
    %c0_i32_0 = arith.constant 0 : i32
    %c0_i32_1 = arith.constant 0 : i32
    return %c0_i32, %c0_i32_0 : i32, i32
  }
  func.func @transform_11(%arg0: i32) -> (i32, i32) {
    %c0_i32 = arith.constant 0 : i32
    %c0_i32_0 = arith.constant 0 : i32
    %c0_i32_1 = arith.constant 0 : i32
    return %c0_i32, %c0_i32_0 : i32, i32
  }
  func.func @transform_12(%arg0: i32) -> (i32, i32) {
    %c0_i32 = arith.constant 0 : i32
    %c0_i32_0 = arith.constant 0 : i32
    %c0_i32_1 = arith.constant 0 : i32
    return %c0_i32, %c0_i32_0 : i32, i32
  }
  func.func @transform_13(%arg0: i32) -> (i32, i32, i32) {
    %c0_i32 = arith.constant 0 : i32
    %c0_i32_0 = arith.constant 0 : i32
    %c0_i32_1 = arith.constant 0 : i32
    return %arg0, %c0_i32, %c0_i32_0 : i32, i32, i32
  }
}

module attributes {stable_mosaic.version = 11 : i64} {
  func.func @_mha_ln_kernel(%arg0: i32, %arg1: memref<1x8x32xf32, #tpu.memory_space<vmem>>, %arg2: memref<1x8x32xf32, #tpu.memory_space<vmem>>, %arg3: memref<1x1x8xf32, #tpu.memory_space<vmem>>, %arg4: memref<4x32x8xbf16, #tpu.memory_space<vmem>>, %arg5: memref<4x32x8xbf16, #tpu.memory_space<vmem>>, %arg6: memref<4x32x8xbf16, #tpu.memory_space<vmem>>, %arg7: memref<4x1x8xf32, #tpu.memory_space<vmem>>, %arg8: memref<4x1x8xf32, #tpu.memory_space<vmem>>, %arg9: memref<4x1x8xf32, #tpu.memory_space<vmem>>, %arg10: memref<4x8x32xbf16, #tpu.memory_space<vmem>>, %arg11: memref<1x32xf32, #tpu.memory_space<vmem>>, %arg12: memref<1x32xf32, #tpu.memory_space<vmem>>, %arg13: memref<1x32xf32, #tpu.memory_space<vmem>>, %arg14: memref<1x8x32xf32, #tpu.memory_space<vmem>>) attributes {dimension_semantics = [#tpu.dimension_semantics<parallel>], iteration_bounds = array<i64: 2>, scalar_prefetch = 0 : i64, scratch_operands = 0 : i64, tpu.core_type = #tpu.core_type<tc>, window_params = [{transform_indices = @transform_0, window_bounds = array<i64: 1, 8, 32>}, {transform_indices = @transform_1, window_bounds = array<i64: 1, 8, 32>}, {transform_indices = @transform_2, window_bounds = array<i64: 1, 1, 8>}, {pipeline_mode = #tpu.pipeline_mode<synchronous>, transform_indices = @transform_3, window_bounds = array<i64: 4, 32, 8>}, {pipeline_mode = #tpu.pipeline_mode<synchronous>, transform_indices = @transform_4, window_bounds = array<i64: 4, 32, 8>}, {pipeline_mode = #tpu.pipeline_mode<synchronous>, transform_indices = @transform_5, window_bounds = array<i64: 4, 32, 8>}, {pipeline_mode = #tpu.pipeline_mode<synchronous>, transform_indices = @transform_6, window_bounds = array<i64: 4, 1, 8>}, {pipeline_mode = #tpu.pipeline_mode<synchronous>, transform_indices = @transform_7, window_bounds = array<i64: 4, 1, 8>}, {pipeline_mode = #tpu.pipeline_mode<synchronous>, transform_indices = @transform_8, window_bounds = array<i64: 4, 1, 8>}, {pipeline_mode = #tpu.pipeline_mode<synchronous>, transform_indices = @transform_9, window_bounds = array<i64: 4, 8, 32>}, {pipeline_mode = #tpu.pipeline_mode<synchronous>, transform_indices = @transform_10, window_bounds = array<i64: 1, 32>}, {pipeline_mode = #tpu.pipeline_mode<synchronous>, transform_indices = @transform_11, window_bounds = array<i64: 1, 32>}, {pipeline_mode = #tpu.pipeline_mode<synchronous>, transform_indices = @transform_12, window_bounds = array<i64: 1, 32>}, {transform_indices = @transform_13, window_bounds = array<i64: 1, 8, 32>}]} {
    %c0 = arith.constant 0 : index
    %c0_0 = arith.constant 0 : index
    %c0_1 = arith.constant 0 : index
    %0 = vector.load %arg1[%c0, %c0_0, %c0_1] : memref<1x8x32xf32, #tpu.memory_space<vmem>>, vector<1x8x32xf32>
    %1 = vector.shape_cast %0 : vector<1x8x32xf32> to vector<8x32xf32>
    %c0_2 = arith.constant 0 : index
    %c0_3 = arith.constant 0 : index
    %c0_4 = arith.constant 0 : index
    %2 = vector.load %arg2[%c0_2, %c0_3, %c0_4] : memref<1x8x32xf32, #tpu.memory_space<vmem>>, vector<1x8x32xf32>
    %3 = vector.shape_cast %2 : vector<1x8x32xf32> to vector<8x32xf32>
    %c0_5 = arith.constant 0 : index
    %c0_6 = arith.constant 0 : index
    %c0_7 = arith.constant 0 : index
    %4 = vector.load %arg3[%c0_5, %c0_6, %c0_7] : memref<1x1x8xf32, #tpu.memory_space<vmem>>, vector<1x1x8xf32>
    %5 = vector.shape_cast %4 : vector<1x1x8xf32> to vector<1x8xf32>
    %cst = arith.constant 1.000000e+00 : f32
    %6 = vector.broadcast %cst : f32 to vector<1x8xf32>
    %7 = arith.subf %6, %5 : vector<1x8xf32>
    %cst_8 = arith.constant -1.000000e+09 : f32
    %8 = vector.broadcast %cst_8 : f32 to vector<1x8xf32>
    %9 = arith.mulf %7, %8 : vector<1x8xf32>
    %10 = arith.truncf %1 : vector<8x32xf32> to vector<8x32xbf16>
    %11 = arith.truncf %3 : vector<8x32xf32> to vector<8x32xbf16>
    %cst_9 = arith.constant 0.000000e+00 : f32
    %12 = vector.broadcast %cst_9 : f32 to vector<8x32xf32>
    %c0_10 = arith.constant 0 : index
    %c0_11 = arith.constant 0 : index
    %c0_12 = arith.constant 0 : index
    %13 = vector.load %arg4[%c0_10, %c0_11, %c0_12] : memref<4x32x8xbf16, #tpu.memory_space<vmem>>, vector<1x32x8xbf16>
    %14 = vector.shape_cast %13 : vector<1x32x8xbf16> to vector<32x8xbf16>
    %cst_13 = arith.constant dense<0.000000e+00> : vector<8x8xf32>
    %15 = tpu.matmul %10, %14, %cst_13 {dimension_numbers = #tpu.dot_dimension_numbers<[1], [0], [0], [1], [0, 0, 1, 1], [], []>} : vector<8x32xbf16>, vector<32x8xbf16>, vector<8x8xf32> -> vector<8x8xf32>
    %c0_14 = arith.constant 0 : index
    %c0_15 = arith.constant 0 : index
    %c0_16 = arith.constant 0 : index
    %16 = vector.load %arg7[%c0_14, %c0_15, %c0_16] : memref<4x1x8xf32, #tpu.memory_space<vmem>>, vector<1x1x8xf32>
    %17 = vector.shape_cast %16 : vector<1x1x8xf32> to vector<1x8xf32>
    %18 = vector.broadcast %17 : vector<1x8xf32> to vector<8x8xf32>
    %19 = arith.addf %15, %18 : vector<8x8xf32>
    %c0_17 = arith.constant 0 : index
    %c0_18 = arith.constant 0 : index
    %c0_19 = arith.constant 0 : index
    %20 = vector.load %arg5[%c0_17, %c0_18, %c0_19] : memref<4x32x8xbf16, #tpu.memory_space<vmem>>, vector<1x32x8xbf16>
    %21 = vector.shape_cast %20 : vector<1x32x8xbf16> to vector<32x8xbf16>
    %cst_20 = arith.constant dense<0.000000e+00> : vector<8x8xf32>
    %22 = tpu.matmul %11, %21, %cst_20 {dimension_numbers = #tpu.dot_dimension_numbers<[1], [0], [0], [1], [0, 0, 1, 1], [], []>} : vector<8x32xbf16>, vector<32x8xbf16>, vector<8x8xf32> -> vector<8x8xf32>
    %c0_21 = arith.constant 0 : index
    %c0_22 = arith.constant 0 : index
    %c0_23 = arith.constant 0 : index
    %23 = vector.load %arg8[%c0_21, %c0_22, %c0_23] : memref<4x1x8xf32, #tpu.memory_space<vmem>>, vector<1x1x8xf32>
    %24 = vector.shape_cast %23 : vector<1x1x8xf32> to vector<1x8xf32>
    %25 = vector.broadcast %24 : vector<1x8xf32> to vector<8x8xf32>
    %26 = arith.addf %22, %25 : vector<8x8xf32>
    %c0_24 = arith.constant 0 : index
    %c0_25 = arith.constant 0 : index
    %c0_26 = arith.constant 0 : index
    %27 = vector.load %arg6[%c0_24, %c0_25, %c0_26] : memref<4x32x8xbf16, #tpu.memory_space<vmem>>, vector<1x32x8xbf16>
    %28 = vector.shape_cast %27 : vector<1x32x8xbf16> to vector<32x8xbf16>
    %cst_27 = arith.constant dense<0.000000e+00> : vector<8x8xf32>
    %29 = tpu.matmul %11, %28, %cst_27 {dimension_numbers = #tpu.dot_dimension_numbers<[1], [0], [0], [1], [0, 0, 1, 1], [], []>} : vector<8x32xbf16>, vector<32x8xbf16>, vector<8x8xf32> -> vector<8x8xf32>
    %c0_28 = arith.constant 0 : index
    %c0_29 = arith.constant 0 : index
    %c0_30 = arith.constant 0 : index
    %30 = vector.load %arg9[%c0_28, %c0_29, %c0_30] : memref<4x1x8xf32, #tpu.memory_space<vmem>>, vector<1x1x8xf32>
    %31 = vector.shape_cast %30 : vector<1x1x8xf32> to vector<1x8xf32>
    %32 = vector.broadcast %31 : vector<1x8xf32> to vector<8x8xf32>
    %33 = arith.addf %29, %32 : vector<8x8xf32>
    %34 = arith.truncf %19 : vector<8x8xf32> to vector<8x8xbf16>
    %35 = arith.truncf %26 : vector<8x8xf32> to vector<8x8xbf16>
    %36 = tpu.transpose %35, [1, 0] : vector<8x8xbf16> -> vector<8x8xbf16>
    %cst_31 = arith.constant dense<0.000000e+00> : vector<8x8xf32>
    %37 = tpu.matmul %34, %36, %cst_31 {dimension_numbers = #tpu.dot_dimension_numbers<[1], [0], [0], [1], [0, 0, 1, 1], [], []>} : vector<8x8xbf16>, vector<8x8xbf16>, vector<8x8xf32> -> vector<8x8xf32>
    %cst_32 = arith.constant 0.353553385 : f32
    %38 = vector.broadcast %cst_32 : f32 to vector<8x8xf32>
    %39 = arith.mulf %37, %38 : vector<8x8xf32>
    %40 = vector.broadcast %9 : vector<1x8xf32> to vector<8x8xf32>
    %41 = arith.addf %39, %40 : vector<8x8xf32>
    %cst_33 = arith.constant dense<0xFF800000> : vector<8xf32>
    %42 = vector.multi_reduction <maximumf>, %41, %cst_33 [1] : vector<8x8xf32> to vector<8xf32>
    %43 = vector.shape_cast %42 : vector<8xf32> to vector<8x1xf32>
    %44 = vector.broadcast %43 : vector<8x1xf32> to vector<8x8xf32>
    %45 = arith.subf %41, %44 : vector<8x8xf32>
    %46 = math.exp %45 : vector<8x8xf32>
    %cst_34 = arith.constant dense<0.000000e+00> : vector<8xf32>
    %47 = vector.multi_reduction <add>, %46, %cst_34 [1] : vector<8x8xf32> to vector<8xf32>
    %48 = vector.shape_cast %47 : vector<8xf32> to vector<8x1xf32>
    %49 = tpu.reciprocal %48 {approx = true} : vector<8x1xf32> -> vector<8x1xf32>
    %50 = vector.broadcast %49 : vector<8x1xf32> to vector<8x8xf32>
    %51 = arith.mulf %46, %50 : vector<8x8xf32>
    %52 = arith.truncf %51 : vector<8x8xf32> to vector<8x8xbf16>
    %53 = arith.truncf %33 : vector<8x8xf32> to vector<8x8xbf16>
    %cst_35 = arith.constant dense<0.000000e+00> : vector<8x8xf32>
    %54 = tpu.matmul %52, %53, %cst_35 {dimension_numbers = #tpu.dot_dimension_numbers<[1], [0], [0], [1], [0, 0, 1, 1], [], []>} : vector<8x8xbf16>, vector<8x8xbf16>, vector<8x8xf32> -> vector<8x8xf32>
    %55 = arith.truncf %54 : vector<8x8xf32> to vector<8x8xbf16>
    %c0_36 = arith.constant 0 : index
    %c0_37 = arith.constant 0 : index
    %c0_38 = arith.constant 0 : index
    %56 = vector.load %arg10[%c0_36, %c0_37, %c0_38] : memref<4x8x32xbf16, #tpu.memory_space<vmem>>, vector<1x8x32xbf16>
    %57 = vector.shape_cast %56 : vector<1x8x32xbf16> to vector<8x32xbf16>
    %cst_39 = arith.constant dense<0.000000e+00> : vector<8x32xf32>
    %58 = tpu.matmul %55, %57, %cst_39 {dimension_numbers = #tpu.dot_dimension_numbers<[1], [0], [0], [1], [0, 0, 1, 1], [], []>} : vector<8x8xbf16>, vector<8x32xbf16>, vector<8x32xf32> -> vector<8x32xf32>
    %59 = arith.addf %12, %58 : vector<8x32xf32>
    %c1 = arith.constant 1 : index
    %c0_40 = arith.constant 0 : index
    %c0_41 = arith.constant 0 : index
    %60 = vector.load %arg4[%c1, %c0_40, %c0_41] : memref<4x32x8xbf16, #tpu.memory_space<vmem>>, vector<1x32x8xbf16>
    %61 = vector.shape_cast %60 : vector<1x32x8xbf16> to vector<32x8xbf16>
    %cst_42 = arith.constant dense<0.000000e+00> : vector<8x8xf32>
    %62 = tpu.matmul %10, %61, %cst_42 {dimension_numbers = #tpu.dot_dimension_numbers<[1], [0], [0], [1], [0, 0, 1, 1], [], []>} : vector<8x32xbf16>, vector<32x8xbf16>, vector<8x8xf32> -> vector<8x8xf32>
    %c1_43 = arith.constant 1 : index
    %c0_44 = arith.constant 0 : index
    %c0_45 = arith.constant 0 : index
    %63 = vector.load %arg7[%c1_43, %c0_44, %c0_45] : memref<4x1x8xf32, #tpu.memory_space<vmem>>, vector<1x1x8xf32>
    %64 = vector.shape_cast %63 : vector<1x1x8xf32> to vector<1x8xf32>
    %65 = vector.broadcast %64 : vector<1x8xf32> to vector<8x8xf32>
    %66 = arith.addf %62, %65 : vector<8x8xf32>
    %c1_46 = arith.constant 1 : index
    %c0_47 = arith.constant 0 : index
    %c0_48 = arith.constant 0 : index
    %67 = vector.load %arg5[%c1_46, %c0_47, %c0_48] : memref<4x32x8xbf16, #tpu.memory_space<vmem>>, vector<1x32x8xbf16>
    %68 = vector.shape_cast %67 : vector<1x32x8xbf16> to vector<32x8xbf16>
    %cst_49 = arith.constant dense<0.000000e+00> : vector<8x8xf32>
    %69 = tpu.matmul %11, %68, %cst_49 {dimension_numbers = #tpu.dot_dimension_numbers<[1], [0], [0], [1], [0, 0, 1, 1], [], []>} : vector<8x32xbf16>, vector<32x8xbf16>, vector<8x8xf32> -> vector<8x8xf32>
    %c1_50 = arith.constant 1 : index
    %c0_51 = arith.constant 0 : index
    %c0_52 = arith.constant 0 : index
    %70 = vector.load %arg8[%c1_50, %c0_51, %c0_52] : memref<4x1x8xf32, #tpu.memory_space<vmem>>, vector<1x1x8xf32>
    %71 = vector.shape_cast %70 : vector<1x1x8xf32> to vector<1x8xf32>
    %72 = vector.broadcast %71 : vector<1x8xf32> to vector<8x8xf32>
    %73 = arith.addf %69, %72 : vector<8x8xf32>
    %c1_53 = arith.constant 1 : index
    %c0_54 = arith.constant 0 : index
    %c0_55 = arith.constant 0 : index
    %74 = vector.load %arg6[%c1_53, %c0_54, %c0_55] : memref<4x32x8xbf16, #tpu.memory_space<vmem>>, vector<1x32x8xbf16>
    %75 = vector.shape_cast %74 : vector<1x32x8xbf16> to vector<32x8xbf16>
    %cst_56 = arith.constant dense<0.000000e+00> : vector<8x8xf32>
    %76 = tpu.matmul %11, %75, %cst_56 {dimension_numbers = #tpu.dot_dimension_numbers<[1], [0], [0], [1], [0, 0, 1, 1], [], []>} : vector<8x32xbf16>, vector<32x8xbf16>, vector<8x8xf32> -> vector<8x8xf32>
    %c1_57 = arith.constant 1 : index
    %c0_58 = arith.constant 0 : index
    %c0_59 = arith.constant 0 : index
    %77 = vector.load %arg9[%c1_57, %c0_58, %c0_59] : memref<4x1x8xf32, #tpu.memory_space<vmem>>, vector<1x1x8xf32>
    %78 = vector.shape_cast %77 : vector<1x1x8xf32> to vector<1x8xf32>
    %79 = vector.broadcast %78 : vector<1x8xf32> to vector<8x8xf32>
    %80 = arith.addf %76, %79 : vector<8x8xf32>
    %81 = arith.truncf %66 : vector<8x8xf32> to vector<8x8xbf16>
    %82 = arith.truncf %73 : vector<8x8xf32> to vector<8x8xbf16>
    %83 = tpu.transpose %82, [1, 0] : vector<8x8xbf16> -> vector<8x8xbf16>
    %cst_60 = arith.constant dense<0.000000e+00> : vector<8x8xf32>
    %84 = tpu.matmul %81, %83, %cst_60 {dimension_numbers = #tpu.dot_dimension_numbers<[1], [0], [0], [1], [0, 0, 1, 1], [], []>} : vector<8x8xbf16>, vector<8x8xbf16>, vector<8x8xf32> -> vector<8x8xf32>
    %cst_61 = arith.constant 0.353553385 : f32
    %85 = vector.broadcast %cst_61 : f32 to vector<8x8xf32>
    %86 = arith.mulf %84, %85 : vector<8x8xf32>
    %87 = vector.broadcast %9 : vector<1x8xf32> to vector<8x8xf32>
    %88 = arith.addf %86, %87 : vector<8x8xf32>
    %cst_62 = arith.constant dense<0xFF800000> : vector<8xf32>
    %89 = vector.multi_reduction <maximumf>, %88, %cst_62 [1] : vector<8x8xf32> to vector<8xf32>
    %90 = vector.shape_cast %89 : vector<8xf32> to vector<8x1xf32>
    %91 = vector.broadcast %90 : vector<8x1xf32> to vector<8x8xf32>
    %92 = arith.subf %88, %91 : vector<8x8xf32>
    %93 = math.exp %92 : vector<8x8xf32>
    %cst_63 = arith.constant dense<0.000000e+00> : vector<8xf32>
    %94 = vector.multi_reduction <add>, %93, %cst_63 [1] : vector<8x8xf32> to vector<8xf32>
    %95 = vector.shape_cast %94 : vector<8xf32> to vector<8x1xf32>
    %96 = tpu.reciprocal %95 {approx = true} : vector<8x1xf32> -> vector<8x1xf32>
    %97 = vector.broadcast %96 : vector<8x1xf32> to vector<8x8xf32>
    %98 = arith.mulf %93, %97 : vector<8x8xf32>
    %99 = arith.truncf %98 : vector<8x8xf32> to vector<8x8xbf16>
    %100 = arith.truncf %80 : vector<8x8xf32> to vector<8x8xbf16>
    %cst_64 = arith.constant dense<0.000000e+00> : vector<8x8xf32>
    %101 = tpu.matmul %99, %100, %cst_64 {dimension_numbers = #tpu.dot_dimension_numbers<[1], [0], [0], [1], [0, 0, 1, 1], [], []>} : vector<8x8xbf16>, vector<8x8xbf16>, vector<8x8xf32> -> vector<8x8xf32>
    %102 = arith.truncf %101 : vector<8x8xf32> to vector<8x8xbf16>
    %c1_65 = arith.constant 1 : index
    %c0_66 = arith.constant 0 : index
    %c0_67 = arith.constant 0 : index
    %103 = vector.load %arg10[%c1_65, %c0_66, %c0_67] : memref<4x8x32xbf16, #tpu.memory_space<vmem>>, vector<1x8x32xbf16>
    %104 = vector.shape_cast %103 : vector<1x8x32xbf16> to vector<8x32xbf16>
    %cst_68 = arith.constant dense<0.000000e+00> : vector<8x32xf32>
    %105 = tpu.matmul %102, %104, %cst_68 {dimension_numbers = #tpu.dot_dimension_numbers<[1], [0], [0], [1], [0, 0, 1, 1], [], []>} : vector<8x8xbf16>, vector<8x32xbf16>, vector<8x32xf32> -> vector<8x32xf32>
    %106 = arith.addf %59, %105 : vector<8x32xf32>
    %c2 = arith.constant 2 : index
    %c0_69 = arith.constant 0 : index
    %c0_70 = arith.constant 0 : index
    %107 = vector.load %arg4[%c2, %c0_69, %c0_70] : memref<4x32x8xbf16, #tpu.memory_space<vmem>>, vector<1x32x8xbf16>
    %108 = vector.shape_cast %107 : vector<1x32x8xbf16> to vector<32x8xbf16>
    %cst_71 = arith.constant dense<0.000000e+00> : vector<8x8xf32>
    %109 = tpu.matmul %10, %108, %cst_71 {dimension_numbers = #tpu.dot_dimension_numbers<[1], [0], [0], [1], [0, 0, 1, 1], [], []>} : vector<8x32xbf16>, vector<32x8xbf16>, vector<8x8xf32> -> vector<8x8xf32>
    %c2_72 = arith.constant 2 : index
    %c0_73 = arith.constant 0 : index
    %c0_74 = arith.constant 0 : index
    %110 = vector.load %arg7[%c2_72, %c0_73, %c0_74] : memref<4x1x8xf32, #tpu.memory_space<vmem>>, vector<1x1x8xf32>
    %111 = vector.shape_cast %110 : vector<1x1x8xf32> to vector<1x8xf32>
    %112 = vector.broadcast %111 : vector<1x8xf32> to vector<8x8xf32>
    %113 = arith.addf %109, %112 : vector<8x8xf32>
    %c2_75 = arith.constant 2 : index
    %c0_76 = arith.constant 0 : index
    %c0_77 = arith.constant 0 : index
    %114 = vector.load %arg5[%c2_75, %c0_76, %c0_77] : memref<4x32x8xbf16, #tpu.memory_space<vmem>>, vector<1x32x8xbf16>
    %115 = vector.shape_cast %114 : vector<1x32x8xbf16> to vector<32x8xbf16>
    %cst_78 = arith.constant dense<0.000000e+00> : vector<8x8xf32>
    %116 = tpu.matmul %11, %115, %cst_78 {dimension_numbers = #tpu.dot_dimension_numbers<[1], [0], [0], [1], [0, 0, 1, 1], [], []>} : vector<8x32xbf16>, vector<32x8xbf16>, vector<8x8xf32> -> vector<8x8xf32>
    %c2_79 = arith.constant 2 : index
    %c0_80 = arith.constant 0 : index
    %c0_81 = arith.constant 0 : index
    %117 = vector.load %arg8[%c2_79, %c0_80, %c0_81] : memref<4x1x8xf32, #tpu.memory_space<vmem>>, vector<1x1x8xf32>
    %118 = vector.shape_cast %117 : vector<1x1x8xf32> to vector<1x8xf32>
    %119 = vector.broadcast %118 : vector<1x8xf32> to vector<8x8xf32>
    %120 = arith.addf %116, %119 : vector<8x8xf32>
    %c2_82 = arith.constant 2 : index
    %c0_83 = arith.constant 0 : index
    %c0_84 = arith.constant 0 : index
    %121 = vector.load %arg6[%c2_82, %c0_83, %c0_84] : memref<4x32x8xbf16, #tpu.memory_space<vmem>>, vector<1x32x8xbf16>
    %122 = vector.shape_cast %121 : vector<1x32x8xbf16> to vector<32x8xbf16>
    %cst_85 = arith.constant dense<0.000000e+00> : vector<8x8xf32>
    %123 = tpu.matmul %11, %122, %cst_85 {dimension_numbers = #tpu.dot_dimension_numbers<[1], [0], [0], [1], [0, 0, 1, 1], [], []>} : vector<8x32xbf16>, vector<32x8xbf16>, vector<8x8xf32> -> vector<8x8xf32>
    %c2_86 = arith.constant 2 : index
    %c0_87 = arith.constant 0 : index
    %c0_88 = arith.constant 0 : index
    %124 = vector.load %arg9[%c2_86, %c0_87, %c0_88] : memref<4x1x8xf32, #tpu.memory_space<vmem>>, vector<1x1x8xf32>
    %125 = vector.shape_cast %124 : vector<1x1x8xf32> to vector<1x8xf32>
    %126 = vector.broadcast %125 : vector<1x8xf32> to vector<8x8xf32>
    %127 = arith.addf %123, %126 : vector<8x8xf32>
    %128 = arith.truncf %113 : vector<8x8xf32> to vector<8x8xbf16>
    %129 = arith.truncf %120 : vector<8x8xf32> to vector<8x8xbf16>
    %130 = tpu.transpose %129, [1, 0] : vector<8x8xbf16> -> vector<8x8xbf16>
    %cst_89 = arith.constant dense<0.000000e+00> : vector<8x8xf32>
    %131 = tpu.matmul %128, %130, %cst_89 {dimension_numbers = #tpu.dot_dimension_numbers<[1], [0], [0], [1], [0, 0, 1, 1], [], []>} : vector<8x8xbf16>, vector<8x8xbf16>, vector<8x8xf32> -> vector<8x8xf32>
    %cst_90 = arith.constant 0.353553385 : f32
    %132 = vector.broadcast %cst_90 : f32 to vector<8x8xf32>
    %133 = arith.mulf %131, %132 : vector<8x8xf32>
    %134 = vector.broadcast %9 : vector<1x8xf32> to vector<8x8xf32>
    %135 = arith.addf %133, %134 : vector<8x8xf32>
    %cst_91 = arith.constant dense<0xFF800000> : vector<8xf32>
    %136 = vector.multi_reduction <maximumf>, %135, %cst_91 [1] : vector<8x8xf32> to vector<8xf32>
    %137 = vector.shape_cast %136 : vector<8xf32> to vector<8x1xf32>
    %138 = vector.broadcast %137 : vector<8x1xf32> to vector<8x8xf32>
    %139 = arith.subf %135, %138 : vector<8x8xf32>
    %140 = math.exp %139 : vector<8x8xf32>
    %cst_92 = arith.constant dense<0.000000e+00> : vector<8xf32>
    %141 = vector.multi_reduction <add>, %140, %cst_92 [1] : vector<8x8xf32> to vector<8xf32>
    %142 = vector.shape_cast %141 : vector<8xf32> to vector<8x1xf32>
    %143 = tpu.reciprocal %142 {approx = true} : vector<8x1xf32> -> vector<8x1xf32>
    %144 = vector.broadcast %143 : vector<8x1xf32> to vector<8x8xf32>
    %145 = arith.mulf %140, %144 : vector<8x8xf32>
    %146 = arith.truncf %145 : vector<8x8xf32> to vector<8x8xbf16>
    %147 = arith.truncf %127 : vector<8x8xf32> to vector<8x8xbf16>
    %cst_93 = arith.constant dense<0.000000e+00> : vector<8x8xf32>
    %148 = tpu.matmul %146, %147, %cst_93 {dimension_numbers = #tpu.dot_dimension_numbers<[1], [0], [0], [1], [0, 0, 1, 1], [], []>} : vector<8x8xbf16>, vector<8x8xbf16>, vector<8x8xf32> -> vector<8x8xf32>
    %149 = arith.truncf %148 : vector<8x8xf32> to vector<8x8xbf16>
    %c2_94 = arith.constant 2 : index
    %c0_95 = arith.constant 0 : index
    %c0_96 = arith.constant 0 : index
    %150 = vector.load %arg10[%c2_94, %c0_95, %c0_96] : memref<4x8x32xbf16, #tpu.memory_space<vmem>>, vector<1x8x32xbf16>
    %151 = vector.shape_cast %150 : vector<1x8x32xbf16> to vector<8x32xbf16>
    %cst_97 = arith.constant dense<0.000000e+00> : vector<8x32xf32>
    %152 = tpu.matmul %149, %151, %cst_97 {dimension_numbers = #tpu.dot_dimension_numbers<[1], [0], [0], [1], [0, 0, 1, 1], [], []>} : vector<8x8xbf16>, vector<8x32xbf16>, vector<8x32xf32> -> vector<8x32xf32>
    %153 = arith.addf %106, %152 : vector<8x32xf32>
    %c3 = arith.constant 3 : index
    %c0_98 = arith.constant 0 : index
    %c0_99 = arith.constant 0 : index
    %154 = vector.load %arg4[%c3, %c0_98, %c0_99] : memref<4x32x8xbf16, #tpu.memory_space<vmem>>, vector<1x32x8xbf16>
    %155 = vector.shape_cast %154 : vector<1x32x8xbf16> to vector<32x8xbf16>
    %cst_100 = arith.constant dense<0.000000e+00> : vector<8x8xf32>
    %156 = tpu.matmul %10, %155, %cst_100 {dimension_numbers = #tpu.dot_dimension_numbers<[1], [0], [0], [1], [0, 0, 1, 1], [], []>} : vector<8x32xbf16>, vector<32x8xbf16>, vector<8x8xf32> -> vector<8x8xf32>
    %c3_101 = arith.constant 3 : index
    %c0_102 = arith.constant 0 : index
    %c0_103 = arith.constant 0 : index
    %157 = vector.load %arg7[%c3_101, %c0_102, %c0_103] : memref<4x1x8xf32, #tpu.memory_space<vmem>>, vector<1x1x8xf32>
    %158 = vector.shape_cast %157 : vector<1x1x8xf32> to vector<1x8xf32>
    %159 = vector.broadcast %158 : vector<1x8xf32> to vector<8x8xf32>
    %160 = arith.addf %156, %159 : vector<8x8xf32>
    %c3_104 = arith.constant 3 : index
    %c0_105 = arith.constant 0 : index
    %c0_106 = arith.constant 0 : index
    %161 = vector.load %arg5[%c3_104, %c0_105, %c0_106] : memref<4x32x8xbf16, #tpu.memory_space<vmem>>, vector<1x32x8xbf16>
    %162 = vector.shape_cast %161 : vector<1x32x8xbf16> to vector<32x8xbf16>
    %cst_107 = arith.constant dense<0.000000e+00> : vector<8x8xf32>
    %163 = tpu.matmul %11, %162, %cst_107 {dimension_numbers = #tpu.dot_dimension_numbers<[1], [0], [0], [1], [0, 0, 1, 1], [], []>} : vector<8x32xbf16>, vector<32x8xbf16>, vector<8x8xf32> -> vector<8x8xf32>
    %c3_108 = arith.constant 3 : index
    %c0_109 = arith.constant 0 : index
    %c0_110 = arith.constant 0 : index
    %164 = vector.load %arg8[%c3_108, %c0_109, %c0_110] : memref<4x1x8xf32, #tpu.memory_space<vmem>>, vector<1x1x8xf32>
    %165 = vector.shape_cast %164 : vector<1x1x8xf32> to vector<1x8xf32>
    %166 = vector.broadcast %165 : vector<1x8xf32> to vector<8x8xf32>
    %167 = arith.addf %163, %166 : vector<8x8xf32>
    %c3_111 = arith.constant 3 : index
    %c0_112 = arith.constant 0 : index
    %c0_113 = arith.constant 0 : index
    %168 = vector.load %arg6[%c3_111, %c0_112, %c0_113] : memref<4x32x8xbf16, #tpu.memory_space<vmem>>, vector<1x32x8xbf16>
    %169 = vector.shape_cast %168 : vector<1x32x8xbf16> to vector<32x8xbf16>
    %cst_114 = arith.constant dense<0.000000e+00> : vector<8x8xf32>
    %170 = tpu.matmul %11, %169, %cst_114 {dimension_numbers = #tpu.dot_dimension_numbers<[1], [0], [0], [1], [0, 0, 1, 1], [], []>} : vector<8x32xbf16>, vector<32x8xbf16>, vector<8x8xf32> -> vector<8x8xf32>
    %c3_115 = arith.constant 3 : index
    %c0_116 = arith.constant 0 : index
    %c0_117 = arith.constant 0 : index
    %171 = vector.load %arg9[%c3_115, %c0_116, %c0_117] : memref<4x1x8xf32, #tpu.memory_space<vmem>>, vector<1x1x8xf32>
    %172 = vector.shape_cast %171 : vector<1x1x8xf32> to vector<1x8xf32>
    %173 = vector.broadcast %172 : vector<1x8xf32> to vector<8x8xf32>
    %174 = arith.addf %170, %173 : vector<8x8xf32>
    %175 = arith.truncf %160 : vector<8x8xf32> to vector<8x8xbf16>
    %176 = arith.truncf %167 : vector<8x8xf32> to vector<8x8xbf16>
    %177 = tpu.transpose %176, [1, 0] : vector<8x8xbf16> -> vector<8x8xbf16>
    %cst_118 = arith.constant dense<0.000000e+00> : vector<8x8xf32>
    %178 = tpu.matmul %175, %177, %cst_118 {dimension_numbers = #tpu.dot_dimension_numbers<[1], [0], [0], [1], [0, 0, 1, 1], [], []>} : vector<8x8xbf16>, vector<8x8xbf16>, vector<8x8xf32> -> vector<8x8xf32>
    %cst_119 = arith.constant 0.353553385 : f32
    %179 = vector.broadcast %cst_119 : f32 to vector<8x8xf32>
    %180 = arith.mulf %178, %179 : vector<8x8xf32>
    %181 = vector.broadcast %9 : vector<1x8xf32> to vector<8x8xf32>
    %182 = arith.addf %180, %181 : vector<8x8xf32>
    %cst_120 = arith.constant dense<0xFF800000> : vector<8xf32>
    %183 = vector.multi_reduction <maximumf>, %182, %cst_120 [1] : vector<8x8xf32> to vector<8xf32>
    %184 = vector.shape_cast %183 : vector<8xf32> to vector<8x1xf32>
    %185 = vector.broadcast %184 : vector<8x1xf32> to vector<8x8xf32>
    %186 = arith.subf %182, %185 : vector<8x8xf32>
    %187 = math.exp %186 : vector<8x8xf32>
    %cst_121 = arith.constant dense<0.000000e+00> : vector<8xf32>
    %188 = vector.multi_reduction <add>, %187, %cst_121 [1] : vector<8x8xf32> to vector<8xf32>
    %189 = vector.shape_cast %188 : vector<8xf32> to vector<8x1xf32>
    %190 = tpu.reciprocal %189 {approx = true} : vector<8x1xf32> -> vector<8x1xf32>
    %191 = vector.broadcast %190 : vector<8x1xf32> to vector<8x8xf32>
    %192 = arith.mulf %187, %191 : vector<8x8xf32>
    %193 = arith.truncf %192 : vector<8x8xf32> to vector<8x8xbf16>
    %194 = arith.truncf %174 : vector<8x8xf32> to vector<8x8xbf16>
    %cst_122 = arith.constant dense<0.000000e+00> : vector<8x8xf32>
    %195 = tpu.matmul %193, %194, %cst_122 {dimension_numbers = #tpu.dot_dimension_numbers<[1], [0], [0], [1], [0, 0, 1, 1], [], []>} : vector<8x8xbf16>, vector<8x8xbf16>, vector<8x8xf32> -> vector<8x8xf32>
    %196 = arith.truncf %195 : vector<8x8xf32> to vector<8x8xbf16>
    %c3_123 = arith.constant 3 : index
    %c0_124 = arith.constant 0 : index
    %c0_125 = arith.constant 0 : index
    %197 = vector.load %arg10[%c3_123, %c0_124, %c0_125] : memref<4x8x32xbf16, #tpu.memory_space<vmem>>, vector<1x8x32xbf16>
    %198 = vector.shape_cast %197 : vector<1x8x32xbf16> to vector<8x32xbf16>
    %cst_126 = arith.constant dense<0.000000e+00> : vector<8x32xf32>
    %199 = tpu.matmul %196, %198, %cst_126 {dimension_numbers = #tpu.dot_dimension_numbers<[1], [0], [0], [1], [0, 0, 1, 1], [], []>} : vector<8x8xbf16>, vector<8x32xbf16>, vector<8x32xf32> -> vector<8x32xf32>
    %200 = arith.addf %153, %199 : vector<8x32xf32>
    %201 = arith.addf %1, %200 : vector<8x32xf32>
    %c0_127 = arith.constant 0 : index
    %c0_128 = arith.constant 0 : index
    %202 = vector.load %arg11[%c0_127, %c0_128] : memref<1x32xf32, #tpu.memory_space<vmem>>, vector<1x32xf32>
    %203 = vector.broadcast %202 : vector<1x32xf32> to vector<8x32xf32>
    %204 = arith.addf %201, %203 : vector<8x32xf32>
    %cst_129 = arith.constant dense<0.000000e+00> : vector<8xf32>
    %205 = vector.multi_reduction <add>, %204, %cst_129 [1] : vector<8x32xf32> to vector<8xf32>
    %206 = vector.shape_cast %205 : vector<8xf32> to vector<8x1xf32>
    %cst_130 = arith.constant 3.200000e+01 : f32
    %207 = vector.broadcast %cst_130 : f32 to vector<8x1xf32>
    %208 = arith.divf %206, %207 : vector<8x1xf32>
    %209 = vector.broadcast %208 : vector<8x1xf32> to vector<8x32xf32>
    %210 = arith.subf %204, %209 : vector<8x32xf32>
    %211 = arith.mulf %210, %210 : vector<8x32xf32>
    %cst_131 = arith.constant dense<0.000000e+00> : vector<8xf32>
    %212 = vector.multi_reduction <add>, %211, %cst_131 [1] : vector<8x32xf32> to vector<8xf32>
    %213 = vector.shape_cast %212 : vector<8xf32> to vector<8x1xf32>
    %cst_132 = arith.constant 3.200000e+01 : f32
    %214 = vector.broadcast %cst_132 : f32 to vector<8x1xf32>
    %215 = arith.divf %213, %214 : vector<8x1xf32>
    %216 = vector.broadcast %208 : vector<8x1xf32> to vector<8x32xf32>
    %217 = arith.subf %204, %216 : vector<8x32xf32>
    %cst_133 = arith.constant 9.99999997E-7 : f32
    %218 = vector.broadcast %cst_133 : f32 to vector<8x1xf32>
    %219 = arith.addf %215, %218 : vector<8x1xf32>
    %220 = math.rsqrt %219 : vector<8x1xf32>
    %221 = vector.broadcast %220 : vector<8x1xf32> to vector<8x32xf32>
    %222 = arith.mulf %217, %221 : vector<8x32xf32>
    %c0_134 = arith.constant 0 : index
    %c0_135 = arith.constant 0 : index
    %223 = vector.load %arg12[%c0_134, %c0_135] : memref<1x32xf32, #tpu.memory_space<vmem>>, vector<1x32xf32>
    %224 = vector.broadcast %223 : vector<1x32xf32> to vector<8x32xf32>
    %225 = arith.mulf %222, %224 : vector<8x32xf32>
    %c0_136 = arith.constant 0 : index
    %c0_137 = arith.constant 0 : index
    %226 = vector.load %arg13[%c0_136, %c0_137] : memref<1x32xf32, #tpu.memory_space<vmem>>, vector<1x32xf32>
    %227 = vector.broadcast %226 : vector<1x32xf32> to vector<8x32xf32>
    %228 = arith.addf %225, %227 : vector<8x32xf32>
    %c0_138 = arith.constant 0 : index
    %c0_139 = arith.constant 0 : index
    %c0_140 = arith.constant 0 : index
    %229 = vector.load %arg14[%c0_138, %c0_139, %c0_140] : memref<1x8x32xf32, #tpu.memory_space<vmem>>, vector<1x8x32xf32>
    %230 = vector.shape_cast %229 : vector<1x8x32xf32> to vector<8x32xf32>
    %231 = vector.shape_cast %228 : vector<8x32xf32> to vector<1x8x32xf32>
    tpu.vector_store %arg14[%c0_138, %c0_139, %c0_140], %231 {strides = array<i32>} : memref<1x8x32xf32, #tpu.memory_space<vmem>>, vector<1x8x32xf32>,
    return
  }
  func.func @transform_0(%arg0: i32) -> (i32, i32, i32) {
    %c0_i32 = arith.constant 0 : i32
    %c0_i32_0 = arith.constant 0 : i32
    %c0_i32_1 = arith.constant 0 : i32
    return %arg0, %c0_i32, %c0_i32_0 : i32, i32, i32
  }
  func.func @transform_1(%arg0: i32) -> (i32, i32, i32) {
    %c0_i32 = arith.constant 0 : i32
    %c0_i32_0 = arith.constant 0 : i32
    %c0_i32_1 = arith.constant 0 : i32
    return %arg0, %c0_i32, %c0_i32_0 : i32, i32, i32
  }
  func.func @transform_2(%arg0: i32) -> (i32, i32, i32) {
    %c0_i32 = arith.constant 0 : i32
    %c0_i32_0 = arith.constant 0 : i32
    %c0_i32_1 = arith.constant 0 : i32
    return %arg0, %c0_i32, %c0_i32_0 : i32, i32, i32
  }
  func.func @transform_3(%arg0: i32) -> (i32, i32, i32) {
    %c0_i32 = arith.constant 0 : i32
    %c0_i32_0 = arith.constant 0 : i32
    %c0_i32_1 = arith.constant 0 : i32
    %c0_i32_2 = arith.constant 0 : i32
    return %c0_i32, %c0_i32_0, %c0_i32_1 : i32, i32, i32
  }
  func.func @transform_4(%arg0: i32) -> (i32, i32, i32) {
    %c0_i32 = arith.constant 0 : i32
    %c0_i32_0 = arith.constant 0 : i32
    %c0_i32_1 = arith.constant 0 : i32
    %c0_i32_2 = arith.constant 0 : i32
    return %c0_i32, %c0_i32_0, %c0_i32_1 : i32, i32, i32
  }
  func.func @transform_5(%arg0: i32) -> (i32, i32, i32) {
    %c0_i32 = arith.constant 0 : i32
    %c0_i32_0 = arith.constant 0 : i32
    %c0_i32_1 = arith.constant 0 : i32
    %c0_i32_2 = arith.constant 0 : i32
    return %c0_i32, %c0_i32_0, %c0_i32_1 : i32, i32, i32
  }
  func.func @transform_6(%arg0: i32) -> (i32, i32, i32) {
    %c0_i32 = arith.constant 0 : i32
    %c0_i32_0 = arith.constant 0 : i32
    %c0_i32_1 = arith.constant 0 : i32
    %c0_i32_2 = arith.constant 0 : i32
    return %c0_i32, %c0_i32_0, %c0_i32_1 : i32, i32, i32
  }
  func.func @transform_7(%arg0: i32) -> (i32, i32, i32) {
    %c0_i32 = arith.constant 0 : i32
    %c0_i32_0 = arith.constant 0 : i32
    %c0_i32_1 = arith.constant 0 : i32
    %c0_i32_2 = arith.constant 0 : i32
    return %c0_i32, %c0_i32_0, %c0_i32_1 : i32, i32, i32
  }
  func.func @transform_8(%arg0: i32) -> (i32, i32, i32) {
    %c0_i32 = arith.constant 0 : i32
    %c0_i32_0 = arith.constant 0 : i32
    %c0_i32_1 = arith.constant 0 : i32
    %c0_i32_2 = arith.constant 0 : i32
    return %c0_i32, %c0_i32_0, %c0_i32_1 : i32, i32, i32
  }
  func.func @transform_9(%arg0: i32) -> (i32, i32, i32) {
    %c0_i32 = arith.constant 0 : i32
    %c0_i32_0 = arith.constant 0 : i32
    %c0_i32_1 = arith.constant 0 : i32
    %c0_i32_2 = arith.constant 0 : i32
    return %c0_i32, %c0_i32_0, %c0_i32_1 : i32, i32, i32
  }
  func.func @transform_10(%arg0: i32) -> (i32, i32) {
    %c0_i32 = arith.constant 0 : i32
    %c0_i32_0 = arith.constant 0 : i32
    %c0_i32_1 = arith.constant 0 : i32
    return %c0_i32, %c0_i32_0 : i32, i32
  }
  func.func @transform_11(%arg0: i32) -> (i32, i32) {
    %c0_i32 = arith.constant 0 : i32
    %c0_i32_0 = arith.constant 0 : i32
    %c0_i32_1 = arith.constant 0 : i32
    return %c0_i32, %c0_i32_0 : i32, i32
  }
  func.func @transform_12(%arg0: i32) -> (i32, i32) {
    %c0_i32 = arith.constant 0 : i32
    %c0_i32_0 = arith.constant 0 : i32
    %c0_i32_1 = arith.constant 0 : i32
    return %c0_i32, %c0_i32_0 : i32, i32
  }
  func.func @transform_13(%arg0: i32) -> (i32, i32, i32) {
    %c0_i32 = arith.constant 0 : i32
    %c0_i32_0 = arith.constant 0 : i32
    %c0_i32_1 = arith.constant 0 : i32
    return %arg0, %c0_i32, %c0_i32_0 : i32, i32, i32
  }
}

module attributes {stable_mosaic.version = 11 : i64} {
  func.func @_ffn_ln_kernel(%arg0: i32, %arg1: memref<16x32xf32, #tpu.memory_space<vmem>>, %arg2: memref<32x64xbf16, #tpu.memory_space<vmem>>, %arg3: memref<1x64xf32, #tpu.memory_space<vmem>>, %arg4: memref<64x32xbf16, #tpu.memory_space<vmem>>, %arg5: memref<1x32xf32, #tpu.memory_space<vmem>>, %arg6: memref<1x32xf32, #tpu.memory_space<vmem>>, %arg7: memref<1x32xf32, #tpu.memory_space<vmem>>, %arg8: memref<16x32xf32, #tpu.memory_space<vmem>>) attributes {dimension_semantics = [#tpu.dimension_semantics<parallel>], iteration_bounds = array<i64: 1>, scalar_prefetch = 0 : i64, scratch_operands = 0 : i64, tpu.core_type = #tpu.core_type<tc>, window_params = [{transform_indices = @transform_0, window_bounds = array<i64: 16, 32>}, {pipeline_mode = #tpu.pipeline_mode<synchronous>, transform_indices = @transform_1, window_bounds = array<i64: 32, 64>}, {pipeline_mode = #tpu.pipeline_mode<synchronous>, transform_indices = @transform_2, window_bounds = array<i64: 1, 64>}, {pipeline_mode = #tpu.pipeline_mode<synchronous>, transform_indices = @transform_3, window_bounds = array<i64: 64, 32>}, {pipeline_mode = #tpu.pipeline_mode<synchronous>, transform_indices = @transform_4, window_bounds = array<i64: 1, 32>}, {pipeline_mode = #tpu.pipeline_mode<synchronous>, transform_indices = @transform_5, window_bounds = array<i64: 1, 32>}, {pipeline_mode = #tpu.pipeline_mode<synchronous>, transform_indices = @transform_6, window_bounds = array<i64: 1, 32>}, {transform_indices = @transform_7, window_bounds = array<i64: 16, 32>}]} {
    %c0 = arith.constant 0 : index
    %c0_0 = arith.constant 0 : index
    %0 = vector.load %arg1[%c0, %c0_0] : memref<16x32xf32, #tpu.memory_space<vmem>>, vector<16x32xf32>
    %1 = arith.truncf %0 : vector<16x32xf32> to vector<16x32xbf16>
    %c0_1 = arith.constant 0 : index
    %c0_2 = arith.constant 0 : index
    %2 = vector.load %arg2[%c0_1, %c0_2] : memref<32x64xbf16, #tpu.memory_space<vmem>>, vector<32x64xbf16>
    %cst = arith.constant dense<0.000000e+00> : vector<16x64xf32>
    %3 = tpu.matmul %1, %2, %cst {dimension_numbers = #tpu.dot_dimension_numbers<[1], [0], [0], [1], [0, 0, 1, 1], [], []>} : vector<16x32xbf16>, vector<32x64xbf16>, vector<16x64xf32> -> vector<16x64xf32>
    %c0_3 = arith.constant 0 : index
    %c0_4 = arith.constant 0 : index
    %4 = vector.load %arg3[%c0_3, %c0_4] : memref<1x64xf32, #tpu.memory_space<vmem>>, vector<1x64xf32>
    %5 = vector.broadcast %4 : vector<1x64xf32> to vector<16x64xf32>
    %6 = arith.addf %3, %5 : vector<16x64xf32>
    %cst_5 = arith.constant 0.000000e+00 : f32
    %7 = vector.broadcast %cst_5 : f32 to vector<16x64xf32>
    %8 = arith.maximumf %6, %7 : vector<16x64xf32>
    %9 = arith.truncf %8 : vector<16x64xf32> to vector<16x64xbf16>
    %c0_6 = arith.constant 0 : index
    %c0_7 = arith.constant 0 : index
    %10 = vector.load %arg4[%c0_6, %c0_7] : memref<64x32xbf16, #tpu.memory_space<vmem>>, vector<64x32xbf16>
    %cst_8 = arith.constant dense<0.000000e+00> : vector<16x32xf32>
    %11 = tpu.matmul %9, %10, %cst_8 {dimension_numbers = #tpu.dot_dimension_numbers<[1], [0], [0], [1], [0, 0, 1, 1], [], []>} : vector<16x64xbf16>, vector<64x32xbf16>, vector<16x32xf32> -> vector<16x32xf32>
    %c0_9 = arith.constant 0 : index
    %c0_10 = arith.constant 0 : index
    %12 = vector.load %arg5[%c0_9, %c0_10] : memref<1x32xf32, #tpu.memory_space<vmem>>, vector<1x32xf32>
    %13 = vector.broadcast %12 : vector<1x32xf32> to vector<16x32xf32>
    %14 = arith.addf %11, %13 : vector<16x32xf32>
    %15 = arith.addf %0, %14 : vector<16x32xf32>
    %cst_11 = arith.constant dense<0.000000e+00> : vector<16xf32>
    %16 = vector.multi_reduction <add>, %15, %cst_11 [1] : vector<16x32xf32> to vector<16xf32>
    %17 = vector.shape_cast %16 : vector<16xf32> to vector<16x1xf32>
    %cst_12 = arith.constant 3.200000e+01 : f32
    %18 = vector.broadcast %cst_12 : f32 to vector<16x1xf32>
    %19 = arith.divf %17, %18 : vector<16x1xf32>
    %20 = vector.broadcast %19 : vector<16x1xf32> to vector<16x32xf32>
    %21 = arith.subf %15, %20 : vector<16x32xf32>
    %22 = arith.mulf %21, %21 : vector<16x32xf32>
    %cst_13 = arith.constant dense<0.000000e+00> : vector<16xf32>
    %23 = vector.multi_reduction <add>, %22, %cst_13 [1] : vector<16x32xf32> to vector<16xf32>
    %24 = vector.shape_cast %23 : vector<16xf32> to vector<16x1xf32>
    %cst_14 = arith.constant 3.200000e+01 : f32
    %25 = vector.broadcast %cst_14 : f32 to vector<16x1xf32>
    %26 = arith.divf %24, %25 : vector<16x1xf32>
    %27 = vector.broadcast %19 : vector<16x1xf32> to vector<16x32xf32>
    %28 = arith.subf %15, %27 : vector<16x32xf32>
    %cst_15 = arith.constant 9.99999997E-7 : f32
    %29 = vector.broadcast %cst_15 : f32 to vector<16x1xf32>
    %30 = arith.addf %26, %29 : vector<16x1xf32>
    %31 = math.rsqrt %30 : vector<16x1xf32>
    %32 = vector.broadcast %31 : vector<16x1xf32> to vector<16x32xf32>
    %33 = arith.mulf %28, %32 : vector<16x32xf32>
    %c0_16 = arith.constant 0 : index
    %c0_17 = arith.constant 0 : index
    %34 = vector.load %arg6[%c0_16, %c0_17] : memref<1x32xf32, #tpu.memory_space<vmem>>, vector<1x32xf32>
    %35 = vector.broadcast %34 : vector<1x32xf32> to vector<16x32xf32>
    %36 = arith.mulf %33, %35 : vector<16x32xf32>
    %c0_18 = arith.constant 0 : index
    %c0_19 = arith.constant 0 : index
    %37 = vector.load %arg7[%c0_18, %c0_19] : memref<1x32xf32, #tpu.memory_space<vmem>>, vector<1x32xf32>
    %38 = vector.broadcast %37 : vector<1x32xf32> to vector<16x32xf32>
    %39 = arith.addf %36, %38 : vector<16x32xf32>
    %c0_20 = arith.constant 0 : index
    %c0_21 = arith.constant 0 : index
    %40 = vector.load %arg8[%c0_20, %c0_21] : memref<16x32xf32, #tpu.memory_space<vmem>>, vector<16x32xf32>
    tpu.vector_store %arg8[%c0_20, %c0_21], %39 {strides = array<i32>} : memref<16x32xf32, #tpu.memory_space<vmem>>, vector<16x32xf32>,
    return
  }
  func.func @transform_0(%arg0: i32) -> (i32, i32) {
    %c0_i32 = arith.constant 0 : i32
    %c0_i32_0 = arith.constant 0 : i32
    return %arg0, %c0_i32 : i32, i32
  }
  func.func @transform_1(%arg0: i32) -> (i32, i32) {
    %c0_i32 = arith.constant 0 : i32
    %c0_i32_0 = arith.constant 0 : i32
    %c0_i32_1 = arith.constant 0 : i32
    return %c0_i32, %c0_i32_0 : i32, i32
  }
  func.func @transform_2(%arg0: i32) -> (i32, i32) {
    %c0_i32 = arith.constant 0 : i32
    %c0_i32_0 = arith.constant 0 : i32
    %c0_i32_1 = arith.constant 0 : i32
    return %c0_i32, %c0_i32_0 : i32, i32
  }
  func.func @transform_3(%arg0: i32) -> (i32, i32) {
    %c0_i32 = arith.constant 0 : i32
    %c0_i32_0 = arith.constant 0 : i32
    %c0_i32_1 = arith.constant 0 : i32
    return %c0_i32, %c0_i32_0 : i32, i32
  }
  func.func @transform_4(%arg0: i32) -> (i32, i32) {
    %c0_i32 = arith.constant 0 : i32
    %c0_i32_0 = arith.constant 0 : i32
    %c0_i32_1 = arith.constant 0 : i32
    return %c0_i32, %c0_i32_0 : i32, i32
  }
  func.func @transform_5(%arg0: i32) -> (i32, i32) {
    %c0_i32 = arith.constant 0 : i32
    %c0_i32_0 = arith.constant 0 : i32
    %c0_i32_1 = arith.constant 0 : i32
    return %c0_i32, %c0_i32_0 : i32, i32
  }
  func.func @transform_6(%arg0: i32) -> (i32, i32) {
    %c0_i32 = arith.constant 0 : i32
    %c0_i32_0 = arith.constant 0 : i32
    %c0_i32_1 = arith.constant 0 : i32
    return %c0_i32, %c0_i32_0 : i32, i32
  }
  func.func @transform_7(%arg0: i32) -> (i32, i32) {
    %c0_i32 = arith.constant 0 : i32
    %c0_i32_0 = arith.constant 0 : i32
    return %arg0, %c0_i32 : i32, i32
  }
}

module attributes {stable_mosaic.version = 11 : i64} {
  func.func @_mha_ln_kernel(%arg0: i32, %arg1: memref<1x16x32xf32, #tpu.memory_space<vmem>>, %arg2: memref<1x8x32xf32, #tpu.memory_space<vmem>>, %arg3: memref<1x1x8xf32, #tpu.memory_space<vmem>>, %arg4: memref<4x32x8xbf16, #tpu.memory_space<vmem>>, %arg5: memref<4x32x8xbf16, #tpu.memory_space<vmem>>, %arg6: memref<4x32x8xbf16, #tpu.memory_space<vmem>>, %arg7: memref<4x1x8xf32, #tpu.memory_space<vmem>>, %arg8: memref<4x1x8xf32, #tpu.memory_space<vmem>>, %arg9: memref<4x1x8xf32, #tpu.memory_space<vmem>>, %arg10: memref<4x8x32xbf16, #tpu.memory_space<vmem>>, %arg11: memref<1x32xf32, #tpu.memory_space<vmem>>, %arg12: memref<1x32xf32, #tpu.memory_space<vmem>>, %arg13: memref<1x32xf32, #tpu.memory_space<vmem>>, %arg14: memref<1x16x32xf32, #tpu.memory_space<vmem>>) attributes {dimension_semantics = [#tpu.dimension_semantics<parallel>], iteration_bounds = array<i64: 2>, scalar_prefetch = 0 : i64, scratch_operands = 0 : i64, tpu.core_type = #tpu.core_type<tc>, window_params = [{transform_indices = @transform_0, window_bounds = array<i64: 1, 16, 32>}, {transform_indices = @transform_1, window_bounds = array<i64: 1, 8, 32>}, {transform_indices = @transform_2, window_bounds = array<i64: 1, 1, 8>}, {pipeline_mode = #tpu.pipeline_mode<synchronous>, transform_indices = @transform_3, window_bounds = array<i64: 4, 32, 8>}, {pipeline_mode = #tpu.pipeline_mode<synchronous>, transform_indices = @transform_4, window_bounds = array<i64: 4, 32, 8>}, {pipeline_mode = #tpu.pipeline_mode<synchronous>, transform_indices = @transform_5, window_bounds = array<i64: 4, 32, 8>}, {pipeline_mode = #tpu.pipeline_mode<synchronous>, transform_indices = @transform_6, window_bounds = array<i64: 4, 1, 8>}, {pipeline_mode = #tpu.pipeline_mode<synchronous>, transform_indices = @transform_7, window_bounds = array<i64: 4, 1, 8>}, {pipeline_mode = #tpu.pipeline_mode<synchronous>, transform_indices = @transform_8, window_bounds = array<i64: 4, 1, 8>}, {pipeline_mode = #tpu.pipeline_mode<synchronous>, transform_indices = @transform_9, window_bounds = array<i64: 4, 8, 32>}, {pipeline_mode = #tpu.pipeline_mode<synchronous>, transform_indices = @transform_10, window_bounds = array<i64: 1, 32>}, {pipeline_mode = #tpu.pipeline_mode<synchronous>, transform_indices = @transform_11, window_bounds = array<i64: 1, 32>}, {pipeline_mode = #tpu.pipeline_mode<synchronous>, transform_indices = @transform_12, window_bounds = array<i64: 1, 32>}, {transform_indices = @transform_13, window_bounds = array<i64: 1, 16, 32>}]} {
    %c0 = arith.constant 0 : index
    %c0_0 = arith.constant 0 : index
    %c0_1 = arith.constant 0 : index
    %0 = vector.load %arg1[%c0, %c0_0, %c0_1] : memref<1x16x32xf32, #tpu.memory_space<vmem>>, vector<1x16x32xf32>
    %1 = vector.shape_cast %0 : vector<1x16x32xf32> to vector<16x32xf32>
    %c0_2 = arith.constant 0 : index
    %c0_3 = arith.constant 0 : index
    %c0_4 = arith.constant 0 : index
    %2 = vector.load %arg2[%c0_2, %c0_3, %c0_4] : memref<1x8x32xf32, #tpu.memory_space<vmem>>, vector<1x8x32xf32>
    %3 = vector.shape_cast %2 : vector<1x8x32xf32> to vector<8x32xf32>
    %c0_5 = arith.constant 0 : index
    %c0_6 = arith.constant 0 : index
    %c0_7 = arith.constant 0 : index
    %4 = vector.load %arg3[%c0_5, %c0_6, %c0_7] : memref<1x1x8xf32, #tpu.memory_space<vmem>>, vector<1x1x8xf32>
    %5 = vector.shape_cast %4 : vector<1x1x8xf32> to vector<1x8xf32>
    %cst = arith.constant 1.000000e+00 : f32
    %6 = vector.broadcast %cst : f32 to vector<1x8xf32>
    %7 = arith.subf %6, %5 : vector<1x8xf32>
    %cst_8 = arith.constant -1.000000e+09 : f32
    %8 = vector.broadcast %cst_8 : f32 to vector<1x8xf32>
    %9 = arith.mulf %7, %8 : vector<1x8xf32>
    %10 = arith.truncf %1 : vector<16x32xf32> to vector<16x32xbf16>
    %11 = arith.truncf %3 : vector<8x32xf32> to vector<8x32xbf16>
    %cst_9 = arith.constant 0.000000e+00 : f32
    %12 = vector.broadcast %cst_9 : f32 to vector<16x32xf32>
    %c0_10 = arith.constant 0 : index
    %c0_11 = arith.constant 0 : index
    %c0_12 = arith.constant 0 : index
    %13 = vector.load %arg4[%c0_10, %c0_11, %c0_12] : memref<4x32x8xbf16, #tpu.memory_space<vmem>>, vector<1x32x8xbf16>
    %14 = vector.shape_cast %13 : vector<1x32x8xbf16> to vector<32x8xbf16>
    %cst_13 = arith.constant dense<0.000000e+00> : vector<16x8xf32>
    %15 = tpu.matmul %10, %14, %cst_13 {dimension_numbers = #tpu.dot_dimension_numbers<[1], [0], [0], [1], [0, 0, 1, 1], [], []>} : vector<16x32xbf16>, vector<32x8xbf16>, vector<16x8xf32> -> vector<16x8xf32>
    %c0_14 = arith.constant 0 : index
    %c0_15 = arith.constant 0 : index
    %c0_16 = arith.constant 0 : index
    %16 = vector.load %arg7[%c0_14, %c0_15, %c0_16] : memref<4x1x8xf32, #tpu.memory_space<vmem>>, vector<1x1x8xf32>
    %17 = vector.shape_cast %16 : vector<1x1x8xf32> to vector<1x8xf32>
    %18 = vector.broadcast %17 : vector<1x8xf32> to vector<16x8xf32>
    %19 = arith.addf %15, %18 : vector<16x8xf32>
    %c0_17 = arith.constant 0 : index
    %c0_18 = arith.constant 0 : index
    %c0_19 = arith.constant 0 : index
    %20 = vector.load %arg5[%c0_17, %c0_18, %c0_19] : memref<4x32x8xbf16, #tpu.memory_space<vmem>>, vector<1x32x8xbf16>
    %21 = vector.shape_cast %20 : vector<1x32x8xbf16> to vector<32x8xbf16>
    %cst_20 = arith.constant dense<0.000000e+00> : vector<8x8xf32>
    %22 = tpu.matmul %11, %21, %cst_20 {dimension_numbers = #tpu.dot_dimension_numbers<[1], [0], [0], [1], [0, 0, 1, 1], [], []>} : vector<8x32xbf16>, vector<32x8xbf16>, vector<8x8xf32> -> vector<8x8xf32>
    %c0_21 = arith.constant 0 : index
    %c0_22 = arith.constant 0 : index
    %c0_23 = arith.constant 0 : index
    %23 = vector.load %arg8[%c0_21, %c0_22, %c0_23] : memref<4x1x8xf32, #tpu.memory_space<vmem>>, vector<1x1x8xf32>
    %24 = vector.shape_cast %23 : vector<1x1x8xf32> to vector<1x8xf32>
    %25 = vector.broadcast %24 : vector<1x8xf32> to vector<8x8xf32>
    %26 = arith.addf %22, %25 : vector<8x8xf32>
    %c0_24 = arith.constant 0 : index
    %c0_25 = arith.constant 0 : index
    %c0_26 = arith.constant 0 : index
    %27 = vector.load %arg6[%c0_24, %c0_25, %c0_26] : memref<4x32x8xbf16, #tpu.memory_space<vmem>>, vector<1x32x8xbf16>
    %28 = vector.shape_cast %27 : vector<1x32x8xbf16> to vector<32x8xbf16>
    %cst_27 = arith.constant dense<0.000000e+00> : vector<8x8xf32>
    %29 = tpu.matmul %11, %28, %cst_27 {dimension_numbers = #tpu.dot_dimension_numbers<[1], [0], [0], [1], [0, 0, 1, 1], [], []>} : vector<8x32xbf16>, vector<32x8xbf16>, vector<8x8xf32> -> vector<8x8xf32>
    %c0_28 = arith.constant 0 : index
    %c0_29 = arith.constant 0 : index
    %c0_30 = arith.constant 0 : index
    %30 = vector.load %arg9[%c0_28, %c0_29, %c0_30] : memref<4x1x8xf32, #tpu.memory_space<vmem>>, vector<1x1x8xf32>
    %31 = vector.shape_cast %30 : vector<1x1x8xf32> to vector<1x8xf32>
    %32 = vector.broadcast %31 : vector<1x8xf32> to vector<8x8xf32>
    %33 = arith.addf %29, %32 : vector<8x8xf32>
    %34 = arith.truncf %19 : vector<16x8xf32> to vector<16x8xbf16>
    %35 = arith.truncf %26 : vector<8x8xf32> to vector<8x8xbf16>
    %36 = tpu.transpose %35, [1, 0] : vector<8x8xbf16> -> vector<8x8xbf16>
    %cst_31 = arith.constant dense<0.000000e+00> : vector<16x8xf32>
    %37 = tpu.matmul %34, %36, %cst_31 {dimension_numbers = #tpu.dot_dimension_numbers<[1], [0], [0], [1], [0, 0, 1, 1], [], []>} : vector<16x8xbf16>, vector<8x8xbf16>, vector<16x8xf32> -> vector<16x8xf32>
    %cst_32 = arith.constant 0.353553385 : f32
    %38 = vector.broadcast %cst_32 : f32 to vector<16x8xf32>
    %39 = arith.mulf %37, %38 : vector<16x8xf32>
    %40 = vector.broadcast %9 : vector<1x8xf32> to vector<16x8xf32>
    %41 = arith.addf %39, %40 : vector<16x8xf32>
    %cst_33 = arith.constant dense<0xFF800000> : vector<16xf32>
    %42 = vector.multi_reduction <maximumf>, %41, %cst_33 [1] : vector<16x8xf32> to vector<16xf32>
    %43 = vector.shape_cast %42 : vector<16xf32> to vector<16x1xf32>
    %44 = vector.broadcast %43 : vector<16x1xf32> to vector<16x8xf32>
    %45 = arith.subf %41, %44 : vector<16x8xf32>
    %46 = math.exp %45 : vector<16x8xf32>
    %cst_34 = arith.constant dense<0.000000e+00> : vector<16xf32>
    %47 = vector.multi_reduction <add>, %46, %cst_34 [1] : vector<16x8xf32> to vector<16xf32>
    %48 = vector.shape_cast %47 : vector<16xf32> to vector<16x1xf32>
    %49 = tpu.reciprocal %48 {approx = true} : vector<16x1xf32> -> vector<16x1xf32>
    %50 = vector.broadcast %49 : vector<16x1xf32> to vector<16x8xf32>
    %51 = arith.mulf %46, %50 : vector<16x8xf32>
    %52 = arith.truncf %51 : vector<16x8xf32> to vector<16x8xbf16>
    %53 = arith.truncf %33 : vector<8x8xf32> to vector<8x8xbf16>
    %cst_35 = arith.constant dense<0.000000e+00> : vector<16x8xf32>
    %54 = tpu.matmul %52, %53, %cst_35 {dimension_numbers = #tpu.dot_dimension_numbers<[1], [0], [0], [1], [0, 0, 1, 1], [], []>} : vector<16x8xbf16>, vector<8x8xbf16>, vector<16x8xf32> -> vector<16x8xf32>
    %55 = arith.truncf %54 : vector<16x8xf32> to vector<16x8xbf16>
    %c0_36 = arith.constant 0 : index
    %c0_37 = arith.constant 0 : index
    %c0_38 = arith.constant 0 : index
    %56 = vector.load %arg10[%c0_36, %c0_37, %c0_38] : memref<4x8x32xbf16, #tpu.memory_space<vmem>>, vector<1x8x32xbf16>
    %57 = vector.shape_cast %56 : vector<1x8x32xbf16> to vector<8x32xbf16>
    %cst_39 = arith.constant dense<0.000000e+00> : vector<16x32xf32>
    %58 = tpu.matmul %55, %57, %cst_39 {dimension_numbers = #tpu.dot_dimension_numbers<[1], [0], [0], [1], [0, 0, 1, 1], [], []>} : vector<16x8xbf16>, vector<8x32xbf16>, vector<16x32xf32> -> vector<16x32xf32>
    %59 = arith.addf %12, %58 : vector<16x32xf32>
    %c1 = arith.constant 1 : index
    %c0_40 = arith.constant 0 : index
    %c0_41 = arith.constant 0 : index
    %60 = vector.load %arg4[%c1, %c0_40, %c0_41] : memref<4x32x8xbf16, #tpu.memory_space<vmem>>, vector<1x32x8xbf16>
    %61 = vector.shape_cast %60 : vector<1x32x8xbf16> to vector<32x8xbf16>
    %cst_42 = arith.constant dense<0.000000e+00> : vector<16x8xf32>
    %62 = tpu.matmul %10, %61, %cst_42 {dimension_numbers = #tpu.dot_dimension_numbers<[1], [0], [0], [1], [0, 0, 1, 1], [], []>} : vector<16x32xbf16>, vector<32x8xbf16>, vector<16x8xf32> -> vector<16x8xf32>
    %c1_43 = arith.constant 1 : index
    %c0_44 = arith.constant 0 : index
    %c0_45 = arith.constant 0 : index
    %63 = vector.load %arg7[%c1_43, %c0_44, %c0_45] : memref<4x1x8xf32, #tpu.memory_space<vmem>>, vector<1x1x8xf32>
    %64 = vector.shape_cast %63 : vector<1x1x8xf32> to vector<1x8xf32>
    %65 = vector.broadcast %64 : vector<1x8xf32> to vector<16x8xf32>
    %66 = arith.addf %62, %65 : vector<16x8xf32>
    %c1_46 = arith.constant 1 : index
    %c0_47 = arith.constant 0 : index
    %c0_48 = arith.constant 0 : index
    %67 = vector.load %arg5[%c1_46, %c0_47, %c0_48] : memref<4x32x8xbf16, #tpu.memory_space<vmem>>, vector<1x32x8xbf16>
    %68 = vector.shape_cast %67 : vector<1x32x8xbf16> to vector<32x8xbf16>
    %cst_49 = arith.constant dense<0.000000e+00> : vector<8x8xf32>
    %69 = tpu.matmul %11, %68, %cst_49 {dimension_numbers = #tpu.dot_dimension_numbers<[1], [0], [0], [1], [0, 0, 1, 1], [], []>} : vector<8x32xbf16>, vector<32x8xbf16>, vector<8x8xf32> -> vector<8x8xf32>
    %c1_50 = arith.constant 1 : index
    %c0_51 = arith.constant 0 : index
    %c0_52 = arith.constant 0 : index
    %70 = vector.load %arg8[%c1_50, %c0_51, %c0_52] : memref<4x1x8xf32, #tpu.memory_space<vmem>>, vector<1x1x8xf32>
    %71 = vector.shape_cast %70 : vector<1x1x8xf32> to vector<1x8xf32>
    %72 = vector.broadcast %71 : vector<1x8xf32> to vector<8x8xf32>
    %73 = arith.addf %69, %72 : vector<8x8xf32>
    %c1_53 = arith.constant 1 : index
    %c0_54 = arith.constant 0 : index
    %c0_55 = arith.constant 0 : index
    %74 = vector.load %arg6[%c1_53, %c0_54, %c0_55] : memref<4x32x8xbf16, #tpu.memory_space<vmem>>, vector<1x32x8xbf16>
    %75 = vector.shape_cast %74 : vector<1x32x8xbf16> to vector<32x8xbf16>
    %cst_56 = arith.constant dense<0.000000e+00> : vector<8x8xf32>
    %76 = tpu.matmul %11, %75, %cst_56 {dimension_numbers = #tpu.dot_dimension_numbers<[1], [0], [0], [1], [0, 0, 1, 1], [], []>} : vector<8x32xbf16>, vector<32x8xbf16>, vector<8x8xf32> -> vector<8x8xf32>
    %c1_57 = arith.constant 1 : index
    %c0_58 = arith.constant 0 : index
    %c0_59 = arith.constant 0 : index
    %77 = vector.load %arg9[%c1_57, %c0_58, %c0_59] : memref<4x1x8xf32, #tpu.memory_space<vmem>>, vector<1x1x8xf32>
    %78 = vector.shape_cast %77 : vector<1x1x8xf32> to vector<1x8xf32>
    %79 = vector.broadcast %78 : vector<1x8xf32> to vector<8x8xf32>
    %80 = arith.addf %76, %79 : vector<8x8xf32>
    %81 = arith.truncf %66 : vector<16x8xf32> to vector<16x8xbf16>
    %82 = arith.truncf %73 : vector<8x8xf32> to vector<8x8xbf16>
    %83 = tpu.transpose %82, [1, 0] : vector<8x8xbf16> -> vector<8x8xbf16>
    %cst_60 = arith.constant dense<0.000000e+00> : vector<16x8xf32>
    %84 = tpu.matmul %81, %83, %cst_60 {dimension_numbers = #tpu.dot_dimension_numbers<[1], [0], [0], [1], [0, 0, 1, 1], [], []>} : vector<16x8xbf16>, vector<8x8xbf16>, vector<16x8xf32> -> vector<16x8xf32>
    %cst_61 = arith.constant 0.353553385 : f32
    %85 = vector.broadcast %cst_61 : f32 to vector<16x8xf32>
    %86 = arith.mulf %84, %85 : vector<16x8xf32>
    %87 = vector.broadcast %9 : vector<1x8xf32> to vector<16x8xf32>
    %88 = arith.addf %86, %87 : vector<16x8xf32>
    %cst_62 = arith.constant dense<0xFF800000> : vector<16xf32>
    %89 = vector.multi_reduction <maximumf>, %88, %cst_62 [1] : vector<16x8xf32> to vector<16xf32>
    %90 = vector.shape_cast %89 : vector<16xf32> to vector<16x1xf32>
    %91 = vector.broadcast %90 : vector<16x1xf32> to vector<16x8xf32>
    %92 = arith.subf %88, %91 : vector<16x8xf32>
    %93 = math.exp %92 : vector<16x8xf32>
    %cst_63 = arith.constant dense<0.000000e+00> : vector<16xf32>
    %94 = vector.multi_reduction <add>, %93, %cst_63 [1] : vector<16x8xf32> to vector<16xf32>
    %95 = vector.shape_cast %94 : vector<16xf32> to vector<16x1xf32>
    %96 = tpu.reciprocal %95 {approx = true} : vector<16x1xf32> -> vector<16x1xf32>
    %97 = vector.broadcast %96 : vector<16x1xf32> to vector<16x8xf32>
    %98 = arith.mulf %93, %97 : vector<16x8xf32>
    %99 = arith.truncf %98 : vector<16x8xf32> to vector<16x8xbf16>
    %100 = arith.truncf %80 : vector<8x8xf32> to vector<8x8xbf16>
    %cst_64 = arith.constant dense<0.000000e+00> : vector<16x8xf32>
    %101 = tpu.matmul %99, %100, %cst_64 {dimension_numbers = #tpu.dot_dimension_numbers<[1], [0], [0], [1], [0, 0, 1, 1], [], []>} : vector<16x8xbf16>, vector<8x8xbf16>, vector<16x8xf32> -> vector<16x8xf32>
    %102 = arith.truncf %101 : vector<16x8xf32> to vector<16x8xbf16>
    %c1_65 = arith.constant 1 : index
    %c0_66 = arith.constant 0 : index
    %c0_67 = arith.constant 0 : index
    %103 = vector.load %arg10[%c1_65, %c0_66, %c0_67] : memref<4x8x32xbf16, #tpu.memory_space<vmem>>, vector<1x8x32xbf16>
    %104 = vector.shape_cast %103 : vector<1x8x32xbf16> to vector<8x32xbf16>
    %cst_68 = arith.constant dense<0.000000e+00> : vector<16x32xf32>
    %105 = tpu.matmul %102, %104, %cst_68 {dimension_numbers = #tpu.dot_dimension_numbers<[1], [0], [0], [1], [0, 0, 1, 1], [], []>} : vector<16x8xbf16>, vector<8x32xbf16>, vector<16x32xf32> -> vector<16x32xf32>
    %106 = arith.addf %59, %105 : vector<16x32xf32>
    %c2 = arith.constant 2 : index
    %c0_69 = arith.constant 0 : index
    %c0_70 = arith.constant 0 : index
    %107 = vector.load %arg4[%c2, %c0_69, %c0_70] : memref<4x32x8xbf16, #tpu.memory_space<vmem>>, vector<1x32x8xbf16>
    %108 = vector.shape_cast %107 : vector<1x32x8xbf16> to vector<32x8xbf16>
    %cst_71 = arith.constant dense<0.000000e+00> : vector<16x8xf32>
    %109 = tpu.matmul %10, %108, %cst_71 {dimension_numbers = #tpu.dot_dimension_numbers<[1], [0], [0], [1], [0, 0, 1, 1], [], []>} : vector<16x32xbf16>, vector<32x8xbf16>, vector<16x8xf32> -> vector<16x8xf32>
    %c2_72 = arith.constant 2 : index
    %c0_73 = arith.constant 0 : index
    %c0_74 = arith.constant 0 : index
    %110 = vector.load %arg7[%c2_72, %c0_73, %c0_74] : memref<4x1x8xf32, #tpu.memory_space<vmem>>, vector<1x1x8xf32>
    %111 = vector.shape_cast %110 : vector<1x1x8xf32> to vector<1x8xf32>
    %112 = vector.broadcast %111 : vector<1x8xf32> to vector<16x8xf32>
    %113 = arith.addf %109, %112 : vector<16x8xf32>
    %c2_75 = arith.constant 2 : index
    %c0_76 = arith.constant 0 : index
    %c0_77 = arith.constant 0 : index
    %114 = vector.load %arg5[%c2_75, %c0_76, %c0_77] : memref<4x32x8xbf16, #tpu.memory_space<vmem>>, vector<1x32x8xbf16>
    %115 = vector.shape_cast %114 : vector<1x32x8xbf16> to vector<32x8xbf16>
    %cst_78 = arith.constant dense<0.000000e+00> : vector<8x8xf32>
    %116 = tpu.matmul %11, %115, %cst_78 {dimension_numbers = #tpu.dot_dimension_numbers<[1], [0], [0], [1], [0, 0, 1, 1], [], []>} : vector<8x32xbf16>, vector<32x8xbf16>, vector<8x8xf32> -> vector<8x8xf32>
    %c2_79 = arith.constant 2 : index
    %c0_80 = arith.constant 0 : index
    %c0_81 = arith.constant 0 : index
    %117 = vector.load %arg8[%c2_79, %c0_80, %c0_81] : memref<4x1x8xf32, #tpu.memory_space<vmem>>, vector<1x1x8xf32>
    %118 = vector.shape_cast %117 : vector<1x1x8xf32> to vector<1x8xf32>
    %119 = vector.broadcast %118 : vector<1x8xf32> to vector<8x8xf32>
    %120 = arith.addf %116, %119 : vector<8x8xf32>
    %c2_82 = arith.constant 2 : index
    %c0_83 = arith.constant 0 : index
    %c0_84 = arith.constant 0 : index
    %121 = vector.load %arg6[%c2_82, %c0_83, %c0_84] : memref<4x32x8xbf16, #tpu.memory_space<vmem>>, vector<1x32x8xbf16>
    %122 = vector.shape_cast %121 : vector<1x32x8xbf16> to vector<32x8xbf16>
    %cst_85 = arith.constant dense<0.000000e+00> : vector<8x8xf32>
    %123 = tpu.matmul %11, %122, %cst_85 {dimension_numbers = #tpu.dot_dimension_numbers<[1], [0], [0], [1], [0, 0, 1, 1], [], []>} : vector<8x32xbf16>, vector<32x8xbf16>, vector<8x8xf32> -> vector<8x8xf32>
    %c2_86 = arith.constant 2 : index
    %c0_87 = arith.constant 0 : index
    %c0_88 = arith.constant 0 : index
    %124 = vector.load %arg9[%c2_86, %c0_87, %c0_88] : memref<4x1x8xf32, #tpu.memory_space<vmem>>, vector<1x1x8xf32>
    %125 = vector.shape_cast %124 : vector<1x1x8xf32> to vector<1x8xf32>
    %126 = vector.broadcast %125 : vector<1x8xf32> to vector<8x8xf32>
    %127 = arith.addf %123, %126 : vector<8x8xf32>
    %128 = arith.truncf %113 : vector<16x8xf32> to vector<16x8xbf16>
    %129 = arith.truncf %120 : vector<8x8xf32> to vector<8x8xbf16>
    %130 = tpu.transpose %129, [1, 0] : vector<8x8xbf16> -> vector<8x8xbf16>
    %cst_89 = arith.constant dense<0.000000e+00> : vector<16x8xf32>
    %131 = tpu.matmul %128, %130, %cst_89 {dimension_numbers = #tpu.dot_dimension_numbers<[1], [0], [0], [1], [0, 0, 1, 1], [], []>} : vector<16x8xbf16>, vector<8x8xbf16>, vector<16x8xf32> -> vector<16x8xf32>
    %cst_90 = arith.constant 0.353553385 : f32
    %132 = vector.broadcast %cst_90 : f32 to vector<16x8xf32>
    %133 = arith.mulf %131, %132 : vector<16x8xf32>
    %134 = vector.broadcast %9 : vector<1x8xf32> to vector<16x8xf32>
    %135 = arith.addf %133, %134 : vector<16x8xf32>
    %cst_91 = arith.constant dense<0xFF800000> : vector<16xf32>
    %136 = vector.multi_reduction <maximumf>, %135, %cst_91 [1] : vector<16x8xf32> to vector<16xf32>
    %137 = vector.shape_cast %136 : vector<16xf32> to vector<16x1xf32>
    %138 = vector.broadcast %137 : vector<16x1xf32> to vector<16x8xf32>
    %139 = arith.subf %135, %138 : vector<16x8xf32>
    %140 = math.exp %139 : vector<16x8xf32>
    %cst_92 = arith.constant dense<0.000000e+00> : vector<16xf32>
    %141 = vector.multi_reduction <add>, %140, %cst_92 [1] : vector<16x8xf32> to vector<16xf32>
    %142 = vector.shape_cast %141 : vector<16xf32> to vector<16x1xf32>
    %143 = tpu.reciprocal %142 {approx = true} : vector<16x1xf32> -> vector<16x1xf32>
    %144 = vector.broadcast %143 : vector<16x1xf32> to vector<16x8xf32>
    %145 = arith.mulf %140, %144 : vector<16x8xf32>
    %146 = arith.truncf %145 : vector<16x8xf32> to vector<16x8xbf16>
    %147 = arith.truncf %127 : vector<8x8xf32> to vector<8x8xbf16>
    %cst_93 = arith.constant dense<0.000000e+00> : vector<16x8xf32>
    %148 = tpu.matmul %146, %147, %cst_93 {dimension_numbers = #tpu.dot_dimension_numbers<[1], [0], [0], [1], [0, 0, 1, 1], [], []>} : vector<16x8xbf16>, vector<8x8xbf16>, vector<16x8xf32> -> vector<16x8xf32>
    %149 = arith.truncf %148 : vector<16x8xf32> to vector<16x8xbf16>
    %c2_94 = arith.constant 2 : index
    %c0_95 = arith.constant 0 : index
    %c0_96 = arith.constant 0 : index
    %150 = vector.load %arg10[%c2_94, %c0_95, %c0_96] : memref<4x8x32xbf16, #tpu.memory_space<vmem>>, vector<1x8x32xbf16>
    %151 = vector.shape_cast %150 : vector<1x8x32xbf16> to vector<8x32xbf16>
    %cst_97 = arith.constant dense<0.000000e+00> : vector<16x32xf32>
    %152 = tpu.matmul %149, %151, %cst_97 {dimension_numbers = #tpu.dot_dimension_numbers<[1], [0], [0], [1], [0, 0, 1, 1], [], []>} : vector<16x8xbf16>, vector<8x32xbf16>, vector<16x32xf32> -> vector<16x32xf32>
    %153 = arith.addf %106, %152 : vector<16x32xf32>
    %c3 = arith.constant 3 : index
    %c0_98 = arith.constant 0 : index
    %c0_99 = arith.constant 0 : index
    %154 = vector.load %arg4[%c3, %c0_98, %c0_99] : memref<4x32x8xbf16, #tpu.memory_space<vmem>>, vector<1x32x8xbf16>
    %155 = vector.shape_cast %154 : vector<1x32x8xbf16> to vector<32x8xbf16>
    %cst_100 = arith.constant dense<0.000000e+00> : vector<16x8xf32>
    %156 = tpu.matmul %10, %155, %cst_100 {dimension_numbers = #tpu.dot_dimension_numbers<[1], [0], [0], [1], [0, 0, 1, 1], [], []>} : vector<16x32xbf16>, vector<32x8xbf16>, vector<16x8xf32> -> vector<16x8xf32>
    %c3_101 = arith.constant 3 : index
    %c0_102 = arith.constant 0 : index
    %c0_103 = arith.constant 0 : index
    %157 = vector.load %arg7[%c3_101, %c0_102, %c0_103] : memref<4x1x8xf32, #tpu.memory_space<vmem>>, vector<1x1x8xf32>
    %158 = vector.shape_cast %157 : vector<1x1x8xf32> to vector<1x8xf32>
    %159 = vector.broadcast %158 : vector<1x8xf32> to vector<16x8xf32>
    %160 = arith.addf %156, %159 : vector<16x8xf32>
    %c3_104 = arith.constant 3 : index
    %c0_105 = arith.constant 0 : index
    %c0_106 = arith.constant 0 : index
    %161 = vector.load %arg5[%c3_104, %c0_105, %c0_106] : memref<4x32x8xbf16, #tpu.memory_space<vmem>>, vector<1x32x8xbf16>
    %162 = vector.shape_cast %161 : vector<1x32x8xbf16> to vector<32x8xbf16>
    %cst_107 = arith.constant dense<0.000000e+00> : vector<8x8xf32>
    %163 = tpu.matmul %11, %162, %cst_107 {dimension_numbers = #tpu.dot_dimension_numbers<[1], [0], [0], [1], [0, 0, 1, 1], [], []>} : vector<8x32xbf16>, vector<32x8xbf16>, vector<8x8xf32> -> vector<8x8xf32>
    %c3_108 = arith.constant 3 : index
    %c0_109 = arith.constant 0 : index
    %c0_110 = arith.constant 0 : index
    %164 = vector.load %arg8[%c3_108, %c0_109, %c0_110] : memref<4x1x8xf32, #tpu.memory_space<vmem>>, vector<1x1x8xf32>
    %165 = vector.shape_cast %164 : vector<1x1x8xf32> to vector<1x8xf32>
    %166 = vector.broadcast %165 : vector<1x8xf32> to vector<8x8xf32>
    %167 = arith.addf %163, %166 : vector<8x8xf32>
    %c3_111 = arith.constant 3 : index
    %c0_112 = arith.constant 0 : index
    %c0_113 = arith.constant 0 : index
    %168 = vector.load %arg6[%c3_111, %c0_112, %c0_113] : memref<4x32x8xbf16, #tpu.memory_space<vmem>>, vector<1x32x8xbf16>
    %169 = vector.shape_cast %168 : vector<1x32x8xbf16> to vector<32x8xbf16>
    %cst_114 = arith.constant dense<0.000000e+00> : vector<8x8xf32>
    %170 = tpu.matmul %11, %169, %cst_114 {dimension_numbers = #tpu.dot_dimension_numbers<[1], [0], [0], [1], [0, 0, 1, 1], [], []>} : vector<8x32xbf16>, vector<32x8xbf16>, vector<8x8xf32> -> vector<8x8xf32>
    %c3_115 = arith.constant 3 : index
    %c0_116 = arith.constant 0 : index
    %c0_117 = arith.constant 0 : index
    %171 = vector.load %arg9[%c3_115, %c0_116, %c0_117] : memref<4x1x8xf32, #tpu.memory_space<vmem>>, vector<1x1x8xf32>
    %172 = vector.shape_cast %171 : vector<1x1x8xf32> to vector<1x8xf32>
    %173 = vector.broadcast %172 : vector<1x8xf32> to vector<8x8xf32>
    %174 = arith.addf %170, %173 : vector<8x8xf32>
    %175 = arith.truncf %160 : vector<16x8xf32> to vector<16x8xbf16>
    %176 = arith.truncf %167 : vector<8x8xf32> to vector<8x8xbf16>
    %177 = tpu.transpose %176, [1, 0] : vector<8x8xbf16> -> vector<8x8xbf16>
    %cst_118 = arith.constant dense<0.000000e+00> : vector<16x8xf32>
    %178 = tpu.matmul %175, %177, %cst_118 {dimension_numbers = #tpu.dot_dimension_numbers<[1], [0], [0], [1], [0, 0, 1, 1], [], []>} : vector<16x8xbf16>, vector<8x8xbf16>, vector<16x8xf32> -> vector<16x8xf32>
    %cst_119 = arith.constant 0.353553385 : f32
    %179 = vector.broadcast %cst_119 : f32 to vector<16x8xf32>
    %180 = arith.mulf %178, %179 : vector<16x8xf32>
    %181 = vector.broadcast %9 : vector<1x8xf32> to vector<16x8xf32>
    %182 = arith.addf %180, %181 : vector<16x8xf32>
    %cst_120 = arith.constant dense<0xFF800000> : vector<16xf32>
    %183 = vector.multi_reduction <maximumf>, %182, %cst_120 [1] : vector<16x8xf32> to vector<16xf32>
    %184 = vector.shape_cast %183 : vector<16xf32> to vector<16x1xf32>
    %185 = vector.broadcast %184 : vector<16x1xf32> to vector<16x8xf32>
    %186 = arith.subf %182, %185 : vector<16x8xf32>
    %187 = math.exp %186 : vector<16x8xf32>
    %cst_121 = arith.constant dense<0.000000e+00> : vector<16xf32>
    %188 = vector.multi_reduction <add>, %187, %cst_121 [1] : vector<16x8xf32> to vector<16xf32>
    %189 = vector.shape_cast %188 : vector<16xf32> to vector<16x1xf32>
    %190 = tpu.reciprocal %189 {approx = true} : vector<16x1xf32> -> vector<16x1xf32>
    %191 = vector.broadcast %190 : vector<16x1xf32> to vector<16x8xf32>
    %192 = arith.mulf %187, %191 : vector<16x8xf32>
    %193 = arith.truncf %192 : vector<16x8xf32> to vector<16x8xbf16>
    %194 = arith.truncf %174 : vector<8x8xf32> to vector<8x8xbf16>
    %cst_122 = arith.constant dense<0.000000e+00> : vector<16x8xf32>
    %195 = tpu.matmul %193, %194, %cst_122 {dimension_numbers = #tpu.dot_dimension_numbers<[1], [0], [0], [1], [0, 0, 1, 1], [], []>} : vector<16x8xbf16>, vector<8x8xbf16>, vector<16x8xf32> -> vector<16x8xf32>
    %196 = arith.truncf %195 : vector<16x8xf32> to vector<16x8xbf16>
    %c3_123 = arith.constant 3 : index
    %c0_124 = arith.constant 0 : index
    %c0_125 = arith.constant 0 : index
    %197 = vector.load %arg10[%c3_123, %c0_124, %c0_125] : memref<4x8x32xbf16, #tpu.memory_space<vmem>>, vector<1x8x32xbf16>
    %198 = vector.shape_cast %197 : vector<1x8x32xbf16> to vector<8x32xbf16>
    %cst_126 = arith.constant dense<0.000000e+00> : vector<16x32xf32>
    %199 = tpu.matmul %196, %198, %cst_126 {dimension_numbers = #tpu.dot_dimension_numbers<[1], [0], [0], [1], [0, 0, 1, 1], [], []>} : vector<16x8xbf16>, vector<8x32xbf16>, vector<16x32xf32> -> vector<16x32xf32>
    %200 = arith.addf %153, %199 : vector<16x32xf32>
    %201 = arith.addf %1, %200 : vector<16x32xf32>
    %c0_127 = arith.constant 0 : index
    %c0_128 = arith.constant 0 : index
    %202 = vector.load %arg11[%c0_127, %c0_128] : memref<1x32xf32, #tpu.memory_space<vmem>>, vector<1x32xf32>
    %203 = vector.broadcast %202 : vector<1x32xf32> to vector<16x32xf32>
    %204 = arith.addf %201, %203 : vector<16x32xf32>
    %cst_129 = arith.constant dense<0.000000e+00> : vector<16xf32>
    %205 = vector.multi_reduction <add>, %204, %cst_129 [1] : vector<16x32xf32> to vector<16xf32>
    %206 = vector.shape_cast %205 : vector<16xf32> to vector<16x1xf32>
    %cst_130 = arith.constant 3.200000e+01 : f32
    %207 = vector.broadcast %cst_130 : f32 to vector<16x1xf32>
    %208 = arith.divf %206, %207 : vector<16x1xf32>
    %209 = vector.broadcast %208 : vector<16x1xf32> to vector<16x32xf32>
    %210 = arith.subf %204, %209 : vector<16x32xf32>
    %211 = arith.mulf %210, %210 : vector<16x32xf32>
    %cst_131 = arith.constant dense<0.000000e+00> : vector<16xf32>
    %212 = vector.multi_reduction <add>, %211, %cst_131 [1] : vector<16x32xf32> to vector<16xf32>
    %213 = vector.shape_cast %212 : vector<16xf32> to vector<16x1xf32>
    %cst_132 = arith.constant 3.200000e+01 : f32
    %214 = vector.broadcast %cst_132 : f32 to vector<16x1xf32>
    %215 = arith.divf %213, %214 : vector<16x1xf32>
    %216 = vector.broadcast %208 : vector<16x1xf32> to vector<16x32xf32>
    %217 = arith.subf %204, %216 : vector<16x32xf32>
    %cst_133 = arith.constant 9.99999997E-7 : f32
    %218 = vector.broadcast %cst_133 : f32 to vector<16x1xf32>
    %219 = arith.addf %215, %218 : vector<16x1xf32>
    %220 = math.rsqrt %219 : vector<16x1xf32>
    %221 = vector.broadcast %220 : vector<16x1xf32> to vector<16x32xf32>
    %222 = arith.mulf %217, %221 : vector<16x32xf32>
    %c0_134 = arith.constant 0 : index
    %c0_135 = arith.constant 0 : index
    %223 = vector.load %arg12[%c0_134, %c0_135] : memref<1x32xf32, #tpu.memory_space<vmem>>, vector<1x32xf32>
    %224 = vector.broadcast %223 : vector<1x32xf32> to vector<16x32xf32>
    %225 = arith.mulf %222, %224 : vector<16x32xf32>
    %c0_136 = arith.constant 0 : index
    %c0_137 = arith.constant 0 : index
    %226 = vector.load %arg13[%c0_136, %c0_137] : memref<1x32xf32, #tpu.memory_space<vmem>>, vector<1x32xf32>
    %227 = vector.broadcast %226 : vector<1x32xf32> to vector<16x32xf32>
    %228 = arith.addf %225, %227 : vector<16x32xf32>
    %c0_138 = arith.constant 0 : index
    %c0_139 = arith.constant 0 : index
    %c0_140 = arith.constant 0 : index
    %229 = vector.load %arg14[%c0_138, %c0_139, %c0_140] : memref<1x16x32xf32, #tpu.memory_space<vmem>>, vector<1x16x32xf32>
    %230 = vector.shape_cast %229 : vector<1x16x32xf32> to vector<16x32xf32>
    %231 = vector.shape_cast %228 : vector<16x32xf32> to vector<1x16x32xf32>
    tpu.vector_store %arg14[%c0_138, %c0_139, %c0_140], %231 {strides = array<i32>} : memref<1x16x32xf32, #tpu.memory_space<vmem>>, vector<1x16x32xf32>,
    return
  }
  func.func @transform_0(%arg0: i32) -> (i32, i32, i32) {
    %c0_i32 = arith.constant 0 : i32
    %c0_i32_0 = arith.constant 0 : i32
    %c0_i32_1 = arith.constant 0 : i32
    return %arg0, %c0_i32, %c0_i32_0 : i32, i32, i32
  }
  func.func @transform_1(%arg0: i32) -> (i32, i32, i32) {
    %c0_i32 = arith.constant 0 : i32
    %c0_i32_0 = arith.constant 0 : i32
    %c0_i32_1 = arith.constant 0 : i32
    return %arg0, %c0_i32, %c0_i32_0 : i32, i32, i32
  }
  func.func @transform_2(%arg0: i32) -> (i32, i32, i32) {
    %c0_i32 = arith.constant 0 : i32
    %c0_i32_0 = arith.constant 0 : i32
    %c0_i32_1 = arith.constant 0 : i32
    return %arg0, %c0_i32, %c0_i32_0 : i32, i32, i32
  }
  func.func @transform_3(%arg0: i32) -> (i32, i32, i32) {
    %c0_i32 = arith.constant 0 : i32
    %c0_i32_0 = arith.constant 0 : i32
    %c0_i32_1 = arith.constant 0 : i32
    %c0_i32_2 = arith.constant 0 : i32
    return %c0_i32, %c0_i32_0, %c0_i32_1 : i32, i32, i32
  }
  func.func @transform_4(%arg0: i32) -> (i32, i32, i32) {
    %c0_i32 = arith.constant 0 : i32
    %c0_i32_0 = arith.constant 0 : i32
    %c0_i32_1 = arith.constant 0 : i32
    %c0_i32_2 = arith.constant 0 : i32
    return %c0_i32, %c0_i32_0, %c0_i32_1 : i32, i32, i32
  }
  func.func @transform_5(%arg0: i32) -> (i32, i32, i32) {
    %c0_i32 = arith.constant 0 : i32
    %c0_i32_0 = arith.constant 0 : i32
    %c0_i32_1 = arith.constant 0 : i32
    %c0_i32_2 = arith.constant 0 : i32
    return %c0_i32, %c0_i32_0, %c0_i32_1 : i32, i32, i32
  }
  func.func @transform_6(%arg0: i32) -> (i32, i32, i32) {
    %c0_i32 = arith.constant 0 : i32
    %c0_i32_0 = arith.constant 0 : i32
    %c0_i32_1 = arith.constant 0 : i32
    %c0_i32_2 = arith.constant 0 : i32
    return %c0_i32, %c0_i32_0, %c0_i32_1 : i32, i32, i32
  }
  func.func @transform_7(%arg0: i32) -> (i32, i32, i32) {
    %c0_i32 = arith.constant 0 : i32
    %c0_i32_0 = arith.constant 0 : i32
    %c0_i32_1 = arith.constant 0 : i32
    %c0_i32_2 = arith.constant 0 : i32
    return %c0_i32, %c0_i32_0, %c0_i32_1 : i32, i32, i32
  }
  func.func @transform_8(%arg0: i32) -> (i32, i32, i32) {
    %c0_i32 = arith.constant 0 : i32
    %c0_i32_0 = arith.constant 0 : i32
    %c0_i32_1 = arith.constant 0 : i32
    %c0_i32_2 = arith.constant 0 : i32
    return %c0_i32, %c0_i32_0, %c0_i32_1 : i32, i32, i32
  }
  func.func @transform_9(%arg0: i32) -> (i32, i32, i32) {
    %c0_i32 = arith.constant 0 : i32
    %c0_i32_0 = arith.constant 0 : i32
    %c0_i32_1 = arith.constant 0 : i32
    %c0_i32_2 = arith.constant 0 : i32
    return %c0_i32, %c0_i32_0, %c0_i32_1 : i32, i32, i32
  }
  func.func @transform_10(%arg0: i32) -> (i32, i32) {
    %c0_i32 = arith.constant 0 : i32
    %c0_i32_0 = arith.constant 0 : i32
    %c0_i32_1 = arith.constant 0 : i32
    return %c0_i32, %c0_i32_0 : i32, i32
  }
  func.func @transform_11(%arg0: i32) -> (i32, i32) {
    %c0_i32 = arith.constant 0 : i32
    %c0_i32_0 = arith.constant 0 : i32
    %c0_i32_1 = arith.constant 0 : i32
    return %c0_i32, %c0_i32_0 : i32, i32
  }
  func.func @transform_12(%arg0: i32) -> (i32, i32) {
    %c0_i32 = arith.constant 0 : i32
    %c0_i32_0 = arith.constant 0 : i32
    %c0_i32_1 = arith.constant 0 : i32
    return %c0_i32, %c0_i32_0 : i32, i32
  }
  func.func @transform_13(%arg0: i32) -> (i32, i32, i32) {
    %c0_i32 = arith.constant 0 : i32
    %c0_i32_0 = arith.constant 0 : i32
    %c0_i32_1 = arith.constant 0 : i32
    return %arg0, %c0_i32, %c0_i32_0 : i32, i32, i32
  }
}

module attributes {stable_mosaic.version = 11 : i64} {
  func.func @_ffn_ln_kernel(%arg0: i32, %arg1: memref<32x32xf32, #tpu.memory_space<vmem>>, %arg2: memref<32x64xbf16, #tpu.memory_space<vmem>>, %arg3: memref<1x64xf32, #tpu.memory_space<vmem>>, %arg4: memref<64x32xbf16, #tpu.memory_space<vmem>>, %arg5: memref<1x32xf32, #tpu.memory_space<vmem>>, %arg6: memref<1x32xf32, #tpu.memory_space<vmem>>, %arg7: memref<1x32xf32, #tpu.memory_space<vmem>>, %arg8: memref<32x32xf32, #tpu.memory_space<vmem>>) attributes {dimension_semantics = [#tpu.dimension_semantics<parallel>], iteration_bounds = array<i64: 1>, scalar_prefetch = 0 : i64, scratch_operands = 0 : i64, tpu.core_type = #tpu.core_type<tc>, window_params = [{transform_indices = @transform_0, window_bounds = array<i64: 32, 32>}, {pipeline_mode = #tpu.pipeline_mode<synchronous>, transform_indices = @transform_1, window_bounds = array<i64: 32, 64>}, {pipeline_mode = #tpu.pipeline_mode<synchronous>, transform_indices = @transform_2, window_bounds = array<i64: 1, 64>}, {pipeline_mode = #tpu.pipeline_mode<synchronous>, transform_indices = @transform_3, window_bounds = array<i64: 64, 32>}, {pipeline_mode = #tpu.pipeline_mode<synchronous>, transform_indices = @transform_4, window_bounds = array<i64: 1, 32>}, {pipeline_mode = #tpu.pipeline_mode<synchronous>, transform_indices = @transform_5, window_bounds = array<i64: 1, 32>}, {pipeline_mode = #tpu.pipeline_mode<synchronous>, transform_indices = @transform_6, window_bounds = array<i64: 1, 32>}, {transform_indices = @transform_7, window_bounds = array<i64: 32, 32>}]} {
    %c0 = arith.constant 0 : index
    %c0_0 = arith.constant 0 : index
    %0 = vector.load %arg1[%c0, %c0_0] : memref<32x32xf32, #tpu.memory_space<vmem>>, vector<32x32xf32>
    %1 = arith.truncf %0 : vector<32x32xf32> to vector<32x32xbf16>
    %c0_1 = arith.constant 0 : index
    %c0_2 = arith.constant 0 : index
    %2 = vector.load %arg2[%c0_1, %c0_2] : memref<32x64xbf16, #tpu.memory_space<vmem>>, vector<32x64xbf16>
    %cst = arith.constant dense<0.000000e+00> : vector<32x64xf32>
    %3 = tpu.matmul %1, %2, %cst {dimension_numbers = #tpu.dot_dimension_numbers<[1], [0], [0], [1], [0, 0, 1, 1], [], []>} : vector<32x32xbf16>, vector<32x64xbf16>, vector<32x64xf32> -> vector<32x64xf32>
    %c0_3 = arith.constant 0 : index
    %c0_4 = arith.constant 0 : index
    %4 = vector.load %arg3[%c0_3, %c0_4] : memref<1x64xf32, #tpu.memory_space<vmem>>, vector<1x64xf32>
    %5 = vector.broadcast %4 : vector<1x64xf32> to vector<32x64xf32>
    %6 = arith.addf %3, %5 : vector<32x64xf32>
    %cst_5 = arith.constant 0.000000e+00 : f32
    %7 = vector.broadcast %cst_5 : f32 to vector<32x64xf32>
    %8 = arith.maximumf %6, %7 : vector<32x64xf32>
    %9 = arith.truncf %8 : vector<32x64xf32> to vector<32x64xbf16>
    %c0_6 = arith.constant 0 : index
    %c0_7 = arith.constant 0 : index
    %10 = vector.load %arg4[%c0_6, %c0_7] : memref<64x32xbf16, #tpu.memory_space<vmem>>, vector<64x32xbf16>
    %cst_8 = arith.constant dense<0.000000e+00> : vector<32x32xf32>
    %11 = tpu.matmul %9, %10, %cst_8 {dimension_numbers = #tpu.dot_dimension_numbers<[1], [0], [0], [1], [0, 0, 1, 1], [], []>} : vector<32x64xbf16>, vector<64x32xbf16>, vector<32x32xf32> -> vector<32x32xf32>
    %c0_9 = arith.constant 0 : index
    %c0_10 = arith.constant 0 : index
    %12 = vector.load %arg5[%c0_9, %c0_10] : memref<1x32xf32, #tpu.memory_space<vmem>>, vector<1x32xf32>
    %13 = vector.broadcast %12 : vector<1x32xf32> to vector<32x32xf32>
    %14 = arith.addf %11, %13 : vector<32x32xf32>
    %15 = arith.addf %0, %14 : vector<32x32xf32>
    %cst_11 = arith.constant dense<0.000000e+00> : vector<32xf32>
    %16 = vector.multi_reduction <add>, %15, %cst_11 [1] : vector<32x32xf32> to vector<32xf32>
    %17 = vector.shape_cast %16 : vector<32xf32> to vector<32x1xf32>
    %cst_12 = arith.constant 3.200000e+01 : f32
    %18 = vector.broadcast %cst_12 : f32 to vector<32x1xf32>
    %19 = arith.divf %17, %18 : vector<32x1xf32>
    %20 = vector.broadcast %19 : vector<32x1xf32> to vector<32x32xf32>
    %21 = arith.subf %15, %20 : vector<32x32xf32>
    %22 = arith.mulf %21, %21 : vector<32x32xf32>
    %cst_13 = arith.constant dense<0.000000e+00> : vector<32xf32>
    %23 = vector.multi_reduction <add>, %22, %cst_13 [1] : vector<32x32xf32> to vector<32xf32>
    %24 = vector.shape_cast %23 : vector<32xf32> to vector<32x1xf32>
    %cst_14 = arith.constant 3.200000e+01 : f32
    %25 = vector.broadcast %cst_14 : f32 to vector<32x1xf32>
    %26 = arith.divf %24, %25 : vector<32x1xf32>
    %27 = vector.broadcast %19 : vector<32x1xf32> to vector<32x32xf32>
    %28 = arith.subf %15, %27 : vector<32x32xf32>
    %cst_15 = arith.constant 9.99999997E-7 : f32
    %29 = vector.broadcast %cst_15 : f32 to vector<32x1xf32>
    %30 = arith.addf %26, %29 : vector<32x1xf32>
    %31 = math.rsqrt %30 : vector<32x1xf32>
    %32 = vector.broadcast %31 : vector<32x1xf32> to vector<32x32xf32>
    %33 = arith.mulf %28, %32 : vector<32x32xf32>
    %c0_16 = arith.constant 0 : index
    %c0_17 = arith.constant 0 : index
    %34 = vector.load %arg6[%c0_16, %c0_17] : memref<1x32xf32, #tpu.memory_space<vmem>>, vector<1x32xf32>
    %35 = vector.broadcast %34 : vector<1x32xf32> to vector<32x32xf32>
    %36 = arith.mulf %33, %35 : vector<32x32xf32>
    %c0_18 = arith.constant 0 : index
    %c0_19 = arith.constant 0 : index
    %37 = vector.load %arg7[%c0_18, %c0_19] : memref<1x32xf32, #tpu.memory_space<vmem>>, vector<1x32xf32>
    %38 = vector.broadcast %37 : vector<1x32xf32> to vector<32x32xf32>
    %39 = arith.addf %36, %38 : vector<32x32xf32>
    %c0_20 = arith.constant 0 : index
    %c0_21 = arith.constant 0 : index
    %40 = vector.load %arg8[%c0_20, %c0_21] : memref<32x32xf32, #tpu.memory_space<vmem>>, vector<32x32xf32>
    tpu.vector_store %arg8[%c0_20, %c0_21], %39 {strides = array<i32>} : memref<32x32xf32, #tpu.memory_space<vmem>>, vector<32x32xf32>,
    return
  }
  func.func @transform_0(%arg0: i32) -> (i32, i32) {
    %c0_i32 = arith.constant 0 : i32
    %c0_i32_0 = arith.constant 0 : i32
    return %arg0, %c0_i32 : i32, i32
  }
  func.func @transform_1(%arg0: i32) -> (i32, i32) {
    %c0_i32 = arith.constant 0 : i32
    %c0_i32_0 = arith.constant 0 : i32
    %c0_i32_1 = arith.constant 0 : i32
    return %c0_i32, %c0_i32_0 : i32, i32
  }
  func.func @transform_2(%arg0: i32) -> (i32, i32) {
    %c0_i32 = arith.constant 0 : i32
    %c0_i32_0 = arith.constant 0 : i32
    %c0_i32_1 = arith.constant 0 : i32
    return %c0_i32, %c0_i32_0 : i32, i32
  }
  func.func @transform_3(%arg0: i32) -> (i32, i32) {
    %c0_i32 = arith.constant 0 : i32
    %c0_i32_0 = arith.constant 0 : i32
    %c0_i32_1 = arith.constant 0 : i32
    return %c0_i32, %c0_i32_0 : i32, i32
  }
  func.func @transform_4(%arg0: i32) -> (i32, i32) {
    %c0_i32 = arith.constant 0 : i32
    %c0_i32_0 = arith.constant 0 : i32
    %c0_i32_1 = arith.constant 0 : i32
    return %c0_i32, %c0_i32_0 : i32, i32
  }
  func.func @transform_5(%arg0: i32) -> (i32, i32) {
    %c0_i32 = arith.constant 0 : i32
    %c0_i32_0 = arith.constant 0 : i32
    %c0_i32_1 = arith.constant 0 : i32
    return %c0_i32, %c0_i32_0 : i32, i32
  }
  func.func @transform_6(%arg0: i32) -> (i32, i32) {
    %c0_i32 = arith.constant 0 : i32
    %c0_i32_0 = arith.constant 0 : i32
    %c0_i32_1 = arith.constant 0 : i32
    return %c0_i32, %c0_i32_0 : i32, i32
  }
  func.func @transform_7(%arg0: i32) -> (i32, i32) {
    %c0_i32 = arith.constant 0 : i32
    %c0_i32_0 = arith.constant 0 : i32
    return %arg0, %c0_i32 : i32, i32
  }
}

module attributes {stable_mosaic.version = 11 : i64} {
  func.func @_head_kernel(%arg0: i32, %arg1: memref<2x16x32xf32, #tpu.memory_space<vmem>>, %arg2: memref<2x32xf32, #tpu.memory_space<vmem>>, %arg3: memref<64x3xf32, #tpu.memory_space<vmem>>, %arg4: memref<1x3xf32, #tpu.memory_space<vmem>>, %arg5: memref<64x8xf32, #tpu.memory_space<vmem>>, %arg6: memref<1x8xf32, #tpu.memory_space<vmem>>, %arg7: memref<2x3xf32, #tpu.memory_space<vmem>>, %arg8: memref<2x8xf32, #tpu.memory_space<vmem>>) attributes {dimension_semantics = [#tpu.dimension_semantics<arbitrary>], iteration_bounds = array<i64: 1>, scalar_prefetch = 0 : i64, scratch_operands = 0 : i64, tpu.core_type = #tpu.core_type<tc>, window_params = [{pipeline_mode = #tpu.pipeline_mode<synchronous>, transform_indices = @transform_0, window_bounds = array<i64: 2, 16, 32>}, {pipeline_mode = #tpu.pipeline_mode<synchronous>, transform_indices = @transform_1, window_bounds = array<i64: 2, 32>}, {pipeline_mode = #tpu.pipeline_mode<synchronous>, transform_indices = @transform_2, window_bounds = array<i64: 64, 3>}, {pipeline_mode = #tpu.pipeline_mode<synchronous>, transform_indices = @transform_3, window_bounds = array<i64: 1, 3>}, {pipeline_mode = #tpu.pipeline_mode<synchronous>, transform_indices = @transform_4, window_bounds = array<i64: 64, 8>}, {pipeline_mode = #tpu.pipeline_mode<synchronous>, transform_indices = @transform_5, window_bounds = array<i64: 1, 8>}, {pipeline_mode = #tpu.pipeline_mode<synchronous>, transform_indices = @transform_6, window_bounds = array<i64: 2, 3>}, {pipeline_mode = #tpu.pipeline_mode<synchronous>, transform_indices = @transform_7, window_bounds = array<i64: 2, 8>}]} {
    %c0 = arith.constant 0 : index
    %c0_0 = arith.constant 0 : index
    %c0_1 = arith.constant 0 : index
    %0 = vector.load %arg1[%c0, %c0_0, %c0_1] : memref<2x16x32xf32, #tpu.memory_space<vmem>>, vector<2x16x32xf32>
    %cst = arith.constant dense<0.000000e+00> : vector<2x32xf32>
    %1 = vector.multi_reduction <add>, %0, %cst [1] : vector<2x16x32xf32> to vector<2x32xf32>
    %cst_2 = arith.constant 1.600000e+01 : f32
    %2 = vector.broadcast %cst_2 : f32 to vector<2x32xf32>
    %3 = arith.divf %1, %2 : vector<2x32xf32>
    %c0_3 = arith.constant 0 : index
    %c0_4 = arith.constant 0 : index
    %4 = vector.load %arg2[%c0_3, %c0_4] : memref<2x32xf32, #tpu.memory_space<vmem>>, vector<2x32xf32>
    %c0_5 = arith.constant 0 : index
    %c0_6 = arith.constant 0 : index
    %5 = vector.load %arg3[%c0_5, %c0_6] : memref<64x3xf32, #tpu.memory_space<vmem>>, vector<32x3xf32>
    %cst_7 = arith.constant dense<0.000000e+00> : vector<2x3xf32>
    %6 = tpu.matmul %3, %5, %cst_7 {dimension_numbers = #tpu.dot_dimension_numbers<[1], [0], [0], [1], [0, 0, 1, 1], [], []>} : vector<2x32xf32>, vector<32x3xf32>, vector<2x3xf32> -> vector<2x3xf32>
    %c32 = arith.constant 32 : index
    %c0_8 = arith.constant 0 : index
    %7 = vector.load %arg3[%c32, %c0_8] : memref<64x3xf32, #tpu.memory_space<vmem>>, vector<32x3xf32>
    %cst_9 = arith.constant dense<0.000000e+00> : vector<2x3xf32>
    %8 = tpu.matmul %4, %7, %cst_9 {dimension_numbers = #tpu.dot_dimension_numbers<[1], [0], [0], [1], [0, 0, 1, 1], [], []>} : vector<2x32xf32>, vector<32x3xf32>, vector<2x3xf32> -> vector<2x3xf32>
    %9 = arith.addf %6, %8 : vector<2x3xf32>
    %c0_10 = arith.constant 0 : index
    %c0_11 = arith.constant 0 : index
    %10 = vector.load %arg4[%c0_10, %c0_11] : memref<1x3xf32, #tpu.memory_space<vmem>>, vector<1x3xf32>
    %11 = vector.broadcast %10 : vector<1x3xf32> to vector<2x3xf32>
    %12 = arith.addf %9, %11 : vector<2x3xf32>
    %c0_12 = arith.constant 0 : index
    %c0_13 = arith.constant 0 : index
    %13 = vector.load %arg5[%c0_12, %c0_13] : memref<64x8xf32, #tpu.memory_space<vmem>>, vector<32x8xf32>
    %cst_14 = arith.constant dense<0.000000e+00> : vector<2x8xf32>
    %14 = tpu.matmul %3, %13, %cst_14 {dimension_numbers = #tpu.dot_dimension_numbers<[1], [0], [0], [1], [0, 0, 1, 1], [], []>} : vector<2x32xf32>, vector<32x8xf32>, vector<2x8xf32> -> vector<2x8xf32>
    %c32_15 = arith.constant 32 : index
    %c0_16 = arith.constant 0 : index
    %15 = vector.load %arg5[%c32_15, %c0_16] : memref<64x8xf32, #tpu.memory_space<vmem>>, vector<32x8xf32>
    %cst_17 = arith.constant dense<0.000000e+00> : vector<2x8xf32>
    %16 = tpu.matmul %4, %15, %cst_17 {dimension_numbers = #tpu.dot_dimension_numbers<[1], [0], [0], [1], [0, 0, 1, 1], [], []>} : vector<2x32xf32>, vector<32x8xf32>, vector<2x8xf32> -> vector<2x8xf32>
    %17 = arith.addf %14, %16 : vector<2x8xf32>
    %c0_18 = arith.constant 0 : index
    %c0_19 = arith.constant 0 : index
    %18 = vector.load %arg6[%c0_18, %c0_19] : memref<1x8xf32, #tpu.memory_space<vmem>>, vector<1x8xf32>
    %19 = vector.broadcast %18 : vector<1x8xf32> to vector<2x8xf32>
    %20 = arith.addf %17, %19 : vector<2x8xf32>
    %21 = arith.negf %12 : vector<2x3xf32>
    %22 = math.exp %21 : vector<2x3xf32>
    %cst_20 = arith.constant 1.000000e+00 : f32
    %23 = vector.broadcast %cst_20 : f32 to vector<2x3xf32>
    %24 = arith.addf %23, %22 : vector<2x3xf32>
    %25 = arith.divf %23, %24 : vector<2x3xf32>
    %c0_21 = arith.constant 0 : index
    %c0_22 = arith.constant 0 : index
    %26 = vector.load %arg7[%c0_21, %c0_22] : memref<2x3xf32, #tpu.memory_space<vmem>>, vector<2x3xf32>
    tpu.vector_store %arg7[%c0_21, %c0_22], %25 {strides = array<i32>} : memref<2x3xf32, #tpu.memory_space<vmem>>, vector<2x3xf32>,
    %c0_23 = arith.constant 0 : index
    %c0_24 = arith.constant 0 : index
    %27 = vector.load %arg8[%c0_23, %c0_24] : memref<2x8xf32, #tpu.memory_space<vmem>>, vector<2x8xf32>
    tpu.vector_store %arg8[%c0_23, %c0_24], %20 {strides = array<i32>} : memref<2x8xf32, #tpu.memory_space<vmem>>, vector<2x8xf32>,
    return
  }
  func.func @transform_0(%arg0: i32) -> (i32, i32, i32) {
    %c0_i32 = arith.constant 0 : i32
    %c0_i32_0 = arith.constant 0 : i32
    %c0_i32_1 = arith.constant 0 : i32
    %c0_i32_2 = arith.constant 0 : i32
    return %c0_i32, %c0_i32_0, %c0_i32_1 : i32, i32, i32
  }
  func.func @transform_1(%arg0: i32) -> (i32, i32) {
    %c0_i32 = arith.constant 0 : i32
    %c0_i32_0 = arith.constant 0 : i32
    %c0_i32_1 = arith.constant 0 : i32
    return %c0_i32, %c0_i32_0 : i32, i32
  }
  func.func @transform_2(%arg0: i32) -> (i32, i32) {
    %c0_i32 = arith.constant 0 : i32
    %c0_i32_0 = arith.constant 0 : i32
    %c0_i32_1 = arith.constant 0 : i32
    return %c0_i32, %c0_i32_0 : i32, i32
  }
  func.func @transform_3(%arg0: i32) -> (i32, i32) {
    %c0_i32 = arith.constant 0 : i32
    %c0_i32_0 = arith.constant 0 : i32
    %c0_i32_1 = arith.constant 0 : i32
    return %c0_i32, %c0_i32_0 : i32, i32
  }
  func.func @transform_4(%arg0: i32) -> (i32, i32) {
    %c0_i32 = arith.constant 0 : i32
    %c0_i32_0 = arith.constant 0 : i32
    %c0_i32_1 = arith.constant 0 : i32
    return %c0_i32, %c0_i32_0 : i32, i32
  }
  func.func @transform_5(%arg0: i32) -> (i32, i32) {
    %c0_i32 = arith.constant 0 : i32
    %c0_i32_0 = arith.constant 0 : i32
    %c0_i32_1 = arith.constant 0 : i32
    return %c0_i32, %c0_i32_0 : i32, i32
  }
  func.func @transform_6(%arg0: i32) -> (i32, i32) {
    %c0_i32 = arith.constant 0 : i32
    %c0_i32_0 = arith.constant 0 : i32
    %c0_i32_1 = arith.constant 0 : i32
    return %c0_i32, %c0_i32_0 : i32, i32
  }
  func.func @transform_7(%arg0: i32) -> (i32, i32) {
    %c0_i32 = arith.constant 0 : i32
    %c0_i32_0 = arith.constant 0 : i32
    %c0_i32_1 = arith.constant 0 : i32
    return %c0_i32, %c0_i32_0 : i32, i32
  }
}

</mosaic_0001>

<llo_original>
// kernel: forward.10
$region0: #{forward.10}
  #allocation0 [shape = 'u32[]', space=smem, size = 0x4, offset = 0x4, fixed_abs, tag = 'smem constant byte address 0x4 - core index']
  #allocation1 [shape = 'u32[144,128]{1,0:T(1,128)}', space=vmem, size = 0x12000, scoped, tag = 'internal scratch']
  %s0 = inlined_call_operand.vmem [shape: f32[32,4], index: 0, kind: input, shape index: {}]
  %s1 = inlined_call_operand.vmem [shape: bf16[4,32], index: 1, kind: input, shape index: {}]
  %s2 = inlined_call_operand.vmem [shape: f32[1,32], index: 2, kind: input, shape index: {}]
  %s3 = inlined_call_operand.vmem [shape: f32[32,32], index: 3, kind: output, shape index: {}]
  %s4 = sld [smem:[#allocation0]]
  $region22: #{forward.10} parent=0
    _
  %s6 = ssub.s32 1, %s4
  %s7 = scalar_select 0, %s6, %s4
  // Predicated region
  $region2: #{forward.10} parent=0 // pred_check
    _
  $region3: #{forward.10} parent=0 // pred_check_branch
    %9 = sbr.rel (0) target = $region5
  $region4: #{forward.10} parent=0 // pred_region
    _
  $region5: #{forward.10} parent=0 // pred_fallthru
    _
  // Predicated region
  $region6: #{forward.10} parent=0 // pred_check
    _
  $region7: #{forward.10} parent=0 // pred_check_branch
    %11 = sbr.rel (0) target = $region9
  $region8: #{forward.10} parent=0 // pred_region
    _
  $region9: #{forward.10} parent=0 // pred_fallthru
    _
  // Predicated region
  $region10: #{forward.10} parent=0 // pred_check
    _
  $region11: #{forward.10} parent=0 // pred_check_branch
    %13 = sbr.rel (0) target = $region13
  $region12: #{forward.10} parent=0 // pred_region
    _
  $region13: #{forward.10} parent=0 // pred_fallthru
    _
  %v15 = vld [vmem:[%s0] sm:$0xff]
  %v16 = vld [vmem:[%s0 + $0x8] sm:$0xff]
  %v17 = vld [vmem:[%s0 + $0x10] sm:$0xff]
  %v18 = vld [vmem:[%s0 + $0x18] sm:$0xff]
  %v19 = vpack.c.bf16 %v16, %v15
  %v20 = vpack.c.bf16 %v18, %v17
  %v21 = vld [vmem:[%s1] sm:$0x3]
  %v22 = vld [vmem:[%s2] sm:$0x1]
  %v24 = vlaneseq
  %v25 = vshrl.u32 %v24, 7
  %v26 = vsub.s32 0, %v25
  %v27 = vrot.slane %v22, %v26
  %vm29 = vcmask 31744
  %v31 = vsel %vm29, %v19, 0
  %v34 = vsel %vm29, %v20, 0
  %vm36 = vcmask 1041408
  %v38 = vsel %vm36, %v21, 0
  %40 = vmatprep.subr.bf16.mxu0 0
  %41 = vmatpush1.bf16.msra.mxu0 %v38
  %42 = vmatprep.subr.bf16.mxu0 0
  %43 = vmatpush1.bf16.msra.mxu0 0
  %44 = vmatprep.subr.bf16.mxu0 0
  %45 = vmatpush1.bf16.msra.mxu0 0
  %46 = vmatprep.subr.bf16.mxu0 0
  %47 = vmatpush1.bf16.msra.mxu0 0
  %48 = vmatprep.subr.bf16.mxu0 0
  %49 = vmatpush1.bf16.msra.mxu0 0
  %50 = vmatprep.subr.bf16.mxu0 0
  %51 = vmatpush1.bf16.msra.mxu0 0
  %52 = vmatprep.subr.bf16.mxu0 0
  %53 = vmatpush1.bf16.msra.mxu0 0
  %54 = vmatprep.subr.bf16.mxu0 0
  %55 = vmatpush1.bf16.msra.mxu0 0
  %56 = vmatprep.subr.bf16.mxu0 0
  %57 = vmatpush1.bf16.msra.mxu0 0
  %58 = vmatprep.subr.bf16.mxu0 0
  %59 = vmatpush1.bf16.msra.mxu0 0
  %60 = vmatprep.subr.bf16.mxu0 0
  %61 = vmatpush1.bf16.msra.mxu0 0
  %62 = vmatprep.subr.bf16.mxu0 0
  %63 = vmatpush1.bf16.msra.mxu0 0
  %64 = vmatprep.subr.bf16.mxu0 0
  %65 = vmatpush1.bf16.msra.mxu0 0
  %66 = vmatprep.subr.bf16.mxu0 0
  %67 = vmatpush1.bf16.msra.mxu0 0
  %68 = vmatprep.subr.bf16.mxu0 0
  %69 = vmatpush1.bf16.msra.mxu0 0
  %70 = vmatprep.subr.bf16.mxu0 0
  %71 = vmatpush1.bf16.msra.mxu0 0
  %72 = vmatprep.mubr.bf16.mxu0 0
  %73 = vmatmul.mubr.bf16.gmra.mrb[0].mxu0 %v31
  %v74 = vpop.f32.mrb[0].mxu0
  %v75 = vadd.f32 %v27, %v74
  %v76 = vpop.f32.mrb[0].mxu0
  %v77 = vpop.f32.mrb[0].mxu0
  %v78 = vadd.f32 %v27, %v77
  %v79 = vpop.f32.mrb[0].mxu0
  %80 = vmatprep.mubr.bf16.mxu0 0
  %81 = vmatmul.mubr.bf16.gmra.mrb[0].mxu0 %v34
  %v82 = vpop.f32.mrb[0].mxu0
  %v83 = vadd.f32 %v27, %v82
  %v84 = vpop.f32.mrb[0].mxu0
  %v85 = vpop.f32.mrb[0].mxu0
  %v86 = vadd.f32 %v27, %v85
  %v87 = vpop.f32.mrb[0].mxu0
  %88 = vdwg.mxu0
  %vm89 = vcmask 261120
  %90 = vst.msk [vmem:[%s3] sm:$0xff] %vm89, %v75
  %91 = vst.msk [vmem:[%s3 + $0x8] sm:$0xff] %vm89, %v78
  %92 = vst.msk [vmem:[%s3 + $0x10] sm:$0xff] %vm89, %v83
  %93 = vst.msk [vmem:[%s3 + $0x18] sm:$0xff] %vm89, %v86
  // Predicated region
  $region14: #{forward.10} parent=0 // pred_check
    _
  $region15: #{forward.10} parent=0 // pred_check_branch
    %95 = sbr.rel (0) target = $region17
  $region16: #{forward.10} parent=0 // pred_region
    _
  $region17: #{forward.10} parent=0 // pred_fallthru
    _
  // Predicated region
  $region18: #{forward.10} parent=0 // pred_check
    _
  $region19: #{forward.10} parent=0 // pred_check_branch
    %97 = sbr.rel (0) target = $region21
  $region20: #{forward.10} parent=0 // pred_region
    _
  $region21: #{forward.10} parent=0 // pred_fallthru
    _

// kernel: forward.12
$region0: #{forward.12}
  #allocation0 [shape = 'u32[]', space=smem, size = 0x4, offset = 0x4, fixed_abs, tag = 'smem constant byte address 0x4 - core index']
  #allocation1 [shape = 'u32[144,128]{1,0:T(1,128)}', space=vmem, size = 0x12000, scoped, tag = 'internal scratch']
  %s0 = inlined_call_operand.vmem [shape: f32[16,32], index: 0, kind: input, shape index: {}]
  %s1 = inlined_call_operand.vmem [shape: bf16[32,64], index: 1, kind: input, shape index: {}]
  %s2 = inlined_call_operand.vmem [shape: f32[1,64], index: 2, kind: input, shape index: {}]
  %s3 = inlined_call_operand.vmem [shape: bf16[64,32], index: 3, kind: input, shape index: {}]
  %s4 = inlined_call_operand.vmem [shape: f32[1,32], index: 4, kind: input, shape index: {}]
  %s5 = inlined_call_operand.vmem [shape: f32[1,32], index: 5, kind: input, shape index: {}]
  %s6 = inlined_call_operand.vmem [shape: f32[1,32], index: 6, kind: input, shape index: {}]
  %s7 = inlined_call_operand.vmem [shape: f32[16,32], index: 7, kind: output, shape index: {}]
  %s8 = sld [smem:[#allocation0]]
  $region38: #{forward.12} parent=0
    _
  %s10 = ssub.s32 1, %s8
  %s11 = scalar_select 0, %s10, %s8
  // Predicated region
  $region2: #{forward.12} parent=0 // pred_check
    _
  $region3: #{forward.12} parent=0 // pred_check_branch
    %13 = sbr.rel (0) target = $region5
  $region4: #{forward.12} parent=0 // pred_region
    _
  $region5: #{forward.12} parent=0 // pred_fallthru
    _
  // Predicated region
  $region6: #{forward.12} parent=0 // pred_check
    _
  $region7: #{forward.12} parent=0 // pred_check_branch
    %15 = sbr.rel (0) target = $region9
  $region8: #{forward.12} parent=0 // pred_region
    _
  $region9: #{forward.12} parent=0 // pred_fallthru
    _
  // Predicated region
  $region10: #{forward.12} parent=0 // pred_check
    _
  $region11: #{forward.12} parent=0 // pred_check_branch
    %17 = sbr.rel (0) target = $region13
  $region12: #{forward.12} parent=0 // pred_region
    _
  $region13: #{forward.12} parent=0 // pred_fallthru
    _
  // Predicated region
  $region14: #{forward.12} parent=0 // pred_check
    _
  $region15: #{forward.12} parent=0 // pred_check_branch
    %19 = sbr.rel (0) target = $region17
  $region16: #{forward.12} parent=0 // pred_region
    _
  $region17: #{forward.12} parent=0 // pred_fallthru
    _
  // Predicated region
  $region18: #{forward.12} parent=0 // pred_check
    _
  $region19: #{forward.12} parent=0 // pred_check_branch
    %21 = sbr.rel (0) target = $region21
  $region20: #{forward.12} parent=0 // pred_region
    _
  $region21: #{forward.12} parent=0 // pred_fallthru
    _
  // Predicated region
  $region22: #{forward.12} parent=0 // pred_check
    _
  $region23: #{forward.12} parent=0 // pred_check_branch
    %23 = sbr.rel (0) target = $region25
  $region24: #{forward.12} parent=0 // pred_region
    _
  $region25: #{forward.12} parent=0 // pred_fallthru
    _
  // Predicated region
  $region26: #{forward.12} parent=0 // pred_check
    _
  $region27: #{forward.12} parent=0 // pred_check_branch
    %25 = sbr.rel (0) target = $region29
  $region28: #{forward.12} parent=0 // pred_region
    _
  $region29: #{forward.12} parent=0 // pred_fallthru
    _
  %v27 = vld [vmem:[%s0] sm:$0xff]
  %v28 = vld [vmem:[%s0 + $0x8] sm:$0xff]
  %v29 = vpack.c.bf16 %v28, %v27
  %v30 = vld [vmem:[%s1] sm:$0xf]
  %v31 = vld [vmem:[%s1 + $0x4] sm:$0xf]
  %v32 = vld [vmem:[%s1 + $0x8] sm:$0xf]
  %v33 = vld [vmem:[%s1 + $0xc] sm:$0xf]
  %v34 = vld [vmem:[%s2] sm:$0x1]
  %v36 = vlaneseq
  %v37 = vshrl.u32 %v36, 7
  %v38 = vsub.s32 0, %v37
  %v39 = vrot.slane %v34, %v38
  %v45 = vunpack.c.l.b16 %v30
  %v46 = vunpack.c.l.b16 %v31
  %v47 = vunpack.c.l.b16 %v32
  %v48 = vunpack.c.l.b16 %v33
  %v49 = vpack.c.b16 %v46, %v45
  %v50 = vpack.c.b16 %v48, %v47
  %vm53 = vcmask 261120
  %v55 = vsel %vm53, %v29, 0
  %57 = vmatprep.subr.bf16.mxu0 0
  %58 = vmatpush1.bf16.msra.mxu0 %v49
  %59 = vmatprep.subr.bf16.mxu0 0
  %60 = vmatpush1.bf16.msra.mxu0 %v50
  %61 = vmatprep.subr.bf16.mxu0 0
  %62 = vmatpush1.bf16.msra.mxu0 0
  %63 = vmatprep.subr.bf16.mxu0 0
  %64 = vmatpush1.bf16.msra.mxu0 0
  %65 = vmatprep.subr.bf16.mxu0 0
  %66 = vmatpush1.bf16.msra.mxu0 0
  %67 = vmatprep.subr.bf16.mxu0 0
  %68 = vmatpush1.bf16.msra.mxu0 0
  %69 = vmatprep.subr.bf16.mxu0 0
  %70 = vmatpush1.bf16.msra.mxu0 0
  %71 = vmatprep.subr.bf16.mxu0 0
  %72 = vmatpush1.bf16.msra.mxu0 0
  %73 = vmatprep.subr.bf16.mxu0 0
  %74 = vmatpush1.bf16.msra.mxu0 0
  %75 = vmatprep.subr.bf16.mxu0 0
  %76 = vmatpush1.bf16.msra.mxu0 0
  %77 = vmatprep.subr.bf16.mxu0 0
  %78 = vmatpush1.bf16.msra.mxu0 0
  %79 = vmatprep.subr.bf16.mxu0 0
  %80 = vmatpush1.bf16.msra.mxu0 0
  %81 = vmatprep.subr.bf16.mxu0 0
  %82 = vmatpush1.bf16.msra.mxu0 0
  %83 = vmatprep.subr.bf16.mxu0 0
  %84 = vmatpush1.bf16.msra.mxu0 0
  %85 = vmatprep.subr.bf16.mxu0 0
  %86 = vmatpush1.bf16.msra.mxu0 0
  %87 = vmatprep.subr.bf16.mxu0 0
  %88 = vmatpush1.bf16.msra.mxu0 0
  %89 = vmatprep.mubr.bf16.mxu0 0
  %90 = vmatmul.mubr.bf16.gmra.mrb[0].mxu0 %v55
  %v91 = vpop.f32.mrb[0].mxu0
  %v92 = vadd.f32 %v39, %v91
  %v93 = vpop.f32.mrb[0].mxu0
  %v94 = vpop.f32.mrb[0].mxu0
  %v95 = vadd.f32 %v39, %v94
  %v96 = vpop.f32.mrb[0].mxu0
  %97 = vdwg.mxu0
  %v98 = vmax.f32 %v92, 0.0
  %v99 = vmax.f32 %v95, 0.0
  %v100 = vpack.c.bf16 %v99, %v98
  %v101 = vld [vmem:[%s3] sm:$0xf]
  %v102 = vld [vmem:[%s3 + $0x4] sm:$0xf]
  %v103 = vld [vmem:[%s3 + $0x8] sm:$0xf]
  %v104 = vld [vmem:[%s3 + $0xc] sm:$0xf]
  %v105 = vld [vmem:[%s3 + $0x10] sm:$0xf]
  %v106 = vld [vmem:[%s3 + $0x14] sm:$0xf]
  %v107 = vld [vmem:[%s3 + $0x18] sm:$0xf]
  %v108 = vld [vmem:[%s3 + $0x1c] sm:$0xf]
  %v109 = vld [vmem:[%s4] sm:$0x1]
  %v111 = vlaneseq
  %v112 = vshrl.u32 %v111, 7
  %v113 = vsub.s32 0, %v112
  %v114 = vrot.slane %v109, %v113
  %v124 = vunpack.c.l.b16 %v101
  %v125 = vunpack.c.l.b16 %v102
  %v126 = vunpack.c.l.b16 %v103
  %v127 = vunpack.c.l.b16 %v104
  %v128 = vunpack.c.l.b16 %v105
  %v129 = vunpack.c.l.b16 %v106
  %v130 = vunpack.c.l.b16 %v107
  %v131 = vunpack.c.l.b16 %v108
  %v132 = vpack.c.b16 %v125, %v124
  %v133 = vpack.c.b16 %v127, %v126
  %v134 = vpack.c.b16 %v129, %v128
  %v135 = vpack.c.b16 %v131, %v130
  %vm140 = vcmask 523264
  %v142 = vsel %vm140, %v100, 0
  %144 = vmatprep.subr.bf16.mxu0 0
  %145 = vmatpush1.bf16.msra.mxu0 %v132
  %146 = vmatprep.subr.bf16.mxu0 0
  %147 = vmatpush1.bf16.msra.mxu0 %v133
  %148 = vmatprep.subr.bf16.mxu0 0
  %149 = vmatpush1.bf16.msra.mxu0 %v134
  %150 = vmatprep.subr.bf16.mxu0 0
  %151 = vmatpush1.bf16.msra.mxu0 %v135
  %152 = vmatprep.subr.bf16.mxu0 0
  %153 = vmatpush1.bf16.msra.mxu0 0
  %154 = vmatprep.subr.bf16.mxu0 0
  %155 = vmatpush1.bf16.msra.mxu0 0
  %156 = vmatprep.subr.bf16.mxu0 0
  %157 = vmatpush1.bf16.msra.mxu0 0
  %158 = vmatprep.subr.bf16.mxu0 0
  %159 = vmatpush1.bf16.msra.mxu0 0
  %160 = vmatprep.subr.bf16.mxu0 0
  %161 = vmatpush1.bf16.msra.mxu0 0
  %162 = vmatprep.subr.bf16.mxu0 0
  %163 = vmatpush1.bf16.msra.mxu0 0
  %164 = vmatprep.subr.bf16.mxu0 0
  %165 = vmatpush1.bf16.msra.mxu0 0
  %166 = vmatprep.subr.bf16.mxu0 0
  %167 = vmatpush1.bf16.msra.mxu0 0
  %168 = vmatprep.subr.bf16.mxu0 0
  %169 = vmatpush1.bf16.msra.mxu0 0
  %170 = vmatprep.subr.bf16.mxu0 0
  %171 = vmatpush1.bf16.msra.mxu0 0
  %172 = vmatprep.subr.bf16.mxu0 0
  %173 = vmatpush1.bf16.msra.mxu0 0
  %174 = vmatprep.subr.bf16.mxu0 0
  %175 = vmatpush1.bf16.msra.mxu0 0
  %176 = vmatprep.mubr.bf16.mxu0 0
  %177 = vmatmul.mubr.bf16.gmra.mrb[0].mxu0 %v142
  %v178 = vpop.f32.mrb[0].mxu0
  %v179 = vadd.f32 %v114, %v178
  %v180 = vpop.f32.mrb[0].mxu0
  %v181 = vpop.f32.mrb[0].mxu0
  %v182 = vadd.f32 %v114, %v181
  %v183 = vpop.f32.mrb[0].mxu0
  %184 = vdwg.mxu0
  %v185 = vadd.f32 %v27, %v179
  %v186 = vadd.f32 %v28, %v182
  %v187 = vsel %vm53, %v185, 0.0
  %188 = vadd.xlane.f32.xlu0 %v187
  %v189 = vpop.xlane.xlu0 %188
  %v190 = vsel %vm53, %v186, 0.0
  %191 = vadd.xlane.f32.xlu0 %v190
  %v192 = vpop.xlane.xlu0 %191
  %v193 = vrcp.pop 32.0
  %v194 = vmul.f32 %v189, %v193
  %v195 = vmul.f32 %v192, %v193
  %v196 = vsub.f32 %v185, %v194
  %v197 = vsub.f32 %v186, %v195
  %v198 = vmul.f32 %v196, %v196
  %v199 = vmul.f32 %v197, %v197
  %v200 = vsel %vm53, %v198, 0.0
  %201 = vadd.xlane.f32.xlu0 %v200
  %v202 = vpop.xlane.xlu0 %201
  %v203 = vsel %vm53, %v199, 0.0
  %204 = vadd.xlane.f32.xlu0 %v203
  %v205 = vpop.xlane.xlu0 %204
  %v206 = vmul.f32 %v202, %v193
  %v207 = vmul.f32 %v205, %v193
  %v208 = vadd.f32 %v206, 1e-06
  %v209 = vadd.f32 %v207, 1e-06
  %v210 = vrsqrt.pop %v208
  %v211 = vrsqrt.pop %v209
  %v212 = vmul.f32 %v196, %v210
  %v213 = vmul.f32 %v197, %v211
  %v214 = vld [vmem:[%s5] sm:$0x1]
  %v216 = vlaneseq
  %v217 = vshrl.u32 %v216, 7
  %v218 = vsub.s32 0, %v217
  %v219 = vrot.slane %v214, %v218
  %v221 = vmul.f32 %v212, %v219
  %v222 = vmul.f32 %v213, %v219
  %v223 = vld [vmem:[%s6] sm:$0x1]
  %v225 = vlaneseq
  %v226 = vshrl.u32 %v225, 7
  %v227 = vsub.s32 0, %v226
  %v228 = vrot.slane %v223, %v227
  %v230 = vadd.f32 %v221, %v228
  %v231 = vadd.f32 %v222, %v228
  %232 = vst.msk [vmem:[%s7] sm:$0xff] %vm53, %v230
  %233 = vst.msk [vmem:[%s7 + $0x8] sm:$0xff] %vm53, %v231
  // Predicated region
  $region30: #{forward.12} parent=0 // pred_check
    _
  $region31: #{forward.12} parent=0 // pred_check_branch
    %235 = sbr.rel (0) target = $region33
  $region32: #{forward.12} parent=0 // pred_region
    _
  $region33: #{forward.12} parent=0 // pred_fallthru
    _
  // Predicated region
  $region34: #{forward.12} parent=0 // pred_check
    _
  $region35: #{forward.12} parent=0 // pred_check_branch
    %237 = sbr.rel (0) target = $region37
  $region36: #{forward.12} parent=0 // pred_region
    _
  $region37: #{forward.12} parent=0 // pred_fallthru
    _

// kernel: forward.13
$region0: #{forward.13}
  #allocation0 [shape = 'u32[]', space=smem, size = 0x4, offset = 0x4, fixed_abs, tag = 'smem constant byte address 0x4 - core index']
  #allocation1 [shape = 'u32[144,128]{1,0:T(1,128)}', space=vmem, size = 0x12000, scoped, tag = 'internal scratch']
  %s0 = inlined_call_operand.vmem [shape: f32[2,16,32], index: 0, kind: input, shape index: {}, may-alias: {0,1}]
  %s1 = inlined_call_operand.vmem [shape: f32[2,16,32], index: 1, kind: input, shape index: {}, may-alias: {0,1}]
  %s2 = inlined_call_operand.vmem [shape: f32[2,1,16], index: 2, kind: input, shape index: {}]
  %s3 = inlined_call_operand.vmem [shape: bf16[4,32,8], index: 3, kind: input, shape index: {}]
  %s4 = inlined_call_operand.vmem [shape: bf16[4,32,8], index: 4, kind: input, shape index: {}]
  %s5 = inlined_call_operand.vmem [shape: bf16[4,32,8], index: 5, kind: input, shape index: {}]
  %s6 = inlined_call_operand.vmem [shape: f32[4,1,8], index: 6, kind: input, shape index: {}]
  %s7 = inlined_call_operand.vmem [shape: f32[4,1,8], index: 7, kind: input, shape index: {}]
  %s8 = inlined_call_operand.vmem [shape: f32[4,1,8], index: 8, kind: input, shape index: {}]
  %s9 = inlined_call_operand.vmem [shape: bf16[4,8,32], index: 9, kind: input, shape index: {}]
  %s10 = inlined_call_operand.vmem [shape: f32[1,32], index: 10, kind: input, shape index: {}]
  %s11 = inlined_call_operand.vmem [shape: f32[1,32], index: 11, kind: input, shape index: {}]
  %s12 = inlined_call_operand.vmem [shape: f32[1,32], index: 12, kind: input, shape index: {}]
  %s13 = inlined_call_operand.vmem [shape: f32[2,16,32], index: 13, kind: output, shape index: {}]
  %s14 = sld [smem:[#allocation0]]
  $region85: #{forward.13} parent=0
    _
  %s16 = ssub.s32 1, %s14
  %s17 = scalar_select 0, %s16, %s14
  loop: start=0, step=1, limit=4
  $region2: #{forward.13} parent=0 // loop_pre_header
    _
  $region3: #{forward.13} parent=0 // loop_header
    %s19 = sphi 0, %s23
    %p20 = scmp.ge.s32.totalorder %s19, 4
    %s29 = sphi 0, %s31
    %s32 = sphi 0, %s29
    %s33 = sphi 0, %s32
    %s49 = sphi 0, %s33
    %s55 = sphi 0, %s57
    %s58 = sphi 0, %s55
    %s59 = sphi 0, %s58
    %s75 = sphi 0, %s59
    %s81 = sphi 0, %s83
    %s84 = sphi 0, %s81
    %s85 = sphi 0, %s84
    %s101 = sphi 0, %s85
    %s105 = sphi 0, %s105
    %s107 = sphi 0, %s105
    %s108 = sphi 0, %s107
    %s122 = sphi 0, %s108
    %s126 = sphi 0, %s126
    %s128 = sphi 0, %s126
    %s129 = sphi 0, %s128
    %s143 = sphi 0, %s129
    %s147 = sphi 0, %s147
    %s149 = sphi 0, %s147
    %s150 = sphi 0, %s149
    %s164 = sphi 0, %s150
    %s168 = sphi 0, %s168
    %s170 = sphi 0, %s168
    %s171 = sphi 0, %s170
    %s185 = sphi 0, %s171
    %s189 = sphi 0, %s189
    %s191 = sphi 0, %s189
    %s192 = sphi 0, %s191
    %s206 = sphi 0, %s192
    %s210 = sphi 0, %s210
    %s212 = sphi 0, %s210
    %s213 = sphi 0, %s212
    %s227 = sphi 0, %s213
    %s231 = sphi 0, %s231
    %s233 = sphi 0, %s231
    %s234 = sphi 0, %s233
    %s248 = sphi 0, %s234
    %s252 = sphi 0, %s252
    %s254 = sphi 0, %s252
    %s255 = sphi 0, %s254
    %s269 = sphi 0, %s255
    %s273 = sphi 0, %s273
    %s275 = sphi 0, %s273
    %s276 = sphi 0, %s275
    %s290 = sphi 0, %s276
    %s294 = sphi 0, %s294
    %s296 = sphi 0, %s294
    %s297 = sphi 0, %s296
    %s311 = sphi 0, %s297
    %s317 = sphi 0, %s319
    %s320 = sphi 0, %s317
    %s321 = sphi 0, %s320
    %s337 = sphi 0, %s321
  $region4: #{forward.13} parent=0 // loop_header_branch
    %22 = sbr.rel (%p20) target = $region8
  $region5: #{forward.13} parent=0 // loop_body
    %s24 = ssub.s32 %s19, 1
    %s25 = ssub.s32 %s19, 2
    %s26 = sadd.s32 %s19, 1
    %s27 = ssub.s32 %s19, %s26
    %p28 = scmp.eq.s32.totalorder %s27, 0
    %s30 = sadd.s32 %s29, 1
    %s31 = scalar_select %p28, %s29, %s30
    %p34 = pneg %p28
    %p35 = scmp.eq.s32.totalorder %s19, 1
    %p36 = por %p34, %p35
    %p37 = scmp.ne.s32.totalorder %s29, %s32
    %p38 = scmp.eq.s32.totalorder %s19, 0
    %p39 = por %p37, %p38
    %p40 = scmp.ne.s32.totalorder %s29, %s32
    %p41 = scmp.eq.s32.totalorder %s24, 1
    %p42 = por %p40, %p41
    %p43 = scmp.ne.s32.totalorder %s32, %s33
    %p44 = scmp.eq.s32.totalorder %s24, 0
    %p45 = por %p43, %p44
    %p46 = scmp.ne.s32.totalorder %s32, %s33
    %p47 = scmp.eq.s32.totalorder %s25, 1
    %p48 = por %p46, %p47
    %p50 = scmp.ne.s32.totalorder %s33, %s49
    %p51 = scmp.eq.s32.totalorder %s25, 0
    %p52 = por %p50, %p51
    %s53 = ssub.s32 %s19, %s26
    %p54 = scmp.eq.s32.totalorder %s53, 0
    %s56 = sadd.s32 %s55, 1
    %s57 = scalar_select %p54, %s55, %s56
    %p60 = pneg %p54
    %p61 = scmp.eq.s32.totalorder %s19, 1
    %p62 = por %p60, %p61
    %p63 = scmp.ne.s32.totalorder %s55, %s58
    %p64 = scmp.eq.s32.totalorder %s19, 0
    %p65 = por %p63, %p64
    %p66 = scmp.ne.s32.totalorder %s55, %s58
    %p67 = scmp.eq.s32.totalorder %s24, 1
    %p68 = por %p66, %p67
    %p69 = scmp.ne.s32.totalorder %s58, %s59
    %p70 = scmp.eq.s32.totalorder %s24, 0
    %p71 = por %p69, %p70
    %p72 = scmp.ne.s32.totalorder %s58, %s59
    %p73 = scmp.eq.s32.totalorder %s25, 1
    %p74 = por %p72, %p73
    %p76 = scmp.ne.s32.totalorder %s59, %s75
    %p77 = scmp.eq.s32.totalorder %s25, 0
    %p78 = por %p76, %p77
    %s79 = ssub.s32 %s19, %s26
    %p80 = scmp.eq.s32.totalorder %s79, 0
    %s82 = sadd.s32 %s81, 1
    %s83 = scalar_select %p80, %s81, %s82
    %p86 = pneg %p80
    %p87 = scmp.eq.s32.totalorder %s19, 1
    %p88 = por %p86, %p87
    %p89 = scmp.ne.s32.totalorder %s81, %s84
    %p90 = scmp.eq.s32.totalorder %s19, 0
    %p91 = por %p89, %p90
    %p92 = scmp.ne.s32.totalorder %s81, %s84
    %p93 = scmp.eq.s32.totalorder %s24, 1
    %p94 = por %p92, %p93
    %p95 = scmp.ne.s32.totalorder %s84, %s85
    %p96 = scmp.eq.s32.totalorder %s24, 0
    %p97 = por %p95, %p96
    %p98 = scmp.ne.s32.totalorder %s84, %s85
    %p99 = scmp.eq.s32.totalorder %s25, 1
    %p100 = por %p98, %p99
    %p102 = scmp.ne.s32.totalorder %s85, %s101
    %p103 = scmp.eq.s32.totalorder %s25, 0
    %p104 = por %p102, %p103
    %s106 = sadd.s32 %s105, 1
    %p109 = scmp.eq.s32.totalorder %s19, 1
    %p110 = scmp.ne.s32.totalorder %s105, %s107
    %p111 = scmp.eq.s32.totalorder %s19, 0
    %p112 = por %p110, %p111
    %p113 = scmp.ne.s32.totalorder %s105, %s107
    %p114 = scmp.eq.s32.totalorder %s24, 1
    %p115 = por %p113, %p114
    %p116 = scmp.ne.s32.totalorder %s107, %s108
    %p117 = scmp.eq.s32.totalorder %s24, 0
    %p118 = por %p116, %p117
    %p119 = scmp.ne.s32.totalorder %s107, %s108
    %p120 = scmp.eq.s32.totalorder %s25, 1
    %p121 = por %p119, %p120
    %p123 = scmp.ne.s32.totalorder %s108, %s122
    %p124 = scmp.eq.s32.totalorder %s25, 0
    %p125 = por %p123, %p124
    %s127 = sadd.s32 %s126, 1
    %p130 = scmp.eq.s32.totalorder %s19, 1
    %p131 = scmp.ne.s32.totalorder %s126, %s128
    %p132 = scmp.eq.s32.totalorder %s19, 0
    %p133 = por %p131, %p132
    %p134 = scmp.ne.s32.totalorder %s126, %s128
    %p135 = scmp.eq.s32.totalorder %s24, 1
    %p136 = por %p134, %p135
    %p137 = scmp.ne.s32.totalorder %s128, %s129
    %p138 = scmp.eq.s32.totalorder %s24, 0
    %p139 = por %p137, %p138
    %p140 = scmp.ne.s32.totalorder %s128, %s129
    %p141 = scmp.eq.s32.totalorder %s25, 1
    %p142 = por %p140, %p141
    %p144 = scmp.ne.s32.totalorder %s129, %s143
    %p145 = scmp.eq.s32.totalorder %s25, 0
    %p146 = por %p144, %p145
    %s148 = sadd.s32 %s147, 1
    %p151 = scmp.eq.s32.totalorder %s19, 1
    %p152 = scmp.ne.s32.totalorder %s147, %s149
    %p153 = scmp.eq.s32.totalorder %s19, 0
    %p154 = por %p152, %p153
    %p155 = scmp.ne.s32.totalorder %s147, %s149
    %p156 = scmp.eq.s32.totalorder %s24, 1
    %p157 = por %p155, %p156
    %p158 = scmp.ne.s32.totalorder %s149, %s150
    %p159 = scmp.eq.s32.totalorder %s24, 0
    %p160 = por %p158, %p159
    %p161 = scmp.ne.s32.totalorder %s149, %s150
    %p162 = scmp.eq.s32.totalorder %s25, 1
    %p163 = por %p161, %p162
    %p165 = scmp.ne.s32.totalorder %s150, %s164
    %p166 = scmp.eq.s32.totalorder %s25, 0
    %p167 = por %p165, %p166
    %s169 = sadd.s32 %s168, 1
    %p172 = scmp.eq.s32.totalorder %s19, 1
    %p173 = scmp.ne.s32.totalorder %s168, %s170
    %p174 = scmp.eq.s32.totalorder %s19, 0
    %p175 = por %p173, %p174
    %p176 = scmp.ne.s32.totalorder %s168, %s170
    %p177 = scmp.eq.s32.totalorder %s24, 1
    %p178 = por %p176, %p177
    %p179 = scmp.ne.s32.totalorder %s170, %s171
    %p180 = scmp.eq.s32.totalorder %s24, 0
    %p181 = por %p179, %p180
    %p182 = scmp.ne.s32.totalorder %s170, %s171
    %p183 = scmp.eq.s32.totalorder %s25, 1
    %p184 = por %p182, %p183
    %p186 = scmp.ne.s32.totalorder %s171, %s185
    %p187 = scmp.eq.s32.totalorder %s25, 0
    %p188 = por %p186, %p187
    %s190 = sadd.s32 %s189, 1
    %p193 = scmp.eq.s32.totalorder %s19, 1
    %p194 = scmp.ne.s32.totalorder %s189, %s191
    %p195 = scmp.eq.s32.totalorder %s19, 0
    %p196 = por %p194, %p195
    %p197 = scmp.ne.s32.totalorder %s189, %s191
    %p198 = scmp.eq.s32.totalorder %s24, 1
    %p199 = por %p197, %p198
    %p200 = scmp.ne.s32.totalorder %s191, %s192
    %p201 = scmp.eq.s32.totalorder %s24, 0
    %p202 = por %p200, %p201
    %p203 = scmp.ne.s32.totalorder %s191, %s192
    %p204 = scmp.eq.s32.totalorder %s25, 1
    %p205 = por %p203, %p204
    %p207 = scmp.ne.s32.totalorder %s192, %s206
    %p208 = scmp.eq.s32.totalorder %s25, 0
    %p209 = por %p207, %p208
    %s211 = sadd.s32 %s210, 1
    %p214 = scmp.eq.s32.totalorder %s19, 1
    %p215 = scmp.ne.s32.totalorder %s210, %s212
    %p216 = scmp.eq.s32.totalorder %s19, 0
    %p217 = por %p215, %p216
    %p218 = scmp.ne.s32.totalorder %s210, %s212
    %p219 = scmp.eq.s32.totalorder %s24, 1
    %p220 = por %p218, %p219
    %p221 = scmp.ne.s32.totalorder %s212, %s213
    %p222 = scmp.eq.s32.totalorder %s24, 0
    %p223 = por %p221, %p222
    %p224 = scmp.ne.s32.totalorder %s212, %s213
    %p225 = scmp.eq.s32.totalorder %s25, 1
    %p226 = por %p224, %p225
    %p228 = scmp.ne.s32.totalorder %s213, %s227
    %p229 = scmp.eq.s32.totalorder %s25, 0
    %p230 = por %p228, %p229
    %s232 = sadd.s32 %s231, 1
    %p235 = scmp.eq.s32.totalorder %s19, 1
    %p236 = scmp.ne.s32.totalorder %s231, %s233
    %p237 = scmp.eq.s32.totalorder %s19, 0
    %p238 = por %p236, %p237
    %p239 = scmp.ne.s32.totalorder %s231, %s233
    %p240 = scmp.eq.s32.totalorder %s24, 1
    %p241 = por %p239, %p240
    %p242 = scmp.ne.s32.totalorder %s233, %s234
    %p243 = scmp.eq.s32.totalorder %s24, 0
    %p244 = por %p242, %p243
    %p245 = scmp.ne.s32.totalorder %s233, %s234
    %p246 = scmp.eq.s32.totalorder %s25, 1
    %p247 = por %p245, %p246
    %p249 = scmp.ne.s32.totalorder %s234, %s248
    %p250 = scmp.eq.s32.totalorder %s25, 0
    %p251 = por %p249, %p250
    %s253 = sadd.s32 %s252, 1
    %p256 = scmp.eq.s32.totalorder %s19, 1
    %p257 = scmp.ne.s32.totalorder %s252, %s254
    %p258 = scmp.eq.s32.totalorder %s19, 0
    %p259 = por %p257, %p258
    %p260 = scmp.ne.s32.totalorder %s252, %s254
    %p261 = scmp.eq.s32.totalorder %s24, 1
    %p262 = por %p260, %p261
    %p263 = scmp.ne.s32.totalorder %s254, %s255
    %p264 = scmp.eq.s32.totalorder %s24, 0
    %p265 = por %p263, %p264
    %p266 = scmp.ne.s32.totalorder %s254, %s255
    %p267 = scmp.eq.s32.totalorder %s25, 1
    %p268 = por %p266, %p267
    %p270 = scmp.ne.s32.totalorder %s255, %s269
    %p271 = scmp.eq.s32.totalorder %s25, 0
    %p272 = por %p270, %p271
    %s274 = sadd.s32 %s273, 1
    %p277 = scmp.eq.s32.totalorder %s19, 1
    %p278 = scmp.ne.s32.totalorder %s273, %s275
    %p279 = scmp.eq.s32.totalorder %s19, 0
    %p280 = por %p278, %p279
    %p281 = scmp.ne.s32.totalorder %s273, %s275
    %p282 = scmp.eq.s32.totalorder %s24, 1
    %p283 = por %p281, %p282
    %p284 = scmp.ne.s32.totalorder %s275, %s276
    %p285 = scmp.eq.s32.totalorder %s24, 0
    %p286 = por %p284, %p285
    %p287 = scmp.ne.s32.totalorder %s275, %s276
    %p288 = scmp.eq.s32.totalorder %s25, 1
    %p289 = por %p287, %p288
    %p291 = scmp.ne.s32.totalorder %s276, %s290
    %p292 = scmp.eq.s32.totalorder %s25, 0
    %p293 = por %p291, %p292
    %s295 = sadd.s32 %s294, 1
    %p298 = scmp.eq.s32.totalorder %s19, 1
    %p299 = scmp.ne.s32.totalorder %s294, %s296
    %p300 = scmp.eq.s32.totalorder %s19, 0
    %p301 = por %p299, %p300
    %p302 = scmp.ne.s32.totalorder %s294, %s296
    %p303 = scmp.eq.s32.totalorder %s24, 1
    %p304 = por %p302, %p303
    %p305 = scmp.ne.s32.totalorder %s296, %s297
    %p306 = scmp.eq.s32.totalorder %s24, 0
    %p307 = por %p305, %p306
    %p308 = scmp.ne.s32.totalorder %s296, %s297
    %p309 = scmp.eq.s32.totalorder %s25, 1
    %p310 = por %p308, %p309
    %p312 = scmp.ne.s32.totalorder %s297, %s311
    %p313 = scmp.eq.s32.totalorder %s25, 0
    %p314 = por %p312, %p313
    %s315 = ssub.s32 %s19, %s26
    %p316 = scmp.eq.s32.totalorder %s315, 0
    %s318 = sadd.s32 %s317, 1
    %s319 = scalar_select %p316, %s317, %s318
    %p322 = pneg %p316
    %p323 = scmp.eq.s32.totalorder %s19, 1
    %p324 = por %p322, %p323
    %p325 = scmp.ne.s32.totalorder %s317, %s320
    %p326 = scmp.eq.s32.totalorder %s19, 0
    %p327 = por %p325, %p326
    %p328 = scmp.ne.s32.totalorder %s317, %s320
    %p329 = scmp.eq.s32.totalorder %s24, 1
    %p330 = por %p328, %p329
    %p331 = scmp.ne.s32.totalorder %s320, %s321
    %p332 = scmp.eq.s32.totalorder %s24, 0
    %p333 = por %p331, %p332
    %p334 = scmp.ne.s32.totalorder %s320, %s321
    %p335 = scmp.eq.s32.totalorder %s25, 1
    %p336 = por %p334, %p335
    %p338 = scmp.ne.s32.totalorder %s321, %s337
    %p339 = scmp.eq.s32.totalorder %s25, 0
    %p340 = por %p338, %p339
    %p341 = scmp.le.s32.totalorder 1, %s19
    %p342 = scmp.lt.s32.totalorder %s19, 3
    %p343 = pnand %p341, %p342
    %p344 = pneg %p343
    // Predicated region
    $region9: #{forward.13} parent=5 // pred_check
      _
    $region10: #{forward.13} parent=5 // pred_check_branch
      %346 = sbr.rel (%p343) target = $region12
    $region11: #{forward.13} parent=5 // pred_region
      %s347 = ssub.s32 %s19, 1
      // Predicated region
      $region13: #{forward.13} parent=11 // pred_check
        %p348 = pneg %p118
      $region14: #{forward.13} parent=11 // pred_check_branch
        %350 = sbr.rel (%p348) target = $region16
      $region15: #{forward.13} parent=11 // pred_region
        _
      $region16: #{forward.13} parent=11 // pred_fallthru
        _
      // Predicated region
      $region17: #{forward.13} parent=11 // pred_check
        %p351 = pneg %p139
      $region18: #{forward.13} parent=11 // pred_check_branch
        %353 = sbr.rel (%p351) target = $region20
      $region19: #{forward.13} parent=11 // pred_region
        _
      $region20: #{forward.13} parent=11 // pred_fallthru
        _
      // Predicated region
      $region21: #{forward.13} parent=11 // pred_check
        %p354 = pneg %p160
      $region22: #{forward.13} parent=11 // pred_check_branch
        %356 = sbr.rel (%p354) target = $region24
      $region23: #{forward.13} parent=11 // pred_region
        _
      $region24: #{forward.13} parent=11 // pred_fallthru
        _
      // Predicated region
      $region25: #{forward.13} parent=11 // pred_check
        %p357 = pneg %p181
      $region26: #{forward.13} parent=11 // pred_check_branch
        %359 = sbr.rel (%p357) target = $region28
      $region27: #{forward.13} parent=11 // pred_region
        _
      $region28: #{forward.13} parent=11 // pred_fallthru
        _
      // Predicated region
      $region29: #{forward.13} parent=11 // pred_check
        %p360 = pneg %p202
      $region30: #{forward.13} parent=11 // pred_check_branch
        %362 = sbr.rel (%p360) target = $region32
      $region31: #{forward.13} parent=11 // pred_region
        _
      $region32: #{forward.13} parent=11 // pred_fallthru
        _
      // Predicated region
      $region33: #{forward.13} parent=11 // pred_check
        %p363 = pneg %p223
      $region34: #{forward.13} parent=11 // pred_check_branch
        %365 = sbr.rel (%p363) target = $region36
      $region35: #{forward.13} parent=11 // pred_region
        _
      $region36: #{forward.13} parent=11 // pred_fallthru
        _
      // Predicated region
      $region37: #{forward.13} parent=11 // pred_check
        %p366 = pneg %p244
      $region38: #{forward.13} parent=11 // pred_check_branch
        %368 = sbr.rel (%p366) target = $region40
      $region39: #{forward.13} parent=11 // pred_region
        _
      $region40: #{forward.13} parent=11 // pred_fallthru
        _
      // Predicated region
      $region41: #{forward.13} parent=11 // pred_check
        %p369 = pneg %p265
      $region42: #{forward.13} parent=11 // pred_check_branch
        %371 = sbr.rel (%p369) target = $region44
      $region43: #{forward.13} parent=11 // pred_region
        _
      $region44: #{forward.13} parent=11 // pred_fallthru
        _
      // Predicated region
      $region45: #{forward.13} parent=11 // pred_check
        %p372 = pneg %p286
      $region46: #{forward.13} parent=11 // pred_check_branch
        %374 = sbr.rel (%p372) target = $region48
      $region47: #{forward.13} parent=11 // pred_region
        _
      $region48: #{forward.13} parent=11 // pred_fallthru
        _
      // Predicated region
      $region49: #{forward.13} parent=11 // pred_check
        %p375 = pneg %p307
      $region50: #{forward.13} parent=11 // pred_check_branch
        %377 = sbr.rel (%p375) target = $region52
      $region51: #{forward.13} parent=11 // pred_region
        _
      $region52: #{forward.13} parent=11 // pred_fallthru
        _
    $region12: #{forward.13} parent=5 // pred_fallthru
      _
    %p378 = scmp.lt.s32.totalorder %s19, 2
    // Predicated region
    $region53: #{forward.13} parent=5 // pred_check
      %p379 = pneg %p378
    $region54: #{forward.13} parent=5 // pred_check_branch
      %381 = sbr.rel (%p379) target = $region56
    $region55: #{forward.13} parent=5 // pred_region
      // Predicated region
      $region57: #{forward.13} parent=55 // pred_check
        %p382 = pneg %p39
      $region58: #{forward.13} parent=55 // pred_check_branch
        %384 = sbr.rel (%p382) target = $region60
      $region59: #{forward.13} parent=55 // pred_region
        %p385 = scmp.lt.s32.totalorder %s19, 1
        %s386 = scalar_select %p385, %s19, 1
        %s387 = smul.addr %s386, 2
        %s388 = smul.addr %s387, 8
        %s389 = scalar_lea.vmem %s0, %s388
      $region60: #{forward.13} parent=55 // pred_fallthru
        _
      // Predicated region
      $region61: #{forward.13} parent=55 // pred_check
        %p390 = pneg %p65
      $region62: #{forward.13} parent=55 // pred_check_branch
        %392 = sbr.rel (%p390) target = $region64
      $region63: #{forward.13} parent=55 // pred_region
        %p393 = scmp.lt.s32.totalorder %s19, 1
        %s394 = scalar_select %p393, %s19, 1
        %s395 = smul.addr %s394, 2
        %s396 = smul.addr %s395, 8
        %s397 = scalar_lea.vmem %s1, %s396
      $region64: #{forward.13} parent=55 // pred_fallthru
        _
      // Predicated region
      $region65: #{forward.13} parent=55 // pred_check
        %p398 = pneg %p91
      $region66: #{forward.13} parent=55 // pred_check_branch
        %400 = sbr.rel (%p398) target = $region68
      $region67: #{forward.13} parent=55 // pred_region
        %p401 = scmp.lt.s32.totalorder %s19, 1
        %s402 = scalar_select %p401, %s19, 1
        %s403 = scalar_lea.vmem %s2, %s402
      $region68: #{forward.13} parent=55 // pred_fallthru
        _
    $region56: #{forward.13} parent=5 // pred_fallthru
      _
    %p404 = scmp.le.s32.totalorder 1, %s19
    %p405 = scmp.lt.s32.totalorder %s19, 3
    %p406 = pnand %p404, %p405
    %p407 = pneg %p406
    // Predicated region
    $region69: #{forward.13} parent=5 // pred_check
      _
    $region70: #{forward.13} parent=5 // pred_check_branch
      %409 = sbr.rel (%p406) target = $region72
    $region71: #{forward.13} parent=5 // pred_region
      %s410 = ssub.s32 %s19, 1
      %p411 = scmp.lt.s32.totalorder %s24, 1
      %s412 = scalar_select %p411, %s24, 1
      %s413 = smul.addr %s412, 2
      %s414 = smul.addr %s413, 8
      %s415 = scalar_lea.vmem %s0, %s414
      %p416 = pneg %p45
      %p417 = pneg %p42
      %p418 = scmp.lt.s32.totalorder %s24, 1
      %s419 = scalar_select %p418, %s24, 1
      %s420 = smul.addr %s419, 2
      %s421 = smul.addr %s420, 8
      %s422 = scalar_lea.vmem %s1, %s421
      %p423 = pneg %p71
      %p424 = pneg %p68
      %p425 = scmp.lt.s32.totalorder %s24, 1
      %s426 = scalar_select %p425, %s24, 1
      %s427 = scalar_lea.vmem %s2, %s426
      %p428 = pneg %p97
      %p429 = pneg %p94
      %p430 = pneg %p118
      %p431 = pneg %p115
      %p432 = pneg %p139
      %p433 = pneg %p136
      %p434 = pneg %p160
      %p435 = pneg %p157
      %p436 = pneg %p181
      %p437 = pneg %p178
      %p438 = pneg %p202
      %p439 = pneg %p199
      %p440 = pneg %p223
      %p441 = pneg %p220
      %p442 = pneg %p244
      %p443 = pneg %p241
      %p444 = pneg %p265
      %p445 = pneg %p262
      %p446 = pneg %p286
      %p447 = pneg %p283
      %p448 = pneg %p307
      %p449 = pneg %p304
      %p450 = pneg %p333
      %p451 = pneg %p330
      %p452 = scmp.lt.s32.totalorder %s24, 1
      %s453 = scalar_select %p452, %s24, 1
      %s454 = smul.addr %s453, 2
      %s455 = smul.addr %s454, 8
      %s456 = scalar_lea.vmem %s13, %s455
      %p457 = scmp.lt.s32.totalorder %s24, 1
      %s458 = scalar_select %p457, %s24, 1
      %s459 = smul.addr %s458, 2
      %s460 = smul.addr %s459, 8
      %s461 = scalar_lea.vmem %s0, %s460
      %p462 = scmp.lt.s32.totalorder %s24, 1
      %s463 = scalar_select %p462, %s24, 1
      %s464 = smul.addr %s463, 2
      %s465 = smul.addr %s464, 8
      %s466 = scalar_lea.vmem %s1, %s465
      %p467 = scmp.lt.s32.totalorder %s24, 1
      %s468 = scalar_select %p467, %s24, 1
      %s469 = scalar_lea.vmem %s2, %s468
      %p470 = scmp.lt.s32.totalorder %s24, 1
      %s471 = scalar_select %p470, %s24, 1
      %s472 = smul.addr %s471, 2
      %s473 = smul.addr %s472, 8
      %s474 = scalar_lea.vmem %s13, %s473
      %v476 = vld [vmem:[%s461] sm:$0xff]
      %v477 = vld [vmem:[%s461 + $0x8] sm:$0xff]
      %v478 = vld [vmem:[%s466] sm:$0xff]
      %v479 = vld [vmem:[%s466 + $0x8] sm:$0xff]
      %v480 = vld [vmem:[%s469] sm:$0x1]
      %v481 = vsub.f32 1.0, %v480
      %v482 = vmul.f32 %v481, -1e+09
      %v483 = vpack.c.bf16 %v477, %v476
      %v484 = vpack.c.bf16 %v479, %v478
      %v485 = vld [vmem:[%s3] sm:$0xf]
      %v486 = vld [vmem:[%s3 + $0x4] sm:$0xf]
      %v487 = vld [vmem:[%s3 + $0x8] sm:$0xf]
      %v488 = vld [vmem:[%s3 + $0xc] sm:$0xf]
      %v489 = vld [vmem:[%s6] sm:$0x1]
      %v491 = vlaneseq
      %v492 = vshrl.u32 %v491, 7
      %v493 = vsub.s32 0, %v492
      %v494 = vrot.slane %v489, %v493
      %v500 = vunpack.c.l.b16 %v485
      %v501 = vunpack.c.l.b16 %v486
      %v502 = vunpack.c.l.b16 %v487
      %v503 = vunpack.c.l.b16 %v488
      %v504 = vpack.c.b16 %v501, %v500
      %v505 = vpack.c.b16 %v503, %v502
      %vm508 = vcmask 261120
      %v510 = vsel %vm508, %v483, 0
      %512 = vmatprep.subr.bf16.mxu0 0
      %513 = vmatpush1.bf16.msra.mxu0 %v504
      %514 = vmatprep.subr.bf16.mxu0 0
      %515 = vmatpush1.bf16.msra.mxu0 %v505
      %516 = vmatprep.subr.bf16.mxu0 0
      %517 = vmatpush1.bf16.msra.mxu0 0
      %518 = vmatprep.subr.bf16.mxu0 0
      %519 = vmatpush1.bf16.msra.mxu0 0
      %520 = vmatprep.subr.bf16.mxu0 0
      %521 = vmatpush1.bf16.msra.mxu0 0
      %522 = vmatprep.subr.bf16.mxu0 0
      %523 = vmatpush1.bf16.msra.mxu0 0
      %524 = vmatprep.subr.bf16.mxu0 0
      %525 = vmatpush1.bf16.msra.mxu0 0
      %526 = vmatprep.subr.bf16.mxu0 0
      %527 = vmatpush1.bf16.msra.mxu0 0
      %528 = vmatprep.subr.bf16.mxu0 0
      %529 = vmatpush1.bf16.msra.mxu0 0
      %530 = vmatprep.subr.bf16.mxu0 0
      %531 = vmatpush1.bf16.msra.mxu0 0
      %532 = vmatprep.subr.bf16.mxu0 0
      %533 = vmatpush1.bf16.msra.mxu0 0
      %534 = vmatprep.subr.bf16.mxu0 0
      %535 = vmatpush1.bf16.msra.mxu0 0
      %536 = vmatprep.subr.bf16.mxu0 0
      %537 = vmatpush1.bf16.msra.mxu0 0
      %538 = vmatprep.subr.bf16.mxu0 0
      %539 = vmatpush1.bf16.msra.mxu0 0
      %540 = vmatprep.subr.bf16.mxu0 0
      %541 = vmatpush1.bf16.msra.mxu0 0
      %542 = vmatprep.subr.bf16.mxu0 0
      %543 = vmatpush1.bf16.msra.mxu0 0
      %544 = vmatprep.mubr.bf16.mxu0 0
      %545 = vmatmul.mubr.bf16.gmra.mrb[0].mxu0 %v510
      %v546 = vpop.f32.mrb[0].mxu0
      %v547 = vadd.f32 %v494, %v546
      %v548 = vpop.f32.mrb[0].mxu0
      %v549 = vpop.f32.mrb[0].mxu0
      %v550 = vadd.f32 %v494, %v549
      %v551 = vpop.f32.mrb[0].mxu0
      %552 = vdwg.mxu0
      %v553 = vld [vmem:[%s4] sm:$0xf]
      %v554 = vld [vmem:[%s4 + $0x4] sm:$0xf]
      %v555 = vld [vmem:[%s4 + $0x8] sm:$0xf]
      %v556 = vld [vmem:[%s4 + $0xc] sm:$0xf]
      %v557 = vld [vmem:[%s7] sm:$0x1]
      %v559 = vlaneseq
      %v560 = vshrl.u32 %v559, 7
      %v561 = vsub.s32 0, %v560
      %v562 = vrot.slane %v557, %v561
      %v568 = vunpack.c.l.b16 %v553
      %v569 = vunpack.c.l.b16 %v554
      %v570 = vunpack.c.l.b16 %v555
      %v571 = vunpack.c.l.b16 %v556
      %v572 = vpack.c.b16 %v569, %v568
      %v573 = vpack.c.b16 %v571, %v570
      %v577 = vsel %vm508, %v484, 0
      %579 = vmatprep.subr.bf16.mxu0 0
      %580 = vmatpush1.bf16.msra.mxu0 %v572
      %581 = vmatprep.subr.bf16.mxu0 0
      %582 = vmatpush1.bf16.msra.mxu0 %v573
      %583 = vmatprep.subr.bf16.mxu0 0
      %584 = vmatpush1.bf16.msra.mxu0 0
      %585 = vmatprep.subr.bf16.mxu0 0
      %586 = vmatpush1.bf16.msra.mxu0 0
      %587 = vmatprep.subr.bf16.mxu0 0
      %588 = vmatpush1.bf16.msra.mxu0 0
      %589 = vmatprep.subr.bf16.mxu0 0
      %590 = vmatpush1.bf16.msra.mxu0 0
      %591 = vmatprep.subr.bf16.mxu0 0
      %592 = vmatpush1.bf16.msra.mxu0 0
      %593 = vmatprep.subr.bf16.mxu0 0
      %594 = vmatpush1.bf16.msra.mxu0 0
      %595 = vmatprep.subr.bf16.mxu0 0
      %596 = vmatpush1.bf16.msra.mxu0 0
      %597 = vmatprep.subr.bf16.mxu0 0
      %598 = vmatpush1.bf16.msra.mxu0 0
      %599 = vmatprep.subr.bf16.mxu0 0
      %600 = vmatpush1.bf16.msra.mxu0 0
      %601 = vmatprep.subr.bf16.mxu0 0
      %602 = vmatpush1.bf16.msra.mxu0 0
      %603 = vmatprep.subr.bf16.mxu0 0
      %604 = vmatpush1.bf16.msra.mxu0 0
      %605 = vmatprep.subr.bf16.mxu0 0
      %606 = vmatpush1.bf16.msra.mxu0 0
      %607 = vmatprep.subr.bf16.mxu0 0
      %608 = vmatpush1.bf16.msra.mxu0 0
      %609 = vmatprep.subr.bf16.mxu0 0
      %610 = vmatpush1.bf16.msra.mxu0 0
      %611 = vmatprep.mubr.bf16.mxu0 0
      %612 = vmatmul.mubr.bf16.gmra.mrb[0].mxu0 %v577
      %v613 = vpop.f32.mrb[0].mxu0
      %v614 = vadd.f32 %v562, %v613
      %v615 = vpop.f32.mrb[0].mxu0
      %v616 = vpop.f32.mrb[0].mxu0
      %v617 = vadd.f32 %v562, %v616
      %v618 = vpop.f32.mrb[0].mxu0
      %619 = vdwg.mxu0
      %v620 = vld [vmem:[%s5] sm:$0xf]
      %v621 = vld [vmem:[%s5 + $0x4] sm:$0xf]
      %v622 = vld [vmem:[%s5 + $0x8] sm:$0xf]
      %v623 = vld [vmem:[%s5 + $0xc] sm:$0xf]
      %v624 = vld [vmem:[%s8] sm:$0x1]
      %v626 = vlaneseq
      %v627 = vshrl.u32 %v626, 7
      %v628 = vsub.s32 0, %v627
      %v629 = vrot.slane %v624, %v628
      %v635 = vunpack.c.l.b16 %v620
      %v636 = vunpack.c.l.b16 %v621
      %v637 = vunpack.c.l.b16 %v622
      %v638 = vunpack.c.l.b16 %v623
      %v639 = vpack.c.b16 %v636, %v635
      %v640 = vpack.c.b16 %v638, %v637
      %643 = vmatprep.subr.bf16.mxu0 0
      %644 = vmatpush1.bf16.msra.mxu0 %v639
      %645 = vmatprep.subr.bf16.mxu0 0
      %646 = vmatpush1.bf16.msra.mxu0 %v640
      %647 = vmatprep.subr.bf16.mxu0 0
      %648 = vmatpush1.bf16.msra.mxu0 0
      %649 = vmatprep.subr.bf16.mxu0 0
      %650 = vmatpush1.bf16.msra.mxu0 0
      %651 = vmatprep.subr.bf16.mxu0 0
      %652 = vmatpush1.bf16.msra.mxu0 0
      %653 = vmatprep.subr.bf16.mxu0 0
      %654 = vmatpush1.bf16.msra.mxu0 0
      %655 = vmatprep.subr.bf16.mxu0 0
      %656 = vmatpush1.bf16.msra.mxu0 0
      %657 = vmatprep.subr.bf16.mxu0 0
      %658 = vmatpush1.bf16.msra.mxu0 0
      %659 = vmatprep.subr.bf16.mxu0 0
      %660 = vmatpush1.bf16.msra.mxu0 0
      %661 = vmatprep.subr.bf16.mxu0 0
      %662 = vmatpush1.bf16.msra.mxu0 0
      %663 = vmatprep.subr.bf16.mxu0 0
      %664 = vmatpush1.bf16.msra.mxu0 0
      %665 = vmatprep.subr.bf16.mxu0 0
      %666 = vmatpush1.bf16.msra.mxu0 0
      %667 = vmatprep.subr.bf16.mxu0 0
      %668 = vmatpush1.bf16.msra.mxu0 0
      %669 = vmatprep.subr.bf16.mxu0 0
      %670 = vmatpush1.bf16.msra.mxu0 0
      %671 = vmatprep.subr.bf16.mxu0 0
      %672 = vmatpush1.bf16.msra.mxu0 0
      %673 = vmatprep.subr.bf16.mxu0 0
      %674 = vmatpush1.bf16.msra.mxu0 0
      %675 = vmatprep.mubr.bf16.mxu0 0
      %676 = vmatmul.mubr.bf16.gmra.mrb[0].mxu0 %v577
      %v677 = vpop.f32.mrb[0].mxu0
      %v678 = vadd.f32 %v629, %v677
      %v679 = vpop.f32.mrb[0].mxu0
      %v680 = vpop.f32.mrb[0].mxu0
      %v681 = vadd.f32 %v629, %v680
      %v682 = vpop.f32.mrb[0].mxu0
      %683 = vdwg.mxu0
      %v684 = vpack.c.bf16 %v550, %v547
      %v685 = vpack.c.bf16 %v617, %v614
      %vm686 = vcmask 64512
      %v688 = vsel %vm686, %v684, 0
      %v691 = vsel %vm686, %v685, 0
      %693 = vmatprep.subr.bf16.mxu0 0
      %694 = vmatpush1.bf16.xpose.msra.mxu0 %v691
      %695 = vmatprep.subr.bf16.mxu0 0
      %696 = vmatpush1.bf16.xpose.msra.mxu0 0
      %697 = vmatprep.subr.bf16.mxu0 0
      %698 = vmatpush1.bf16.xpose.msra.mxu0 0
      %699 = vmatprep.subr.bf16.mxu0 0
      %700 = vmatpush1.bf16.xpose.msra.mxu0 0
      %701 = vmatprep.subr.bf16.mxu0 0
      %702 = vmatpush1.bf16.xpose.msra.mxu0 0
      %703 = vmatprep.subr.bf16.mxu0 0
      %704 = vmatpush1.bf16.xpose.msra.mxu0 0
      %705 = vmatprep.subr.bf16.mxu0 0
      %706 = vmatpush1.bf16.xpose.msra.mxu0 0
      %707 = vmatprep.subr.bf16.mxu0 0
      %708 = vmatpush1.bf16.xpose.msra.mxu0 0
      %709 = vmatprep.subr.bf16.mxu0 0
      %710 = vmatpush1.bf16.xpose.msra.mxu0 0
      %711 = vmatprep.subr.bf16.mxu0 0
      %712 = vmatpush1.bf16.xpose.msra.mxu0 0
      %713 = vmatprep.subr.bf16.mxu0 0
      %714 = vmatpush1.bf16.xpose.msra.mxu0 0
      %715 = vmatprep.subr.bf16.mxu0 0
      %716 = vmatpush1.bf16.xpose.msra.mxu0 0
      %717 = vmatprep.subr.bf16.mxu0 0
      %718 = vmatpush1.bf16.xpose.msra.mxu0 0
      %719 = vmatprep.subr.bf16.mxu0 0
      %720 = vmatpush1.bf16.xpose.msra.mxu0 0
      %721 = vmatprep.subr.bf16.mxu0 0
      %722 = vmatpush1.bf16.xpose.msra.mxu0 0
      %723 = vmatprep.subr.bf16.mxu0 0
      %724 = vmatpush1.bf16.xpose.msra.mxu0 0
      %725 = vmatprep.mubr.bf16.mxu0 0
      %726 = vmatmul.mubr.bf16.gmra.mrb[0].mxu0 %v688
      %v727 = vpop.f32.mrb[0].mxu0
      %v728 = vadd.f32 0.0, %v727
      %v729 = vpop.f32.mrb[0].mxu0
      %v730 = vpop.f32.mrb[0].mxu0
      %v731 = vadd.f32 0.0, %v730
      %v732 = vpop.f32.mrb[0].mxu0
      %733 = vdwg.mxu0
      %v734 = vmul.f32 %v728, 0.35355338
      %v735 = vmul.f32 %v731, 0.35355338
      %v737 = vlaneseq
      %v738 = vshrl.u32 %v737, 7
      %v739 = vsub.s32 0, %v738
      %v740 = vrot.slane %v482, %v739
      %v742 = vadd.f32 %v734, %v740
      %v743 = vadd.f32 %v735, %v740
      %vm744 = vcmask 130048
      %v745 = vsel %vm744, %v742, -inf
      %746 = vmax.xlane.f32.xlu0 %v745
      %v747 = vpop.xlane.xlu0 %746
      %v748 = vsel %vm744, %v743, -inf
      %749 = vmax.xlane.f32.xlu0 %v748
      %v750 = vpop.xlane.xlu0 %749
      %v751 = vsub.f32 %v742, %v747
      %v752 = vsub.f32 %v743, %v750
      %v753 = vmul.f32 %v751, 1.442695
      %v754 = vpow.pop %v753
      %v755 = vmul.f32 %v752, 1.442695
      %v756 = vpow.pop %v755
      %v757 = vsel %vm744, %v754, 0.0
      %758 = vadd.xlane.f32.xlu0 %v757
      %v759 = vpop.xlane.xlu0 %758
      %v760 = vsel %vm744, %v756, 0.0
      %761 = vadd.xlane.f32.xlu0 %v760
      %v762 = vpop.xlane.xlu0 %761
      %v763 = vrcp.pop %v759
      %v764 = vrcp.pop %v762
      %v765 = vmul.f32 %v754, %v763
      %v766 = vmul.f32 %v756, %v764
      %v767 = vpack.c.bf16 %v766, %v765
      %v768 = vpack.c.bf16 %v681, %v678
      %v770 = vsel %vm744, %v767, 0
      %772 = vmatprep.subr.bf16.mxu0 0
      %773 = vmatpush1.bf16.msra.mxu0 %v768
      %774 = vmatprep.subr.bf16.mxu0 0
      %775 = vmatpush1.bf16.msra.mxu0 0
      %776 = vmatprep.subr.bf16.mxu0 0
      %777 = vmatpush1.bf16.msra.mxu0 0
      %778 = vmatprep.subr.bf16.mxu0 0
      %779 = vmatpush1.bf16.msra.mxu0 0
      %780 = vmatprep.subr.bf16.mxu0 0
      %781 = vmatpush1.bf16.msra.mxu0 0
      %782 = vmatprep.subr.bf16.mxu0 0
      %783 = vmatpush1.bf16.msra.mxu0 0
      %784 = vmatprep.subr.bf16.mxu0 0
      %785 = vmatpush1.bf16.msra.mxu0 0
      %786 = vmatprep.subr.bf16.mxu0 0
      %787 = vmatpush1.bf16.msra.mxu0 0
      %788 = vmatprep.subr.bf16.mxu0 0
      %789 = vmatpush1.bf16.msra.mxu0 0
      %790 = vmatprep.subr.bf16.mxu0 0
      %791 = vmatpush1.bf16.msra.mxu0 0
      %792 = vmatprep.subr.bf16.mxu0 0
      %793 = vmatpush1.bf16.msra.mxu0 0
      %794 = vmatprep.subr.bf16.mxu0 0
      %795 = vmatpush1.bf16.msra.mxu0 0
      %796 = vmatprep.subr.bf16.mxu0 0
      %797 = vmatpush1.bf16.msra.mxu0 0
      %798 = vmatprep.subr.bf16.mxu0 0
      %799 = vmatpush1.bf16.msra.mxu0 0
      %800 = vmatprep.subr.bf16.mxu0 0
      %801 = vmatpush1.bf16.msra.mxu0 0
      %802 = vmatprep.subr.bf16.mxu0 0
      %803 = vmatpush1.bf16.msra.mxu0 0
      %804 = vmatprep.mubr.bf16.mxu0 0
      %805 = vmatmul.mubr.bf16.gmra.mrb[0].mxu0 %v770
      %v806 = vpop.f32.mrb[0].mxu0
      %v807 = vadd.f32 0.0, %v806
      %v808 = vpop.f32.mrb[0].mxu0
      %v809 = vpop.f32.mrb[0].mxu0
      %v810 = vadd.f32 0.0, %v809
      %v811 = vpop.f32.mrb[0].mxu0
      %812 = vdwg.mxu0
      %v813 = vpack.c.bf16 %v810, %v807
      %v814 = vld [vmem:[%s9] sm:$0xf]
      %s815 = scalar_lea.vmem %s3, 16
      %v816 = vld [vmem:[%s815] sm:$0xf]
      %v817 = vld [vmem:[%s815 + $0x4] sm:$0xf]
      %v818 = vld [vmem:[%s815 + $0x8] sm:$0xf]
      %v819 = vld [vmem:[%s815 + $0xc] sm:$0xf]
      %s820 = scalar_lea.vmem %s6, 1
      %v821 = vld [vmem:[%s820] sm:$0x1]
      %v823 = vlaneseq
      %v824 = vshrl.u32 %v823, 7
      %v825 = vsub.s32 0, %v824
      %v826 = vrot.slane %v821, %v825
      %v832 = vunpack.c.l.b16 %v816
      %v833 = vunpack.c.l.b16 %v817
      %v834 = vunpack.c.l.b16 %v818
      %v835 = vunpack.c.l.b16 %v819
      %v836 = vpack.c.b16 %v833, %v832
      %v837 = vpack.c.b16 %v835, %v834
      %840 = vmatprep.subr.bf16.mxu0 0
      %841 = vmatpush1.bf16.msra.mxu0 %v836
      %842 = vmatprep.subr.bf16.mxu0 0
      %843 = vmatpush1.bf16.msra.mxu0 %v837
      %844 = vmatprep.subr.bf16.mxu0 0
      %845 = vmatpush1.bf16.msra.mxu0 0
      %846 = vmatprep.subr.bf16.mxu0 0
      %847 = vmatpush1.bf16.msra.mxu0 0
      %848 = vmatprep.subr.bf16.mxu0 0
      %849 = vmatpush1.bf16.msra.mxu0 0
      %850 = vmatprep.subr.bf16.mxu0 0
      %851 = vmatpush1.bf16.msra.mxu0 0
      %852 = vmatprep.subr.bf16.mxu0 0
      %853 = vmatpush1.bf16.msra.mxu0 0
      %854 = vmatprep.subr.bf16.mxu0 0
      %855 = vmatpush1.bf16.msra.mxu0 0
      %856 = vmatprep.subr.bf16.mxu0 0
      %857 = vmatpush1.bf16.msra.mxu0 0
      %858 = vmatprep.subr.bf16.mxu0 0
      %859 = vmatpush1.bf16.msra.mxu0 0
      %860 = vmatprep.subr.bf16.mxu0 0
      %861 = vmatpush1.bf16.msra.mxu0 0
      %862 = vmatprep.subr.bf16.mxu0 0
      %863 = vmatpush1.bf16.msra.mxu0 0
      %864 = vmatprep.subr.bf16.mxu0 0
      %865 = vmatpush1.bf16.msra.mxu0 0
      %866 = vmatprep.subr.bf16.mxu0 0
      %867 = vmatpush1.bf16.msra.mxu0 0
      %868 = vmatprep.subr.bf16.mxu0 0
      %869 = vmatpush1.bf16.msra.mxu0 0
      %870 = vmatprep.subr.bf16.mxu0 0
      %871 = vmatpush1.bf16.msra.mxu0 0
      %872 = vmatprep.mubr.bf16.mxu0 0
      %873 = vmatmul.mubr.bf16.gmra.mrb[0].mxu0 %v510
      %v874 = vpop.f32.mrb[0].mxu0
      %v875 = vadd.f32 %v826, %v874
      %v876 = vpop.f32.mrb[0].mxu0
      %v877 = vpop.f32.mrb[0].mxu0
      %v878 = vadd.f32 %v826, %v877
      %v879 = vpop.f32.mrb[0].mxu0
      %880 = vdwg.mxu0
      %s881 = scalar_lea.vmem %s4, 16
      %v882 = vld [vmem:[%s881] sm:$0xf]
      %v883 = vld [vmem:[%s881 + $0x4] sm:$0xf]
      %v884 = vld [vmem:[%s881 + $0x8] sm:$0xf]
      %v885 = vld [vmem:[%s881 + $0xc] sm:$0xf]
      %s886 = scalar_lea.vmem %s7, 1
      %v887 = vld [vmem:[%s886] sm:$0x1]
      %v889 = vlaneseq
      %v890 = vshrl.u32 %v889, 7
      %v891 = vsub.s32 0, %v890
      %v892 = vrot.slane %v887, %v891
      %v898 = vunpack.c.l.b16 %v882
      %v899 = vunpack.c.l.b16 %v883
      %v900 = vunpack.c.l.b16 %v884
      %v901 = vunpack.c.l.b16 %v885
      %v902 = vpack.c.b16 %v899, %v898
      %v903 = vpack.c.b16 %v901, %v900
      %906 = vmatprep.subr.bf16.mxu0 0
      %907 = vmatpush1.bf16.msra.mxu0 %v902
      %908 = vmatprep.subr.bf16.mxu0 0
      %909 = vmatpush1.bf16.msra.mxu0 %v903
      %910 = vmatprep.subr.bf16.mxu0 0
      %911 = vmatpush1.bf16.msra.mxu0 0
      %912 = vmatprep.subr.bf16.mxu0 0
      %913 = vmatpush1.bf16.msra.mxu0 0
      %914 = vmatprep.subr.bf16.mxu0 0
      %915 = vmatpush1.bf16.msra.mxu0 0
      %916 = vmatprep.subr.bf16.mxu0 0
      %917 = vmatpush1.bf16.msra.mxu0 0
      %918 = vmatprep.subr.bf16.mxu0 0
      %919 = vmatpush1.bf16.msra.mxu0 0
      %920 = vmatprep.subr.bf16.mxu0 0
      %921 = vmatpush1.bf16.msra.mxu0 0
      %922 = vmatprep.subr.bf16.mxu0 0
      %923 = vmatpush1.bf16.msra.mxu0 0
      %924 = vmatprep.subr.bf16.mxu0 0
      %925 = vmatpush1.bf16.msra.mxu0 0
      %926 = vmatprep.subr.bf16.mxu0 0
      %927 = vmatpush1.bf16.msra.mxu0 0
      %928 = vmatprep.subr.bf16.mxu0 0
      %929 = vmatpush1.bf16.msra.mxu0 0
      %930 = vmatprep.subr.bf16.mxu0 0
      %931 = vmatpush1.bf16.msra.mxu0 0
      %932 = vmatprep.subr.bf16.mxu0 0
      %933 = vmatpush1.bf16.msra.mxu0 0
      %934 = vmatprep.subr.bf16.mxu0 0
      %935 = vmatpush1.bf16.msra.mxu0 0
      %936 = vmatprep.subr.bf16.mxu0 0
      %937 = vmatpush1.bf16.msra.mxu0 0
      %938 = vmatprep.mubr.bf16.mxu0 0
      %939 = vmatmul.mubr.bf16.gmra.mrb[0].mxu0 %v577
      %v940 = vpop.f32.mrb[0].mxu0
      %v941 = vadd.f32 %v892, %v940
      %v942 = vpop.f32.mrb[0].mxu0
      %v943 = vpop.f32.mrb[0].mxu0
      %v944 = vadd.f32 %v892, %v943
      %v945 = vpop.f32.mrb[0].mxu0
      %946 = vdwg.mxu0
      %s947 = scalar_lea.vmem %s5, 16
      %v948 = vld [vmem:[%s947] sm:$0xf]
      %v949 = vld [vmem:[%s947 + $0x4] sm:$0xf]
      %v950 = vld [vmem:[%s947 + $0x8] sm:$0xf]
      %v951 = vld [vmem:[%s947 + $0xc] sm:$0xf]
      %s952 = scalar_lea.vmem %s8, 1
      %v953 = vld [vmem:[%s952] sm:$0x1]
      %v955 = vlaneseq
      %v956 = vshrl.u32 %v955, 7
      %v957 = vsub.s32 0, %v956
      %v958 = vrot.slane %v953, %v957
      %v964 = vunpack.c.l.b16 %v948
      %v965 = vunpack.c.l.b16 %v949
      %v966 = vunpack.c.l.b16 %v950
      %v967 = vunpack.c.l.b16 %v951
      %v968 = vpack.c.b16 %v965, %v964
      %v969 = vpack.c.b16 %v967, %v966
      %972 = vmatprep.subr.bf16.mxu0 0
      %973 = vmatpush1.bf16.msra.mxu0 %v968
      %974 = vmatprep.subr.bf16.mxu0 0
      %975 = vmatpush1.bf16.msra.mxu0 %v969
      %976 = vmatprep.subr.bf16.mxu0 0
      %977 = vmatpush1.bf16.msra.mxu0 0
      %978 = vmatprep.subr.bf16.mxu0 0
      %979 = vmatpush1.bf16.msra.mxu0 0
      %980 = vmatprep.subr.bf16.mxu0 0
      %981 = vmatpush1.bf16.msra.mxu0 0
      %982 = vmatprep.subr.bf16.mxu0 0
      %983 = vmatpush1.bf16.msra.mxu0 0
      %984 = vmatprep.subr.bf16.mxu0 0
      %985 = vmatpush1.bf16.msra.mxu0 0
      %986 = vmatprep.subr.bf16.mxu0 0
      %987 = vmatpush1.bf16.msra.mxu0 0
      %988 = vmatprep.subr.bf16.mxu0 0
      %989 = vmatpush1.bf16.msra.mxu0 0
      %990 = vmatprep.subr.bf16.mxu0 0
      %991 = vmatpush1.bf16.msra.mxu0 0
      %992 = vmatprep.subr.bf16.mxu0 0
      %993 = vmatpush1.bf16.msra.mxu0 0
      %994 = vmatprep.subr.bf16.mxu0 0
      %995 = vmatpush1.bf16.msra.mxu0 0
      %996 = vmatprep.subr.bf16.mxu0 0
      %997 = vmatpush1.bf16.msra.mxu0 0
      %998 = vmatprep.subr.bf16.mxu0 0
      %999 = vmatpush1.bf16.msra.mxu0 0
      %1000 = vmatprep.subr.bf16.mxu0 0
      %1001 = vmatpush1.bf16.msra.mxu0 0
      %1002 = vmatprep.subr.bf16.mxu0 0
      %1003 = vmatpush1.bf16.msra.mxu0 0
      %1004 = vmatprep.mubr.bf16.mxu0 0
      %1005 = vmatmul.mubr.bf16.gmra.mrb[0].mxu0 %v577
      %v1006 = vpop.f32.mrb[0].mxu0
      %v1007 = vadd.f32 %v958, %v1006
      %v1008 = vpop.f32.mrb[0].mxu0
      %v1009 = vpop.f32.mrb[0].mxu0
      %v1010 = vadd.f32 %v958, %v1009
      %v1011 = vpop.f32.mrb[0].mxu0
      %1012 = vdwg.mxu0
      %v1013 = vpack.c.bf16 %v878, %v875
      %v1014 = vpack.c.bf16 %v944, %v941
      %v1016 = vsel %vm686, %v1013, 0
      %v1019 = vsel %vm686, %v1014, 0
      %1021 = vmatprep.subr.bf16.mxu0 0
      %1022 = vmatpush1.bf16.xpose.msra.mxu0 %v1019
      %1023 = vmatprep.subr.bf16.mxu0 0
      %1024 = vmatpush1.bf16.xpose.msra.mxu0 0
      %1025 = vmatprep.subr.bf16.mxu0 0
      %1026 = vmatpush1.bf16.xpose.msra.mxu0 0
      %1027 = vmatprep.subr.bf16.mxu0 0
      %1028 = vmatpush1.bf16.xpose.msra.mxu0 0
      %1029 = vmatprep.subr.bf16.mxu0 0
      %1030 = vmatpush1.bf16.xpose.msra.mxu0 0
      %1031 = vmatprep.subr.bf16.mxu0 0
      %1032 = vmatpush1.bf16.xpose.msra.mxu0 0
      %1033 = vmatprep.subr.bf16.mxu0 0
      %1034 = vmatpush1.bf16.xpose.msra.mxu0 0
      %1035 = vmatprep.subr.bf16.mxu0 0
      %1036 = vmatpush1.bf16.xpose.msra.mxu0 0
      %1037 = vmatprep.subr.bf16.mxu0 0
      %1038 = vmatpush1.bf16.xpose.msra.mxu0 0
      %1039 = vmatprep.subr.bf16.mxu0 0
      %1040 = vmatpush1.bf16.xpose.msra.mxu0 0
      %1041 = vmatprep.subr.bf16.mxu0 0
      %1042 = vmatpush1.bf16.xpose.msra.mxu0 0
      %1043 = vmatprep.subr.bf16.mxu0 0
      %1044 = vmatpush1.bf16.xpose.msra.mxu0 0
      %1045 = vmatprep.subr.bf16.mxu0 0
      %1046 = vmatpush1.bf16.xpose.msra.mxu0 0
      %1047 = vmatprep.subr.bf16.mxu0 0
      %1048 = vmatpush1.bf16.xpose.msra.mxu0 0
      %1049 = vmatprep.subr.bf16.mxu0 0
      %1050 = vmatpush1.bf16.xpose.msra.mxu0 0
      %1051 = vmatprep.subr.bf16.mxu0 0
      %1052 = vmatpush1.bf16.xpose.msra.mxu0 0
      %1053 = vmatprep.mubr.bf16.mxu0 0
      %1054 = vmatmul.mubr.bf16.gmra.mrb[0].mxu0 %v1016
      %v1055 = vpop.f32.mrb[0].mxu0
      %v1056 = vadd.f32 0.0, %v1055
      %v1057 = vpop.f32.mrb[0].mxu0
      %v1058 = vpop.f32.mrb[0].mxu0
      %v1059 = vadd.f32 0.0, %v1058
      %v1060 = vpop.f32.mrb[0].mxu0
      %1061 = vdwg.mxu0
      %v1062 = vmul.f32 %v1056, 0.35355338
      %v1063 = vmul.f32 %v1059, 0.35355338
      %v1064 = vadd.f32 %v1062, %v740
      %v1065 = vadd.f32 %v1063, %v740
      %v1066 = vsel %vm744, %v1064, -inf
      %1067 = vmax.xlane.f32.xlu0 %v1066
      %v1068 = vpop.xlane.xlu0 %1067
      %v1069 = vsel %vm744, %v1065, -inf
      %1070 = vmax.xlane.f32.xlu0 %v1069
      %v1071 = vpop.xlane.xlu0 %1070
      %v1072 = vsub.f32 %v1064, %v1068
      %v1073 = vsub.f32 %v1065, %v1071
      %v1074 = vmul.f32 %v1072, 1.442695
      %v1075 = vpow.pop %v1074
      %v1076 = vmul.f32 %v1073, 1.442695
      %v1077 = vpow.pop %v1076
      %v1078 = vsel %vm744, %v1075, 0.0
      %1079 = vadd.xlane.f32.xlu0 %v1078
      %v1080 = vpop.xlane.xlu0 %1079
      %v1081 = vsel %vm744, %v1077, 0.0
      %1082 = vadd.xlane.f32.xlu0 %v1081
      %v1083 = vpop.xlane.xlu0 %1082
      %v1084 = vrcp.pop %v1080
      %v1085 = vrcp.pop %v1083
      %v1086 = vmul.f32 %v1075, %v1084
      %v1087 = vmul.f32 %v1077, %v1085
      %v1088 = vpack.c.bf16 %v1087, %v1086
      %v1089 = vpack.c.bf16 %v1010, %v1007
      %v1091 = vsel %vm744, %v1088, 0
      %1093 = vmatprep.subr.bf16.mxu0 0
      %1094 = vmatpush1.bf16.msra.mxu0 %v1089
      %1095 = vmatprep.subr.bf16.mxu0 0
      %1096 = vmatpush1.bf16.msra.mxu0 0
      %1097 = vmatprep.subr.bf16.mxu0 0
      %1098 = vmatpush1.bf16.msra.mxu0 0
      %1099 = vmatprep.subr.bf16.mxu0 0
      %1100 = vmatpush1.bf16.msra.mxu0 0
      %1101 = vmatprep.subr.bf16.mxu0 0
      %1102 = vmatpush1.bf16.msra.mxu0 0
      %1103 = vmatprep.subr.bf16.mxu0 0
      %1104 = vmatpush1.bf16.msra.mxu0 0
      %1105 = vmatprep.subr.bf16.mxu0 0
      %1106 = vmatpush1.bf16.msra.mxu0 0
      %1107 = vmatprep.subr.bf16.mxu0 0
      %1108 = vmatpush1.bf16.msra.mxu0 0
      %1109 = vmatprep.subr.bf16.mxu0 0
      %1110 = vmatpush1.bf16.msra.mxu0 0
      %1111 = vmatprep.subr.bf16.mxu0 0
      %1112 = vmatpush1.bf16.msra.mxu0 0
      %1113 = vmatprep.subr.bf16.mxu0 0
      %1114 = vmatpush1.bf16.msra.mxu0 0
      %1115 = vmatprep.subr.bf16.mxu0 0
      %1116 = vmatpush1.bf16.msra.mxu0 0
      %1117 = vmatprep.subr.bf16.mxu0 0
      %1118 = vmatpush1.bf16.msra.mxu0 0
      %1119 = vmatprep.subr.bf16.mxu0 0
      %1120 = vmatpush1.bf16.msra.mxu0 0
      %1121 = vmatprep.subr.bf16.mxu0 0
      %1122 = vmatpush1.bf16.msra.mxu0 0
      %1123 = vmatprep.subr.bf16.mxu0 0
      %1124 = vmatpush1.bf16.msra.mxu0 0
      %1125 = vmatprep.mubr.bf16.mxu0 0
      %1126 = vmatmul.mubr.bf16.gmra.mrb[0].mxu0 %v1091
      %v1127 = vpop.f32.mrb[0].mxu0
      %v1128 = vadd.f32 0.0, %v1127
      %v1129 = vpop.f32.mrb[0].mxu0
      %v1130 = vpop.f32.mrb[0].mxu0
      %v1131 = vadd.f32 0.0, %v1130
      %v1132 = vpop.f32.mrb[0].mxu0
      %1133 = vdwg.mxu0
      %v1134 = vpack.c.bf16 %v1131, %v1128
      %s1135 = scalar_lea.vmem %s9, 4
      %v1136 = vld [vmem:[%s1135] sm:$0xf]
      %v1138 = vsel %vm686, %v1134, 0
      %vm1140 = vcmask 1043456
      %v1142 = vsel %vm1140, %v1136, 0
      %1144 = vmatprep.subr.bf16.mxu0 0
      %1145 = vmatpush1.bf16.msra.mxu0 %v1142
      %1146 = vmatprep.subr.bf16.mxu0 0
      %1147 = vmatpush1.bf16.msra.mxu0 0
      %1148 = vmatprep.subr.bf16.mxu0 0
      %1149 = vmatpush1.bf16.msra.mxu0 0
      %1150 = vmatprep.subr.bf16.mxu0 0
      %1151 = vmatpush1.bf16.msra.mxu0 0
      %1152 = vmatprep.subr.bf16.mxu0 0
      %1153 = vmatpush1.bf16.msra.mxu0 0
      %1154 = vmatprep.subr.bf16.mxu0 0
      %1155 = vmatpush1.bf16.msra.mxu0 0
      %1156 = vmatprep.subr.bf16.mxu0 0
      %1157 = vmatpush1.bf16.msra.mxu0 0
      %1158 = vmatprep.subr.bf16.mxu0 0
      %1159 = vmatpush1.bf16.msra.mxu0 0
      %1160 = vmatprep.subr.bf16.mxu0 0
      %1161 = vmatpush1.bf16.msra.mxu0 0
      %1162 = vmatprep.subr.bf16.mxu0 0
      %1163 = vmatpush1.bf16.msra.mxu0 0
      %1164 = vmatprep.subr.bf16.mxu0 0
      %1165 = vmatpush1.bf16.msra.mxu0 0
      %1166 = vmatprep.subr.bf16.mxu0 0
      %1167 = vmatpush1.bf16.msra.mxu0 0
      %1168 = vmatprep.subr.bf16.mxu0 0
      %1169 = vmatpush1.bf16.msra.mxu0 0
      %1170 = vmatprep.subr.bf16.mxu0 0
      %1171 = vmatpush1.bf16.msra.mxu0 0
      %1172 = vmatprep.subr.bf16.mxu0 0
      %1173 = vmatpush1.bf16.msra.mxu0 0
      %1174 = vmatprep.subr.bf16.mxu0 0
      %1175 = vmatpush1.bf16.msra.mxu0 0
      %1176 = vmatprep.mubr.bf16.mxu0 0
      %1177 = vmatmul.mubr.bf16.gmra.mrb[0].mxu0 %v1138
      %v1178 = vpop.f32.mrb[0].mxu0
      %v1179 = vadd.f32 0.0, %v1178
      %v1180 = vpop.f32.mrb[0].mxu0
      %v1181 = vpop.f32.mrb[0].mxu0
      %v1182 = vadd.f32 0.0, %v1181
      %v1183 = vpop.f32.mrb[0].mxu0
      %1184 = vdwg.mxu0
      %v1186 = vsel %vm686, %v813, 0
      %v1189 = vsel %vm1140, %v814, 0
      %1191 = vmatprep.subr.bf16.mxu0 0
      %1192 = vmatpush1.bf16.msra.mxu0 %v1189
      %1193 = vmatprep.subr.bf16.mxu0 0
      %1194 = vmatpush1.bf16.msra.mxu0 0
      %1195 = vmatprep.subr.bf16.mxu0 0
      %1196 = vmatpush1.bf16.msra.mxu0 0
      %1197 = vmatprep.subr.bf16.mxu0 0
      %1198 = vmatpush1.bf16.msra.mxu0 0
      %1199 = vmatprep.subr.bf16.mxu0 0
      %1200 = vmatpush1.bf16.msra.mxu0 0
      %1201 = vmatprep.subr.bf16.mxu0 0
      %1202 = vmatpush1.bf16.msra.mxu0 0
      %1203 = vmatprep.subr.bf16.mxu0 0
      %1204 = vmatpush1.bf16.msra.mxu0 0
      %1205 = vmatprep.subr.bf16.mxu0 0
      %1206 = vmatpush1.bf16.msra.mxu0 0
      %1207 = vmatprep.subr.bf16.mxu0 0
      %1208 = vmatpush1.bf16.msra.mxu0 0
      %1209 = vmatprep.subr.bf16.mxu0 0
      %1210 = vmatpush1.bf16.msra.mxu0 0
      %1211 = vmatprep.subr.bf16.mxu0 0
      %1212 = vmatpush1.bf16.msra.mxu0 0
      %1213 = vmatprep.subr.bf16.mxu0 0
      %1214 = vmatpush1.bf16.msra.mxu0 0
      %1215 = vmatprep.subr.bf16.mxu0 0
      %1216 = vmatpush1.bf16.msra.mxu0 0
      %1217 = vmatprep.subr.bf16.mxu0 0
      %1218 = vmatpush1.bf16.msra.mxu0 0
      %1219 = vmatprep.subr.bf16.mxu0 0
      %1220 = vmatpush1.bf16.msra.mxu0 0
      %1221 = vmatprep.subr.bf16.mxu0 0
      %1222 = vmatpush1.bf16.msra.mxu0 0
      %1223 = vmatprep.mubr.bf16.mxu0 0
      %1224 = vmatmul.mubr.bf16.gmra.mrb[0].mxu0 %v1186
      %v1225 = vpop.f32.mrb[0].mxu0
      %v1226 = vadd.f32 %v1179, %v1225
      %v1227 = vpop.f32.mrb[0].mxu0
      %v1228 = vpop.f32.mrb[0].mxu0
      %v1229 = vadd.f32 %v1182, %v1228
      %v1230 = vpop.f32.mrb[0].mxu0
      %1231 = vdwg.mxu0
      %s1232 = scalar_lea.vmem %s3, 32
      %v1233 = vld [vmem:[%s1232] sm:$0xf]
      %v1234 = vld [vmem:[%s1232 + $0x4] sm:$0xf]
      %v1235 = vld [vmem:[%s1232 + $0x8] sm:$0xf]
      %v1236 = vld [vmem:[%s1232 + $0xc] sm:$0xf]
      %s1237 = scalar_lea.vmem %s6, 2
      %v1238 = vld [vmem:[%s1237] sm:$0x1]
      %v1240 = vlaneseq
      %v1241 = vshrl.u32 %v1240, 7
      %v1242 = vsub.s32 0, %v1241
      %v1243 = vrot.slane %v1238, %v1242
      %v1249 = vunpack.c.l.b16 %v1233
      %v1250 = vunpack.c.l.b16 %v1234
      %v1251 = vunpack.c.l.b16 %v1235
      %v1252 = vunpack.c.l.b16 %v1236
      %v1253 = vpack.c.b16 %v1250, %v1249
      %v1254 = vpack.c.b16 %v1252, %v1251
      %1257 = vmatprep.subr.bf16.mxu0 0
      %1258 = vmatpush1.bf16.msra.mxu0 %v1253
      %1259 = vmatprep.subr.bf16.mxu0 0
      %1260 = vmatpush1.bf16.msra.mxu0 %v1254
      %1261 = vmatprep.subr.bf16.mxu0 0
      %1262 = vmatpush1.bf16.msra.mxu0 0
      %1263 = vmatprep.subr.bf16.mxu0 0
      %1264 = vmatpush1.bf16.msra.mxu0 0
      %1265 = vmatprep.subr.bf16.mxu0 0
      %1266 = vmatpush1.bf16.msra.mxu0 0
      %1267 = vmatprep.subr.bf16.mxu0 0
      %1268 = vmatpush1.bf16.msra.mxu0 0
      %1269 = vmatprep.subr.bf16.mxu0 0
      %1270 = vmatpush1.bf16.msra.mxu0 0
      %1271 = vmatprep.subr.bf16.mxu0 0
      %1272 = vmatpush1.bf16.msra.mxu0 0
      %1273 = vmatprep.subr.bf16.mxu0 0
      %1274 = vmatpush1.bf16.msra.mxu0 0
      %1275 = vmatprep.subr.bf16.mxu0 0
      %1276 = vmatpush1.bf16.msra.mxu0 0
      %1277 = vmatprep.subr.bf16.mxu0 0
      %1278 = vmatpush1.bf16.msra.mxu0 0
      %1279 = vmatprep.subr.bf16.mxu0 0
      %1280 = vmatpush1.bf16.msra.mxu0 0
      %1281 = vmatprep.subr.bf16.mxu0 0
      %1282 = vmatpush1.bf16.msra.mxu0 0
      %1283 = vmatprep.subr.bf16.mxu0 0
      %1284 = vmatpush1.bf16.msra.mxu0 0
      %1285 = vmatprep.subr.bf16.mxu0 0
      %1286 = vmatpush1.bf16.msra.mxu0 0
      %1287 = vmatprep.subr.bf16.mxu0 0
      %1288 = vmatpush1.bf16.msra.mxu0 0
      %1289 = vmatprep.mubr.bf16.mxu0 0
      %1290 = vmatmul.mubr.bf16.gmra.mrb[0].mxu0 %v510
      %v1291 = vpop.f32.mrb[0].mxu0
      %v1292 = vadd.f32 %v1243, %v1291
      %v1293 = vpop.f32.mrb[0].mxu0
      %v1294 = vpop.f32.mrb[0].mxu0
      %v1295 = vadd.f32 %v1243, %v1294
      %v1296 = vpop.f32.mrb[0].mxu0
      %1297 = vdwg.mxu0
      %s1298 = scalar_lea.vmem %s4, 32
      %v1299 = vld [vmem:[%s1298] sm:$0xf]
      %v1300 = vld [vmem:[%s1298 + $0x4] sm:$0xf]
      %v1301 = vld [vmem:[%s1298 + $0x8] sm:$0xf]
      %v1302 = vld [vmem:[%s1298 + $0xc] sm:$0xf]
      %s1303 = scalar_lea.vmem %s7, 2
      %v1304 = vld [vmem:[%s1303] sm:$0x1]
      %v1306 = vlaneseq
      %v1307 = vshrl.u32 %v1306, 7
      %v1308 = vsub.s32 0, %v1307
      %v1309 = vrot.slane %v1304, %v1308
      %v1315 = vunpack.c.l.b16 %v1299
      %v1316 = vunpack.c.l.b16 %v1300
      %v1317 = vunpack.c.l.b16 %v1301
      %v1318 = vunpack.c.l.b16 %v1302
      %v1319 = vpack.c.b16 %v1316, %v1315
      %v1320 = vpack.c.b16 %v1318, %v1317
      %1323 = vmatprep.subr.bf16.mxu0 0
      %1324 = vmatpush1.bf16.msra.mxu0 %v1319
      %1325 = vmatprep.subr.bf16.mxu0 0
      %1326 = vmatpush1.bf16.msra.mxu0 %v1320
      %1327 = vmatprep.subr.bf16.mxu0 0
      %1328 = vmatpush1.bf16.msra.mxu0 0
      %1329 = vmatprep.subr.bf16.mxu0 0
      %1330 = vmatpush1.bf16.msra.mxu0 0
      %1331 = vmatprep.subr.bf16.mxu0 0
      %1332 = vmatpush1.bf16.msra.mxu0 0
      %1333 = vmatprep.subr.bf16.mxu0 0
      %1334 = vmatpush1.bf16.msra.mxu0 0
      %1335 = vmatprep.subr.bf16.mxu0 0
      %1336 = vmatpush1.bf16.msra.mxu0 0
      %1337 = vmatprep.subr.bf16.mxu0 0
      %1338 = vmatpush1.bf16.msra.mxu0 0
      %1339 = vmatprep.subr.bf16.mxu0 0
      %1340 = vmatpush1.bf16.msra.mxu0 0
      %1341 = vmatprep.subr.bf16.mxu0 0
      %1342 = vmatpush1.bf16.msra.mxu0 0
      %1343 = vmatprep.subr.bf16.mxu0 0
      %1344 = vmatpush1.bf16.msra.mxu0 0
      %1345 = vmatprep.subr.bf16.mxu0 0
      %1346 = vmatpush1.bf16.msra.mxu0 0
      %1347 = vmatprep.subr.bf16.mxu0 0
      %1348 = vmatpush1.bf16.msra.mxu0 0
      %1349 = vmatprep.subr.bf16.mxu0 0
      %1350 = vmatpush1.bf16.msra.mxu0 0
      %1351 = vmatprep.subr.bf16.mxu0 0
      %1352 = vmatpush1.bf16.msra.mxu0 0
      %1353 = vmatprep.subr.bf16.mxu0 0
      %1354 = vmatpush1.bf16.msra.mxu0 0
      %1355 = vmatprep.mubr.bf16.mxu0 0
      %1356 = vmatmul.mubr.bf16.gmra.mrb[0].mxu0 %v577
      %v1357 = vpop.f32.mrb[0].mxu0
      %v1358 = vadd.f32 %v1309, %v1357
      %v1359 = vpop.f32.mrb[0].mxu0
      %v1360 = vpop.f32.mrb[0].mxu0
      %v1361 = vadd.f32 %v1309, %v1360
      %v1362 = vpop.f32.mrb[0].mxu0
      %1363 = vdwg.mxu0
      %s1364 = scalar_lea.vmem %s5, 32
      %v1365 = vld [vmem:[%s1364] sm:$0xf]
      %v1366 = vld [vmem:[%s1364 + $0x4] sm:$0xf]
      %v1367 = vld [vmem:[%s1364 + $0x8] sm:$0xf]
      %v1368 = vld [vmem:[%s1364 + $0xc] sm:$0xf]
      %s1369 = scalar_lea.vmem %s8, 2
      %v1370 = vld [vmem:[%s1369] sm:$0x1]
      %v1372 = vlaneseq
      %v1373 = vshrl.u32 %v1372, 7
      %v1374 = vsub.s32 0, %v1373
      %v1375 = vrot.slane %v1370, %v1374
      %v1381 = vunpack.c.l.b16 %v1365
      %v1382 = vunpack.c.l.b16 %v1366
      %v1383 = vunpack.c.l.b16 %v1367
      %v1384 = vunpack.c.l.b16 %v1368
      %v1385 = vpack.c.b16 %v1382, %v1381
      %v1386 = vpack.c.b16 %v1384, %v1383
      %1389 = vmatprep.subr.bf16.mxu0 0
      %1390 = vmatpush1.bf16.msra.mxu0 %v1385
      %1391 = vmatprep.subr.bf16.mxu0 0
      %1392 = vmatpush1.bf16.msra.mxu0 %v1386
      %1393 = vmatprep.subr.bf16.mxu0 0
      %1394 = vmatpush1.bf16.msra.mxu0 0
      %1395 = vmatprep.subr.bf16.mxu0 0
      %1396 = vmatpush1.bf16.msra.mxu0 0
      %1397 = vmatprep.subr.bf16.mxu0 0
      %1398 = vmatpush1.bf16.msra.mxu0 0
      %1399 = vmatprep.subr.bf16.mxu0 0
      %1400 = vmatpush1.bf16.msra.mxu0 0
      %1401 = vmatprep.subr.bf16.mxu0 0
      %1402 = vmatpush1.bf16.msra.mxu0 0
      %1403 = vmatprep.subr.bf16.mxu0 0
      %1404 = vmatpush1.bf16.msra.mxu0 0
      %1405 = vmatprep.subr.bf16.mxu0 0
      %1406 = vmatpush1.bf16.msra.mxu0 0
      %1407 = vmatprep.subr.bf16.mxu0 0
      %1408 = vmatpush1.bf16.msra.mxu0 0
      %1409 = vmatprep.subr.bf16.mxu0 0
      %1410 = vmatpush1.bf16.msra.mxu0 0
      %1411 = vmatprep.subr.bf16.mxu0 0
      %1412 = vmatpush1.bf16.msra.mxu0 0
      %1413 = vmatprep.subr.bf16.mxu0 0
      %1414 = vmatpush1.bf16.msra.mxu0 0
      %1415 = vmatprep.subr.bf16.mxu0 0
      %1416 = vmatpush1.bf16.msra.mxu0 0
      %1417 = vmatprep.subr.bf16.mxu0 0
      %1418 = vmatpush1.bf16.msra.mxu0 0
      %1419 = vmatprep.subr.bf16.mxu0 0
      %1420 = vmatpush1.bf16.msra.mxu0 0
      %1421 = vmatprep.mubr.bf16.mxu0 0
      %1422 = vmatmul.mubr.bf16.gmra.mrb[0].mxu0 %v577
      %v1423 = vpop.f32.mrb[0].mxu0
      %v1424 = vadd.f32 %v1375, %v1423
      %v1425 = vpop.f32.mrb[0].mxu0
      %v1426 = vpop.f32.mrb[0].mxu0
      %v1427 = vadd.f32 %v1375, %v1426
      %v1428 = vpop.f32.mrb[0].mxu0
      %1429 = vdwg.mxu0
      %v1430 = vpack.c.bf16 %v1295, %v1292
      %v1431 = vpack.c.bf16 %v1361, %v1358
      %v1433 = vsel %vm686, %v1430, 0
      %v1436 = vsel %vm686, %v1431, 0
      %1438 = vmatprep.subr.bf16.mxu0 0
      %1439 = vmatpush1.bf16.xpose.msra.mxu0 %v1436
      %1440 = vmatprep.subr.bf16.mxu0 0
      %1441 = vmatpush1.bf16.xpose.msra.mxu0 0
      %1442 = vmatprep.subr.bf16.mxu0 0
      %1443 = vmatpush1.bf16.xpose.msra.mxu0 0
      %1444 = vmatprep.subr.bf16.mxu0 0
      %1445 = vmatpush1.bf16.xpose.msra.mxu0 0
      %1446 = vmatprep.subr.bf16.mxu0 0
      %1447 = vmatpush1.bf16.xpose.msra.mxu0 0
      %1448 = vmatprep.subr.bf16.mxu0 0
      %1449 = vmatpush1.bf16.xpose.msra.mxu0 0
      %1450 = vmatprep.subr.bf16.mxu0 0
      %1451 = vmatpush1.bf16.xpose.msra.mxu0 0
      %1452 = vmatprep.subr.bf16.mxu0 0
      %1453 = vmatpush1.bf16.xpose.msra.mxu0 0
      %1454 = vmatprep.subr.bf16.mxu0 0
      %1455 = vmatpush1.bf16.xpose.msra.mxu0 0
      %1456 = vmatprep.subr.bf16.mxu0 0
      %1457 = vmatpush1.bf16.xpose.msra.mxu0 0
      %1458 = vmatprep.subr.bf16.mxu0 0
      %1459 = vmatpush1.bf16.xpose.msra.mxu0 0
      %1460 = vmatprep.subr.bf16.mxu0 0
      %1461 = vmatpush1.bf16.xpose.msra.mxu0 0
      %1462 = vmatprep.subr.bf16.mxu0 0
      %1463 = vmatpush1.bf16.xpose.msra.mxu0 0
      %1464 = vmatprep.subr.bf16.mxu0 0
      %1465 = vmatpush1.bf16.xpose.msra.mxu0 0
      %1466 = vmatprep.subr.bf16.mxu0 0
      %1467 = vmatpush1.bf16.xpose.msra.mxu0 0
      %1468 = vmatprep.subr.bf16.mxu0 0
      %1469 = vmatpush1.bf16.xpose.msra.mxu0 0
      %1470 = vmatprep.mubr.bf16.mxu0 0
      %1471 = vmatmul.mubr.bf16.gmra.mrb[0].mxu0 %v1433
      %v1472 = vpop.f32.mrb[0].mxu0
      %v1473 = vadd.f32 0.0, %v1472
      %v1474 = vpop.f32.mrb[0].mxu0
      %v1475 = vpop.f32.mrb[0].mxu0
      %v1476 = vadd.f32 0.0, %v1475
      %v1477 = vpop.f32.mrb[0].mxu0
      %1478 = vdwg.mxu0
      %v1479 = vmul.f32 %v1473, 0.35355338
      %v1480 = vmul.f32 %v1476, 0.35355338
      %v1481 = vadd.f32 %v1479, %v740
      %v1482 = vadd.f32 %v1480, %v740
      %v1483 = vsel %vm744, %v1481, -inf
      %1484 = vmax.xlane.f32.xlu0 %v1483
      %v1485 = vpop.xlane.xlu0 %1484
      %v1486 = vsel %vm744, %v1482, -inf
      %1487 = vmax.xlane.f32.xlu0 %v1486
      %v1488 = vpop.xlane.xlu0 %1487
      %v1489 = vsub.f32 %v1481, %v1485
      %v1490 = vsub.f32 %v1482, %v1488
      %v1491 = vmul.f32 %v1489, 1.442695
      %v1492 = vpow.pop %v1491
      %v1493 = vmul.f32 %v1490, 1.442695
      %v1494 = vpow.pop %v1493
      %v1495 = vsel %vm744, %v1492, 0.0
      %1496 = vadd.xlane.f32.xlu0 %v1495
      %v1497 = vpop.xlane.xlu0 %1496
      %v1498 = vsel %vm744, %v1494, 0.0
      %1499 = vadd.xlane.f32.xlu0 %v1498
      %v1500 = vpop.xlane.xlu0 %1499
      %v1501 = vrcp.pop %v1497
      %v1502 = vrcp.pop %v1500
      %v1503 = vmul.f32 %v1492, %v1501
      %v1504 = vmul.f32 %v1494, %v1502
      %v1505 = vpack.c.bf16 %v1504, %v1503
      %v1506 = vpack.c.bf16 %v1427, %v1424
      %v1508 = vsel %vm744, %v1505, 0
      %1510 = vmatprep.subr.bf16.mxu0 0
      %1511 = vmatpush1.bf16.msra.mxu0 %v1506
      %1512 = vmatprep.subr.bf16.mxu0 0
      %1513 = vmatpush1.bf16.msra.mxu0 0
      %1514 = vmatprep.subr.bf16.mxu0 0
      %1515 = vmatpush1.bf16.msra.mxu0 0
      %1516 = vmatprep.subr.bf16.mxu0 0
      %1517 = vmatpush1.bf16.msra.mxu0 0
      %1518 = vmatprep.subr.bf16.mxu0 0
      %1519 = vmatpush1.bf16.msra.mxu0 0
      %1520 = vmatprep.subr.bf16.mxu0 0
      %1521 = vmatpush1.bf16.msra.mxu0 0
      %1522 = vmatprep.subr.bf16.mxu0 0
      %1523 = vmatpush1.bf16.msra.mxu0 0
      %1524 = vmatprep.subr.bf16.mxu0 0
      %1525 = vmatpush1.bf16.msra.mxu0 0
      %1526 = vmatprep.subr.bf16.mxu0 0
      %1527 = vmatpush1.bf16.msra.mxu0 0
      %1528 = vmatprep.subr.bf16.mxu0 0
      %1529 = vmatpush1.bf16.msra.mxu0 0
      %1530 = vmatprep.subr.bf16.mxu0 0
      %1531 = vmatpush1.bf16.msra.mxu0 0
      %1532 = vmatprep.subr.bf16.mxu0 0
      %1533 = vmatpush1.bf16.msra.mxu0 0
      %1534 = vmatprep.subr.bf16.mxu0 0
      %1535 = vmatpush1.bf16.msra.mxu0 0
      %1536 = vmatprep.subr.bf16.mxu0 0
      %1537 = vmatpush1.bf16.msra.mxu0 0
      %1538 = vmatprep.subr.bf16.mxu0 0
      %1539 = vmatpush1.bf16.msra.mxu0 0
      %1540 = vmatprep.subr.bf16.mxu0 0
      %1541 = vmatpush1.bf16.msra.mxu0 0
      %1542 = vmatprep.mubr.bf16.mxu0 0
      %1543 = vmatmul.mubr.bf16.gmra.mrb[0].mxu0 %v1508
      %v1544 = vpop.f32.mrb[0].mxu0
      %v1545 = vadd.f32 0.0, %v1544
      %v1546 = vpop.f32.mrb[0].mxu0
      %v1547 = vpop.f32.mrb[0].mxu0
      %v1548 = vadd.f32 0.0, %v1547
      %v1549 = vpop.f32.mrb[0].mxu0
      %1550 = vdwg.mxu0
      %v1551 = vpack.c.bf16 %v1548, %v1545
      %s1552 = scalar_lea.vmem %s9, 8
      %v1553 = vld [vmem:[%s1552] sm:$0xf]
      %v1555 = vsel %vm686, %v1551, 0
      %v1558 = vsel %vm1140, %v1553, 0
      %1560 = vmatprep.subr.bf16.mxu0 0
      %1561 = vmatpush1.bf16.msra.mxu0 %v1558
      %1562 = vmatprep.subr.bf16.mxu0 0
      %1563 = vmatpush1.bf16.msra.mxu0 0
      %1564 = vmatprep.subr.bf16.mxu0 0
      %1565 = vmatpush1.bf16.msra.mxu0 0
      %1566 = vmatprep.subr.bf16.mxu0 0
      %1567 = vmatpush1.bf16.msra.mxu0 0
      %1568 = vmatprep.subr.bf16.mxu0 0
      %1569 = vmatpush1.bf16.msra.mxu0 0
      %1570 = vmatprep.subr.bf16.mxu0 0
      %1571 = vmatpush1.bf16.msra.mxu0 0
      %1572 = vmatprep.subr.bf16.mxu0 0
      %1573 = vmatpush1.bf16.msra.mxu0 0
      %1574 = vmatprep.subr.bf16.mxu0 0
      %1575 = vmatpush1.bf16.msra.mxu0 0
      %1576 = vmatprep.subr.bf16.mxu0 0
      %1577 = vmatpush1.bf16.msra.mxu0 0
      %1578 = vmatprep.subr.bf16.mxu0 0
      %1579 = vmatpush1.bf16.msra.mxu0 0
      %1580 = vmatprep.subr.bf16.mxu0 0
      %1581 = vmatpush1.bf16.msra.mxu0 0
      %1582 = vmatprep.subr.bf16.mxu0 0
      %1583 = vmatpush1.bf16.msra.mxu0 0
      %1584 = vmatprep.subr.bf16.mxu0 0
      %1585 = vmatpush1.bf16.msra.mxu0 0
      %1586 = vmatprep.subr.bf16.mxu0 0
      %1587 = vmatpush1.bf16.msra.mxu0 0
      %1588 = vmatprep.subr.bf16.mxu0 0
      %1589 = vmatpush1.bf16.msra.mxu0 0
      %1590 = vmatprep.subr.bf16.mxu0 0
      %1591 = vmatpush1.bf16.msra.mxu0 0
      %1592 = vmatprep.mubr.bf16.mxu0 0
      %1593 = vmatmul.mubr.bf16.gmra.mrb[0].mxu0 %v1555
      %v1594 = vpop.f32.mrb[0].mxu0
      %v1595 = vadd.f32 0.0, %v1594
      %v1596 = vpop.f32.mrb[0].mxu0
      %v1597 = vpop.f32.mrb[0].mxu0
      %v1598 = vadd.f32 0.0, %v1597
      %v1599 = vpop.f32.mrb[0].mxu0
      %1600 = vdwg.mxu0
      %v1601 = vadd.f32 %v1226, %v1595
      %v1602 = vadd.f32 %v1229, %v1598
      %s1603 = scalar_lea.vmem %s3, 48
      %v1604 = vld [vmem:[%s1603] sm:$0xf]
      %v1605 = vld [vmem:[%s1603 + $0x4] sm:$0xf]
      %v1606 = vld [vmem:[%s1603 + $0x8] sm:$0xf]
      %v1607 = vld [vmem:[%s1603 + $0xc] sm:$0xf]
      %s1608 = scalar_lea.vmem %s6, 3
      %v1609 = vld [vmem:[%s1608] sm:$0x1]
      %v1611 = vlaneseq
      %v1612 = vshrl.u32 %v1611, 7
      %v1613 = vsub.s32 0, %v1612
      %v1614 = vrot.slane %v1609, %v1613
      %v1620 = vunpack.c.l.b16 %v1604
      %v1621 = vunpack.c.l.b16 %v1605
      %v1622 = vunpack.c.l.b16 %v1606
      %v1623 = vunpack.c.l.b16 %v1607
      %v1624 = vpack.c.b16 %v1621, %v1620
      %v1625 = vpack.c.b16 %v1623, %v1622
      %1628 = vmatprep.subr.bf16.mxu0 0
      %1629 = vmatpush1.bf16.msra.mxu0 %v1624
      %1630 = vmatprep.subr.bf16.mxu0 0
      %1631 = vmatpush1.bf16.msra.mxu0 %v1625
      %1632 = vmatprep.subr.bf16.mxu0 0
      %1633 = vmatpush1.bf16.msra.mxu0 0
      %1634 = vmatprep.subr.bf16.mxu0 0
      %1635 = vmatpush1.bf16.msra.mxu0 0
      %1636 = vmatprep.subr.bf16.mxu0 0
      %1637 = vmatpush1.bf16.msra.mxu0 0
      %1638 = vmatprep.subr.bf16.mxu0 0
      %1639 = vmatpush1.bf16.msra.mxu0 0
      %1640 = vmatprep.subr.bf16.mxu0 0
      %1641 = vmatpush1.bf16.msra.mxu0 0
      %1642 = vmatprep.subr.bf16.mxu0 0
      %1643 = vmatpush1.bf16.msra.mxu0 0
      %1644 = vmatprep.subr.bf16.mxu0 0
      %1645 = vmatpush1.bf16.msra.mxu0 0
      %1646 = vmatprep.subr.bf16.mxu0 0
      %1647 = vmatpush1.bf16.msra.mxu0 0
      %1648 = vmatprep.subr.bf16.mxu0 0
      %1649 = vmatpush1.bf16.msra.mxu0 0
      %1650 = vmatprep.subr.bf16.mxu0 0
      %1651 = vmatpush1.bf16.msra.mxu0 0
      %1652 = vmatprep.subr.bf16.mxu0 0
      %1653 = vmatpush1.bf16.msra.mxu0 0
      %1654 = vmatprep.subr.bf16.mxu0 0
      %1655 = vmatpush1.bf16.msra.mxu0 0
      %1656 = vmatprep.subr.bf16.mxu0 0
      %1657 = vmatpush1.bf16.msra.mxu0 0
      %1658 = vmatprep.subr.bf16.mxu0 0
      %1659 = vmatpush1.bf16.msra.mxu0 0
      %1660 = vmatprep.mubr.bf16.mxu0 0
      %1661 = vmatmul.mubr.bf16.gmra.mrb[0].mxu0 %v510
      %v1662 = vpop.f32.mrb[0].mxu0
      %v1663 = vadd.f32 %v1614, %v1662
      %v1664 = vpop.f32.mrb[0].mxu0
      %v1665 = vpop.f32.mrb[0].mxu0
      %v1666 = vadd.f32 %v1614, %v1665
      %v1667 = vpop.f32.mrb[0].mxu0
      %1668 = vdwg.mxu0
      %s1669 = scalar_lea.vmem %s4, 48
      %v1670 = vld [vmem:[%s1669] sm:$0xf]
      %v1671 = vld [vmem:[%s1669 + $0x4] sm:$0xf]
      %v1672 = vld [vmem:[%s1669 + $0x8] sm:$0xf]
      %v1673 = vld [vmem:[%s1669 + $0xc] sm:$0xf]
      %s1674 = scalar_lea.vmem %s7, 3
      %v1675 = vld [vmem:[%s1674] sm:$0x1]
      %v1677 = vlaneseq
      %v1678 = vshrl.u32 %v1677, 7
      %v1679 = vsub.s32 0, %v1678
      %v1680 = vrot.slane %v1675, %v1679
      %v1686 = vunpack.c.l.b16 %v1670
      %v1687 = vunpack.c.l.b16 %v1671
      %v1688 = vunpack.c.l.b16 %v1672
      %v1689 = vunpack.c.l.b16 %v1673
      %v1690 = vpack.c.b16 %v1687, %v1686
      %v1691 = vpack.c.b16 %v1689, %v1688
      %1694 = vmatprep.subr.bf16.mxu0 0
      %1695 = vmatpush1.bf16.msra.mxu0 %v1690
      %1696 = vmatprep.subr.bf16.mxu0 0
      %1697 = vmatpush1.bf16.msra.mxu0 %v1691
      %1698 = vmatprep.subr.bf16.mxu0 0
      %1699 = vmatpush1.bf16.msra.mxu0 0
      %1700 = vmatprep.subr.bf16.mxu0 0
      %1701 = vmatpush1.bf16.msra.mxu0 0
      %1702 = vmatprep.subr.bf16.mxu0 0
      %1703 = vmatpush1.bf16.msra.mxu0 0
      %1704 = vmatprep.subr.bf16.mxu0 0
      %1705 = vmatpush1.bf16.msra.mxu0 0
      %1706 = vmatprep.subr.bf16.mxu0 0
      %1707 = vmatpush1.bf16.msra.mxu0 0
      %1708 = vmatprep.subr.bf16.mxu0 0
      %1709 = vmatpush1.bf16.msra.mxu0 0
      %1710 = vmatprep.subr.bf16.mxu0 0
      %1711 = vmatpush1.bf16.msra.mxu0 0
      %1712 = vmatprep.subr.bf16.mxu0 0
      %1713 = vmatpush1.bf16.msra.mxu0 0
      %1714 = vmatprep.subr.bf16.mxu0 0
      %1715 = vmatpush1.bf16.msra.mxu0 0
      %1716 = vmatprep.subr.bf16.mxu0 0
      %1717 = vmatpush1.bf16.msra.mxu0 0
      %1718 = vmatprep.subr.bf16.mxu0 0
      %1719 = vmatpush1.bf16.msra.mxu0 0
      %1720 = vmatprep.subr.bf16.mxu0 0
      %1721 = vmatpush1.bf16.msra.mxu0 0
      %1722 = vmatprep.subr.bf16.mxu0 0
      %1723 = vmatpush1.bf16.msra.mxu0 0
      %1724 = vmatprep.subr.bf16.mxu0 0
      %1725 = vmatpush1.bf16.msra.mxu0 0
      %1726 = vmatprep.mubr.bf16.mxu0 0
      %1727 = vmatmul.mubr.bf16.gmra.mrb[0].mxu0 %v577
      %v1728 = vpop.f32.mrb[0].mxu0
      %v1729 = vadd.f32 %v1680, %v1728
      %v1730 = vpop.f32.mrb[0].mxu0
      %v1731 = vpop.f32.mrb[0].mxu0
      %v1732 = vadd.f32 %v1680, %v1731
      %v1733 = vpop.f32.mrb[0].mxu0
      %1734 = vdwg.mxu0
      %s1735 = scalar_lea.vmem %s5, 48
      %v1736 = vld [vmem:[%s1735] sm:$0xf]
      %v1737 = vld [vmem:[%s1735 + $0x4] sm:$0xf]
      %v1738 = vld [vmem:[%s1735 + $0x8] sm:$0xf]
      %v1739 = vld [vmem:[%s1735 + $0xc] sm:$0xf]
      %s1740 = scalar_lea.vmem %s8, 3
      %v1741 = vld [vmem:[%s1740] sm:$0x1]
      %v1743 = vlaneseq
      %v1744 = vshrl.u32 %v1743, 7
      %v1745 = vsub.s32 0, %v1744
      %v1746 = vrot.slane %v1741, %v1745
      %v1752 = vunpack.c.l.b16 %v1736
      %v1753 = vunpack.c.l.b16 %v1737
      %v1754 = vunpack.c.l.b16 %v1738
      %v1755 = vunpack.c.l.b16 %v1739
      %v1756 = vpack.c.b16 %v1753, %v1752
      %v1757 = vpack.c.b16 %v1755, %v1754
      %1760 = vmatprep.subr.bf16.mxu0 0
      %1761 = vmatpush1.bf16.msra.mxu0 %v1756
      %1762 = vmatprep.subr.bf16.mxu0 0
      %1763 = vmatpush1.bf16.msra.mxu0 %v1757
      %1764 = vmatprep.subr.bf16.mxu0 0
      %1765 = vmatpush1.bf16.msra.mxu0 0
      %1766 = vmatprep.subr.bf16.mxu0 0
      %1767 = vmatpush1.bf16.msra.mxu0 0
      %1768 = vmatprep.subr.bf16.mxu0 0
      %1769 = vmatpush1.bf16.msra.mxu0 0
      %1770 = vmatprep.subr.bf16.mxu0 0
      %1771 = vmatpush1.bf16.msra.mxu0 0
      %1772 = vmatprep.subr.bf16.mxu0 0
      %1773 = vmatpush1.bf16.msra.mxu0 0
      %1774 = vmatprep.subr.bf16.mxu0 0
      %1775 = vmatpush1.bf16.msra.mxu0 0
      %1776 = vmatprep.subr.bf16.mxu0 0
      %1777 = vmatpush1.bf16.msra.mxu0 0
      %1778 = vmatprep.subr.bf16.mxu0 0
      %1779 = vmatpush1.bf16.msra.mxu0 0
      %1780 = vmatprep.subr.bf16.mxu0 0
      %1781 = vmatpush1.bf16.msra.mxu0 0
      %1782 = vmatprep.subr.bf16.mxu0 0
      %1783 = vmatpush1.bf16.msra.mxu0 0
      %1784 = vmatprep.subr.bf16.mxu0 0
      %1785 = vmatpush1.bf16.msra.mxu0 0
      %1786 = vmatprep.subr.bf16.mxu0 0
      %1787 = vmatpush1.bf16.msra.mxu0 0
      %1788 = vmatprep.subr.bf16.mxu0 0
      %1789 = vmatpush1.bf16.msra.mxu0 0
      %1790 = vmatprep.subr.bf16.mxu0 0
      %1791 = vmatpush1.bf16.msra.mxu0 0
      %1792 = vmatprep.mubr.bf16.mxu0 0
      %1793 = vmatmul.mubr.bf16.gmra.mrb[0].mxu0 %v577
      %v1794 = vpop.f32.mrb[0].mxu0
      %v1795 = vadd.f32 %v1746, %v1794
      %v1796 = vpop.f32.mrb[0].mxu0
      %v1797 = vpop.f32.mrb[0].mxu0
      %v1798 = vadd.f32 %v1746, %v1797
      %v1799 = vpop.f32.mrb[0].mxu0
      %1800 = vdwg.mxu0
      %v1801 = vpack.c.bf16 %v1666, %v1663
      %v1802 = vpack.c.bf16 %v1732, %v1729
      %v1804 = vsel %vm686, %v1801, 0
      %v1807 = vsel %vm686, %v1802, 0
      %1809 = vmatprep.subr.bf16.mxu0 0
      %1810 = vmatpush1.bf16.xpose.msra.mxu0 %v1807
      %1811 = vmatprep.subr.bf16.mxu0 0
      %1812 = vmatpush1.bf16.xpose.msra.mxu0 0
      %1813 = vmatprep.subr.bf16.mxu0 0
      %1814 = vmatpush1.bf16.xpose.msra.mxu0 0
      %1815 = vmatprep.subr.bf16.mxu0 0
      %1816 = vmatpush1.bf16.xpose.msra.mxu0 0
      %1817 = vmatprep.subr.bf16.mxu0 0
      %1818 = vmatpush1.bf16.xpose.msra.mxu0 0
      %1819 = vmatprep.subr.bf16.mxu0 0
      %1820 = vmatpush1.bf16.xpose.msra.mxu0 0
      %1821 = vmatprep.subr.bf16.mxu0 0
      %1822 = vmatpush1.bf16.xpose.msra.mxu0 0
      %1823 = vmatprep.subr.bf16.mxu0 0
      %1824 = vmatpush1.bf16.xpose.msra.mxu0 0
      %1825 = vmatprep.subr.bf16.mxu0 0
      %1826 = vmatpush1.bf16.xpose.msra.mxu0 0
      %1827 = vmatprep.subr.bf16.mxu0 0
      %1828 = vmatpush1.bf16.xpose.msra.mxu0 0
      %1829 = vmatprep.subr.bf16.mxu0 0
      %1830 = vmatpush1.bf16.xpose.msra.mxu0 0
      %1831 = vmatprep.subr.bf16.mxu0 0
      %1832 = vmatpush1.bf16.xpose.msra.mxu0 0
      %1833 = vmatprep.subr.bf16.mxu0 0
      %1834 = vmatpush1.bf16.xpose.msra.mxu0 0
      %1835 = vmatprep.subr.bf16.mxu0 0
      %1836 = vmatpush1.bf16.xpose.msra.mxu0 0
      %1837 = vmatprep.subr.bf16.mxu0 0
      %1838 = vmatpush1.bf16.xpose.msra.mxu0 0
      %1839 = vmatprep.subr.bf16.mxu0 0
      %1840 = vmatpush1.bf16.xpose.msra.mxu0 0
      %1841 = vmatprep.mubr.bf16.mxu0 0
      %1842 = vmatmul.mubr.bf16.gmra.mrb[0].mxu0 %v1804
      %v1843 = vpop.f32.mrb[0].mxu0
      %v1844 = vadd.f32 0.0, %v1843
      %v1845 = vpop.f32.mrb[0].mxu0
      %v1846 = vpop.f32.mrb[0].mxu0
      %v1847 = vadd.f32 0.0, %v1846
      %v1848 = vpop.f32.mrb[0].mxu0
      %1849 = vdwg.mxu0
      %v1850 = vmul.f32 %v1844, 0.35355338
      %v1851 = vmul.f32 %v1847, 0.35355338
      %v1852 = vadd.f32 %v1850, %v740
      %v1853 = vadd.f32 %v1851, %v740
      %v1854 = vsel %vm744, %v1852, -inf
      %1855 = vmax.xlane.f32.xlu0 %v1854
      %v1856 = vpop.xlane.xlu0 %1855
      %v1857 = vsel %vm744, %v1853, -inf
      %1858 = vmax.xlane.f32.xlu0 %v1857
      %v1859 = vpop.xlane.xlu0 %1858
      %v1860 = vsub.f32 %v1852, %v1856
      %v1861 = vsub.f32 %v1853, %v1859
      %v1862 = vmul.f32 %v1860, 1.442695
      %v1863 = vpow.pop %v1862
      %v1864 = vmul.f32 %v1861, 1.442695
      %v1865 = vpow.pop %v1864
      %v1866 = vsel %vm744, %v1863, 0.0
      %1867 = vadd.xlane.f32.xlu0 %v1866
      %v1868 = vpop.xlane.xlu0 %1867
      %v1869 = vsel %vm744, %v1865, 0.0
      %1870 = vadd.xlane.f32.xlu0 %v1869
      %v1871 = vpop.xlane.xlu0 %1870
      %v1872 = vrcp.pop %v1868
      %v1873 = vrcp.pop %v1871
      %v1874 = vmul.f32 %v1863, %v1872
      %v1875 = vmul.f32 %v1865, %v1873
      %v1876 = vpack.c.bf16 %v1875, %v1874
      %v1877 = vpack.c.bf16 %v1798, %v1795
      %v1879 = vsel %vm744, %v1876, 0
      %1881 = vmatprep.subr.bf16.mxu0 0
      %1882 = vmatpush1.bf16.msra.mxu0 %v1877
      %1883 = vmatprep.subr.bf16.mxu0 0
      %1884 = vmatpush1.bf16.msra.mxu0 0
      %1885 = vmatprep.subr.bf16.mxu0 0
      %1886 = vmatpush1.bf16.msra.mxu0 0
      %1887 = vmatprep.subr.bf16.mxu0 0
      %1888 = vmatpush1.bf16.msra.mxu0 0
      %1889 = vmatprep.subr.bf16.mxu0 0
      %1890 = vmatpush1.bf16.msra.mxu0 0
      %1891 = vmatprep.subr.bf16.mxu0 0
      %1892 = vmatpush1.bf16.msra.mxu0 0
      %1893 = vmatprep.subr.bf16.mxu0 0
      %1894 = vmatpush1.bf16.msra.mxu0 0
      %1895 = vmatprep.subr.bf16.mxu0 0
      %1896 = vmatpush1.bf16.msra.mxu0 0
      %1897 = vmatprep.subr.bf16.mxu0 0
      %1898 = vmatpush1.bf16.msra.mxu0 0
      %1899 = vmatprep.subr.bf16.mxu0 0
      %1900 = vmatpush1.bf16.msra.mxu0 0
      %1901 = vmatprep.subr.bf16.mxu0 0
      %1902 = vmatpush1.bf16.msra.mxu0 0
      %1903 = vmatprep.subr.bf16.mxu0 0
      %1904 = vmatpush1.bf16.msra.mxu0 0
      %1905 = vmatprep.subr.bf16.mxu0 0
      %1906 = vmatpush1.bf16.msra.mxu0 0
      %1907 = vmatprep.subr.bf16.mxu0 0
      %1908 = vmatpush1.bf16.msra.mxu0 0
      %1909 = vmatprep.subr.bf16.mxu0 0
      %1910 = vmatpush1.bf16.msra.mxu0 0
      %1911 = vmatprep.subr.bf16.mxu0 0
      %1912 = vmatpush1.bf16.msra.mxu0 0
      %1913 = vmatprep.mubr.bf16.mxu0 0
      %1914 = vmatmul.mubr.bf16.gmra.mrb[0].mxu0 %v1879
      %v1915 = vpop.f32.mrb[0].mxu0
      %v1916 = vadd.f32 0.0, %v1915
      %v1917 = vpop.f32.mrb[0].mxu0
      %v1918 = vpop.f32.mrb[0].mxu0
      %v1919 = vadd.f32 0.0, %v1918
      %v1920 = vpop.f32.mrb[0].mxu0
      %1921 = vdwg.mxu0
      %v1922 = vpack.c.bf16 %v1919, %v1916
      %s1923 = scalar_lea.vmem %s9, 12
      %v1924 = vld [vmem:[%s1923] sm:$0xf]
      %v1926 = vsel %vm686, %v1922, 0
      %v1929 = vsel %vm1140, %v1924, 0
      %1931 = vmatprep.subr.bf16.mxu0 0
      %1932 = vmatpush1.bf16.msra.mxu0 %v1929
      %1933 = vmatprep.subr.bf16.mxu0 0
      %1934 = vmatpush1.bf16.msra.mxu0 0
      %1935 = vmatprep.subr.bf16.mxu0 0
      %1936 = vmatpush1.bf16.msra.mxu0 0
      %1937 = vmatprep.subr.bf16.mxu0 0
      %1938 = vmatpush1.bf16.msra.mxu0 0
      %1939 = vmatprep.subr.bf16.mxu0 0
      %1940 = vmatpush1.bf16.msra.mxu0 0
      %1941 = vmatprep.subr.bf16.mxu0 0
      %1942 = vmatpush1.bf16.msra.mxu0 0
      %1943 = vmatprep.subr.bf16.mxu0 0
      %1944 = vmatpush1.bf16.msra.mxu0 0
      %1945 = vmatprep.subr.bf16.mxu0 0
      %1946 = vmatpush1.bf16.msra.mxu0 0
      %1947 = vmatprep.subr.bf16.mxu0 0
      %1948 = vmatpush1.bf16.msra.mxu0 0
      %1949 = vmatprep.subr.bf16.mxu0 0
      %1950 = vmatpush1.bf16.msra.mxu0 0
      %1951 = vmatprep.subr.bf16.mxu0 0
      %1952 = vmatpush1.bf16.msra.mxu0 0
      %1953 = vmatprep.subr.bf16.mxu0 0
      %1954 = vmatpush1.bf16.msra.mxu0 0
      %1955 = vmatprep.subr.bf16.mxu0 0
      %1956 = vmatpush1.bf16.msra.mxu0 0
      %1957 = vmatprep.subr.bf16.mxu0 0
      %1958 = vmatpush1.bf16.msra.mxu0 0
      %1959 = vmatprep.subr.bf16.mxu0 0
      %1960 = vmatpush1.bf16.msra.mxu0 0
      %1961 = vmatprep.subr.bf16.mxu0 0
      %1962 = vmatpush1.bf16.msra.mxu0 0
      %1963 = vmatprep.mubr.bf16.mxu0 0
      %1964 = vmatmul.mubr.bf16.gmra.mrb[0].mxu0 %v1926
      %v1965 = vpop.f32.mrb[0].mxu0
      %v1966 = vadd.f32 0.0, %v1965
      %v1967 = vpop.f32.mrb[0].mxu0
      %v1968 = vpop.f32.mrb[0].mxu0
      %v1969 = vadd.f32 0.0, %v1968
      %v1970 = vpop.f32.mrb[0].mxu0
      %1971 = vdwg.mxu0
      %v1972 = vadd.f32 %v1601, %v1966
      %v1973 = vadd.f32 %v1602, %v1969
      %v1974 = vadd.f32 %v476, %v1972
      %v1975 = vadd.f32 %v477, %v1973
      %v1976 = vld [vmem:[%s10] sm:$0x1]
      %v1978 = vlaneseq
      %v1979 = vshrl.u32 %v1978, 7
      %v1980 = vsub.s32 0, %v1979
      %v1981 = vrot.slane %v1976, %v1980
      %v1983 = vadd.f32 %v1974, %v1981
      %v1984 = vadd.f32 %v1975, %v1981
      %v1985 = vsel %vm508, %v1983, 0.0
      %1986 = vadd.xlane.f32.xlu0 %v1985
      %v1987 = vpop.xlane.xlu0 %1986
      %v1988 = vsel %vm508, %v1984, 0.0
      %1989 = vadd.xlane.f32.xlu0 %v1988
      %v1990 = vpop.xlane.xlu0 %1989
      %v1991 = vrcp.pop 32.0
      %v1992 = vmul.f32 %v1987, %v1991
      %v1993 = vmul.f32 %v1990, %v1991
      %v1994 = vsub.f32 %v1983, %v1992
      %v1995 = vsub.f32 %v1984, %v1993
      %v1996 = vmul.f32 %v1994, %v1994
      %v1997 = vmul.f32 %v1995, %v1995
      %v1998 = vsel %vm508, %v1996, 0.0
      %1999 = vadd.xlane.f32.xlu0 %v1998
      %v2000 = vpop.xlane.xlu0 %1999
      %v2001 = vsel %vm508, %v1997, 0.0
      %2002 = vadd.xlane.f32.xlu0 %v2001
      %v2003 = vpop.xlane.xlu0 %2002
      %v2004 = vmul.f32 %v2000, %v1991
      %v2005 = vmul.f32 %v2003, %v1991
      %v2006 = vadd.f32 %v2004, 1e-06
      %v2007 = vadd.f32 %v2005, 1e-06
      %v2008 = vrsqrt.pop %v2006
      %v2009 = vrsqrt.pop %v2007
      %v2010 = vmul.f32 %v1994, %v2008
      %v2011 = vmul.f32 %v1995, %v2009
      %v2012 = vld [vmem:[%s11] sm:$0x1]
      %v2014 = vlaneseq
      %v2015 = vshrl.u32 %v2014, 7
      %v2016 = vsub.s32 0, %v2015
      %v2017 = vrot.slane %v2012, %v2016
      %v2019 = vmul.f32 %v2010, %v2017
      %v2020 = vmul.f32 %v2011, %v2017
      %v2021 = vld [vmem:[%s12] sm:$0x1]
      %v2023 = vlaneseq
      %v2024 = vshrl.u32 %v2023, 7
      %v2025 = vsub.s32 0, %v2024
      %v2026 = vrot.slane %v2021, %v2025
      %v2028 = vadd.f32 %v2019, %v2026
      %v2029 = vadd.f32 %v2020, %v2026
      %2030 = vst.msk [vmem:[%s474] sm:$0xff] %vm508, %v2028
      %2031 = vst.msk [vmem:[%s474 + $0x8] sm:$0xff] %vm508, %v2029
      %p2032 = scmp.lt.s32.totalorder %s24, 1
      %s2033 = scalar_select %p2032, %s24, 1
      %s2034 = smul.addr %s2033, 2
      %s2035 = smul.addr %s2034, 8
      %s2036 = scalar_lea.vmem %s13, %s2035
      // Predicated region
      $region73: #{forward.13} parent=71 // pred_check
        %p2037 = pneg %p330
      $region74: #{forward.13} parent=71 // pred_check_branch
        %2039 = sbr.rel (%p2037) target = $region76
      $region75: #{forward.13} parent=71 // pred_region
        _
      $region76: #{forward.13} parent=71 // pred_fallthru
        _
    $region72: #{forward.13} parent=5 // pred_fallthru
      _
    %p2040 = scmp.le.s32.totalorder 2, %s19
    // Predicated region
    $region77: #{forward.13} parent=5 // pred_check
      %p2041 = pneg %p2040
    $region78: #{forward.13} parent=5 // pred_check_branch
      %2043 = sbr.rel (%p2041) target = $region80
    $region79: #{forward.13} parent=5 // pred_region
      %s2044 = ssub.s32 %s19, 2
      // Predicated region
      $region81: #{forward.13} parent=79 // pred_check
        %p2045 = pneg %p336
      $region82: #{forward.13} parent=79 // pred_check_branch
        %2047 = sbr.rel (%p2045) target = $region84
      $region83: #{forward.13} parent=79 // pred_region
        %p2048 = scmp.lt.s32.totalorder %s25, 1
        %s2049 = scalar_select %p2048, %s25, 1
        %s2050 = smul.addr %s2049, 2
        %s2051 = smul.addr %s2050, 8
        %s2052 = scalar_lea.vmem %s13, %s2051
      $region84: #{forward.13} parent=79 // pred_fallthru
        _
    $region80: #{forward.13} parent=5 // pred_fallthru
      _
  $region6: #{forward.13} parent=0 // loop_footer
    %s23 = sadd.s32 1, %s19
  $region7: #{forward.13} parent=0 // loop_footer_branch
    %18 = sbr.rel target = $region3
  $region8: #{forward.13} parent=0 // loop_exit
    _

// kernel: forward.11
$region0: #{forward.11}
  #allocation0 [shape = 'u32[]', space=smem, size = 0x4, offset = 0x4, fixed_abs, tag = 'smem constant byte address 0x4 - core index']
  #allocation1 [shape = 'u32[144,128]{1,0:T(1,128)}', space=vmem, size = 0x12000, scoped, tag = 'internal scratch']
  %s0 = inlined_call_operand.vmem [shape: f32[2,8,32], index: 0, kind: input, shape index: {}, may-alias: {0,1}]
  %s1 = inlined_call_operand.vmem [shape: f32[2,8,32], index: 1, kind: input, shape index: {}, may-alias: {0,1}]
  %s2 = inlined_call_operand.vmem [shape: f32[2,1,8], index: 2, kind: input, shape index: {}]
  %s3 = inlined_call_operand.vmem [shape: bf16[4,32,8], index: 3, kind: input, shape index: {}]
  %s4 = inlined_call_operand.vmem [shape: bf16[4,32,8], index: 4, kind: input, shape index: {}]
  %s5 = inlined_call_operand.vmem [shape: bf16[4,32,8], index: 5, kind: input, shape index: {}]
  %s6 = inlined_call_operand.vmem [shape: f32[4,1,8], index: 6, kind: input, shape index: {}]
  %s7 = inlined_call_operand.vmem [shape: f32[4,1,8], index: 7, kind: input, shape index: {}]
  %s8 = inlined_call_operand.vmem [shape: f32[4,1,8], index: 8, kind: input, shape index: {}]
  %s9 = inlined_call_operand.vmem [shape: bf16[4,8,32], index: 9, kind: input, shape index: {}]
  %s10 = inlined_call_operand.vmem [shape: f32[1,32], index: 10, kind: input, shape index: {}]
  %s11 = inlined_call_operand.vmem [shape: f32[1,32], index: 11, kind: input, shape index: {}]
  %s12 = inlined_call_operand.vmem [shape: f32[1,32], index: 12, kind: input, shape index: {}]
  %s13 = inlined_call_operand.vmem [shape: f32[2,8,32], index: 13, kind: output, shape index: {}]
  %s14 = sld [smem:[#allocation0]]
  $region85: #{forward.11} parent=0
    _
  %s16 = ssub.s32 1, %s14
  %s17 = scalar_select 0, %s16, %s14
  loop: start=0, step=1, limit=4
  $region2: #{forward.11} parent=0 // loop_pre_header
    _
  $region3: #{forward.11} parent=0 // loop_header
    %s19 = sphi 0, %s23
    %p20 = scmp.ge.s32.totalorder %s19, 4
    %s29 = sphi 0, %s31
    %s32 = sphi 0, %s29
    %s33 = sphi 0, %s32
    %s49 = sphi 0, %s33
    %s55 = sphi 0, %s57
    %s58 = sphi 0, %s55
    %s59 = sphi 0, %s58
    %s75 = sphi 0, %s59
    %s81 = sphi 0, %s83
    %s84 = sphi 0, %s81
    %s85 = sphi 0, %s84
    %s101 = sphi 0, %s85
    %s105 = sphi 0, %s105
    %s107 = sphi 0, %s105
    %s108 = sphi 0, %s107
    %s122 = sphi 0, %s108
    %s126 = sphi 0, %s126
    %s128 = sphi 0, %s126
    %s129 = sphi 0, %s128
    %s143 = sphi 0, %s129
    %s147 = sphi 0, %s147
    %s149 = sphi 0, %s147
    %s150 = sphi 0, %s149
    %s164 = sphi 0, %s150
    %s168 = sphi 0, %s168
    %s170 = sphi 0, %s168
    %s171 = sphi 0, %s170
    %s185 = sphi 0, %s171
    %s189 = sphi 0, %s189
    %s191 = sphi 0, %s189
    %s192 = sphi 0, %s191
    %s206 = sphi 0, %s192
    %s210 = sphi 0, %s210
    %s212 = sphi 0, %s210
    %s213 = sphi 0, %s212
    %s227 = sphi 0, %s213
    %s231 = sphi 0, %s231
    %s233 = sphi 0, %s231
    %s234 = sphi 0, %s233
    %s248 = sphi 0, %s234
    %s252 = sphi 0, %s252
    %s254 = sphi 0, %s252
    %s255 = sphi 0, %s254
    %s269 = sphi 0, %s255
    %s273 = sphi 0, %s273
    %s275 = sphi 0, %s273
    %s276 = sphi 0, %s275
    %s290 = sphi 0, %s276
    %s294 = sphi 0, %s294
    %s296 = sphi 0, %s294
    %s297 = sphi 0, %s296
    %s311 = sphi 0, %s297
    %s317 = sphi 0, %s319
    %s320 = sphi 0, %s317
    %s321 = sphi 0, %s320
    %s337 = sphi 0, %s321
  $region4: #{forward.11} parent=0 // loop_header_branch
    %22 = sbr.rel (%p20) target = $region8
  $region5: #{forward.11} parent=0 // loop_body
    %s24 = ssub.s32 %s19, 1
    %s25 = ssub.s32 %s19, 2
    %s26 = sadd.s32 %s19, 1
    %s27 = ssub.s32 %s19, %s26
    %p28 = scmp.eq.s32.totalorder %s27, 0
    %s30 = sadd.s32 %s29, 1
    %s31 = scalar_select %p28, %s29, %s30
    %p34 = pneg %p28
    %p35 = scmp.eq.s32.totalorder %s19, 1
    %p36 = por %p34, %p35
    %p37 = scmp.ne.s32.totalorder %s29, %s32
    %p38 = scmp.eq.s32.totalorder %s19, 0
    %p39 = por %p37, %p38
    %p40 = scmp.ne.s32.totalorder %s29, %s32
    %p41 = scmp.eq.s32.totalorder %s24, 1
    %p42 = por %p40, %p41
    %p43 = scmp.ne.s32.totalorder %s32, %s33
    %p44 = scmp.eq.s32.totalorder %s24, 0
    %p45 = por %p43, %p44
    %p46 = scmp.ne.s32.totalorder %s32, %s33
    %p47 = scmp.eq.s32.totalorder %s25, 1
    %p48 = por %p46, %p47
    %p50 = scmp.ne.s32.totalorder %s33, %s49
    %p51 = scmp.eq.s32.totalorder %s25, 0
    %p52 = por %p50, %p51
    %s53 = ssub.s32 %s19, %s26
    %p54 = scmp.eq.s32.totalorder %s53, 0
    %s56 = sadd.s32 %s55, 1
    %s57 = scalar_select %p54, %s55, %s56
    %p60 = pneg %p54
    %p61 = scmp.eq.s32.totalorder %s19, 1
    %p62 = por %p60, %p61
    %p63 = scmp.ne.s32.totalorder %s55, %s58
    %p64 = scmp.eq.s32.totalorder %s19, 0
    %p65 = por %p63, %p64
    %p66 = scmp.ne.s32.totalorder %s55, %s58
    %p67 = scmp.eq.s32.totalorder %s24, 1
    %p68 = por %p66, %p67
    %p69 = scmp.ne.s32.totalorder %s58, %s59
    %p70 = scmp.eq.s32.totalorder %s24, 0
    %p71 = por %p69, %p70
    %p72 = scmp.ne.s32.totalorder %s58, %s59
    %p73 = scmp.eq.s32.totalorder %s25, 1
    %p74 = por %p72, %p73
    %p76 = scmp.ne.s32.totalorder %s59, %s75
    %p77 = scmp.eq.s32.totalorder %s25, 0
    %p78 = por %p76, %p77
    %s79 = ssub.s32 %s19, %s26
    %p80 = scmp.eq.s32.totalorder %s79, 0
    %s82 = sadd.s32 %s81, 1
    %s83 = scalar_select %p80, %s81, %s82
    %p86 = pneg %p80
    %p87 = scmp.eq.s32.totalorder %s19, 1
    %p88 = por %p86, %p87
    %p89 = scmp.ne.s32.totalorder %s81, %s84
    %p90 = scmp.eq.s32.totalorder %s19, 0
    %p91 = por %p89, %p90
    %p92 = scmp.ne.s32.totalorder %s81, %s84
    %p93 = scmp.eq.s32.totalorder %s24, 1
    %p94 = por %p92, %p93
    %p95 = scmp.ne.s32.totalorder %s84, %s85
    %p96 = scmp.eq.s32.totalorder %s24, 0
    %p97 = por %p95, %p96
    %p98 = scmp.ne.s32.totalorder %s84, %s85
    %p99 = scmp.eq.s32.totalorder %s25, 1
    %p100 = por %p98, %p99
    %p102 = scmp.ne.s32.totalorder %s85, %s101
    %p103 = scmp.eq.s32.totalorder %s25, 0
    %p104 = por %p102, %p103
    %s106 = sadd.s32 %s105, 1
    %p109 = scmp.eq.s32.totalorder %s19, 1
    %p110 = scmp.ne.s32.totalorder %s105, %s107
    %p111 = scmp.eq.s32.totalorder %s19, 0
    %p112 = por %p110, %p111
    %p113 = scmp.ne.s32.totalorder %s105, %s107
    %p114 = scmp.eq.s32.totalorder %s24, 1
    %p115 = por %p113, %p114
    %p116 = scmp.ne.s32.totalorder %s107, %s108
    %p117 = scmp.eq.s32.totalorder %s24, 0
    %p118 = por %p116, %p117
    %p119 = scmp.ne.s32.totalorder %s107, %s108
    %p120 = scmp.eq.s32.totalorder %s25, 1
    %p121 = por %p119, %p120
    %p123 = scmp.ne.s32.totalorder %s108, %s122
    %p124 = scmp.eq.s32.totalorder %s25, 0
    %p125 = por %p123, %p124
    %s127 = sadd.s32 %s126, 1
    %p130 = scmp.eq.s32.totalorder %s19, 1
    %p131 = scmp.ne.s32.totalorder %s126, %s128
    %p132 = scmp.eq.s32.totalorder %s19, 0
    %p133 = por %p131, %p132
    %p134 = scmp.ne.s32.totalorder %s126, %s128
    %p135 = scmp.eq.s32.totalorder %s24, 1
    %p136 = por %p134, %p135
    %p137 = scmp.ne.s32.totalorder %s128, %s129
    %p138 = scmp.eq.s32.totalorder %s24, 0
    %p139 = por %p137, %p138
    %p140 = scmp.ne.s32.totalorder %s128, %s129
    %p141 = scmp.eq.s32.totalorder %s25, 1
    %p142 = por %p140, %p141
    %p144 = scmp.ne.s32.totalorder %s129, %s143
    %p145 = scmp.eq.s32.totalorder %s25, 0
    %p146 = por %p144, %p145
    %s148 = sadd.s32 %s147, 1
    %p151 = scmp.eq.s32.totalorder %s19, 1
    %p152 = scmp.ne.s32.totalorder %s147, %s149
    %p153 = scmp.eq.s32.totalorder %s19, 0
    %p154 = por %p152, %p153
    %p155 = scmp.ne.s32.totalorder %s147, %s149
    %p156 = scmp.eq.s32.totalorder %s24, 1
    %p157 = por %p155, %p156
    %p158 = scmp.ne.s32.totalorder %s149, %s150
    %p159 = scmp.eq.s32.totalorder %s24, 0
    %p160 = por %p158, %p159
    %p161 = scmp.ne.s32.totalorder %s149, %s150
    %p162 = scmp.eq.s32.totalorder %s25, 1
    %p163 = por %p161, %p162
    %p165 = scmp.ne.s32.totalorder %s150, %s164
    %p166 = scmp.eq.s32.totalorder %s25, 0
    %p167 = por %p165, %p166
    %s169 = sadd.s32 %s168, 1
    %p172 = scmp.eq.s32.totalorder %s19, 1
    %p173 = scmp.ne.s32.totalorder %s168, %s170
    %p174 = scmp.eq.s32.totalorder %s19, 0
    %p175 = por %p173, %p174
    %p176 = scmp.ne.s32.totalorder %s168, %s170
    %p177 = scmp.eq.s32.totalorder %s24, 1
    %p178 = por %p176, %p177
    %p179 = scmp.ne.s32.totalorder %s170, %s171
    %p180 = scmp.eq.s32.totalorder %s24, 0
    %p181 = por %p179, %p180
    %p182 = scmp.ne.s32.totalorder %s170, %s171
    %p183 = scmp.eq.s32.totalorder %s25, 1
    %p184 = por %p182, %p183
    %p186 = scmp.ne.s32.totalorder %s171, %s185
    %p187 = scmp.eq.s32.totalorder %s25, 0
    %p188 = por %p186, %p187
    %s190 = sadd.s32 %s189, 1
    %p193 = scmp.eq.s32.totalorder %s19, 1
    %p194 = scmp.ne.s32.totalorder %s189, %s191
    %p195 = scmp.eq.s32.totalorder %s19, 0
    %p196 = por %p194, %p195
    %p197 = scmp.ne.s32.totalorder %s189, %s191
    %p198 = scmp.eq.s32.totalorder %s24, 1
    %p199 = por %p197, %p198
    %p200 = scmp.ne.s32.totalorder %s191, %s192
    %p201 = scmp.eq.s32.totalorder %s24, 0
    %p202 = por %p200, %p201
    %p203 = scmp.ne.s32.totalorder %s191, %s192
    %p204 = scmp.eq.s32.totalorder %s25, 1
    %p205 = por %p203, %p204
    %p207 = scmp.ne.s32.totalorder %s192, %s206
    %p208 = scmp.eq.s32.totalorder %s25, 0
    %p209 = por %p207, %p208
    %s211 = sadd.s32 %s210, 1
    %p214 = scmp.eq.s32.totalorder %s19, 1
    %p215 = scmp.ne.s32.totalorder %s210, %s212
    %p216 = scmp.eq.s32.totalorder %s19, 0
    %p217 = por %p215, %p216
    %p218 = scmp.ne.s32.totalorder %s210, %s212
    %p219 = scmp.eq.s32.totalorder %s24, 1
    %p220 = por %p218, %p219
    %p221 = scmp.ne.s32.totalorder %s212, %s213
    %p222 = scmp.eq.s32.totalorder %s24, 0
    %p223 = por %p221, %p222
    %p224 = scmp.ne.s32.totalorder %s212, %s213
    %p225 = scmp.eq.s32.totalorder %s25, 1
    %p226 = por %p224, %p225
    %p228 = scmp.ne.s32.totalorder %s213, %s227
    %p229 = scmp.eq.s32.totalorder %s25, 0
    %p230 = por %p228, %p229
    %s232 = sadd.s32 %s231, 1
    %p235 = scmp.eq.s32.totalorder %s19, 1
    %p236 = scmp.ne.s32.totalorder %s231, %s233
    %p237 = scmp.eq.s32.totalorder %s19, 0
    %p238 = por %p236, %p237
    %p239 = scmp.ne.s32.totalorder %s231, %s233
    %p240 = scmp.eq.s32.totalorder %s24, 1
    %p241 = por %p239, %p240
    %p242 = scmp.ne.s32.totalorder %s233, %s234
    %p243 = scmp.eq.s32.totalorder %s24, 0
    %p244 = por %p242, %p243
    %p245 = scmp.ne.s32.totalorder %s233, %s234
    %p246 = scmp.eq.s32.totalorder %s25, 1
    %p247 = por %p245, %p246
    %p249 = scmp.ne.s32.totalorder %s234, %s248
    %p250 = scmp.eq.s32.totalorder %s25, 0
    %p251 = por %p249, %p250
    %s253 = sadd.s32 %s252, 1
    %p256 = scmp.eq.s32.totalorder %s19, 1
    %p257 = scmp.ne.s32.totalorder %s252, %s254
    %p258 = scmp.eq.s32.totalorder %s19, 0
    %p259 = por %p257, %p258
    %p260 = scmp.ne.s32.totalorder %s252, %s254
    %p261 = scmp.eq.s32.totalorder %s24, 1
    %p262 = por %p260, %p261
    %p263 = scmp.ne.s32.totalorder %s254, %s255
    %p264 = scmp.eq.s32.totalorder %s24, 0
    %p265 = por %p263, %p264
    %p266 = scmp.ne.s32.totalorder %s254, %s255
    %p267 = scmp.eq.s32.totalorder %s25, 1
    %p268 = por %p266, %p267
    %p270 = scmp.ne.s32.totalorder %s255, %s269
    %p271 = scmp.eq.s32.totalorder %s25, 0
    %p272 = por %p270, %p271
    %s274 = sadd.s32 %s273, 1
    %p277 = scmp.eq.s32.totalorder %s19, 1
    %p278 = scmp.ne.s32.totalorder %s273, %s275
    %p279 = scmp.eq.s32.totalorder %s19, 0
    %p280 = por %p278, %p279
    %p281 = scmp.ne.s32.totalorder %s273, %s275
    %p282 = scmp.eq.s32.totalorder %s24, 1
    %p283 = por %p281, %p282
    %p284 = scmp.ne.s32.totalorder %s275, %s276
    %p285 = scmp.eq.s32.totalorder %s24, 0
    %p286 = por %p284, %p285
    %p287 = scmp.ne.s32.totalorder %s275, %s276
    %p288 = scmp.eq.s32.totalorder %s25, 1
    %p289 = por %p287, %p288
    %p291 = scmp.ne.s32.totalorder %s276, %s290
    %p292 = scmp.eq.s32.totalorder %s25, 0
    %p293 = por %p291, %p292
    %s295 = sadd.s32 %s294, 1
    %p298 = scmp.eq.s32.totalorder %s19, 1
    %p299 = scmp.ne.s32.totalorder %s294, %s296
    %p300 = scmp.eq.s32.totalorder %s19, 0
    %p301 = por %p299, %p300
    %p302 = scmp.ne.s32.totalorder %s294, %s296
    %p303 = scmp.eq.s32.totalorder %s24, 1
    %p304 = por %p302, %p303
    %p305 = scmp.ne.s32.totalorder %s296, %s297
    %p306 = scmp.eq.s32.totalorder %s24, 0
    %p307 = por %p305, %p306
    %p308 = scmp.ne.s32.totalorder %s296, %s297
    %p309 = scmp.eq.s32.totalorder %s25, 1
    %p310 = por %p308, %p309
    %p312 = scmp.ne.s32.totalorder %s297, %s311
    %p313 = scmp.eq.s32.totalorder %s25, 0
    %p314 = por %p312, %p313
    %s315 = ssub.s32 %s19, %s26
    %p316 = scmp.eq.s32.totalorder %s315, 0
    %s318 = sadd.s32 %s317, 1
    %s319 = scalar_select %p316, %s317, %s318
    %p322 = pneg %p316
    %p323 = scmp.eq.s32.totalorder %s19, 1
    %p324 = por %p322, %p323
    %p325 = scmp.ne.s32.totalorder %s317, %s320
    %p326 = scmp.eq.s32.totalorder %s19, 0
    %p327 = por %p325, %p326
    %p328 = scmp.ne.s32.totalorder %s317, %s320
    %p329 = scmp.eq.s32.totalorder %s24, 1
    %p330 = por %p328, %p329
    %p331 = scmp.ne.s32.totalorder %s320, %s321
    %p332 = scmp.eq.s32.totalorder %s24, 0
    %p333 = por %p331, %p332
    %p334 = scmp.ne.s32.totalorder %s320, %s321
    %p335 = scmp.eq.s32.totalorder %s25, 1
    %p336 = por %p334, %p335
    %p338 = scmp.ne.s32.totalorder %s321, %s337
    %p339 = scmp.eq.s32.totalorder %s25, 0
    %p340 = por %p338, %p339
    %p341 = scmp.le.s32.totalorder 1, %s19
    %p342 = scmp.lt.s32.totalorder %s19, 3
    %p343 = pnand %p341, %p342
    %p344 = pneg %p343
    // Predicated region
    $region9: #{forward.11} parent=5 // pred_check
      _
    $region10: #{forward.11} parent=5 // pred_check_branch
      %346 = sbr.rel (%p343) target = $region12
    $region11: #{forward.11} parent=5 // pred_region
      %s347 = ssub.s32 %s19, 1
      // Predicated region
      $region13: #{forward.11} parent=11 // pred_check
        %p348 = pneg %p118
      $region14: #{forward.11} parent=11 // pred_check_branch
        %350 = sbr.rel (%p348) target = $region16
      $region15: #{forward.11} parent=11 // pred_region
        _
      $region16: #{forward.11} parent=11 // pred_fallthru
        _
      // Predicated region
      $region17: #{forward.11} parent=11 // pred_check
        %p351 = pneg %p139
      $region18: #{forward.11} parent=11 // pred_check_branch
        %353 = sbr.rel (%p351) target = $region20
      $region19: #{forward.11} parent=11 // pred_region
        _
      $region20: #{forward.11} parent=11 // pred_fallthru
        _
      // Predicated region
      $region21: #{forward.11} parent=11 // pred_check
        %p354 = pneg %p160
      $region22: #{forward.11} parent=11 // pred_check_branch
        %356 = sbr.rel (%p354) target = $region24
      $region23: #{forward.11} parent=11 // pred_region
        _
      $region24: #{forward.11} parent=11 // pred_fallthru
        _
      // Predicated region
      $region25: #{forward.11} parent=11 // pred_check
        %p357 = pneg %p181
      $region26: #{forward.11} parent=11 // pred_check_branch
        %359 = sbr.rel (%p357) target = $region28
      $region27: #{forward.11} parent=11 // pred_region
        _
      $region28: #{forward.11} parent=11 // pred_fallthru
        _
      // Predicated region
      $region29: #{forward.11} parent=11 // pred_check
        %p360 = pneg %p202
      $region30: #{forward.11} parent=11 // pred_check_branch
        %362 = sbr.rel (%p360) target = $region32
      $region31: #{forward.11} parent=11 // pred_region
        _
      $region32: #{forward.11} parent=11 // pred_fallthru
        _
      // Predicated region
      $region33: #{forward.11} parent=11 // pred_check
        %p363 = pneg %p223
      $region34: #{forward.11} parent=11 // pred_check_branch
        %365 = sbr.rel (%p363) target = $region36
      $region35: #{forward.11} parent=11 // pred_region
        _
      $region36: #{forward.11} parent=11 // pred_fallthru
        _
      // Predicated region
      $region37: #{forward.11} parent=11 // pred_check
        %p366 = pneg %p244
      $region38: #{forward.11} parent=11 // pred_check_branch
        %368 = sbr.rel (%p366) target = $region40
      $region39: #{forward.11} parent=11 // pred_region
        _
      $region40: #{forward.11} parent=11 // pred_fallthru
        _
      // Predicated region
      $region41: #{forward.11} parent=11 // pred_check
        %p369 = pneg %p265
      $region42: #{forward.11} parent=11 // pred_check_branch
        %371 = sbr.rel (%p369) target = $region44
      $region43: #{forward.11} parent=11 // pred_region
        _
      $region44: #{forward.11} parent=11 // pred_fallthru
        _
      // Predicated region
      $region45: #{forward.11} parent=11 // pred_check
        %p372 = pneg %p286
      $region46: #{forward.11} parent=11 // pred_check_branch
        %374 = sbr.rel (%p372) target = $region48
      $region47: #{forward.11} parent=11 // pred_region
        _
      $region48: #{forward.11} parent=11 // pred_fallthru
        _
      // Predicated region
      $region49: #{forward.11} parent=11 // pred_check
        %p375 = pneg %p307
      $region50: #{forward.11} parent=11 // pred_check_branch
        %377 = sbr.rel (%p375) target = $region52
      $region51: #{forward.11} parent=11 // pred_region
        _
      $region52: #{forward.11} parent=11 // pred_fallthru
        _
    $region12: #{forward.11} parent=5 // pred_fallthru
      _
    %p378 = scmp.lt.s32.totalorder %s19, 2
    // Predicated region
    $region53: #{forward.11} parent=5 // pred_check
      %p379 = pneg %p378
    $region54: #{forward.11} parent=5 // pred_check_branch
      %381 = sbr.rel (%p379) target = $region56
    $region55: #{forward.11} parent=5 // pred_region
      // Predicated region
      $region57: #{forward.11} parent=55 // pred_check
        %p382 = pneg %p39
      $region58: #{forward.11} parent=55 // pred_check_branch
        %384 = sbr.rel (%p382) target = $region60
      $region59: #{forward.11} parent=55 // pred_region
        %p385 = scmp.lt.s32.totalorder %s19, 1
        %s386 = scalar_select %p385, %s19, 1
        %s387 = smul.addr %s386, 8
        %s388 = scalar_lea.vmem %s0, %s387
      $region60: #{forward.11} parent=55 // pred_fallthru
        _
      // Predicated region
      $region61: #{forward.11} parent=55 // pred_check
        %p389 = pneg %p65
      $region62: #{forward.11} parent=55 // pred_check_branch
        %391 = sbr.rel (%p389) target = $region64
      $region63: #{forward.11} parent=55 // pred_region
        %p392 = scmp.lt.s32.totalorder %s19, 1
        %s393 = scalar_select %p392, %s19, 1
        %s394 = smul.addr %s393, 8
        %s395 = scalar_lea.vmem %s1, %s394
      $region64: #{forward.11} parent=55 // pred_fallthru
        _
      // Predicated region
      $region65: #{forward.11} parent=55 // pred_check
        %p396 = pneg %p91
      $region66: #{forward.11} parent=55 // pred_check_branch
        %398 = sbr.rel (%p396) target = $region68
      $region67: #{forward.11} parent=55 // pred_region
        %p399 = scmp.lt.s32.totalorder %s19, 1
        %s400 = scalar_select %p399, %s19, 1
        %s401 = scalar_lea.vmem %s2, %s400
      $region68: #{forward.11} parent=55 // pred_fallthru
        _
    $region56: #{forward.11} parent=5 // pred_fallthru
      _
    %p402 = scmp.le.s32.totalorder 1, %s19
    %p403 = scmp.lt.s32.totalorder %s19, 3
    %p404 = pnand %p402, %p403
    %p405 = pneg %p404
    // Predicated region
    $region69: #{forward.11} parent=5 // pred_check
      _
    $region70: #{forward.11} parent=5 // pred_check_branch
      %407 = sbr.rel (%p404) target = $region72
    $region71: #{forward.11} parent=5 // pred_region
      %s408 = ssub.s32 %s19, 1
      %p409 = scmp.lt.s32.totalorder %s24, 1
      %s410 = scalar_select %p409, %s24, 1
      %s411 = smul.addr %s410, 8
      %s412 = scalar_lea.vmem %s0, %s411
      %p413 = pneg %p45
      %p414 = pneg %p42
      %p415 = scmp.lt.s32.totalorder %s24, 1
      %s416 = scalar_select %p415, %s24, 1
      %s417 = smul.addr %s416, 8
      %s418 = scalar_lea.vmem %s1, %s417
      %p419 = pneg %p71
      %p420 = pneg %p68
      %p421 = scmp.lt.s32.totalorder %s24, 1
      %s422 = scalar_select %p421, %s24, 1
      %s423 = scalar_lea.vmem %s2, %s422
      %p424 = pneg %p97
      %p425 = pneg %p94
      %p426 = pneg %p118
      %p427 = pneg %p115
      %p428 = pneg %p139
      %p429 = pneg %p136
      %p430 = pneg %p160
      %p431 = pneg %p157
      %p432 = pneg %p181
      %p433 = pneg %p178
      %p434 = pneg %p202
      %p435 = pneg %p199
      %p436 = pneg %p223
      %p437 = pneg %p220
      %p438 = pneg %p244
      %p439 = pneg %p241
      %p440 = pneg %p265
      %p441 = pneg %p262
      %p442 = pneg %p286
      %p443 = pneg %p283
      %p444 = pneg %p307
      %p445 = pneg %p304
      %p446 = pneg %p333
      %p447 = pneg %p330
      %p448 = scmp.lt.s32.totalorder %s24, 1
      %s449 = scalar_select %p448, %s24, 1
      %s450 = smul.addr %s449, 8
      %s451 = scalar_lea.vmem %s13, %s450
      %p452 = scmp.lt.s32.totalorder %s24, 1
      %s453 = scalar_select %p452, %s24, 1
      %s454 = smul.addr %s453, 8
      %s455 = scalar_lea.vmem %s0, %s454
      %p456 = scmp.lt.s32.totalorder %s24, 1
      %s457 = scalar_select %p456, %s24, 1
      %s458 = smul.addr %s457, 8
      %s459 = scalar_lea.vmem %s1, %s458
      %p460 = scmp.lt.s32.totalorder %s24, 1
      %s461 = scalar_select %p460, %s24, 1
      %s462 = scalar_lea.vmem %s2, %s461
      %p463 = scmp.lt.s32.totalorder %s24, 1
      %s464 = scalar_select %p463, %s24, 1
      %s465 = smul.addr %s464, 8
      %s466 = scalar_lea.vmem %s13, %s465
      %v468 = vld [vmem:[%s455] sm:$0xff]
      %v469 = vld [vmem:[%s459] sm:$0xff]
      %v470 = vld [vmem:[%s462] sm:$0x1]
      %v471 = vsub.f32 1.0, %v470
      %v472 = vmul.f32 %v471, -1e+09
      %v473 = vpack.c.bf16 %v468, %v468
      %v474 = vpack.c.bf16 %v469, %v469
      %v475 = vld [vmem:[%s3] sm:$0xf]
      %v476 = vld [vmem:[%s3 + $0x4] sm:$0xf]
      %v477 = vld [vmem:[%s3 + $0x8] sm:$0xf]
      %v478 = vld [vmem:[%s3 + $0xc] sm:$0xf]
      %v479 = vld [vmem:[%s6] sm:$0x1]
      %v481 = vlaneseq
      %v482 = vshrl.u32 %v481, 7
      %v483 = vsub.s32 0, %v482
      %v484 = vrot.slane %v479, %v483
      %v490 = vunpack.c.l.b16 %v475
      %v491 = vunpack.c.l.b16 %v476
      %v492 = vunpack.c.l.b16 %v477
      %v493 = vunpack.c.l.b16 %v478
      %v494 = vpack.c.b16 %v491, %v490
      %v495 = vpack.c.b16 %v493, %v492
      %vm498 = vcmask 261120
      %v500 = vsel %vm498, %v473, 0
      %502 = vmatprep.subr.bf16.mxu0 0
      %503 = vmatpush1.bf16.msra.mxu0 %v494
      %504 = vmatprep.subr.bf16.mxu0 0
      %505 = vmatpush1.bf16.msra.mxu0 %v495
      %506 = vmatprep.subr.bf16.mxu0 0
      %507 = vmatpush1.bf16.msra.mxu0 0
      %508 = vmatprep.subr.bf16.mxu0 0
      %509 = vmatpush1.bf16.msra.mxu0 0
      %510 = vmatprep.subr.bf16.mxu0 0
      %511 = vmatpush1.bf16.msra.mxu0 0
      %512 = vmatprep.subr.bf16.mxu0 0
      %513 = vmatpush1.bf16.msra.mxu0 0
      %514 = vmatprep.subr.bf16.mxu0 0
      %515 = vmatpush1.bf16.msra.mxu0 0
      %516 = vmatprep.subr.bf16.mxu0 0
      %517 = vmatpush1.bf16.msra.mxu0 0
      %518 = vmatprep.subr.bf16.mxu0 0
      %519 = vmatpush1.bf16.msra.mxu0 0
      %520 = vmatprep.subr.bf16.mxu0 0
      %521 = vmatpush1.bf16.msra.mxu0 0
      %522 = vmatprep.subr.bf16.mxu0 0
      %523 = vmatpush1.bf16.msra.mxu0 0
      %524 = vmatprep.subr.bf16.mxu0 0
      %525 = vmatpush1.bf16.msra.mxu0 0
      %526 = vmatprep.subr.bf16.mxu0 0
      %527 = vmatpush1.bf16.msra.mxu0 0
      %528 = vmatprep.subr.bf16.mxu0 0
      %529 = vmatpush1.bf16.msra.mxu0 0
      %530 = vmatprep.subr.bf16.mxu0 0
      %531 = vmatpush1.bf16.msra.mxu0 0
      %532 = vmatprep.subr.bf16.mxu0 0
      %533 = vmatpush1.bf16.msra.mxu0 0
      %534 = vmatprep.mubr.bf16.mxu0 0
      %535 = vmatmul.mubr.bf16.gmra.mrb[0].mxu0 %v500
      %v536 = vpop.f32.mrb[0].mxu0
      %v537 = vadd.f32 %v484, %v536
      %v538 = vpop.f32.mrb[0].mxu0
      %v539 = vpop.f32.mrb[0].mxu0
      %v540 = vpop.f32.mrb[0].mxu0
      %541 = vdwg.mxu0
      %v542 = vld [vmem:[%s4] sm:$0xf]
      %v543 = vld [vmem:[%s4 + $0x4] sm:$0xf]
      %v544 = vld [vmem:[%s4 + $0x8] sm:$0xf]
      %v545 = vld [vmem:[%s4 + $0xc] sm:$0xf]
      %v546 = vld [vmem:[%s7] sm:$0x1]
      %v548 = vlaneseq
      %v549 = vshrl.u32 %v548, 7
      %v550 = vsub.s32 0, %v549
      %v551 = vrot.slane %v546, %v550
      %v557 = vunpack.c.l.b16 %v542
      %v558 = vunpack.c.l.b16 %v543
      %v559 = vunpack.c.l.b16 %v544
      %v560 = vunpack.c.l.b16 %v545
      %v561 = vpack.c.b16 %v558, %v557
      %v562 = vpack.c.b16 %v560, %v559
      %v566 = vsel %vm498, %v474, 0
      %568 = vmatprep.subr.bf16.mxu0 0
      %569 = vmatpush1.bf16.msra.mxu0 %v561
      %570 = vmatprep.subr.bf16.mxu0 0
      %571 = vmatpush1.bf16.msra.mxu0 %v562
      %572 = vmatprep.subr.bf16.mxu0 0
      %573 = vmatpush1.bf16.msra.mxu0 0
      %574 = vmatprep.subr.bf16.mxu0 0
      %575 = vmatpush1.bf16.msra.mxu0 0
      %576 = vmatprep.subr.bf16.mxu0 0
      %577 = vmatpush1.bf16.msra.mxu0 0
      %578 = vmatprep.subr.bf16.mxu0 0
      %579 = vmatpush1.bf16.msra.mxu0 0
      %580 = vmatprep.subr.bf16.mxu0 0
      %581 = vmatpush1.bf16.msra.mxu0 0
      %582 = vmatprep.subr.bf16.mxu0 0
      %583 = vmatpush1.bf16.msra.mxu0 0
      %584 = vmatprep.subr.bf16.mxu0 0
      %585 = vmatpush1.bf16.msra.mxu0 0
      %586 = vmatprep.subr.bf16.mxu0 0
      %587 = vmatpush1.bf16.msra.mxu0 0
      %588 = vmatprep.subr.bf16.mxu0 0
      %589 = vmatpush1.bf16.msra.mxu0 0
      %590 = vmatprep.subr.bf16.mxu0 0
      %591 = vmatpush1.bf16.msra.mxu0 0
      %592 = vmatprep.subr.bf16.mxu0 0
      %593 = vmatpush1.bf16.msra.mxu0 0
      %594 = vmatprep.subr.bf16.mxu0 0
      %595 = vmatpush1.bf16.msra.mxu0 0
      %596 = vmatprep.subr.bf16.mxu0 0
      %597 = vmatpush1.bf16.msra.mxu0 0
      %598 = vmatprep.subr.bf16.mxu0 0
      %599 = vmatpush1.bf16.msra.mxu0 0
      %600 = vmatprep.mubr.bf16.mxu0 0
      %601 = vmatmul.mubr.bf16.gmra.mrb[0].mxu0 %v566
      %v602 = vpop.f32.mrb[0].mxu0
      %v603 = vadd.f32 %v551, %v602
      %v604 = vpop.f32.mrb[0].mxu0
      %v605 = vpop.f32.mrb[0].mxu0
      %v606 = vpop.f32.mrb[0].mxu0
      %607 = vdwg.mxu0
      %v608 = vld [vmem:[%s5] sm:$0xf]
      %v609 = vld [vmem:[%s5 + $0x4] sm:$0xf]
      %v610 = vld [vmem:[%s5 + $0x8] sm:$0xf]
      %v611 = vld [vmem:[%s5 + $0xc] sm:$0xf]
      %v612 = vld [vmem:[%s8] sm:$0x1]
      %v614 = vlaneseq
      %v615 = vshrl.u32 %v614, 7
      %v616 = vsub.s32 0, %v615
      %v617 = vrot.slane %v612, %v616
      %v623 = vunpack.c.l.b16 %v608
      %v624 = vunpack.c.l.b16 %v609
      %v625 = vunpack.c.l.b16 %v610
      %v626 = vunpack.c.l.b16 %v611
      %v627 = vpack.c.b16 %v624, %v623
      %v628 = vpack.c.b16 %v626, %v625
      %631 = vmatprep.subr.bf16.mxu0 0
      %632 = vmatpush1.bf16.msra.mxu0 %v627
      %633 = vmatprep.subr.bf16.mxu0 0
      %634 = vmatpush1.bf16.msra.mxu0 %v628
      %635 = vmatprep.subr.bf16.mxu0 0
      %636 = vmatpush1.bf16.msra.mxu0 0
      %637 = vmatprep.subr.bf16.mxu0 0
      %638 = vmatpush1.bf16.msra.mxu0 0
      %639 = vmatprep.subr.bf16.mxu0 0
      %640 = vmatpush1.bf16.msra.mxu0 0
      %641 = vmatprep.subr.bf16.mxu0 0
      %642 = vmatpush1.bf16.msra.mxu0 0
      %643 = vmatprep.subr.bf16.mxu0 0
      %644 = vmatpush1.bf16.msra.mxu0 0
      %645 = vmatprep.subr.bf16.mxu0 0
      %646 = vmatpush1.bf16.msra.mxu0 0
      %647 = vmatprep.subr.bf16.mxu0 0
      %648 = vmatpush1.bf16.msra.mxu0 0
      %649 = vmatprep.subr.bf16.mxu0 0
      %650 = vmatpush1.bf16.msra.mxu0 0
      %651 = vmatprep.subr.bf16.mxu0 0
      %652 = vmatpush1.bf16.msra.mxu0 0
      %653 = vmatprep.subr.bf16.mxu0 0
      %654 = vmatpush1.bf16.msra.mxu0 0
      %655 = vmatprep.subr.bf16.mxu0 0
      %656 = vmatpush1.bf16.msra.mxu0 0
      %657 = vmatprep.subr.bf16.mxu0 0
      %658 = vmatpush1.bf16.msra.mxu0 0
      %659 = vmatprep.subr.bf16.mxu0 0
      %660 = vmatpush1.bf16.msra.mxu0 0
      %661 = vmatprep.subr.bf16.mxu0 0
      %662 = vmatpush1.bf16.msra.mxu0 0
      %663 = vmatprep.mubr.bf16.mxu0 0
      %664 = vmatmul.mubr.bf16.gmra.mrb[0].mxu0 %v566
      %v665 = vpop.f32.mrb[0].mxu0
      %v666 = vadd.f32 %v617, %v665
      %v667 = vpop.f32.mrb[0].mxu0
      %v668 = vpop.f32.mrb[0].mxu0
      %v669 = vpop.f32.mrb[0].mxu0
      %670 = vdwg.mxu0
      %v671 = vpack.c.bf16 %v537, %v537
      %v672 = vpack.c.bf16 %v603, %v603
      %vm673 = vcmask 64512
      %v675 = vsel %vm673, %v671, 0
      %v678 = vsel %vm673, %v672, 0
      %680 = vmatprep.subr.bf16.mxu0 0
      %681 = vmatpush1.bf16.xpose.msra.mxu0 %v678
      %682 = vmatprep.subr.bf16.mxu0 0
      %683 = vmatpush1.bf16.xpose.msra.mxu0 0
      %684 = vmatprep.subr.bf16.mxu0 0
      %685 = vmatpush1.bf16.xpose.msra.mxu0 0
      %686 = vmatprep.subr.bf16.mxu0 0
      %687 = vmatpush1.bf16.xpose.msra.mxu0 0
      %688 = vmatprep.subr.bf16.mxu0 0
      %689 = vmatpush1.bf16.xpose.msra.mxu0 0
      %690 = vmatprep.subr.bf16.mxu0 0
      %691 = vmatpush1.bf16.xpose.msra.mxu0 0
      %692 = vmatprep.subr.bf16.mxu0 0
      %693 = vmatpush1.bf16.xpose.msra.mxu0 0
      %694 = vmatprep.subr.bf16.mxu0 0
      %695 = vmatpush1.bf16.xpose.msra.mxu0 0
      %696 = vmatprep.subr.bf16.mxu0 0
      %697 = vmatpush1.bf16.xpose.msra.mxu0 0
      %698 = vmatprep.subr.bf16.mxu0 0
      %699 = vmatpush1.bf16.xpose.msra.mxu0 0
      %700 = vmatprep.subr.bf16.mxu0 0
      %701 = vmatpush1.bf16.xpose.msra.mxu0 0
      %702 = vmatprep.subr.bf16.mxu0 0
      %703 = vmatpush1.bf16.xpose.msra.mxu0 0
      %704 = vmatprep.subr.bf16.mxu0 0
      %705 = vmatpush1.bf16.xpose.msra.mxu0 0
      %706 = vmatprep.subr.bf16.mxu0 0
      %707 = vmatpush1.bf16.xpose.msra.mxu0 0
      %708 = vmatprep.subr.bf16.mxu0 0
      %709 = vmatpush1.bf16.xpose.msra.mxu0 0
      %710 = vmatprep.subr.bf16.mxu0 0
      %711 = vmatpush1.bf16.xpose.msra.mxu0 0
      %712 = vmatprep.mubr.bf16.mxu0 0
      %713 = vmatmul.mubr.bf16.gmra.mrb[0].mxu0 %v675
      %v714 = vpop.f32.mrb[0].mxu0
      %v715 = vadd.f32 0.0, %v714
      %v716 = vpop.f32.mrb[0].mxu0
      %v717 = vpop.f32.mrb[0].mxu0
      %v718 = vpop.f32.mrb[0].mxu0
      %719 = vdwg.mxu0
      %v720 = vmul.f32 %v715, 0.35355338
      %v722 = vlaneseq
      %v723 = vshrl.u32 %v722, 7
      %v724 = vsub.s32 0, %v723
      %v725 = vrot.slane %v472, %v724
      %v727 = vadd.f32 %v720, %v725
      %v728 = vsel %vm673, %v727, -inf
      %729 = vmax.xlane.f32.xlu0 %v728
      %v730 = vpop.xlane.xlu0 %729
      %v731 = vsub.f32 %v727, %v730
      %v732 = vmul.f32 %v731, 1.442695
      %v733 = vpow.pop %v732
      %v734 = vsel %vm673, %v733, 0.0
      %735 = vadd.xlane.f32.xlu0 %v734
      %v736 = vpop.xlane.xlu0 %735
      %v737 = vrcp.pop %v736
      %v738 = vmul.f32 %v733, %v737
      %v739 = vpack.c.bf16 %v738, %v738
      %v740 = vpack.c.bf16 %v666, %v666
      %v742 = vsel %vm673, %v739, 0
      %vm744 = vcmask 1043456
      %v746 = vsel %vm744, %v740, 0
      %748 = vmatprep.subr.bf16.mxu0 0
      %749 = vmatpush1.bf16.msra.mxu0 %v746
      %750 = vmatprep.subr.bf16.mxu0 0
      %751 = vmatpush1.bf16.msra.mxu0 0
      %752 = vmatprep.subr.bf16.mxu0 0
      %753 = vmatpush1.bf16.msra.mxu0 0
      %754 = vmatprep.subr.bf16.mxu0 0
      %755 = vmatpush1.bf16.msra.mxu0 0
      %756 = vmatprep.subr.bf16.mxu0 0
      %757 = vmatpush1.bf16.msra.mxu0 0
      %758 = vmatprep.subr.bf16.mxu0 0
      %759 = vmatpush1.bf16.msra.mxu0 0
      %760 = vmatprep.subr.bf16.mxu0 0
      %761 = vmatpush1.bf16.msra.mxu0 0
      %762 = vmatprep.subr.bf16.mxu0 0
      %763 = vmatpush1.bf16.msra.mxu0 0
      %764 = vmatprep.subr.bf16.mxu0 0
      %765 = vmatpush1.bf16.msra.mxu0 0
      %766 = vmatprep.subr.bf16.mxu0 0
      %767 = vmatpush1.bf16.msra.mxu0 0
      %768 = vmatprep.subr.bf16.mxu0 0
      %769 = vmatpush1.bf16.msra.mxu0 0
      %770 = vmatprep.subr.bf16.mxu0 0
      %771 = vmatpush1.bf16.msra.mxu0 0
      %772 = vmatprep.subr.bf16.mxu0 0
      %773 = vmatpush1.bf16.msra.mxu0 0
      %774 = vmatprep.subr.bf16.mxu0 0
      %775 = vmatpush1.bf16.msra.mxu0 0
      %776 = vmatprep.subr.bf16.mxu0 0
      %777 = vmatpush1.bf16.msra.mxu0 0
      %778 = vmatprep.subr.bf16.mxu0 0
      %779 = vmatpush1.bf16.msra.mxu0 0
      %780 = vmatprep.mubr.bf16.mxu0 0
      %781 = vmatmul.mubr.bf16.gmra.mrb[0].mxu0 %v742
      %v782 = vpop.f32.mrb[0].mxu0
      %v783 = vadd.f32 0.0, %v782
      %v784 = vpop.f32.mrb[0].mxu0
      %v785 = vpop.f32.mrb[0].mxu0
      %v786 = vpop.f32.mrb[0].mxu0
      %787 = vdwg.mxu0
      %v788 = vpack.c.bf16 %v783, %v783
      %v789 = vld [vmem:[%s9] sm:$0xf]
      %s790 = scalar_lea.vmem %s3, 16
      %v791 = vld [vmem:[%s790] sm:$0xf]
      %v792 = vld [vmem:[%s790 + $0x4] sm:$0xf]
      %v793 = vld [vmem:[%s790 + $0x8] sm:$0xf]
      %v794 = vld [vmem:[%s790 + $0xc] sm:$0xf]
      %s795 = scalar_lea.vmem %s6, 1
      %v796 = vld [vmem:[%s795] sm:$0x1]
      %v798 = vlaneseq
      %v799 = vshrl.u32 %v798, 7
      %v800 = vsub.s32 0, %v799
      %v801 = vrot.slane %v796, %v800
      %v807 = vunpack.c.l.b16 %v791
      %v808 = vunpack.c.l.b16 %v792
      %v809 = vunpack.c.l.b16 %v793
      %v810 = vunpack.c.l.b16 %v794
      %v811 = vpack.c.b16 %v808, %v807
      %v812 = vpack.c.b16 %v810, %v809
      %815 = vmatprep.subr.bf16.mxu0 0
      %816 = vmatpush1.bf16.msra.mxu0 %v811
      %817 = vmatprep.subr.bf16.mxu0 0
      %818 = vmatpush1.bf16.msra.mxu0 %v812
      %819 = vmatprep.subr.bf16.mxu0 0
      %820 = vmatpush1.bf16.msra.mxu0 0
      %821 = vmatprep.subr.bf16.mxu0 0
      %822 = vmatpush1.bf16.msra.mxu0 0
      %823 = vmatprep.subr.bf16.mxu0 0
      %824 = vmatpush1.bf16.msra.mxu0 0
      %825 = vmatprep.subr.bf16.mxu0 0
      %826 = vmatpush1.bf16.msra.mxu0 0
      %827 = vmatprep.subr.bf16.mxu0 0
      %828 = vmatpush1.bf16.msra.mxu0 0
      %829 = vmatprep.subr.bf16.mxu0 0
      %830 = vmatpush1.bf16.msra.mxu0 0
      %831 = vmatprep.subr.bf16.mxu0 0
      %832 = vmatpush1.bf16.msra.mxu0 0
      %833 = vmatprep.subr.bf16.mxu0 0
      %834 = vmatpush1.bf16.msra.mxu0 0
      %835 = vmatprep.subr.bf16.mxu0 0
      %836 = vmatpush1.bf16.msra.mxu0 0
      %837 = vmatprep.subr.bf16.mxu0 0
      %838 = vmatpush1.bf16.msra.mxu0 0
      %839 = vmatprep.subr.bf16.mxu0 0
      %840 = vmatpush1.bf16.msra.mxu0 0
      %841 = vmatprep.subr.bf16.mxu0 0
      %842 = vmatpush1.bf16.msra.mxu0 0
      %843 = vmatprep.subr.bf16.mxu0 0
      %844 = vmatpush1.bf16.msra.mxu0 0
      %845 = vmatprep.subr.bf16.mxu0 0
      %846 = vmatpush1.bf16.msra.mxu0 0
      %847 = vmatprep.mubr.bf16.mxu0 0
      %848 = vmatmul.mubr.bf16.gmra.mrb[0].mxu0 %v500
      %v849 = vpop.f32.mrb[0].mxu0
      %v850 = vadd.f32 %v801, %v849
      %v851 = vpop.f32.mrb[0].mxu0
      %v852 = vpop.f32.mrb[0].mxu0
      %v853 = vpop.f32.mrb[0].mxu0
      %854 = vdwg.mxu0
      %s855 = scalar_lea.vmem %s4, 16
      %v856 = vld [vmem:[%s855] sm:$0xf]
      %v857 = vld [vmem:[%s855 + $0x4] sm:$0xf]
      %v858 = vld [vmem:[%s855 + $0x8] sm:$0xf]
      %v859 = vld [vmem:[%s855 + $0xc] sm:$0xf]
      %s860 = scalar_lea.vmem %s7, 1
      %v861 = vld [vmem:[%s860] sm:$0x1]
      %v863 = vlaneseq
      %v864 = vshrl.u32 %v863, 7
      %v865 = vsub.s32 0, %v864
      %v866 = vrot.slane %v861, %v865
      %v872 = vunpack.c.l.b16 %v856
      %v873 = vunpack.c.l.b16 %v857
      %v874 = vunpack.c.l.b16 %v858
      %v875 = vunpack.c.l.b16 %v859
      %v876 = vpack.c.b16 %v873, %v872
      %v877 = vpack.c.b16 %v875, %v874
      %880 = vmatprep.subr.bf16.mxu0 0
      %881 = vmatpush1.bf16.msra.mxu0 %v876
      %882 = vmatprep.subr.bf16.mxu0 0
      %883 = vmatpush1.bf16.msra.mxu0 %v877
      %884 = vmatprep.subr.bf16.mxu0 0
      %885 = vmatpush1.bf16.msra.mxu0 0
      %886 = vmatprep.subr.bf16.mxu0 0
      %887 = vmatpush1.bf16.msra.mxu0 0
      %888 = vmatprep.subr.bf16.mxu0 0
      %889 = vmatpush1.bf16.msra.mxu0 0
      %890 = vmatprep.subr.bf16.mxu0 0
      %891 = vmatpush1.bf16.msra.mxu0 0
      %892 = vmatprep.subr.bf16.mxu0 0
      %893 = vmatpush1.bf16.msra.mxu0 0
      %894 = vmatprep.subr.bf16.mxu0 0
      %895 = vmatpush1.bf16.msra.mxu0 0
      %896 = vmatprep.subr.bf16.mxu0 0
      %897 = vmatpush1.bf16.msra.mxu0 0
      %898 = vmatprep.subr.bf16.mxu0 0
      %899 = vmatpush1.bf16.msra.mxu0 0
      %900 = vmatprep.subr.bf16.mxu0 0
      %901 = vmatpush1.bf16.msra.mxu0 0
      %902 = vmatprep.subr.bf16.mxu0 0
      %903 = vmatpush1.bf16.msra.mxu0 0
      %904 = vmatprep.subr.bf16.mxu0 0
      %905 = vmatpush1.bf16.msra.mxu0 0
      %906 = vmatprep.subr.bf16.mxu0 0
      %907 = vmatpush1.bf16.msra.mxu0 0
      %908 = vmatprep.subr.bf16.mxu0 0
      %909 = vmatpush1.bf16.msra.mxu0 0
      %910 = vmatprep.subr.bf16.mxu0 0
      %911 = vmatpush1.bf16.msra.mxu0 0
      %912 = vmatprep.mubr.bf16.mxu0 0
      %913 = vmatmul.mubr.bf16.gmra.mrb[0].mxu0 %v566
      %v914 = vpop.f32.mrb[0].mxu0
      %v915 = vadd.f32 %v866, %v914
      %v916 = vpop.f32.mrb[0].mxu0
      %v917 = vpop.f32.mrb[0].mxu0
      %v918 = vpop.f32.mrb[0].mxu0
      %919 = vdwg.mxu0
      %s920 = scalar_lea.vmem %s5, 16
      %v921 = vld [vmem:[%s920] sm:$0xf]
      %v922 = vld [vmem:[%s920 + $0x4] sm:$0xf]
      %v923 = vld [vmem:[%s920 + $0x8] sm:$0xf]
      %v924 = vld [vmem:[%s920 + $0xc] sm:$0xf]
      %s925 = scalar_lea.vmem %s8, 1
      %v926 = vld [vmem:[%s925] sm:$0x1]
      %v928 = vlaneseq
      %v929 = vshrl.u32 %v928, 7
      %v930 = vsub.s32 0, %v929
      %v931 = vrot.slane %v926, %v930
      %v937 = vunpack.c.l.b16 %v921
      %v938 = vunpack.c.l.b16 %v922
      %v939 = vunpack.c.l.b16 %v923
      %v940 = vunpack.c.l.b16 %v924
      %v941 = vpack.c.b16 %v938, %v937
      %v942 = vpack.c.b16 %v940, %v939
      %945 = vmatprep.subr.bf16.mxu0 0
      %946 = vmatpush1.bf16.msra.mxu0 %v941
      %947 = vmatprep.subr.bf16.mxu0 0
      %948 = vmatpush1.bf16.msra.mxu0 %v942
      %949 = vmatprep.subr.bf16.mxu0 0
      %950 = vmatpush1.bf16.msra.mxu0 0
      %951 = vmatprep.subr.bf16.mxu0 0
      %952 = vmatpush1.bf16.msra.mxu0 0
      %953 = vmatprep.subr.bf16.mxu0 0
      %954 = vmatpush1.bf16.msra.mxu0 0
      %955 = vmatprep.subr.bf16.mxu0 0
      %956 = vmatpush1.bf16.msra.mxu0 0
      %957 = vmatprep.subr.bf16.mxu0 0
      %958 = vmatpush1.bf16.msra.mxu0 0
      %959 = vmatprep.subr.bf16.mxu0 0
      %960 = vmatpush1.bf16.msra.mxu0 0
      %961 = vmatprep.subr.bf16.mxu0 0
      %962 = vmatpush1.bf16.msra.mxu0 0
      %963 = vmatprep.subr.bf16.mxu0 0
      %964 = vmatpush1.bf16.msra.mxu0 0
      %965 = vmatprep.subr.bf16.mxu0 0
      %966 = vmatpush1.bf16.msra.mxu0 0
      %967 = vmatprep.subr.bf16.mxu0 0
      %968 = vmatpush1.bf16.msra.mxu0 0
      %969 = vmatprep.subr.bf16.mxu0 0
      %970 = vmatpush1.bf16.msra.mxu0 0
      %971 = vmatprep.subr.bf16.mxu0 0
      %972 = vmatpush1.bf16.msra.mxu0 0
      %973 = vmatprep.subr.bf16.mxu0 0
      %974 = vmatpush1.bf16.msra.mxu0 0
      %975 = vmatprep.subr.bf16.mxu0 0
      %976 = vmatpush1.bf16.msra.mxu0 0
      %977 = vmatprep.mubr.bf16.mxu0 0
      %978 = vmatmul.mubr.bf16.gmra.mrb[0].mxu0 %v566
      %v979 = vpop.f32.mrb[0].mxu0
      %v980 = vadd.f32 %v931, %v979
      %v981 = vpop.f32.mrb[0].mxu0
      %v982 = vpop.f32.mrb[0].mxu0
      %v983 = vpop.f32.mrb[0].mxu0
      %984 = vdwg.mxu0
      %v985 = vpack.c.bf16 %v850, %v850
      %v986 = vpack.c.bf16 %v915, %v915
      %v988 = vsel %vm673, %v985, 0
      %v991 = vsel %vm673, %v986, 0
      %993 = vmatprep.subr.bf16.mxu0 0
      %994 = vmatpush1.bf16.xpose.msra.mxu0 %v991
      %995 = vmatprep.subr.bf16.mxu0 0
      %996 = vmatpush1.bf16.xpose.msra.mxu0 0
      %997 = vmatprep.subr.bf16.mxu0 0
      %998 = vmatpush1.bf16.xpose.msra.mxu0 0
      %999 = vmatprep.subr.bf16.mxu0 0
      %1000 = vmatpush1.bf16.xpose.msra.mxu0 0
      %1001 = vmatprep.subr.bf16.mxu0 0
      %1002 = vmatpush1.bf16.xpose.msra.mxu0 0
      %1003 = vmatprep.subr.bf16.mxu0 0
      %1004 = vmatpush1.bf16.xpose.msra.mxu0 0
      %1005 = vmatprep.subr.bf16.mxu0 0
      %1006 = vmatpush1.bf16.xpose.msra.mxu0 0
      %1007 = vmatprep.subr.bf16.mxu0 0
      %1008 = vmatpush1.bf16.xpose.msra.mxu0 0
      %1009 = vmatprep.subr.bf16.mxu0 0
      %1010 = vmatpush1.bf16.xpose.msra.mxu0 0
      %1011 = vmatprep.subr.bf16.mxu0 0
      %1012 = vmatpush1.bf16.xpose.msra.mxu0 0
      %1013 = vmatprep.subr.bf16.mxu0 0
      %1014 = vmatpush1.bf16.xpose.msra.mxu0 0
      %1015 = vmatprep.subr.bf16.mxu0 0
      %1016 = vmatpush1.bf16.xpose.msra.mxu0 0
      %1017 = vmatprep.subr.bf16.mxu0 0
      %1018 = vmatpush1.bf16.xpose.msra.mxu0 0
      %1019 = vmatprep.subr.bf16.mxu0 0
      %1020 = vmatpush1.bf16.xpose.msra.mxu0 0
      %1021 = vmatprep.subr.bf16.mxu0 0
      %1022 = vmatpush1.bf16.xpose.msra.mxu0 0
      %1023 = vmatprep.subr.bf16.mxu0 0
      %1024 = vmatpush1.bf16.xpose.msra.mxu0 0
      %1025 = vmatprep.mubr.bf16.mxu0 0
      %1026 = vmatmul.mubr.bf16.gmra.mrb[0].mxu0 %v988
      %v1027 = vpop.f32.mrb[0].mxu0
      %v1028 = vadd.f32 0.0, %v1027
      %v1029 = vpop.f32.mrb[0].mxu0
      %v1030 = vpop.f32.mrb[0].mxu0
      %v1031 = vpop.f32.mrb[0].mxu0
      %1032 = vdwg.mxu0
      %v1033 = vmul.f32 %v1028, 0.35355338
      %v1034 = vadd.f32 %v1033, %v725
      %v1035 = vsel %vm673, %v1034, -inf
      %1036 = vmax.xlane.f32.xlu0 %v1035
      %v1037 = vpop.xlane.xlu0 %1036
      %v1038 = vsub.f32 %v1034, %v1037
      %v1039 = vmul.f32 %v1038, 1.442695
      %v1040 = vpow.pop %v1039
      %v1041 = vsel %vm673, %v1040, 0.0
      %1042 = vadd.xlane.f32.xlu0 %v1041
      %v1043 = vpop.xlane.xlu0 %1042
      %v1044 = vrcp.pop %v1043
      %v1045 = vmul.f32 %v1040, %v1044
      %v1046 = vpack.c.bf16 %v1045, %v1045
      %v1047 = vpack.c.bf16 %v980, %v980
      %v1049 = vsel %vm673, %v1046, 0
      %v1052 = vsel %vm744, %v1047, 0
      %1054 = vmatprep.subr.bf16.mxu0 0
      %1055 = vmatpush1.bf16.msra.mxu0 %v1052
      %1056 = vmatprep.subr.bf16.mxu0 0
      %1057 = vmatpush1.bf16.msra.mxu0 0
      %1058 = vmatprep.subr.bf16.mxu0 0
      %1059 = vmatpush1.bf16.msra.mxu0 0
      %1060 = vmatprep.subr.bf16.mxu0 0
      %1061 = vmatpush1.bf16.msra.mxu0 0
      %1062 = vmatprep.subr.bf16.mxu0 0
      %1063 = vmatpush1.bf16.msra.mxu0 0
      %1064 = vmatprep.subr.bf16.mxu0 0
      %1065 = vmatpush1.bf16.msra.mxu0 0
      %1066 = vmatprep.subr.bf16.mxu0 0
      %1067 = vmatpush1.bf16.msra.mxu0 0
      %1068 = vmatprep.subr.bf16.mxu0 0
      %1069 = vmatpush1.bf16.msra.mxu0 0
      %1070 = vmatprep.subr.bf16.mxu0 0
      %1071 = vmatpush1.bf16.msra.mxu0 0
      %1072 = vmatprep.subr.bf16.mxu0 0
      %1073 = vmatpush1.bf16.msra.mxu0 0
      %1074 = vmatprep.subr.bf16.mxu0 0
      %1075 = vmatpush1.bf16.msra.mxu0 0
      %1076 = vmatprep.subr.bf16.mxu0 0
      %1077 = vmatpush1.bf16.msra.mxu0 0
      %1078 = vmatprep.subr.bf16.mxu0 0
      %1079 = vmatpush1.bf16.msra.mxu0 0
      %1080 = vmatprep.subr.bf16.mxu0 0
      %1081 = vmatpush1.bf16.msra.mxu0 0
      %1082 = vmatprep.subr.bf16.mxu0 0
      %1083 = vmatpush1.bf16.msra.mxu0 0
      %1084 = vmatprep.subr.bf16.mxu0 0
      %1085 = vmatpush1.bf16.msra.mxu0 0
      %1086 = vmatprep.mubr.bf16.mxu0 0
      %1087 = vmatmul.mubr.bf16.gmra.mrb[0].mxu0 %v1049
      %v1088 = vpop.f32.mrb[0].mxu0
      %v1089 = vadd.f32 0.0, %v1088
      %v1090 = vpop.f32.mrb[0].mxu0
      %v1091 = vpop.f32.mrb[0].mxu0
      %v1092 = vpop.f32.mrb[0].mxu0
      %1093 = vdwg.mxu0
      %v1094 = vpack.c.bf16 %v1089, %v1089
      %s1095 = scalar_lea.vmem %s9, 4
      %v1096 = vld [vmem:[%s1095] sm:$0xf]
      %v1098 = vsel %vm673, %v1094, 0
      %v1101 = vsel %vm744, %v1096, 0
      %1103 = vmatprep.subr.bf16.mxu0 0
      %1104 = vmatpush1.bf16.msra.mxu0 %v1101
      %1105 = vmatprep.subr.bf16.mxu0 0
      %1106 = vmatpush1.bf16.msra.mxu0 0
      %1107 = vmatprep.subr.bf16.mxu0 0
      %1108 = vmatpush1.bf16.msra.mxu0 0
      %1109 = vmatprep.subr.bf16.mxu0 0
      %1110 = vmatpush1.bf16.msra.mxu0 0
      %1111 = vmatprep.subr.bf16.mxu0 0
      %1112 = vmatpush1.bf16.msra.mxu0 0
      %1113 = vmatprep.subr.bf16.mxu0 0
      %1114 = vmatpush1.bf16.msra.mxu0 0
      %1115 = vmatprep.subr.bf16.mxu0 0
      %1116 = vmatpush1.bf16.msra.mxu0 0
      %1117 = vmatprep.subr.bf16.mxu0 0
      %1118 = vmatpush1.bf16.msra.mxu0 0
      %1119 = vmatprep.subr.bf16.mxu0 0
      %1120 = vmatpush1.bf16.msra.mxu0 0
      %1121 = vmatprep.subr.bf16.mxu0 0
      %1122 = vmatpush1.bf16.msra.mxu0 0
      %1123 = vmatprep.subr.bf16.mxu0 0
      %1124 = vmatpush1.bf16.msra.mxu0 0
      %1125 = vmatprep.subr.bf16.mxu0 0
      %1126 = vmatpush1.bf16.msra.mxu0 0
      %1127 = vmatprep.subr.bf16.mxu0 0
      %1128 = vmatpush1.bf16.msra.mxu0 0
      %1129 = vmatprep.subr.bf16.mxu0 0
      %1130 = vmatpush1.bf16.msra.mxu0 0
      %1131 = vmatprep.subr.bf16.mxu0 0
      %1132 = vmatpush1.bf16.msra.mxu0 0
      %1133 = vmatprep.subr.bf16.mxu0 0
      %1134 = vmatpush1.bf16.msra.mxu0 0
      %1135 = vmatprep.mubr.bf16.mxu0 0
      %1136 = vmatmul.mubr.bf16.gmra.mrb[0].mxu0 %v1098
      %v1137 = vpop.f32.mrb[0].mxu0
      %v1138 = vadd.f32 0.0, %v1137
      %v1139 = vpop.f32.mrb[0].mxu0
      %v1140 = vpop.f32.mrb[0].mxu0
      %v1141 = vpop.f32.mrb[0].mxu0
      %1142 = vdwg.mxu0
      %v1144 = vsel %vm673, %v788, 0
      %v1147 = vsel %vm744, %v789, 0
      %1149 = vmatprep.subr.bf16.mxu0 0
      %1150 = vmatpush1.bf16.msra.mxu0 %v1147
      %1151 = vmatprep.subr.bf16.mxu0 0
      %1152 = vmatpush1.bf16.msra.mxu0 0
      %1153 = vmatprep.subr.bf16.mxu0 0
      %1154 = vmatpush1.bf16.msra.mxu0 0
      %1155 = vmatprep.subr.bf16.mxu0 0
      %1156 = vmatpush1.bf16.msra.mxu0 0
      %1157 = vmatprep.subr.bf16.mxu0 0
      %1158 = vmatpush1.bf16.msra.mxu0 0
      %1159 = vmatprep.subr.bf16.mxu0 0
      %1160 = vmatpush1.bf16.msra.mxu0 0
      %1161 = vmatprep.subr.bf16.mxu0 0
      %1162 = vmatpush1.bf16.msra.mxu0 0
      %1163 = vmatprep.subr.bf16.mxu0 0
      %1164 = vmatpush1.bf16.msra.mxu0 0
      %1165 = vmatprep.subr.bf16.mxu0 0
      %1166 = vmatpush1.bf16.msra.mxu0 0
      %1167 = vmatprep.subr.bf16.mxu0 0
      %1168 = vmatpush1.bf16.msra.mxu0 0
      %1169 = vmatprep.subr.bf16.mxu0 0
      %1170 = vmatpush1.bf16.msra.mxu0 0
      %1171 = vmatprep.subr.bf16.mxu0 0
      %1172 = vmatpush1.bf16.msra.mxu0 0
      %1173 = vmatprep.subr.bf16.mxu0 0
      %1174 = vmatpush1.bf16.msra.mxu0 0
      %1175 = vmatprep.subr.bf16.mxu0 0
      %1176 = vmatpush1.bf16.msra.mxu0 0
      %1177 = vmatprep.subr.bf16.mxu0 0
      %1178 = vmatpush1.bf16.msra.mxu0 0
      %1179 = vmatprep.subr.bf16.mxu0 0
      %1180 = vmatpush1.bf16.msra.mxu0 0
      %1181 = vmatprep.mubr.bf16.mxu0 0
      %1182 = vmatmul.mubr.bf16.gmra.mrb[0].mxu0 %v1144
      %v1183 = vpop.f32.mrb[0].mxu0
      %v1184 = vadd.f32 %v1138, %v1183
      %v1185 = vpop.f32.mrb[0].mxu0
      %v1186 = vpop.f32.mrb[0].mxu0
      %v1187 = vpop.f32.mrb[0].mxu0
      %1188 = vdwg.mxu0
      %s1189 = scalar_lea.vmem %s3, 32
      %v1190 = vld [vmem:[%s1189] sm:$0xf]
      %v1191 = vld [vmem:[%s1189 + $0x4] sm:$0xf]
      %v1192 = vld [vmem:[%s1189 + $0x8] sm:$0xf]
      %v1193 = vld [vmem:[%s1189 + $0xc] sm:$0xf]
      %s1194 = scalar_lea.vmem %s6, 2
      %v1195 = vld [vmem:[%s1194] sm:$0x1]
      %v1197 = vlaneseq
      %v1198 = vshrl.u32 %v1197, 7
      %v1199 = vsub.s32 0, %v1198
      %v1200 = vrot.slane %v1195, %v1199
      %v1206 = vunpack.c.l.b16 %v1190
      %v1207 = vunpack.c.l.b16 %v1191
      %v1208 = vunpack.c.l.b16 %v1192
      %v1209 = vunpack.c.l.b16 %v1193
      %v1210 = vpack.c.b16 %v1207, %v1206
      %v1211 = vpack.c.b16 %v1209, %v1208
      %1214 = vmatprep.subr.bf16.mxu0 0
      %1215 = vmatpush1.bf16.msra.mxu0 %v1210
      %1216 = vmatprep.subr.bf16.mxu0 0
      %1217 = vmatpush1.bf16.msra.mxu0 %v1211
      %1218 = vmatprep.subr.bf16.mxu0 0
      %1219 = vmatpush1.bf16.msra.mxu0 0
      %1220 = vmatprep.subr.bf16.mxu0 0
      %1221 = vmatpush1.bf16.msra.mxu0 0
      %1222 = vmatprep.subr.bf16.mxu0 0
      %1223 = vmatpush1.bf16.msra.mxu0 0
      %1224 = vmatprep.subr.bf16.mxu0 0
      %1225 = vmatpush1.bf16.msra.mxu0 0
      %1226 = vmatprep.subr.bf16.mxu0 0
      %1227 = vmatpush1.bf16.msra.mxu0 0
      %1228 = vmatprep.subr.bf16.mxu0 0
      %1229 = vmatpush1.bf16.msra.mxu0 0
      %1230 = vmatprep.subr.bf16.mxu0 0
      %1231 = vmatpush1.bf16.msra.mxu0 0
      %1232 = vmatprep.subr.bf16.mxu0 0
      %1233 = vmatpush1.bf16.msra.mxu0 0
      %1234 = vmatprep.subr.bf16.mxu0 0
      %1235 = vmatpush1.bf16.msra.mxu0 0
      %1236 = vmatprep.subr.bf16.mxu0 0
      %1237 = vmatpush1.bf16.msra.mxu0 0
      %1238 = vmatprep.subr.bf16.mxu0 0
      %1239 = vmatpush1.bf16.msra.mxu0 0
      %1240 = vmatprep.subr.bf16.mxu0 0
      %1241 = vmatpush1.bf16.msra.mxu0 0
      %1242 = vmatprep.subr.bf16.mxu0 0
      %1243 = vmatpush1.bf16.msra.mxu0 0
      %1244 = vmatprep.subr.bf16.mxu0 0
      %1245 = vmatpush1.bf16.msra.mxu0 0
      %1246 = vmatprep.mubr.bf16.mxu0 0
      %1247 = vmatmul.mubr.bf16.gmra.mrb[0].mxu0 %v500
      %v1248 = vpop.f32.mrb[0].mxu0
      %v1249 = vadd.f32 %v1200, %v1248
      %v1250 = vpop.f32.mrb[0].mxu0
      %v1251 = vpop.f32.mrb[0].mxu0
      %v1252 = vpop.f32.mrb[0].mxu0
      %1253 = vdwg.mxu0
      %s1254 = scalar_lea.vmem %s4, 32
      %v1255 = vld [vmem:[%s1254] sm:$0xf]
      %v1256 = vld [vmem:[%s1254 + $0x4] sm:$0xf]
      %v1257 = vld [vmem:[%s1254 + $0x8] sm:$0xf]
      %v1258 = vld [vmem:[%s1254 + $0xc] sm:$0xf]
      %s1259 = scalar_lea.vmem %s7, 2
      %v1260 = vld [vmem:[%s1259] sm:$0x1]
      %v1262 = vlaneseq
      %v1263 = vshrl.u32 %v1262, 7
      %v1264 = vsub.s32 0, %v1263
      %v1265 = vrot.slane %v1260, %v1264
      %v1271 = vunpack.c.l.b16 %v1255
      %v1272 = vunpack.c.l.b16 %v1256
      %v1273 = vunpack.c.l.b16 %v1257
      %v1274 = vunpack.c.l.b16 %v1258
      %v1275 = vpack.c.b16 %v1272, %v1271
      %v1276 = vpack.c.b16 %v1274, %v1273
      %1279 = vmatprep.subr.bf16.mxu0 0
      %1280 = vmatpush1.bf16.msra.mxu0 %v1275
      %1281 = vmatprep.subr.bf16.mxu0 0
      %1282 = vmatpush1.bf16.msra.mxu0 %v1276
      %1283 = vmatprep.subr.bf16.mxu0 0
      %1284 = vmatpush1.bf16.msra.mxu0 0
      %1285 = vmatprep.subr.bf16.mxu0 0
      %1286 = vmatpush1.bf16.msra.mxu0 0
      %1287 = vmatprep.subr.bf16.mxu0 0
      %1288 = vmatpush1.bf16.msra.mxu0 0
      %1289 = vmatprep.subr.bf16.mxu0 0
      %1290 = vmatpush1.bf16.msra.mxu0 0
      %1291 = vmatprep.subr.bf16.mxu0 0
      %1292 = vmatpush1.bf16.msra.mxu0 0
      %1293 = vmatprep.subr.bf16.mxu0 0
      %1294 = vmatpush1.bf16.msra.mxu0 0
      %1295 = vmatprep.subr.bf16.mxu0 0
      %1296 = vmatpush1.bf16.msra.mxu0 0
      %1297 = vmatprep.subr.bf16.mxu0 0
      %1298 = vmatpush1.bf16.msra.mxu0 0
      %1299 = vmatprep.subr.bf16.mxu0 0
      %1300 = vmatpush1.bf16.msra.mxu0 0
      %1301 = vmatprep.subr.bf16.mxu0 0
      %1302 = vmatpush1.bf16.msra.mxu0 0
      %1303 = vmatprep.subr.bf16.mxu0 0
      %1304 = vmatpush1.bf16.msra.mxu0 0
      %1305 = vmatprep.subr.bf16.mxu0 0
      %1306 = vmatpush1.bf16.msra.mxu0 0
      %1307 = vmatprep.subr.bf16.mxu0 0
      %1308 = vmatpush1.bf16.msra.mxu0 0
      %1309 = vmatprep.subr.bf16.mxu0 0
      %1310 = vmatpush1.bf16.msra.mxu0 0
      %1311 = vmatprep.mubr.bf16.mxu0 0
      %1312 = vmatmul.mubr.bf16.gmra.mrb[0].mxu0 %v566
      %v1313 = vpop.f32.mrb[0].mxu0
      %v1314 = vadd.f32 %v1265, %v1313
      %v1315 = vpop.f32.mrb[0].mxu0
      %v1316 = vpop.f32.mrb[0].mxu0
      %v1317 = vpop.f32.mrb[0].mxu0
      %1318 = vdwg.mxu0
      %s1319 = scalar_lea.vmem %s5, 32
      %v1320 = vld [vmem:[%s1319] sm:$0xf]
      %v1321 = vld [vmem:[%s1319 + $0x4] sm:$0xf]
      %v1322 = vld [vmem:[%s1319 + $0x8] sm:$0xf]
      %v1323 = vld [vmem:[%s1319 + $0xc] sm:$0xf]
      %s1324 = scalar_lea.vmem %s8, 2
      %v1325 = vld [vmem:[%s1324] sm:$0x1]
      %v1327 = vlaneseq
      %v1328 = vshrl.u32 %v1327, 7
      %v1329 = vsub.s32 0, %v1328
      %v1330 = vrot.slane %v1325, %v1329
      %v1336 = vunpack.c.l.b16 %v1320
      %v1337 = vunpack.c.l.b16 %v1321
      %v1338 = vunpack.c.l.b16 %v1322
      %v1339 = vunpack.c.l.b16 %v1323
      %v1340 = vpack.c.b16 %v1337, %v1336
      %v1341 = vpack.c.b16 %v1339, %v1338
      %1344 = vmatprep.subr.bf16.mxu0 0
      %1345 = vmatpush1.bf16.msra.mxu0 %v1340
      %1346 = vmatprep.subr.bf16.mxu0 0
      %1347 = vmatpush1.bf16.msra.mxu0 %v1341
      %1348 = vmatprep.subr.bf16.mxu0 0
      %1349 = vmatpush1.bf16.msra.mxu0 0
      %1350 = vmatprep.subr.bf16.mxu0 0
      %1351 = vmatpush1.bf16.msra.mxu0 0
      %1352 = vmatprep.subr.bf16.mxu0 0
      %1353 = vmatpush1.bf16.msra.mxu0 0
      %1354 = vmatprep.subr.bf16.mxu0 0
      %1355 = vmatpush1.bf16.msra.mxu0 0
      %1356 = vmatprep.subr.bf16.mxu0 0
      %1357 = vmatpush1.bf16.msra.mxu0 0
      %1358 = vmatprep.subr.bf16.mxu0 0
      %1359 = vmatpush1.bf16.msra.mxu0 0
      %1360 = vmatprep.subr.bf16.mxu0 0
      %1361 = vmatpush1.bf16.msra.mxu0 0
      %1362 = vmatprep.subr.bf16.mxu0 0
      %1363 = vmatpush1.bf16.msra.mxu0 0
      %1364 = vmatprep.subr.bf16.mxu0 0
      %1365 = vmatpush1.bf16.msra.mxu0 0
      %1366 = vmatprep.subr.bf16.mxu0 0
      %1367 = vmatpush1.bf16.msra.mxu0 0
      %1368 = vmatprep.subr.bf16.mxu0 0
      %1369 = vmatpush1.bf16.msra.mxu0 0
      %1370 = vmatprep.subr.bf16.mxu0 0
      %1371 = vmatpush1.bf16.msra.mxu0 0
      %1372 = vmatprep.subr.bf16.mxu0 0
      %1373 = vmatpush1.bf16.msra.mxu0 0
      %1374 = vmatprep.subr.bf16.mxu0 0
      %1375 = vmatpush1.bf16.msra.mxu0 0
      %1376 = vmatprep.mubr.bf16.mxu0 0
      %1377 = vmatmul.mubr.bf16.gmra.mrb[0].mxu0 %v566
      %v1378 = vpop.f32.mrb[0].mxu0
      %v1379 = vadd.f32 %v1330, %v1378
      %v1380 = vpop.f32.mrb[0].mxu0
      %v1381 = vpop.f32.mrb[0].mxu0
      %v1382 = vpop.f32.mrb[0].mxu0
      %1383 = vdwg.mxu0
      %v1384 = vpack.c.bf16 %v1249, %v1249
      %v1385 = vpack.c.bf16 %v1314, %v1314
      %v1387 = vsel %vm673, %v1384, 0
      %v1390 = vsel %vm673, %v1385, 0
      %1392 = vmatprep.subr.bf16.mxu0 0
      %1393 = vmatpush1.bf16.xpose.msra.mxu0 %v1390
      %1394 = vmatprep.subr.bf16.mxu0 0
      %1395 = vmatpush1.bf16.xpose.msra.mxu0 0
      %1396 = vmatprep.subr.bf16.mxu0 0
      %1397 = vmatpush1.bf16.xpose.msra.mxu0 0
      %1398 = vmatprep.subr.bf16.mxu0 0
      %1399 = vmatpush1.bf16.xpose.msra.mxu0 0
      %1400 = vmatprep.subr.bf16.mxu0 0
      %1401 = vmatpush1.bf16.xpose.msra.mxu0 0
      %1402 = vmatprep.subr.bf16.mxu0 0
      %1403 = vmatpush1.bf16.xpose.msra.mxu0 0
      %1404 = vmatprep.subr.bf16.mxu0 0
      %1405 = vmatpush1.bf16.xpose.msra.mxu0 0
      %1406 = vmatprep.subr.bf16.mxu0 0
      %1407 = vmatpush1.bf16.xpose.msra.mxu0 0
      %1408 = vmatprep.subr.bf16.mxu0 0
      %1409 = vmatpush1.bf16.xpose.msra.mxu0 0
      %1410 = vmatprep.subr.bf16.mxu0 0
      %1411 = vmatpush1.bf16.xpose.msra.mxu0 0
      %1412 = vmatprep.subr.bf16.mxu0 0
      %1413 = vmatpush1.bf16.xpose.msra.mxu0 0
      %1414 = vmatprep.subr.bf16.mxu0 0
      %1415 = vmatpush1.bf16.xpose.msra.mxu0 0
      %1416 = vmatprep.subr.bf16.mxu0 0
      %1417 = vmatpush1.bf16.xpose.msra.mxu0 0
      %1418 = vmatprep.subr.bf16.mxu0 0
      %1419 = vmatpush1.bf16.xpose.msra.mxu0 0
      %1420 = vmatprep.subr.bf16.mxu0 0
      %1421 = vmatpush1.bf16.xpose.msra.mxu0 0
      %1422 = vmatprep.subr.bf16.mxu0 0
      %1423 = vmatpush1.bf16.xpose.msra.mxu0 0
      %1424 = vmatprep.mubr.bf16.mxu0 0
      %1425 = vmatmul.mubr.bf16.gmra.mrb[0].mxu0 %v1387
      %v1426 = vpop.f32.mrb[0].mxu0
      %v1427 = vadd.f32 0.0, %v1426
      %v1428 = vpop.f32.mrb[0].mxu0
      %v1429 = vpop.f32.mrb[0].mxu0
      %v1430 = vpop.f32.mrb[0].mxu0
      %1431 = vdwg.mxu0
      %v1432 = vmul.f32 %v1427, 0.35355338
      %v1433 = vadd.f32 %v1432, %v725
      %v1434 = vsel %vm673, %v1433, -inf
      %1435 = vmax.xlane.f32.xlu0 %v1434
      %v1436 = vpop.xlane.xlu0 %1435
      %v1437 = vsub.f32 %v1433, %v1436
      %v1438 = vmul.f32 %v1437, 1.442695
      %v1439 = vpow.pop %v1438
      %v1440 = vsel %vm673, %v1439, 0.0
      %1441 = vadd.xlane.f32.xlu0 %v1440
      %v1442 = vpop.xlane.xlu0 %1441
      %v1443 = vrcp.pop %v1442
      %v1444 = vmul.f32 %v1439, %v1443
      %v1445 = vpack.c.bf16 %v1444, %v1444
      %v1446 = vpack.c.bf16 %v1379, %v1379
      %v1448 = vsel %vm673, %v1445, 0
      %v1451 = vsel %vm744, %v1446, 0
      %1453 = vmatprep.subr.bf16.mxu0 0
      %1454 = vmatpush1.bf16.msra.mxu0 %v1451
      %1455 = vmatprep.subr.bf16.mxu0 0
      %1456 = vmatpush1.bf16.msra.mxu0 0
      %1457 = vmatprep.subr.bf16.mxu0 0
      %1458 = vmatpush1.bf16.msra.mxu0 0
      %1459 = vmatprep.subr.bf16.mxu0 0
      %1460 = vmatpush1.bf16.msra.mxu0 0
      %1461 = vmatprep.subr.bf16.mxu0 0
      %1462 = vmatpush1.bf16.msra.mxu0 0
      %1463 = vmatprep.subr.bf16.mxu0 0
      %1464 = vmatpush1.bf16.msra.mxu0 0
      %1465 = vmatprep.subr.bf16.mxu0 0
      %1466 = vmatpush1.bf16.msra.mxu0 0
      %1467 = vmatprep.subr.bf16.mxu0 0
      %1468 = vmatpush1.bf16.msra.mxu0 0
      %1469 = vmatprep.subr.bf16.mxu0 0
      %1470 = vmatpush1.bf16.msra.mxu0 0
      %1471 = vmatprep.subr.bf16.mxu0 0
      %1472 = vmatpush1.bf16.msra.mxu0 0
      %1473 = vmatprep.subr.bf16.mxu0 0
      %1474 = vmatpush1.bf16.msra.mxu0 0
      %1475 = vmatprep.subr.bf16.mxu0 0
      %1476 = vmatpush1.bf16.msra.mxu0 0
      %1477 = vmatprep.subr.bf16.mxu0 0
      %1478 = vmatpush1.bf16.msra.mxu0 0
      %1479 = vmatprep.subr.bf16.mxu0 0
      %1480 = vmatpush1.bf16.msra.mxu0 0
      %1481 = vmatprep.subr.bf16.mxu0 0
      %1482 = vmatpush1.bf16.msra.mxu0 0
      %1483 = vmatprep.subr.bf16.mxu0 0
      %1484 = vmatpush1.bf16.msra.mxu0 0
      %1485 = vmatprep.mubr.bf16.mxu0 0
      %1486 = vmatmul.mubr.bf16.gmra.mrb[0].mxu0 %v1448
      %v1487 = vpop.f32.mrb[0].mxu0
      %v1488 = vadd.f32 0.0, %v1487
      %v1489 = vpop.f32.mrb[0].mxu0
      %v1490 = vpop.f32.mrb[0].mxu0
      %v1491 = vpop.f32.mrb[0].mxu0
      %1492 = vdwg.mxu0
      %v1493 = vpack.c.bf16 %v1488, %v1488
      %s1494 = scalar_lea.vmem %s9, 8
      %v1495 = vld [vmem:[%s1494] sm:$0xf]
      %v1497 = vsel %vm673, %v1493, 0
      %v1500 = vsel %vm744, %v1495, 0
      %1502 = vmatprep.subr.bf16.mxu0 0
      %1503 = vmatpush1.bf16.msra.mxu0 %v1500
      %1504 = vmatprep.subr.bf16.mxu0 0
      %1505 = vmatpush1.bf16.msra.mxu0 0
      %1506 = vmatprep.subr.bf16.mxu0 0
      %1507 = vmatpush1.bf16.msra.mxu0 0
      %1508 = vmatprep.subr.bf16.mxu0 0
      %1509 = vmatpush1.bf16.msra.mxu0 0
      %1510 = vmatprep.subr.bf16.mxu0 0
      %1511 = vmatpush1.bf16.msra.mxu0 0
      %1512 = vmatprep.subr.bf16.mxu0 0
      %1513 = vmatpush1.bf16.msra.mxu0 0
      %1514 = vmatprep.subr.bf16.mxu0 0
      %1515 = vmatpush1.bf16.msra.mxu0 0
      %1516 = vmatprep.subr.bf16.mxu0 0
      %1517 = vmatpush1.bf16.msra.mxu0 0
      %1518 = vmatprep.subr.bf16.mxu0 0
      %1519 = vmatpush1.bf16.msra.mxu0 0
      %1520 = vmatprep.subr.bf16.mxu0 0
      %1521 = vmatpush1.bf16.msra.mxu0 0
      %1522 = vmatprep.subr.bf16.mxu0 0
      %1523 = vmatpush1.bf16.msra.mxu0 0
      %1524 = vmatprep.subr.bf16.mxu0 0
      %1525 = vmatpush1.bf16.msra.mxu0 0
      %1526 = vmatprep.subr.bf16.mxu0 0
      %1527 = vmatpush1.bf16.msra.mxu0 0
      %1528 = vmatprep.subr.bf16.mxu0 0
      %1529 = vmatpush1.bf16.msra.mxu0 0
      %1530 = vmatprep.subr.bf16.mxu0 0
      %1531 = vmatpush1.bf16.msra.mxu0 0
      %1532 = vmatprep.subr.bf16.mxu0 0
      %1533 = vmatpush1.bf16.msra.mxu0 0
      %1534 = vmatprep.mubr.bf16.mxu0 0
      %1535 = vmatmul.mubr.bf16.gmra.mrb[0].mxu0 %v1497
      %v1536 = vpop.f32.mrb[0].mxu0
      %v1537 = vadd.f32 0.0, %v1536
      %v1538 = vpop.f32.mrb[0].mxu0
      %v1539 = vpop.f32.mrb[0].mxu0
      %v1540 = vpop.f32.mrb[0].mxu0
      %1541 = vdwg.mxu0
      %v1542 = vadd.f32 %v1184, %v1537
      %s1543 = scalar_lea.vmem %s3, 48
      %v1544 = vld [vmem:[%s1543] sm:$0xf]
      %v1545 = vld [vmem:[%s1543 + $0x4] sm:$0xf]
      %v1546 = vld [vmem:[%s1543 + $0x8] sm:$0xf]
      %v1547 = vld [vmem:[%s1543 + $0xc] sm:$0xf]
      %s1548 = scalar_lea.vmem %s6, 3
      %v1549 = vld [vmem:[%s1548] sm:$0x1]
      %v1551 = vlaneseq
      %v1552 = vshrl.u32 %v1551, 7
      %v1553 = vsub.s32 0, %v1552
      %v1554 = vrot.slane %v1549, %v1553
      %v1560 = vunpack.c.l.b16 %v1544
      %v1561 = vunpack.c.l.b16 %v1545
      %v1562 = vunpack.c.l.b16 %v1546
      %v1563 = vunpack.c.l.b16 %v1547
      %v1564 = vpack.c.b16 %v1561, %v1560
      %v1565 = vpack.c.b16 %v1563, %v1562
      %1568 = vmatprep.subr.bf16.mxu0 0
      %1569 = vmatpush1.bf16.msra.mxu0 %v1564
      %1570 = vmatprep.subr.bf16.mxu0 0
      %1571 = vmatpush1.bf16.msra.mxu0 %v1565
      %1572 = vmatprep.subr.bf16.mxu0 0
      %1573 = vmatpush1.bf16.msra.mxu0 0
      %1574 = vmatprep.subr.bf16.mxu0 0
      %1575 = vmatpush1.bf16.msra.mxu0 0
      %1576 = vmatprep.subr.bf16.mxu0 0
      %1577 = vmatpush1.bf16.msra.mxu0 0
      %1578 = vmatprep.subr.bf16.mxu0 0
      %1579 = vmatpush1.bf16.msra.mxu0 0
      %1580 = vmatprep.subr.bf16.mxu0 0
      %1581 = vmatpush1.bf16.msra.mxu0 0
      %1582 = vmatprep.subr.bf16.mxu0 0
      %1583 = vmatpush1.bf16.msra.mxu0 0
      %1584 = vmatprep.subr.bf16.mxu0 0
      %1585 = vmatpush1.bf16.msra.mxu0 0
      %1586 = vmatprep.subr.bf16.mxu0 0
      %1587 = vmatpush1.bf16.msra.mxu0 0
      %1588 = vmatprep.subr.bf16.mxu0 0
      %1589 = vmatpush1.bf16.msra.mxu0 0
      %1590 = vmatprep.subr.bf16.mxu0 0
      %1591 = vmatpush1.bf16.msra.mxu0 0
      %1592 = vmatprep.subr.bf16.mxu0 0
      %1593 = vmatpush1.bf16.msra.mxu0 0
      %1594 = vmatprep.subr.bf16.mxu0 0
      %1595 = vmatpush1.bf16.msra.mxu0 0
      %1596 = vmatprep.subr.bf16.mxu0 0
      %1597 = vmatpush1.bf16.msra.mxu0 0
      %1598 = vmatprep.subr.bf16.mxu0 0
      %1599 = vmatpush1.bf16.msra.mxu0 0
      %1600 = vmatprep.mubr.bf16.mxu0 0
      %1601 = vmatmul.mubr.bf16.gmra.mrb[0].mxu0 %v500
      %v1602 = vpop.f32.mrb[0].mxu0
      %v1603 = vadd.f32 %v1554, %v1602
      %v1604 = vpop.f32.mrb[0].mxu0
      %v1605 = vpop.f32.mrb[0].mxu0
      %v1606 = vpop.f32.mrb[0].mxu0
      %1607 = vdwg.mxu0
      %s1608 = scalar_lea.vmem %s4, 48
      %v1609 = vld [vmem:[%s1608] sm:$0xf]
      %v1610 = vld [vmem:[%s1608 + $0x4] sm:$0xf]
      %v1611 = vld [vmem:[%s1608 + $0x8] sm:$0xf]
      %v1612 = vld [vmem:[%s1608 + $0xc] sm:$0xf]
      %s1613 = scalar_lea.vmem %s7, 3
      %v1614 = vld [vmem:[%s1613] sm:$0x1]
      %v1616 = vlaneseq
      %v1617 = vshrl.u32 %v1616, 7
      %v1618 = vsub.s32 0, %v1617
      %v1619 = vrot.slane %v1614, %v1618
      %v1625 = vunpack.c.l.b16 %v1609
      %v1626 = vunpack.c.l.b16 %v1610
      %v1627 = vunpack.c.l.b16 %v1611
      %v1628 = vunpack.c.l.b16 %v1612
      %v1629 = vpack.c.b16 %v1626, %v1625
      %v1630 = vpack.c.b16 %v1628, %v1627
      %1633 = vmatprep.subr.bf16.mxu0 0
      %1634 = vmatpush1.bf16.msra.mxu0 %v1629
      %1635 = vmatprep.subr.bf16.mxu0 0
      %1636 = vmatpush1.bf16.msra.mxu0 %v1630
      %1637 = vmatprep.subr.bf16.mxu0 0
      %1638 = vmatpush1.bf16.msra.mxu0 0
      %1639 = vmatprep.subr.bf16.mxu0 0
      %1640 = vmatpush1.bf16.msra.mxu0 0
      %1641 = vmatprep.subr.bf16.mxu0 0
      %1642 = vmatpush1.bf16.msra.mxu0 0
      %1643 = vmatprep.subr.bf16.mxu0 0
      %1644 = vmatpush1.bf16.msra.mxu0 0
      %1645 = vmatprep.subr.bf16.mxu0 0
      %1646 = vmatpush1.bf16.msra.mxu0 0
      %1647 = vmatprep.subr.bf16.mxu0 0
      %1648 = vmatpush1.bf16.msra.mxu0 0
      %1649 = vmatprep.subr.bf16.mxu0 0
      %1650 = vmatpush1.bf16.msra.mxu0 0
      %1651 = vmatprep.subr.bf16.mxu0 0
      %1652 = vmatpush1.bf16.msra.mxu0 0
      %1653 = vmatprep.subr.bf16.mxu0 0
      %1654 = vmatpush1.bf16.msra.mxu0 0
      %1655 = vmatprep.subr.bf16.mxu0 0
      %1656 = vmatpush1.bf16.msra.mxu0 0
      %1657 = vmatprep.subr.bf16.mxu0 0
      %1658 = vmatpush1.bf16.msra.mxu0 0
      %1659 = vmatprep.subr.bf16.mxu0 0
      %1660 = vmatpush1.bf16.msra.mxu0 0
      %1661 = vmatprep.subr.bf16.mxu0 0
      %1662 = vmatpush1.bf16.msra.mxu0 0
      %1663 = vmatprep.subr.bf16.mxu0 0
      %1664 = vmatpush1.bf16.msra.mxu0 0
      %1665 = vmatprep.mubr.bf16.mxu0 0
      %1666 = vmatmul.mubr.bf16.gmra.mrb[0].mxu0 %v566
      %v1667 = vpop.f32.mrb[0].mxu0
      %v1668 = vadd.f32 %v1619, %v1667
      %v1669 = vpop.f32.mrb[0].mxu0
      %v1670 = vpop.f32.mrb[0].mxu0
      %v1671 = vpop.f32.mrb[0].mxu0
      %1672 = vdwg.mxu0
      %s1673 = scalar_lea.vmem %s5, 48
      %v1674 = vld [vmem:[%s1673] sm:$0xf]
      %v1675 = vld [vmem:[%s1673 + $0x4] sm:$0xf]
      %v1676 = vld [vmem:[%s1673 + $0x8] sm:$0xf]
      %v1677 = vld [vmem:[%s1673 + $0xc] sm:$0xf]
      %s1678 = scalar_lea.vmem %s8, 3
      %v1679 = vld [vmem:[%s1678] sm:$0x1]
      %v1681 = vlaneseq
      %v1682 = vshrl.u32 %v1681, 7
      %v1683 = vsub.s32 0, %v1682
      %v1684 = vrot.slane %v1679, %v1683
      %v1690 = vunpack.c.l.b16 %v1674
      %v1691 = vunpack.c.l.b16 %v1675
      %v1692 = vunpack.c.l.b16 %v1676
      %v1693 = vunpack.c.l.b16 %v1677
      %v1694 = vpack.c.b16 %v1691, %v1690
      %v1695 = vpack.c.b16 %v1693, %v1692
      %1698 = vmatprep.subr.bf16.mxu0 0
      %1699 = vmatpush1.bf16.msra.mxu0 %v1694
      %1700 = vmatprep.subr.bf16.mxu0 0
      %1701 = vmatpush1.bf16.msra.mxu0 %v1695
      %1702 = vmatprep.subr.bf16.mxu0 0
      %1703 = vmatpush1.bf16.msra.mxu0 0
      %1704 = vmatprep.subr.bf16.mxu0 0
      %1705 = vmatpush1.bf16.msra.mxu0 0
      %1706 = vmatprep.subr.bf16.mxu0 0
      %1707 = vmatpush1.bf16.msra.mxu0 0
      %1708 = vmatprep.subr.bf16.mxu0 0
      %1709 = vmatpush1.bf16.msra.mxu0 0
      %1710 = vmatprep.subr.bf16.mxu0 0
      %1711 = vmatpush1.bf16.msra.mxu0 0
      %1712 = vmatprep.subr.bf16.mxu0 0
      %1713 = vmatpush1.bf16.msra.mxu0 0
      %1714 = vmatprep.subr.bf16.mxu0 0
      %1715 = vmatpush1.bf16.msra.mxu0 0
      %1716 = vmatprep.subr.bf16.mxu0 0
      %1717 = vmatpush1.bf16.msra.mxu0 0
      %1718 = vmatprep.subr.bf16.mxu0 0
      %1719 = vmatpush1.bf16.msra.mxu0 0
      %1720 = vmatprep.subr.bf16.mxu0 0
      %1721 = vmatpush1.bf16.msra.mxu0 0
      %1722 = vmatprep.subr.bf16.mxu0 0
      %1723 = vmatpush1.bf16.msra.mxu0 0
      %1724 = vmatprep.subr.bf16.mxu0 0
      %1725 = vmatpush1.bf16.msra.mxu0 0
      %1726 = vmatprep.subr.bf16.mxu0 0
      %1727 = vmatpush1.bf16.msra.mxu0 0
      %1728 = vmatprep.subr.bf16.mxu0 0
      %1729 = vmatpush1.bf16.msra.mxu0 0
      %1730 = vmatprep.mubr.bf16.mxu0 0
      %1731 = vmatmul.mubr.bf16.gmra.mrb[0].mxu0 %v566
      %v1732 = vpop.f32.mrb[0].mxu0
      %v1733 = vadd.f32 %v1684, %v1732
      %v1734 = vpop.f32.mrb[0].mxu0
      %v1735 = vpop.f32.mrb[0].mxu0
      %v1736 = vpop.f32.mrb[0].mxu0
      %1737 = vdwg.mxu0
      %v1738 = vpack.c.bf16 %v1603, %v1603
      %v1739 = vpack.c.bf16 %v1668, %v1668
      %v1741 = vsel %vm673, %v1738, 0
      %v1744 = vsel %vm673, %v1739, 0
      %1746 = vmatprep.subr.bf16.mxu0 0
      %1747 = vmatpush1.bf16.xpose.msra.mxu0 %v1744
      %1748 = vmatprep.subr.bf16.mxu0 0
      %1749 = vmatpush1.bf16.xpose.msra.mxu0 0
      %1750 = vmatprep.subr.bf16.mxu0 0
      %1751 = vmatpush1.bf16.xpose.msra.mxu0 0
      %1752 = vmatprep.subr.bf16.mxu0 0
      %1753 = vmatpush1.bf16.xpose.msra.mxu0 0
      %1754 = vmatprep.subr.bf16.mxu0 0
      %1755 = vmatpush1.bf16.xpose.msra.mxu0 0
      %1756 = vmatprep.subr.bf16.mxu0 0
      %1757 = vmatpush1.bf16.xpose.msra.mxu0 0
      %1758 = vmatprep.subr.bf16.mxu0 0
      %1759 = vmatpush1.bf16.xpose.msra.mxu0 0
      %1760 = vmatprep.subr.bf16.mxu0 0
      %1761 = vmatpush1.bf16.xpose.msra.mxu0 0
      %1762 = vmatprep.subr.bf16.mxu0 0
      %1763 = vmatpush1.bf16.xpose.msra.mxu0 0
      %1764 = vmatprep.subr.bf16.mxu0 0
      %1765 = vmatpush1.bf16.xpose.msra.mxu0 0
      %1766 = vmatprep.subr.bf16.mxu0 0
      %1767 = vmatpush1.bf16.xpose.msra.mxu0 0
      %1768 = vmatprep.subr.bf16.mxu0 0
      %1769 = vmatpush1.bf16.xpose.msra.mxu0 0
      %1770 = vmatprep.subr.bf16.mxu0 0
      %1771 = vmatpush1.bf16.xpose.msra.mxu0 0
      %1772 = vmatprep.subr.bf16.mxu0 0
      %1773 = vmatpush1.bf16.xpose.msra.mxu0 0
      %1774 = vmatprep.subr.bf16.mxu0 0
      %1775 = vmatpush1.bf16.xpose.msra.mxu0 0
      %1776 = vmatprep.subr.bf16.mxu0 0
      %1777 = vmatpush1.bf16.xpose.msra.mxu0 0
      %1778 = vmatprep.mubr.bf16.mxu0 0
      %1779 = vmatmul.mubr.bf16.gmra.mrb[0].mxu0 %v1741
      %v1780 = vpop.f32.mrb[0].mxu0
      %v1781 = vadd.f32 0.0, %v1780
      %v1782 = vpop.f32.mrb[0].mxu0
      %v1783 = vpop.f32.mrb[0].mxu0
      %v1784 = vpop.f32.mrb[0].mxu0
      %1785 = vdwg.mxu0
      %v1786 = vmul.f32 %v1781, 0.35355338
      %v1787 = vadd.f32 %v1786, %v725
      %v1788 = vsel %vm673, %v1787, -inf
      %1789 = vmax.xlane.f32.xlu0 %v1788
      %v1790 = vpop.xlane.xlu0 %1789
      %v1791 = vsub.f32 %v1787, %v1790
      %v1792 = vmul.f32 %v1791, 1.442695
      %v1793 = vpow.pop %v1792
      %v1794 = vsel %vm673, %v1793, 0.0
      %1795 = vadd.xlane.f32.xlu0 %v1794
      %v1796 = vpop.xlane.xlu0 %1795
      %v1797 = vrcp.pop %v1796
      %v1798 = vmul.f32 %v1793, %v1797
      %v1799 = vpack.c.bf16 %v1798, %v1798
      %v1800 = vpack.c.bf16 %v1733, %v1733
      %v1802 = vsel %vm673, %v1799, 0
      %v1805 = vsel %vm744, %v1800, 0
      %1807 = vmatprep.subr.bf16.mxu0 0
      %1808 = vmatpush1.bf16.msra.mxu0 %v1805
      %1809 = vmatprep.subr.bf16.mxu0 0
      %1810 = vmatpush1.bf16.msra.mxu0 0
      %1811 = vmatprep.subr.bf16.mxu0 0
      %1812 = vmatpush1.bf16.msra.mxu0 0
      %1813 = vmatprep.subr.bf16.mxu0 0
      %1814 = vmatpush1.bf16.msra.mxu0 0
      %1815 = vmatprep.subr.bf16.mxu0 0
      %1816 = vmatpush1.bf16.msra.mxu0 0
      %1817 = vmatprep.subr.bf16.mxu0 0
      %1818 = vmatpush1.bf16.msra.mxu0 0
      %1819 = vmatprep.subr.bf16.mxu0 0
      %1820 = vmatpush1.bf16.msra.mxu0 0
      %1821 = vmatprep.subr.bf16.mxu0 0
      %1822 = vmatpush1.bf16.msra.mxu0 0
      %1823 = vmatprep.subr.bf16.mxu0 0
      %1824 = vmatpush1.bf16.msra.mxu0 0
      %1825 = vmatprep.subr.bf16.mxu0 0
      %1826 = vmatpush1.bf16.msra.mxu0 0
      %1827 = vmatprep.subr.bf16.mxu0 0
      %1828 = vmatpush1.bf16.msra.mxu0 0
      %1829 = vmatprep.subr.bf16.mxu0 0
      %1830 = vmatpush1.bf16.msra.mxu0 0
      %1831 = vmatprep.subr.bf16.mxu0 0
      %1832 = vmatpush1.bf16.msra.mxu0 0
      %1833 = vmatprep.subr.bf16.mxu0 0
      %1834 = vmatpush1.bf16.msra.mxu0 0
      %1835 = vmatprep.subr.bf16.mxu0 0
      %1836 = vmatpush1.bf16.msra.mxu0 0
      %1837 = vmatprep.subr.bf16.mxu0 0
      %1838 = vmatpush1.bf16.msra.mxu0 0
      %1839 = vmatprep.mubr.bf16.mxu0 0
      %1840 = vmatmul.mubr.bf16.gmra.mrb[0].mxu0 %v1802
      %v1841 = vpop.f32.mrb[0].mxu0
      %v1842 = vadd.f32 0.0, %v1841
      %v1843 = vpop.f32.mrb[0].mxu0
      %v1844 = vpop.f32.mrb[0].mxu0
      %v1845 = vpop.f32.mrb[0].mxu0
      %1846 = vdwg.mxu0
      %v1847 = vpack.c.bf16 %v1842, %v1842
      %s1848 = scalar_lea.vmem %s9, 12
      %v1849 = vld [vmem:[%s1848] sm:$0xf]
      %v1851 = vsel %vm673, %v1847, 0
      %v1854 = vsel %vm744, %v1849, 0
      %1856 = vmatprep.subr.bf16.mxu0 0
      %1857 = vmatpush1.bf16.msra.mxu0 %v1854
      %1858 = vmatprep.subr.bf16.mxu0 0
      %1859 = vmatpush1.bf16.msra.mxu0 0
      %1860 = vmatprep.subr.bf16.mxu0 0
      %1861 = vmatpush1.bf16.msra.mxu0 0
      %1862 = vmatprep.subr.bf16.mxu0 0
      %1863 = vmatpush1.bf16.msra.mxu0 0
      %1864 = vmatprep.subr.bf16.mxu0 0
      %1865 = vmatpush1.bf16.msra.mxu0 0
      %1866 = vmatprep.subr.bf16.mxu0 0
      %1867 = vmatpush1.bf16.msra.mxu0 0
      %1868 = vmatprep.subr.bf16.mxu0 0
      %1869 = vmatpush1.bf16.msra.mxu0 0
      %1870 = vmatprep.subr.bf16.mxu0 0
      %1871 = vmatpush1.bf16.msra.mxu0 0
      %1872 = vmatprep.subr.bf16.mxu0 0
      %1873 = vmatpush1.bf16.msra.mxu0 0
      %1874 = vmatprep.subr.bf16.mxu0 0
      %1875 = vmatpush1.bf16.msra.mxu0 0
      %1876 = vmatprep.subr.bf16.mxu0 0
      %1877 = vmatpush1.bf16.msra.mxu0 0
      %1878 = vmatprep.subr.bf16.mxu0 0
      %1879 = vmatpush1.bf16.msra.mxu0 0
      %1880 = vmatprep.subr.bf16.mxu0 0
      %1881 = vmatpush1.bf16.msra.mxu0 0
      %1882 = vmatprep.subr.bf16.mxu0 0
      %1883 = vmatpush1.bf16.msra.mxu0 0
      %1884 = vmatprep.subr.bf16.mxu0 0
      %1885 = vmatpush1.bf16.msra.mxu0 0
      %1886 = vmatprep.subr.bf16.mxu0 0
      %1887 = vmatpush1.bf16.msra.mxu0 0
      %1888 = vmatprep.mubr.bf16.mxu0 0
      %1889 = vmatmul.mubr.bf16.gmra.mrb[0].mxu0 %v1851
      %v1890 = vpop.f32.mrb[0].mxu0
      %v1891 = vadd.f32 0.0, %v1890
      %v1892 = vpop.f32.mrb[0].mxu0
      %v1893 = vpop.f32.mrb[0].mxu0
      %v1894 = vpop.f32.mrb[0].mxu0
      %1895 = vdwg.mxu0
      %v1896 = vadd.f32 %v1542, %v1891
      %v1897 = vadd.f32 %v468, %v1896
      %v1898 = vld [vmem:[%s10] sm:$0x1]
      %v1900 = vlaneseq
      %v1901 = vshrl.u32 %v1900, 7
      %v1902 = vsub.s32 0, %v1901
      %v1903 = vrot.slane %v1898, %v1902
      %v1905 = vadd.f32 %v1897, %v1903
      %v1906 = vsel %vm498, %v1905, 0.0
      %1907 = vadd.xlane.f32.xlu0 %v1906
      %v1908 = vpop.xlane.xlu0 %1907
      %v1909 = vrcp.pop 32.0
      %v1910 = vmul.f32 %v1908, %v1909
      %v1911 = vsub.f32 %v1905, %v1910
      %v1912 = vmul.f32 %v1911, %v1911
      %v1913 = vsel %vm498, %v1912, 0.0
      %1914 = vadd.xlane.f32.xlu0 %v1913
      %v1915 = vpop.xlane.xlu0 %1914
      %v1916 = vmul.f32 %v1915, %v1909
      %v1917 = vadd.f32 %v1916, 1e-06
      %v1918 = vrsqrt.pop %v1917
      %v1919 = vmul.f32 %v1911, %v1918
      %v1920 = vld [vmem:[%s11] sm:$0x1]
      %v1922 = vlaneseq
      %v1923 = vshrl.u32 %v1922, 7
      %v1924 = vsub.s32 0, %v1923
      %v1925 = vrot.slane %v1920, %v1924
      %v1927 = vmul.f32 %v1919, %v1925
      %v1928 = vld [vmem:[%s12] sm:$0x1]
      %v1930 = vlaneseq
      %v1931 = vshrl.u32 %v1930, 7
      %v1932 = vsub.s32 0, %v1931
      %v1933 = vrot.slane %v1928, %v1932
      %v1935 = vadd.f32 %v1927, %v1933
      %1936 = vst.msk [vmem:[%s466] sm:$0xff] %vm498, %v1935
      %p1937 = scmp.lt.s32.totalorder %s24, 1
      %s1938 = scalar_select %p1937, %s24, 1
      %s1939 = smul.addr %s1938, 8
      %s1940 = scalar_lea.vmem %s13, %s1939
      // Predicated region
      $region73: #{forward.11} parent=71 // pred_check
        %p1941 = pneg %p330
      $region74: #{forward.11} parent=71 // pred_check_branch
        %1943 = sbr.rel (%p1941) target = $region76
      $region75: #{forward.11} parent=71 // pred_region
        _
      $region76: #{forward.11} parent=71 // pred_fallthru
        _
    $region72: #{forward.11} parent=5 // pred_fallthru
      _
    %p1944 = scmp.le.s32.totalorder 2, %s19
    // Predicated region
    $region77: #{forward.11} parent=5 // pred_check
      %p1945 = pneg %p1944
    $region78: #{forward.11} parent=5 // pred_check_branch
      %1947 = sbr.rel (%p1945) target = $region80
    $region79: #{forward.11} parent=5 // pred_region
      %s1948 = ssub.s32 %s19, 2
      // Predicated region
      $region81: #{forward.11} parent=79 // pred_check
        %p1949 = pneg %p336
      $region82: #{forward.11} parent=79 // pred_check_branch
        %1951 = sbr.rel (%p1949) target = $region84
      $region83: #{forward.11} parent=79 // pred_region
        %p1952 = scmp.lt.s32.totalorder %s25, 1
        %s1953 = scalar_select %p1952, %s25, 1
        %s1954 = smul.addr %s1953, 8
        %s1955 = scalar_lea.vmem %s13, %s1954
      $region84: #{forward.11} parent=79 // pred_fallthru
        _
    $region80: #{forward.11} parent=5 // pred_fallthru
      _
  $region6: #{forward.11} parent=0 // loop_footer
    %s23 = sadd.s32 1, %s19
  $region7: #{forward.11} parent=0 // loop_footer_branch
    %18 = sbr.rel target = $region3
  $region8: #{forward.11} parent=0 // loop_exit
    _

// kernel: forward.15
$region0: #{forward.15}
  #allocation0 [shape = 'u32[]', space=smem, size = 0x4, offset = 0x4, fixed_abs, tag = 'smem constant byte address 0x4 - core index']
  #allocation1 [shape = 'u32[144,128]{1,0:T(1,128)}', space=vmem, size = 0x12000, scoped, tag = 'internal scratch']
  %s0 = inlined_call_operand.vmem [shape: f32[32,32], index: 0, kind: input, shape index: {}]
  %s1 = inlined_call_operand.vmem [shape: bf16[32,64], index: 1, kind: input, shape index: {}]
  %s2 = inlined_call_operand.vmem [shape: f32[1,64], index: 2, kind: input, shape index: {}]
  %s3 = inlined_call_operand.vmem [shape: bf16[64,32], index: 3, kind: input, shape index: {}]
  %s4 = inlined_call_operand.vmem [shape: f32[1,32], index: 4, kind: input, shape index: {}]
  %s5 = inlined_call_operand.vmem [shape: f32[1,32], index: 5, kind: input, shape index: {}]
  %s6 = inlined_call_operand.vmem [shape: f32[1,32], index: 6, kind: input, shape index: {}]
  %s7 = inlined_call_operand.vmem [shape: f32[32,32], index: 7, kind: output, shape index: {}]
  %s8 = sld [smem:[#allocation0]]
  $region38: #{forward.15} parent=0
    _
  %s10 = ssub.s32 1, %s8
  %s11 = scalar_select 0, %s10, %s8
  // Predicated region
  $region2: #{forward.15} parent=0 // pred_check
    _
  $region3: #{forward.15} parent=0 // pred_check_branch
    %13 = sbr.rel (0) target = $region5
  $region4: #{forward.15} parent=0 // pred_region
    _
  $region5: #{forward.15} parent=0 // pred_fallthru
    _
  // Predicated region
  $region6: #{forward.15} parent=0 // pred_check
    _
  $region7: #{forward.15} parent=0 // pred_check_branch
    %15 = sbr.rel (0) target = $region9
  $region8: #{forward.15} parent=0 // pred_region
    _
  $region9: #{forward.15} parent=0 // pred_fallthru
    _
  // Predicated region
  $region10: #{forward.15} parent=0 // pred_check
    _
  $region11: #{forward.15} parent=0 // pred_check_branch
    %17 = sbr.rel (0) target = $region13
  $region12: #{forward.15} parent=0 // pred_region
    _
  $region13: #{forward.15} parent=0 // pred_fallthru
    _
  // Predicated region
  $region14: #{forward.15} parent=0 // pred_check
    _
  $region15: #{forward.15} parent=0 // pred_check_branch
    %19 = sbr.rel (0) target = $region17
  $region16: #{forward.15} parent=0 // pred_region
    _
  $region17: #{forward.15} parent=0 // pred_fallthru
    _
  // Predicated region
  $region18: #{forward.15} parent=0 // pred_check
    _
  $region19: #{forward.15} parent=0 // pred_check_branch
    %21 = sbr.rel (0) target = $region21
  $region20: #{forward.15} parent=0 // pred_region
    _
  $region21: #{forward.15} parent=0 // pred_fallthru
    _
  // Predicated region
  $region22: #{forward.15} parent=0 // pred_check
    _
  $region23: #{forward.15} parent=0 // pred_check_branch
    %23 = sbr.rel (0) target = $region25
  $region24: #{forward.15} parent=0 // pred_region
    _
  $region25: #{forward.15} parent=0 // pred_fallthru
    _
  // Predicated region
  $region26: #{forward.15} parent=0 // pred_check
    _
  $region27: #{forward.15} parent=0 // pred_check_branch
    %25 = sbr.rel (0) target = $region29
  $region28: #{forward.15} parent=0 // pred_region
    _
  $region29: #{forward.15} parent=0 // pred_fallthru
    _
  %v27 = vld [vmem:[%s0] sm:$0xff]
  %v28 = vld [vmem:[%s0 + $0x8] sm:$0xff]
  %v29 = vld [vmem:[%s0 + $0x10] sm:$0xff]
  %v30 = vld [vmem:[%s0 + $0x18] sm:$0xff]
  %v31 = vpack.c.bf16 %v28, %v27
  %v32 = vpack.c.bf16 %v30, %v29
  %v33 = vld [vmem:[%s1] sm:$0xf]
  %v34 = vld [vmem:[%s1 + $0x4] sm:$0xf]
  %v35 = vld [vmem:[%s1 + $0x8] sm:$0xf]
  %v36 = vld [vmem:[%s1 + $0xc] sm:$0xf]
  %v37 = vld [vmem:[%s2] sm:$0x1]
  %v39 = vlaneseq
  %v40 = vshrl.u32 %v39, 7
  %v41 = vsub.s32 0, %v40
  %v42 = vrot.slane %v37, %v41
  %v48 = vunpack.c.l.b16 %v33
  %v49 = vunpack.c.l.b16 %v34
  %v50 = vunpack.c.l.b16 %v35
  %v51 = vunpack.c.l.b16 %v36
  %v52 = vpack.c.b16 %v49, %v48
  %v53 = vpack.c.b16 %v51, %v50
  %vm56 = vcmask 261120
  %v58 = vsel %vm56, %v31, 0
  %v61 = vsel %vm56, %v32, 0
  %63 = vmatprep.subr.bf16.mxu0 0
  %64 = vmatpush1.bf16.msra.mxu0 %v52
  %65 = vmatprep.subr.bf16.mxu0 0
  %66 = vmatpush1.bf16.msra.mxu0 %v53
  %67 = vmatprep.subr.bf16.mxu0 0
  %68 = vmatpush1.bf16.msra.mxu0 0
  %69 = vmatprep.subr.bf16.mxu0 0
  %70 = vmatpush1.bf16.msra.mxu0 0
  %71 = vmatprep.subr.bf16.mxu0 0
  %72 = vmatpush1.bf16.msra.mxu0 0
  %73 = vmatprep.subr.bf16.mxu0 0
  %74 = vmatpush1.bf16.msra.mxu0 0
  %75 = vmatprep.subr.bf16.mxu0 0
  %76 = vmatpush1.bf16.msra.mxu0 0
  %77 = vmatprep.subr.bf16.mxu0 0
  %78 = vmatpush1.bf16.msra.mxu0 0
  %79 = vmatprep.subr.bf16.mxu0 0
  %80 = vmatpush1.bf16.msra.mxu0 0
  %81 = vmatprep.subr.bf16.mxu0 0
  %82 = vmatpush1.bf16.msra.mxu0 0
  %83 = vmatprep.subr.bf16.mxu0 0
  %84 = vmatpush1.bf16.msra.mxu0 0
  %85 = vmatprep.subr.bf16.mxu0 0
  %86 = vmatpush1.bf16.msra.mxu0 0
  %87 = vmatprep.subr.bf16.mxu0 0
  %88 = vmatpush1.bf16.msra.mxu0 0
  %89 = vmatprep.subr.bf16.mxu0 0
  %90 = vmatpush1.bf16.msra.mxu0 0
  %91 = vmatprep.subr.bf16.mxu0 0
  %92 = vmatpush1.bf16.msra.mxu0 0
  %93 = vmatprep.subr.bf16.mxu0 0
  %94 = vmatpush1.bf16.msra.mxu0 0
  %95 = vmatprep.mubr.bf16.mxu0 0
  %96 = vmatmul.mubr.bf16.gmra.mrb[0].mxu0 %v58
  %v97 = vpop.f32.mrb[0].mxu0
  %v98 = vadd.f32 %v42, %v97
  %v99 = vpop.f32.mrb[0].mxu0
  %v100 = vpop.f32.mrb[0].mxu0
  %v101 = vadd.f32 %v42, %v100
  %v102 = vpop.f32.mrb[0].mxu0
  %103 = vmatprep.mubr.bf16.mxu0 0
  %104 = vmatmul.mubr.bf16.gmra.mrb[0].mxu0 %v61
  %v105 = vpop.f32.mrb[0].mxu0
  %v106 = vadd.f32 %v42, %v105
  %v107 = vpop.f32.mrb[0].mxu0
  %v108 = vpop.f32.mrb[0].mxu0
  %v109 = vadd.f32 %v42, %v108
  %v110 = vpop.f32.mrb[0].mxu0
  %111 = vdwg.mxu0
  %v112 = vmax.f32 %v98, 0.0
  %v113 = vmax.f32 %v101, 0.0
  %v114 = vmax.f32 %v106, 0.0
  %v115 = vmax.f32 %v109, 0.0
  %v116 = vpack.c.bf16 %v113, %v112
  %v117 = vpack.c.bf16 %v115, %v114
  %v118 = vld [vmem:[%s3] sm:$0xf]
  %v119 = vld [vmem:[%s3 + $0x4] sm:$0xf]
  %v120 = vld [vmem:[%s3 + $0x8] sm:$0xf]
  %v121 = vld [vmem:[%s3 + $0xc] sm:$0xf]
  %v122 = vld [vmem:[%s3 + $0x10] sm:$0xf]
  %v123 = vld [vmem:[%s3 + $0x14] sm:$0xf]
  %v124 = vld [vmem:[%s3 + $0x18] sm:$0xf]
  %v125 = vld [vmem:[%s3 + $0x1c] sm:$0xf]
  %v126 = vld [vmem:[%s4] sm:$0x1]
  %v128 = vlaneseq
  %v129 = vshrl.u32 %v128, 7
  %v130 = vsub.s32 0, %v129
  %v131 = vrot.slane %v126, %v130
  %v141 = vunpack.c.l.b16 %v118
  %v142 = vunpack.c.l.b16 %v119
  %v143 = vunpack.c.l.b16 %v120
  %v144 = vunpack.c.l.b16 %v121
  %v145 = vunpack.c.l.b16 %v122
  %v146 = vunpack.c.l.b16 %v123
  %v147 = vunpack.c.l.b16 %v124
  %v148 = vunpack.c.l.b16 %v125
  %v149 = vpack.c.b16 %v142, %v141
  %v150 = vpack.c.b16 %v144, %v143
  %v151 = vpack.c.b16 %v146, %v145
  %v152 = vpack.c.b16 %v148, %v147
  %vm157 = vcmask 523264
  %v159 = vsel %vm157, %v116, 0
  %v162 = vsel %vm157, %v117, 0
  %164 = vmatprep.subr.bf16.mxu0 0
  %165 = vmatpush1.bf16.msra.mxu0 %v149
  %166 = vmatprep.subr.bf16.mxu0 0
  %167 = vmatpush1.bf16.msra.mxu0 %v150
  %168 = vmatprep.subr.bf16.mxu0 0
  %169 = vmatpush1.bf16.msra.mxu0 %v151
  %170 = vmatprep.subr.bf16.mxu0 0
  %171 = vmatpush1.bf16.msra.mxu0 %v152
  %172 = vmatprep.subr.bf16.mxu0 0
  %173 = vmatpush1.bf16.msra.mxu0 0
  %174 = vmatprep.subr.bf16.mxu0 0
  %175 = vmatpush1.bf16.msra.mxu0 0
  %176 = vmatprep.subr.bf16.mxu0 0
  %177 = vmatpush1.bf16.msra.mxu0 0
  %178 = vmatprep.subr.bf16.mxu0 0
  %179 = vmatpush1.bf16.msra.mxu0 0
  %180 = vmatprep.subr.bf16.mxu0 0
  %181 = vmatpush1.bf16.msra.mxu0 0
  %182 = vmatprep.subr.bf16.mxu0 0
  %183 = vmatpush1.bf16.msra.mxu0 0
  %184 = vmatprep.subr.bf16.mxu0 0
  %185 = vmatpush1.bf16.msra.mxu0 0
  %186 = vmatprep.subr.bf16.mxu0 0
  %187 = vmatpush1.bf16.msra.mxu0 0
  %188 = vmatprep.subr.bf16.mxu0 0
  %189 = vmatpush1.bf16.msra.mxu0 0
  %190 = vmatprep.subr.bf16.mxu0 0
  %191 = vmatpush1.bf16.msra.mxu0 0
  %192 = vmatprep.subr.bf16.mxu0 0
  %193 = vmatpush1.bf16.msra.mxu0 0
  %194 = vmatprep.subr.bf16.mxu0 0
  %195 = vmatpush1.bf16.msra.mxu0 0
  %196 = vmatprep.mubr.bf16.mxu0 0
  %197 = vmatmul.mubr.bf16.gmra.mrb[0].mxu0 %v159
  %v198 = vpop.f32.mrb[0].mxu0
  %v199 = vadd.f32 %v131, %v198
  %v200 = vpop.f32.mrb[0].mxu0
  %v201 = vpop.f32.mrb[0].mxu0
  %v202 = vadd.f32 %v131, %v201
  %v203 = vpop.f32.mrb[0].mxu0
  %204 = vmatprep.mubr.bf16.mxu0 0
  %205 = vmatmul.mubr.bf16.gmra.mrb[0].mxu0 %v162
  %v206 = vpop.f32.mrb[0].mxu0
  %v207 = vadd.f32 %v131, %v206
  %v208 = vpop.f32.mrb[0].mxu0
  %v209 = vpop.f32.mrb[0].mxu0
  %v210 = vadd.f32 %v131, %v209
  %v211 = vpop.f32.mrb[0].mxu0
  %212 = vdwg.mxu0
  %v213 = vadd.f32 %v27, %v199
  %v214 = vadd.f32 %v28, %v202
  %v215 = vadd.f32 %v29, %v207
  %v216 = vadd.f32 %v30, %v210
  %v217 = vsel %vm56, %v213, 0.0
  %218 = vadd.xlane.f32.xlu0 %v217
  %v219 = vpop.xlane.xlu0 %218
  %v220 = vsel %vm56, %v214, 0.0
  %221 = vadd.xlane.f32.xlu0 %v220
  %v222 = vpop.xlane.xlu0 %221
  %v223 = vsel %vm56, %v215, 0.0
  %224 = vadd.xlane.f32.xlu0 %v223
  %v225 = vpop.xlane.xlu0 %224
  %v226 = vsel %vm56, %v216, 0.0
  %227 = vadd.xlane.f32.xlu0 %v226
  %v228 = vpop.xlane.xlu0 %227
  %v229 = vrcp.pop 32.0
  %v230 = vmul.f32 %v219, %v229
  %v231 = vmul.f32 %v222, %v229
  %v232 = vmul.f32 %v225, %v229
  %v233 = vmul.f32 %v228, %v229
  %v234 = vsub.f32 %v213, %v230
  %v235 = vsub.f32 %v214, %v231
  %v236 = vsub.f32 %v215, %v232
  %v237 = vsub.f32 %v216, %v233
  %v238 = vmul.f32 %v234, %v234
  %v239 = vmul.f32 %v235, %v235
  %v240 = vmul.f32 %v236, %v236
  %v241 = vmul.f32 %v237, %v237
  %v242 = vsel %vm56, %v238, 0.0
  %243 = vadd.xlane.f32.xlu0 %v242
  %v244 = vpop.xlane.xlu0 %243
  %v245 = vsel %vm56, %v239, 0.0
  %246 = vadd.xlane.f32.xlu0 %v245
  %v247 = vpop.xlane.xlu0 %246
  %v248 = vsel %vm56, %v240, 0.0
  %249 = vadd.xlane.f32.xlu0 %v248
  %v250 = vpop.xlane.xlu0 %249
  %v251 = vsel %vm56, %v241, 0.0
  %252 = vadd.xlane.f32.xlu0 %v251
  %v253 = vpop.xlane.xlu0 %252
  %v254 = vmul.f32 %v244, %v229
  %v255 = vmul.f32 %v247, %v229
  %v256 = vmul.f32 %v250, %v229
  %v257 = vmul.f32 %v253, %v229
  %v258 = vadd.f32 %v254, 1e-06
  %v259 = vadd.f32 %v255, 1e-06
  %v260 = vadd.f32 %v256, 1e-06
  %v261 = vadd.f32 %v257, 1e-06
  %v262 = vrsqrt.pop %v258
  %v263 = vrsqrt.pop %v259
  %v264 = vrsqrt.pop %v260
  %v265 = vrsqrt.pop %v261
  %v266 = vmul.f32 %v234, %v262
  %v267 = vmul.f32 %v235, %v263
  %v268 = vmul.f32 %v236, %v264
  %v269 = vmul.f32 %v237, %v265
  %v270 = vld [vmem:[%s5] sm:$0x1]
  %v272 = vlaneseq
  %v273 = vshrl.u32 %v272, 7
  %v274 = vsub.s32 0, %v273
  %v275 = vrot.slane %v270, %v274
  %v277 = vmul.f32 %v266, %v275
  %v278 = vmul.f32 %v267, %v275
  %v279 = vmul.f32 %v268, %v275
  %v280 = vmul.f32 %v269, %v275
  %v281 = vld [vmem:[%s6] sm:$0x1]
  %v283 = vlaneseq
  %v284 = vshrl.u32 %v283, 7
  %v285 = vsub.s32 0, %v284
  %v286 = vrot.slane %v281, %v285
  %v288 = vadd.f32 %v277, %v286
  %v289 = vadd.f32 %v278, %v286
  %v290 = vadd.f32 %v279, %v286
  %v291 = vadd.f32 %v280, %v286
  %292 = vst.msk [vmem:[%s7] sm:$0xff] %vm56, %v288
  %293 = vst.msk [vmem:[%s7 + $0x8] sm:$0xff] %vm56, %v289
  %294 = vst.msk [vmem:[%s7 + $0x10] sm:$0xff] %vm56, %v290
  %295 = vst.msk [vmem:[%s7 + $0x18] sm:$0xff] %vm56, %v291
  // Predicated region
  $region30: #{forward.15} parent=0 // pred_check
    _
  $region31: #{forward.15} parent=0 // pred_check_branch
    %297 = sbr.rel (0) target = $region33
  $region32: #{forward.15} parent=0 // pred_region
    _
  $region33: #{forward.15} parent=0 // pred_fallthru
    _
  // Predicated region
  $region34: #{forward.15} parent=0 // pred_check
    _
  $region35: #{forward.15} parent=0 // pred_check_branch
    %299 = sbr.rel (0) target = $region37
  $region36: #{forward.15} parent=0 // pred_region
    _
  $region37: #{forward.15} parent=0 // pred_fallthru
    _

// kernel: forward.14
$region0: #{forward.14}
  #allocation0 [shape = 'u32[]', space=smem, size = 0x4, offset = 0x4, fixed_abs, tag = 'smem constant byte address 0x4 - core index']
  #allocation1 [shape = 'u32[144,128]{1,0:T(1,128)}', space=vmem, size = 0x12000, scoped, tag = 'internal scratch']
  %s0 = inlined_call_operand.vmem [shape: f32[2,16,32], index: 0, kind: input, shape index: {}]
  %s1 = inlined_call_operand.vmem [shape: f32[2,8,32], index: 1, kind: input, shape index: {}]
  %s2 = inlined_call_operand.vmem [shape: f32[2,1,8], index: 2, kind: input, shape index: {}]
  %s3 = inlined_call_operand.vmem [shape: bf16[4,32,8], index: 3, kind: input, shape index: {}]
  %s4 = inlined_call_operand.vmem [shape: bf16[4,32,8], index: 4, kind: input, shape index: {}]
  %s5 = inlined_call_operand.vmem [shape: bf16[4,32,8], index: 5, kind: input, shape index: {}]
  %s6 = inlined_call_operand.vmem [shape: f32[4,1,8], index: 6, kind: input, shape index: {}]
  %s7 = inlined_call_operand.vmem [shape: f32[4,1,8], index: 7, kind: input, shape index: {}]
  %s8 = inlined_call_operand.vmem [shape: f32[4,1,8], index: 8, kind: input, shape index: {}]
  %s9 = inlined_call_operand.vmem [shape: bf16[4,8,32], index: 9, kind: input, shape index: {}]
  %s10 = inlined_call_operand.vmem [shape: f32[1,32], index: 10, kind: input, shape index: {}]
  %s11 = inlined_call_operand.vmem [shape: f32[1,32], index: 11, kind: input, shape index: {}]
  %s12 = inlined_call_operand.vmem [shape: f32[1,32], index: 12, kind: input, shape index: {}]
  %s13 = inlined_call_operand.vmem [shape: f32[2,16,32], index: 13, kind: output, shape index: {}]
  %s14 = sld [smem:[#allocation0]]
  $region85: #{forward.14} parent=0
    _
  %s16 = ssub.s32 1, %s14
  %s17 = scalar_select 0, %s16, %s14
  loop: start=0, step=1, limit=4
  $region2: #{forward.14} parent=0 // loop_pre_header
    _
  $region3: #{forward.14} parent=0 // loop_header
    %s19 = sphi 0, %s23
    %p20 = scmp.ge.s32.totalorder %s19, 4
    %s29 = sphi 0, %s31
    %s32 = sphi 0, %s29
    %s33 = sphi 0, %s32
    %s49 = sphi 0, %s33
    %s55 = sphi 0, %s57
    %s58 = sphi 0, %s55
    %s59 = sphi 0, %s58
    %s75 = sphi 0, %s59
    %s81 = sphi 0, %s83
    %s84 = sphi 0, %s81
    %s85 = sphi 0, %s84
    %s101 = sphi 0, %s85
    %s105 = sphi 0, %s105
    %s107 = sphi 0, %s105
    %s108 = sphi 0, %s107
    %s122 = sphi 0, %s108
    %s126 = sphi 0, %s126
    %s128 = sphi 0, %s126
    %s129 = sphi 0, %s128
    %s143 = sphi 0, %s129
    %s147 = sphi 0, %s147
    %s149 = sphi 0, %s147
    %s150 = sphi 0, %s149
    %s164 = sphi 0, %s150
    %s168 = sphi 0, %s168
    %s170 = sphi 0, %s168
    %s171 = sphi 0, %s170
    %s185 = sphi 0, %s171
    %s189 = sphi 0, %s189
    %s191 = sphi 0, %s189
    %s192 = sphi 0, %s191
    %s206 = sphi 0, %s192
    %s210 = sphi 0, %s210
    %s212 = sphi 0, %s210
    %s213 = sphi 0, %s212
    %s227 = sphi 0, %s213
    %s231 = sphi 0, %s231
    %s233 = sphi 0, %s231
    %s234 = sphi 0, %s233
    %s248 = sphi 0, %s234
    %s252 = sphi 0, %s252
    %s254 = sphi 0, %s252
    %s255 = sphi 0, %s254
    %s269 = sphi 0, %s255
    %s273 = sphi 0, %s273
    %s275 = sphi 0, %s273
    %s276 = sphi 0, %s275
    %s290 = sphi 0, %s276
    %s294 = sphi 0, %s294
    %s296 = sphi 0, %s294
    %s297 = sphi 0, %s296
    %s311 = sphi 0, %s297
    %s317 = sphi 0, %s319
    %s320 = sphi 0, %s317
    %s321 = sphi 0, %s320
    %s337 = sphi 0, %s321
  $region4: #{forward.14} parent=0 // loop_header_branch
    %22 = sbr.rel (%p20) target = $region8
  $region5: #{forward.14} parent=0 // loop_body
    %s24 = ssub.s32 %s19, 1
    %s25 = ssub.s32 %s19, 2
    %s26 = sadd.s32 %s19, 1
    %s27 = ssub.s32 %s19, %s26
    %p28 = scmp.eq.s32.totalorder %s27, 0
    %s30 = sadd.s32 %s29, 1
    %s31 = scalar_select %p28, %s29, %s30
    %p34 = pneg %p28
    %p35 = scmp.eq.s32.totalorder %s19, 1
    %p36 = por %p34, %p35
    %p37 = scmp.ne.s32.totalorder %s29, %s32
    %p38 = scmp.eq.s32.totalorder %s19, 0
    %p39 = por %p37, %p38
    %p40 = scmp.ne.s32.totalorder %s29, %s32
    %p41 = scmp.eq.s32.totalorder %s24, 1
    %p42 = por %p40, %p41
    %p43 = scmp.ne.s32.totalorder %s32, %s33
    %p44 = scmp.eq.s32.totalorder %s24, 0
    %p45 = por %p43, %p44
    %p46 = scmp.ne.s32.totalorder %s32, %s33
    %p47 = scmp.eq.s32.totalorder %s25, 1
    %p48 = por %p46, %p47
    %p50 = scmp.ne.s32.totalorder %s33, %s49
    %p51 = scmp.eq.s32.totalorder %s25, 0
    %p52 = por %p50, %p51
    %s53 = ssub.s32 %s19, %s26
    %p54 = scmp.eq.s32.totalorder %s53, 0
    %s56 = sadd.s32 %s55, 1
    %s57 = scalar_select %p54, %s55, %s56
    %p60 = pneg %p54
    %p61 = scmp.eq.s32.totalorder %s19, 1
    %p62 = por %p60, %p61
    %p63 = scmp.ne.s32.totalorder %s55, %s58
    %p64 = scmp.eq.s32.totalorder %s19, 0
    %p65 = por %p63, %p64
    %p66 = scmp.ne.s32.totalorder %s55, %s58
    %p67 = scmp.eq.s32.totalorder %s24, 1
    %p68 = por %p66, %p67
    %p69 = scmp.ne.s32.totalorder %s58, %s59
    %p70 = scmp.eq.s32.totalorder %s24, 0
    %p71 = por %p69, %p70
    %p72 = scmp.ne.s32.totalorder %s58, %s59
    %p73 = scmp.eq.s32.totalorder %s25, 1
    %p74 = por %p72, %p73
    %p76 = scmp.ne.s32.totalorder %s59, %s75
    %p77 = scmp.eq.s32.totalorder %s25, 0
    %p78 = por %p76, %p77
    %s79 = ssub.s32 %s19, %s26
    %p80 = scmp.eq.s32.totalorder %s79, 0
    %s82 = sadd.s32 %s81, 1
    %s83 = scalar_select %p80, %s81, %s82
    %p86 = pneg %p80
    %p87 = scmp.eq.s32.totalorder %s19, 1
    %p88 = por %p86, %p87
    %p89 = scmp.ne.s32.totalorder %s81, %s84
    %p90 = scmp.eq.s32.totalorder %s19, 0
    %p91 = por %p89, %p90
    %p92 = scmp.ne.s32.totalorder %s81, %s84
    %p93 = scmp.eq.s32.totalorder %s24, 1
    %p94 = por %p92, %p93
    %p95 = scmp.ne.s32.totalorder %s84, %s85
    %p96 = scmp.eq.s32.totalorder %s24, 0
    %p97 = por %p95, %p96
    %p98 = scmp.ne.s32.totalorder %s84, %s85
    %p99 = scmp.eq.s32.totalorder %s25, 1
    %p100 = por %p98, %p99
    %p102 = scmp.ne.s32.totalorder %s85, %s101
    %p103 = scmp.eq.s32.totalorder %s25, 0
    %p104 = por %p102, %p103
    %s106 = sadd.s32 %s105, 1
    %p109 = scmp.eq.s32.totalorder %s19, 1
    %p110 = scmp.ne.s32.totalorder %s105, %s107
    %p111 = scmp.eq.s32.totalorder %s19, 0
    %p112 = por %p110, %p111
    %p113 = scmp.ne.s32.totalorder %s105, %s107
    %p114 = scmp.eq.s32.totalorder %s24, 1
    %p115 = por %p113, %p114
    %p116 = scmp.ne.s32.totalorder %s107, %s108
    %p117 = scmp.eq.s32.totalorder %s24, 0
    %p118 = por %p116, %p117
    %p119 = scmp.ne.s32.totalorder %s107, %s108
    %p120 = scmp.eq.s32.totalorder %s25, 1
    %p121 = por %p119, %p120
    %p123 = scmp.ne.s32.totalorder %s108, %s122
    %p124 = scmp.eq.s32.totalorder %s25, 0
    %p125 = por %p123, %p124
    %s127 = sadd.s32 %s126, 1
    %p130 = scmp.eq.s32.totalorder %s19, 1
    %p131 = scmp.ne.s32.totalorder %s126, %s128
    %p132 = scmp.eq.s32.totalorder %s19, 0
    %p133 = por %p131, %p132
    %p134 = scmp.ne.s32.totalorder %s126, %s128
    %p135 = scmp.eq.s32.totalorder %s24, 1
    %p136 = por %p134, %p135
    %p137 = scmp.ne.s32.totalorder %s128, %s129
    %p138 = scmp.eq.s32.totalorder %s24, 0
    %p139 = por %p137, %p138
    %p140 = scmp.ne.s32.totalorder %s128, %s129
    %p141 = scmp.eq.s32.totalorder %s25, 1
    %p142 = por %p140, %p141
    %p144 = scmp.ne.s32.totalorder %s129, %s143
    %p145 = scmp.eq.s32.totalorder %s25, 0
    %p146 = por %p144, %p145
    %s148 = sadd.s32 %s147, 1
    %p151 = scmp.eq.s32.totalorder %s19, 1
    %p152 = scmp.ne.s32.totalorder %s147, %s149
    %p153 = scmp.eq.s32.totalorder %s19, 0
    %p154 = por %p152, %p153
    %p155 = scmp.ne.s32.totalorder %s147, %s149
    %p156 = scmp.eq.s32.totalorder %s24, 1
    %p157 = por %p155, %p156
    %p158 = scmp.ne.s32.totalorder %s149, %s150
    %p159 = scmp.eq.s32.totalorder %s24, 0
    %p160 = por %p158, %p159
    %p161 = scmp.ne.s32.totalorder %s149, %s150
    %p162 = scmp.eq.s32.totalorder %s25, 1
    %p163 = por %p161, %p162
    %p165 = scmp.ne.s32.totalorder %s150, %s164
    %p166 = scmp.eq.s32.totalorder %s25, 0
    %p167 = por %p165, %p166
    %s169 = sadd.s32 %s168, 1
    %p172 = scmp.eq.s32.totalorder %s19, 1
    %p173 = scmp.ne.s32.totalorder %s168, %s170
    %p174 = scmp.eq.s32.totalorder %s19, 0
    %p175 = por %p173, %p174
    %p176 = scmp.ne.s32.totalorder %s168, %s170
    %p177 = scmp.eq.s32.totalorder %s24, 1
    %p178 = por %p176, %p177
    %p179 = scmp.ne.s32.totalorder %s170, %s171
    %p180 = scmp.eq.s32.totalorder %s24, 0
    %p181 = por %p179, %p180
    %p182 = scmp.ne.s32.totalorder %s170, %s171
    %p183 = scmp.eq.s32.totalorder %s25, 1
    %p184 = por %p182, %p183
    %p186 = scmp.ne.s32.totalorder %s171, %s185
    %p187 = scmp.eq.s32.totalorder %s25, 0
    %p188 = por %p186, %p187
    %s190 = sadd.s32 %s189, 1
    %p193 = scmp.eq.s32.totalorder %s19, 1
    %p194 = scmp.ne.s32.totalorder %s189, %s191
    %p195 = scmp.eq.s32.totalorder %s19, 0
    %p196 = por %p194, %p195
    %p197 = scmp.ne.s32.totalorder %s189, %s191
    %p198 = scmp.eq.s32.totalorder %s24, 1
    %p199 = por %p197, %p198
    %p200 = scmp.ne.s32.totalorder %s191, %s192
    %p201 = scmp.eq.s32.totalorder %s24, 0
    %p202 = por %p200, %p201
    %p203 = scmp.ne.s32.totalorder %s191, %s192
    %p204 = scmp.eq.s32.totalorder %s25, 1
    %p205 = por %p203, %p204
    %p207 = scmp.ne.s32.totalorder %s192, %s206
    %p208 = scmp.eq.s32.totalorder %s25, 0
    %p209 = por %p207, %p208
    %s211 = sadd.s32 %s210, 1
    %p214 = scmp.eq.s32.totalorder %s19, 1
    %p215 = scmp.ne.s32.totalorder %s210, %s212
    %p216 = scmp.eq.s32.totalorder %s19, 0
    %p217 = por %p215, %p216
    %p218 = scmp.ne.s32.totalorder %s210, %s212
    %p219 = scmp.eq.s32.totalorder %s24, 1
    %p220 = por %p218, %p219
    %p221 = scmp.ne.s32.totalorder %s212, %s213
    %p222 = scmp.eq.s32.totalorder %s24, 0
    %p223 = por %p221, %p222
    %p224 = scmp.ne.s32.totalorder %s212, %s213
    %p225 = scmp.eq.s32.totalorder %s25, 1
    %p226 = por %p224, %p225
    %p228 = scmp.ne.s32.totalorder %s213, %s227
    %p229 = scmp.eq.s32.totalorder %s25, 0
    %p230 = por %p228, %p229
    %s232 = sadd.s32 %s231, 1
    %p235 = scmp.eq.s32.totalorder %s19, 1
    %p236 = scmp.ne.s32.totalorder %s231, %s233
    %p237 = scmp.eq.s32.totalorder %s19, 0
    %p238 = por %p236, %p237
    %p239 = scmp.ne.s32.totalorder %s231, %s233
    %p240 = scmp.eq.s32.totalorder %s24, 1
    %p241 = por %p239, %p240
    %p242 = scmp.ne.s32.totalorder %s233, %s234
    %p243 = scmp.eq.s32.totalorder %s24, 0
    %p244 = por %p242, %p243
    %p245 = scmp.ne.s32.totalorder %s233, %s234
    %p246 = scmp.eq.s32.totalorder %s25, 1
    %p247 = por %p245, %p246
    %p249 = scmp.ne.s32.totalorder %s234, %s248
    %p250 = scmp.eq.s32.totalorder %s25, 0
    %p251 = por %p249, %p250
    %s253 = sadd.s32 %s252, 1
    %p256 = scmp.eq.s32.totalorder %s19, 1
    %p257 = scmp.ne.s32.totalorder %s252, %s254
    %p258 = scmp.eq.s32.totalorder %s19, 0
    %p259 = por %p257, %p258
    %p260 = scmp.ne.s32.totalorder %s252, %s254
    %p261 = scmp.eq.s32.totalorder %s24, 1
    %p262 = por %p260, %p261
    %p263 = scmp.ne.s32.totalorder %s254, %s255
    %p264 = scmp.eq.s32.totalorder %s24, 0
    %p265 = por %p263, %p264
    %p266 = scmp.ne.s32.totalorder %s254, %s255
    %p267 = scmp.eq.s32.totalorder %s25, 1
    %p268 = por %p266, %p267
    %p270 = scmp.ne.s32.totalorder %s255, %s269
    %p271 = scmp.eq.s32.totalorder %s25, 0
    %p272 = por %p270, %p271
    %s274 = sadd.s32 %s273, 1
    %p277 = scmp.eq.s32.totalorder %s19, 1
    %p278 = scmp.ne.s32.totalorder %s273, %s275
    %p279 = scmp.eq.s32.totalorder %s19, 0
    %p280 = por %p278, %p279
    %p281 = scmp.ne.s32.totalorder %s273, %s275
    %p282 = scmp.eq.s32.totalorder %s24, 1
    %p283 = por %p281, %p282
    %p284 = scmp.ne.s32.totalorder %s275, %s276
    %p285 = scmp.eq.s32.totalorder %s24, 0
    %p286 = por %p284, %p285
    %p287 = scmp.ne.s32.totalorder %s275, %s276
    %p288 = scmp.eq.s32.totalorder %s25, 1
    %p289 = por %p287, %p288
    %p291 = scmp.ne.s32.totalorder %s276, %s290
    %p292 = scmp.eq.s32.totalorder %s25, 0
    %p293 = por %p291, %p292
    %s295 = sadd.s32 %s294, 1
    %p298 = scmp.eq.s32.totalorder %s19, 1
    %p299 = scmp.ne.s32.totalorder %s294, %s296
    %p300 = scmp.eq.s32.totalorder %s19, 0
    %p301 = por %p299, %p300
    %p302 = scmp.ne.s32.totalorder %s294, %s296
    %p303 = scmp.eq.s32.totalorder %s24, 1
    %p304 = por %p302, %p303
    %p305 = scmp.ne.s32.totalorder %s296, %s297
    %p306 = scmp.eq.s32.totalorder %s24, 0
    %p307 = por %p305, %p306
    %p308 = scmp.ne.s32.totalorder %s296, %s297
    %p309 = scmp.eq.s32.totalorder %s25, 1
    %p310 = por %p308, %p309
    %p312 = scmp.ne.s32.totalorder %s297, %s311
    %p313 = scmp.eq.s32.totalorder %s25, 0
    %p314 = por %p312, %p313
    %s315 = ssub.s32 %s19, %s26
    %p316 = scmp.eq.s32.totalorder %s315, 0
    %s318 = sadd.s32 %s317, 1
    %s319 = scalar_select %p316, %s317, %s318
    %p322 = pneg %p316
    %p323 = scmp.eq.s32.totalorder %s19, 1
    %p324 = por %p322, %p323
    %p325 = scmp.ne.s32.totalorder %s317, %s320
    %p326 = scmp.eq.s32.totalorder %s19, 0
    %p327 = por %p325, %p326
    %p328 = scmp.ne.s32.totalorder %s317, %s320
    %p329 = scmp.eq.s32.totalorder %s24, 1
    %p330 = por %p328, %p329
    %p331 = scmp.ne.s32.totalorder %s320, %s321
    %p332 = scmp.eq.s32.totalorder %s24, 0
    %p333 = por %p331, %p332
    %p334 = scmp.ne.s32.totalorder %s320, %s321
    %p335 = scmp.eq.s32.totalorder %s25, 1
    %p336 = por %p334, %p335
    %p338 = scmp.ne.s32.totalorder %s321, %s337
    %p339 = scmp.eq.s32.totalorder %s25, 0
    %p340 = por %p338, %p339
    %p341 = scmp.le.s32.totalorder 1, %s19
    %p342 = scmp.lt.s32.totalorder %s19, 3
    %p343 = pnand %p341, %p342
    %p344 = pneg %p343
    // Predicated region
    $region9: #{forward.14} parent=5 // pred_check
      _
    $region10: #{forward.14} parent=5 // pred_check_branch
      %346 = sbr.rel (%p343) target = $region12
    $region11: #{forward.14} parent=5 // pred_region
      %s347 = ssub.s32 %s19, 1
      // Predicated region
      $region13: #{forward.14} parent=11 // pred_check
        %p348 = pneg %p118
      $region14: #{forward.14} parent=11 // pred_check_branch
        %350 = sbr.rel (%p348) target = $region16
      $region15: #{forward.14} parent=11 // pred_region
        _
      $region16: #{forward.14} parent=11 // pred_fallthru
        _
      // Predicated region
      $region17: #{forward.14} parent=11 // pred_check
        %p351 = pneg %p139
      $region18: #{forward.14} parent=11 // pred_check_branch
        %353 = sbr.rel (%p351) target = $region20
      $region19: #{forward.14} parent=11 // pred_region
        _
      $region20: #{forward.14} parent=11 // pred_fallthru
        _
      // Predicated region
      $region21: #{forward.14} parent=11 // pred_check
        %p354 = pneg %p160
      $region22: #{forward.14} parent=11 // pred_check_branch
        %356 = sbr.rel (%p354) target = $region24
      $region23: #{forward.14} parent=11 // pred_region
        _
      $region24: #{forward.14} parent=11 // pred_fallthru
        _
      // Predicated region
      $region25: #{forward.14} parent=11 // pred_check
        %p357 = pneg %p181
      $region26: #{forward.14} parent=11 // pred_check_branch
        %359 = sbr.rel (%p357) target = $region28
      $region27: #{forward.14} parent=11 // pred_region
        _
      $region28: #{forward.14} parent=11 // pred_fallthru
        _
      // Predicated region
      $region29: #{forward.14} parent=11 // pred_check
        %p360 = pneg %p202
      $region30: #{forward.14} parent=11 // pred_check_branch
        %362 = sbr.rel (%p360) target = $region32
      $region31: #{forward.14} parent=11 // pred_region
        _
      $region32: #{forward.14} parent=11 // pred_fallthru
        _
      // Predicated region
      $region33: #{forward.14} parent=11 // pred_check
        %p363 = pneg %p223
      $region34: #{forward.14} parent=11 // pred_check_branch
        %365 = sbr.rel (%p363) target = $region36
      $region35: #{forward.14} parent=11 // pred_region
        _
      $region36: #{forward.14} parent=11 // pred_fallthru
        _
      // Predicated region
      $region37: #{forward.14} parent=11 // pred_check
        %p366 = pneg %p244
      $region38: #{forward.14} parent=11 // pred_check_branch
        %368 = sbr.rel (%p366) target = $region40
      $region39: #{forward.14} parent=11 // pred_region
        _
      $region40: #{forward.14} parent=11 // pred_fallthru
        _
      // Predicated region
      $region41: #{forward.14} parent=11 // pred_check
        %p369 = pneg %p265
      $region42: #{forward.14} parent=11 // pred_check_branch
        %371 = sbr.rel (%p369) target = $region44
      $region43: #{forward.14} parent=11 // pred_region
        _
      $region44: #{forward.14} parent=11 // pred_fallthru
        _
      // Predicated region
      $region45: #{forward.14} parent=11 // pred_check
        %p372 = pneg %p286
      $region46: #{forward.14} parent=11 // pred_check_branch
        %374 = sbr.rel (%p372) target = $region48
      $region47: #{forward.14} parent=11 // pred_region
        _
      $region48: #{forward.14} parent=11 // pred_fallthru
        _
      // Predicated region
      $region49: #{forward.14} parent=11 // pred_check
        %p375 = pneg %p307
      $region50: #{forward.14} parent=11 // pred_check_branch
        %377 = sbr.rel (%p375) target = $region52
      $region51: #{forward.14} parent=11 // pred_region
        _
      $region52: #{forward.14} parent=11 // pred_fallthru
        _
    $region12: #{forward.14} parent=5 // pred_fallthru
      _
    %p378 = scmp.lt.s32.totalorder %s19, 2
    // Predicated region
    $region53: #{forward.14} parent=5 // pred_check
      %p379 = pneg %p378
    $region54: #{forward.14} parent=5 // pred_check_branch
      %381 = sbr.rel (%p379) target = $region56
    $region55: #{forward.14} parent=5 // pred_region
      // Predicated region
      $region57: #{forward.14} parent=55 // pred_check
        %p382 = pneg %p39
      $region58: #{forward.14} parent=55 // pred_check_branch
        %384 = sbr.rel (%p382) target = $region60
      $region59: #{forward.14} parent=55 // pred_region
        %p385 = scmp.lt.s32.totalorder %s19, 1
        %s386 = scalar_select %p385, %s19, 1
        %s387 = smul.addr %s386, 2
        %s388 = smul.addr %s387, 8
        %s389 = scalar_lea.vmem %s0, %s388
      $region60: #{forward.14} parent=55 // pred_fallthru
        _
      // Predicated region
      $region61: #{forward.14} parent=55 // pred_check
        %p390 = pneg %p65
      $region62: #{forward.14} parent=55 // pred_check_branch
        %392 = sbr.rel (%p390) target = $region64
      $region63: #{forward.14} parent=55 // pred_region
        %p393 = scmp.lt.s32.totalorder %s19, 1
        %s394 = scalar_select %p393, %s19, 1
        %s395 = smul.addr %s394, 8
        %s396 = scalar_lea.vmem %s1, %s395
      $region64: #{forward.14} parent=55 // pred_fallthru
        _
      // Predicated region
      $region65: #{forward.14} parent=55 // pred_check
        %p397 = pneg %p91
      $region66: #{forward.14} parent=55 // pred_check_branch
        %399 = sbr.rel (%p397) target = $region68
      $region67: #{forward.14} parent=55 // pred_region
        %p400 = scmp.lt.s32.totalorder %s19, 1
        %s401 = scalar_select %p400, %s19, 1
        %s402 = scalar_lea.vmem %s2, %s401
      $region68: #{forward.14} parent=55 // pred_fallthru
        _
    $region56: #{forward.14} parent=5 // pred_fallthru
      _
    %p403 = scmp.le.s32.totalorder 1, %s19
    %p404 = scmp.lt.s32.totalorder %s19, 3
    %p405 = pnand %p403, %p404
    %p406 = pneg %p405
    // Predicated region
    $region69: #{forward.14} parent=5 // pred_check
      _
    $region70: #{forward.14} parent=5 // pred_check_branch
      %408 = sbr.rel (%p405) target = $region72
    $region71: #{forward.14} parent=5 // pred_region
      %s409 = ssub.s32 %s19, 1
      %p410 = scmp.lt.s32.totalorder %s24, 1
      %s411 = scalar_select %p410, %s24, 1
      %s412 = smul.addr %s411, 2
      %s413 = smul.addr %s412, 8
      %s414 = scalar_lea.vmem %s0, %s413
      %p415 = pneg %p45
      %p416 = pneg %p42
      %p417 = scmp.lt.s32.totalorder %s24, 1
      %s418 = scalar_select %p417, %s24, 1
      %s419 = smul.addr %s418, 8
      %s420 = scalar_lea.vmem %s1, %s419
      %p421 = pneg %p71
      %p422 = pneg %p68
      %p423 = scmp.lt.s32.totalorder %s24, 1
      %s424 = scalar_select %p423, %s24, 1
      %s425 = scalar_lea.vmem %s2, %s424
      %p426 = pneg %p97
      %p427 = pneg %p94
      %p428 = pneg %p118
      %p429 = pneg %p115
      %p430 = pneg %p139
      %p431 = pneg %p136
      %p432 = pneg %p160
      %p433 = pneg %p157
      %p434 = pneg %p181
      %p435 = pneg %p178
      %p436 = pneg %p202
      %p437 = pneg %p199
      %p438 = pneg %p223
      %p439 = pneg %p220
      %p440 = pneg %p244
      %p441 = pneg %p241
      %p442 = pneg %p265
      %p443 = pneg %p262
      %p444 = pneg %p286
      %p445 = pneg %p283
      %p446 = pneg %p307
      %p447 = pneg %p304
      %p448 = pneg %p333
      %p449 = pneg %p330
      %p450 = scmp.lt.s32.totalorder %s24, 1
      %s451 = scalar_select %p450, %s24, 1
      %s452 = smul.addr %s451, 2
      %s453 = smul.addr %s452, 8
      %s454 = scalar_lea.vmem %s13, %s453
      %p455 = scmp.lt.s32.totalorder %s24, 1
      %s456 = scalar_select %p455, %s24, 1
      %s457 = smul.addr %s456, 2
      %s458 = smul.addr %s457, 8
      %s459 = scalar_lea.vmem %s0, %s458
      %p460 = scmp.lt.s32.totalorder %s24, 1
      %s461 = scalar_select %p460, %s24, 1
      %s462 = smul.addr %s461, 8
      %s463 = scalar_lea.vmem %s1, %s462
      %p464 = scmp.lt.s32.totalorder %s24, 1
      %s465 = scalar_select %p464, %s24, 1
      %s466 = scalar_lea.vmem %s2, %s465
      %p467 = scmp.lt.s32.totalorder %s24, 1
      %s468 = scalar_select %p467, %s24, 1
      %s469 = smul.addr %s468, 2
      %s470 = smul.addr %s469, 8
      %s471 = scalar_lea.vmem %s13, %s470
      %v473 = vld [vmem:[%s459] sm:$0xff]
      %v474 = vld [vmem:[%s459 + $0x8] sm:$0xff]
      %v475 = vld [vmem:[%s463] sm:$0xff]
      %v476 = vld [vmem:[%s466] sm:$0x1]
      %v477 = vsub.f32 1.0, %v476
      %v478 = vmul.f32 %v477, -1e+09
      %v479 = vpack.c.bf16 %v474, %v473
      %v480 = vpack.c.bf16 %v475, %v475
      %v481 = vld [vmem:[%s3] sm:$0xf]
      %v482 = vld [vmem:[%s3 + $0x4] sm:$0xf]
      %v483 = vld [vmem:[%s3 + $0x8] sm:$0xf]
      %v484 = vld [vmem:[%s3 + $0xc] sm:$0xf]
      %v485 = vld [vmem:[%s6] sm:$0x1]
      %v487 = vlaneseq
      %v488 = vshrl.u32 %v487, 7
      %v489 = vsub.s32 0, %v488
      %v490 = vrot.slane %v485, %v489
      %v496 = vunpack.c.l.b16 %v481
      %v497 = vunpack.c.l.b16 %v482
      %v498 = vunpack.c.l.b16 %v483
      %v499 = vunpack.c.l.b16 %v484
      %v500 = vpack.c.b16 %v497, %v496
      %v501 = vpack.c.b16 %v499, %v498
      %vm504 = vcmask 261120
      %v506 = vsel %vm504, %v479, 0
      %508 = vmatprep.subr.bf16.mxu0 0
      %509 = vmatpush1.bf16.msra.mxu0 %v500
      %510 = vmatprep.subr.bf16.mxu0 0
      %511 = vmatpush1.bf16.msra.mxu0 %v501
      %512 = vmatprep.subr.bf16.mxu0 0
      %513 = vmatpush1.bf16.msra.mxu0 0
      %514 = vmatprep.subr.bf16.mxu0 0
      %515 = vmatpush1.bf16.msra.mxu0 0
      %516 = vmatprep.subr.bf16.mxu0 0
      %517 = vmatpush1.bf16.msra.mxu0 0
      %518 = vmatprep.subr.bf16.mxu0 0
      %519 = vmatpush1.bf16.msra.mxu0 0
      %520 = vmatprep.subr.bf16.mxu0 0
      %521 = vmatpush1.bf16.msra.mxu0 0
      %522 = vmatprep.subr.bf16.mxu0 0
      %523 = vmatpush1.bf16.msra.mxu0 0
      %524 = vmatprep.subr.bf16.mxu0 0
      %525 = vmatpush1.bf16.msra.mxu0 0
      %526 = vmatprep.subr.bf16.mxu0 0
      %527 = vmatpush1.bf16.msra.mxu0 0
      %528 = vmatprep.subr.bf16.mxu0 0
      %529 = vmatpush1.bf16.msra.mxu0 0
      %530 = vmatprep.subr.bf16.mxu0 0
      %531 = vmatpush1.bf16.msra.mxu0 0
      %532 = vmatprep.subr.bf16.mxu0 0
      %533 = vmatpush1.bf16.msra.mxu0 0
      %534 = vmatprep.subr.bf16.mxu0 0
      %535 = vmatpush1.bf16.msra.mxu0 0
      %536 = vmatprep.subr.bf16.mxu0 0
      %537 = vmatpush1.bf16.msra.mxu0 0
      %538 = vmatprep.subr.bf16.mxu0 0
      %539 = vmatpush1.bf16.msra.mxu0 0
      %540 = vmatprep.mubr.bf16.mxu0 0
      %541 = vmatmul.mubr.bf16.gmra.mrb[0].mxu0 %v506
      %v542 = vpop.f32.mrb[0].mxu0
      %v543 = vadd.f32 %v490, %v542
      %v544 = vpop.f32.mrb[0].mxu0
      %v545 = vpop.f32.mrb[0].mxu0
      %v546 = vadd.f32 %v490, %v545
      %v547 = vpop.f32.mrb[0].mxu0
      %548 = vdwg.mxu0
      %v549 = vld [vmem:[%s4] sm:$0xf]
      %v550 = vld [vmem:[%s4 + $0x4] sm:$0xf]
      %v551 = vld [vmem:[%s4 + $0x8] sm:$0xf]
      %v552 = vld [vmem:[%s4 + $0xc] sm:$0xf]
      %v553 = vld [vmem:[%s7] sm:$0x1]
      %v555 = vlaneseq
      %v556 = vshrl.u32 %v555, 7
      %v557 = vsub.s32 0, %v556
      %v558 = vrot.slane %v553, %v557
      %v564 = vunpack.c.l.b16 %v549
      %v565 = vunpack.c.l.b16 %v550
      %v566 = vunpack.c.l.b16 %v551
      %v567 = vunpack.c.l.b16 %v552
      %v568 = vpack.c.b16 %v565, %v564
      %v569 = vpack.c.b16 %v567, %v566
      %v573 = vsel %vm504, %v480, 0
      %575 = vmatprep.subr.bf16.mxu0 0
      %576 = vmatpush1.bf16.msra.mxu0 %v568
      %577 = vmatprep.subr.bf16.mxu0 0
      %578 = vmatpush1.bf16.msra.mxu0 %v569
      %579 = vmatprep.subr.bf16.mxu0 0
      %580 = vmatpush1.bf16.msra.mxu0 0
      %581 = vmatprep.subr.bf16.mxu0 0
      %582 = vmatpush1.bf16.msra.mxu0 0
      %583 = vmatprep.subr.bf16.mxu0 0
      %584 = vmatpush1.bf16.msra.mxu0 0
      %585 = vmatprep.subr.bf16.mxu0 0
      %586 = vmatpush1.bf16.msra.mxu0 0
      %587 = vmatprep.subr.bf16.mxu0 0
      %588 = vmatpush1.bf16.msra.mxu0 0
      %589 = vmatprep.subr.bf16.mxu0 0
      %590 = vmatpush1.bf16.msra.mxu0 0
      %591 = vmatprep.subr.bf16.mxu0 0
      %592 = vmatpush1.bf16.msra.mxu0 0
      %593 = vmatprep.subr.bf16.mxu0 0
      %594 = vmatpush1.bf16.msra.mxu0 0
      %595 = vmatprep.subr.bf16.mxu0 0
      %596 = vmatpush1.bf16.msra.mxu0 0
      %597 = vmatprep.subr.bf16.mxu0 0
      %598 = vmatpush1.bf16.msra.mxu0 0
      %599 = vmatprep.subr.bf16.mxu0 0
      %600 = vmatpush1.bf16.msra.mxu0 0
      %601 = vmatprep.subr.bf16.mxu0 0
      %602 = vmatpush1.bf16.msra.mxu0 0
      %603 = vmatprep.subr.bf16.mxu0 0
      %604 = vmatpush1.bf16.msra.mxu0 0
      %605 = vmatprep.subr.bf16.mxu0 0
      %606 = vmatpush1.bf16.msra.mxu0 0
      %607 = vmatprep.mubr.bf16.mxu0 0
      %608 = vmatmul.mubr.bf16.gmra.mrb[0].mxu0 %v573
      %v609 = vpop.f32.mrb[0].mxu0
      %v610 = vadd.f32 %v558, %v609
      %v611 = vpop.f32.mrb[0].mxu0
      %v612 = vpop.f32.mrb[0].mxu0
      %v613 = vpop.f32.mrb[0].mxu0
      %614 = vdwg.mxu0
      %v615 = vld [vmem:[%s5] sm:$0xf]
      %v616 = vld [vmem:[%s5 + $0x4] sm:$0xf]
      %v617 = vld [vmem:[%s5 + $0x8] sm:$0xf]
      %v618 = vld [vmem:[%s5 + $0xc] sm:$0xf]
      %v619 = vld [vmem:[%s8] sm:$0x1]
      %v621 = vlaneseq
      %v622 = vshrl.u32 %v621, 7
      %v623 = vsub.s32 0, %v622
      %v624 = vrot.slane %v619, %v623
      %v630 = vunpack.c.l.b16 %v615
      %v631 = vunpack.c.l.b16 %v616
      %v632 = vunpack.c.l.b16 %v617
      %v633 = vunpack.c.l.b16 %v618
      %v634 = vpack.c.b16 %v631, %v630
      %v635 = vpack.c.b16 %v633, %v632
      %638 = vmatprep.subr.bf16.mxu0 0
      %639 = vmatpush1.bf16.msra.mxu0 %v634
      %640 = vmatprep.subr.bf16.mxu0 0
      %641 = vmatpush1.bf16.msra.mxu0 %v635
      %642 = vmatprep.subr.bf16.mxu0 0
      %643 = vmatpush1.bf16.msra.mxu0 0
      %644 = vmatprep.subr.bf16.mxu0 0
      %645 = vmatpush1.bf16.msra.mxu0 0
      %646 = vmatprep.subr.bf16.mxu0 0
      %647 = vmatpush1.bf16.msra.mxu0 0
      %648 = vmatprep.subr.bf16.mxu0 0
      %649 = vmatpush1.bf16.msra.mxu0 0
      %650 = vmatprep.subr.bf16.mxu0 0
      %651 = vmatpush1.bf16.msra.mxu0 0
      %652 = vmatprep.subr.bf16.mxu0 0
      %653 = vmatpush1.bf16.msra.mxu0 0
      %654 = vmatprep.subr.bf16.mxu0 0
      %655 = vmatpush1.bf16.msra.mxu0 0
      %656 = vmatprep.subr.bf16.mxu0 0
      %657 = vmatpush1.bf16.msra.mxu0 0
      %658 = vmatprep.subr.bf16.mxu0 0
      %659 = vmatpush1.bf16.msra.mxu0 0
      %660 = vmatprep.subr.bf16.mxu0 0
      %661 = vmatpush1.bf16.msra.mxu0 0
      %662 = vmatprep.subr.bf16.mxu0 0
      %663 = vmatpush1.bf16.msra.mxu0 0
      %664 = vmatprep.subr.bf16.mxu0 0
      %665 = vmatpush1.bf16.msra.mxu0 0
      %666 = vmatprep.subr.bf16.mxu0 0
      %667 = vmatpush1.bf16.msra.mxu0 0
      %668 = vmatprep.subr.bf16.mxu0 0
      %669 = vmatpush1.bf16.msra.mxu0 0
      %670 = vmatprep.mubr.bf16.mxu0 0
      %671 = vmatmul.mubr.bf16.gmra.mrb[0].mxu0 %v573
      %v672 = vpop.f32.mrb[0].mxu0
      %v673 = vadd.f32 %v624, %v672
      %v674 = vpop.f32.mrb[0].mxu0
      %v675 = vpop.f32.mrb[0].mxu0
      %v676 = vpop.f32.mrb[0].mxu0
      %677 = vdwg.mxu0
      %v678 = vpack.c.bf16 %v546, %v543
      %v679 = vpack.c.bf16 %v610, %v610
      %vm680 = vcmask 64512
      %v682 = vsel %vm680, %v678, 0
      %v685 = vsel %vm680, %v679, 0
      %687 = vmatprep.subr.bf16.mxu0 0
      %688 = vmatpush1.bf16.xpose.msra.mxu0 %v685
      %689 = vmatprep.subr.bf16.mxu0 0
      %690 = vmatpush1.bf16.xpose.msra.mxu0 0
      %691 = vmatprep.subr.bf16.mxu0 0
      %692 = vmatpush1.bf16.xpose.msra.mxu0 0
      %693 = vmatprep.subr.bf16.mxu0 0
      %694 = vmatpush1.bf16.xpose.msra.mxu0 0
      %695 = vmatprep.subr.bf16.mxu0 0
      %696 = vmatpush1.bf16.xpose.msra.mxu0 0
      %697 = vmatprep.subr.bf16.mxu0 0
      %698 = vmatpush1.bf16.xpose.msra.mxu0 0
      %699 = vmatprep.subr.bf16.mxu0 0
      %700 = vmatpush1.bf16.xpose.msra.mxu0 0
      %701 = vmatprep.subr.bf16.mxu0 0
      %702 = vmatpush1.bf16.xpose.msra.mxu0 0
      %703 = vmatprep.subr.bf16.mxu0 0
      %704 = vmatpush1.bf16.xpose.msra.mxu0 0
      %705 = vmatprep.subr.bf16.mxu0 0
      %706 = vmatpush1.bf16.xpose.msra.mxu0 0
      %707 = vmatprep.subr.bf16.mxu0 0
      %708 = vmatpush1.bf16.xpose.msra.mxu0 0
      %709 = vmatprep.subr.bf16.mxu0 0
      %710 = vmatpush1.bf16.xpose.msra.mxu0 0
      %711 = vmatprep.subr.bf16.mxu0 0
      %712 = vmatpush1.bf16.xpose.msra.mxu0 0
      %713 = vmatprep.subr.bf16.mxu0 0
      %714 = vmatpush1.bf16.xpose.msra.mxu0 0
      %715 = vmatprep.subr.bf16.mxu0 0
      %716 = vmatpush1.bf16.xpose.msra.mxu0 0
      %717 = vmatprep.subr.bf16.mxu0 0
      %718 = vmatpush1.bf16.xpose.msra.mxu0 0
      %719 = vmatprep.mubr.bf16.mxu0 0
      %720 = vmatmul.mubr.bf16.gmra.mrb[0].mxu0 %v682
      %v721 = vpop.f32.mrb[0].mxu0
      %v722 = vadd.f32 0.0, %v721
      %v723 = vpop.f32.mrb[0].mxu0
      %v724 = vpop.f32.mrb[0].mxu0
      %v725 = vadd.f32 0.0, %v724
      %v726 = vpop.f32.mrb[0].mxu0
      %727 = vdwg.mxu0
      %v728 = vmul.f32 %v722, 0.35355338
      %v729 = vmul.f32 %v725, 0.35355338
      %v731 = vlaneseq
      %v732 = vshrl.u32 %v731, 7
      %v733 = vsub.s32 0, %v732
      %v734 = vrot.slane %v478, %v733
      %v736 = vadd.f32 %v728, %v734
      %v737 = vadd.f32 %v729, %v734
      %v738 = vsel %vm680, %v736, -inf
      %739 = vmax.xlane.f32.xlu0 %v738
      %v740 = vpop.xlane.xlu0 %739
      %v741 = vsel %vm680, %v737, -inf
      %742 = vmax.xlane.f32.xlu0 %v741
      %v743 = vpop.xlane.xlu0 %742
      %v744 = vsub.f32 %v736, %v740
      %v745 = vsub.f32 %v737, %v743
      %v746 = vmul.f32 %v744, 1.442695
      %v747 = vpow.pop %v746
      %v748 = vmul.f32 %v745, 1.442695
      %v749 = vpow.pop %v748
      %v750 = vsel %vm680, %v747, 0.0
      %751 = vadd.xlane.f32.xlu0 %v750
      %v752 = vpop.xlane.xlu0 %751
      %v753 = vsel %vm680, %v749, 0.0
      %754 = vadd.xlane.f32.xlu0 %v753
      %v755 = vpop.xlane.xlu0 %754
      %v756 = vrcp.pop %v752
      %v757 = vrcp.pop %v755
      %v758 = vmul.f32 %v747, %v756
      %v759 = vmul.f32 %v749, %v757
      %v760 = vpack.c.bf16 %v759, %v758
      %v761 = vpack.c.bf16 %v673, %v673
      %v763 = vsel %vm680, %v760, 0
      %vm765 = vcmask 1043456
      %v767 = vsel %vm765, %v761, 0
      %769 = vmatprep.subr.bf16.mxu0 0
      %770 = vmatpush1.bf16.msra.mxu0 %v767
      %771 = vmatprep.subr.bf16.mxu0 0
      %772 = vmatpush1.bf16.msra.mxu0 0
      %773 = vmatprep.subr.bf16.mxu0 0
      %774 = vmatpush1.bf16.msra.mxu0 0
      %775 = vmatprep.subr.bf16.mxu0 0
      %776 = vmatpush1.bf16.msra.mxu0 0
      %777 = vmatprep.subr.bf16.mxu0 0
      %778 = vmatpush1.bf16.msra.mxu0 0
      %779 = vmatprep.subr.bf16.mxu0 0
      %780 = vmatpush1.bf16.msra.mxu0 0
      %781 = vmatprep.subr.bf16.mxu0 0
      %782 = vmatpush1.bf16.msra.mxu0 0
      %783 = vmatprep.subr.bf16.mxu0 0
      %784 = vmatpush1.bf16.msra.mxu0 0
      %785 = vmatprep.subr.bf16.mxu0 0
      %786 = vmatpush1.bf16.msra.mxu0 0
      %787 = vmatprep.subr.bf16.mxu0 0
      %788 = vmatpush1.bf16.msra.mxu0 0
      %789 = vmatprep.subr.bf16.mxu0 0
      %790 = vmatpush1.bf16.msra.mxu0 0
      %791 = vmatprep.subr.bf16.mxu0 0
      %792 = vmatpush1.bf16.msra.mxu0 0
      %793 = vmatprep.subr.bf16.mxu0 0
      %794 = vmatpush1.bf16.msra.mxu0 0
      %795 = vmatprep.subr.bf16.mxu0 0
      %796 = vmatpush1.bf16.msra.mxu0 0
      %797 = vmatprep.subr.bf16.mxu0 0
      %798 = vmatpush1.bf16.msra.mxu0 0
      %799 = vmatprep.subr.bf16.mxu0 0
      %800 = vmatpush1.bf16.msra.mxu0 0
      %801 = vmatprep.mubr.bf16.mxu0 0
      %802 = vmatmul.mubr.bf16.gmra.mrb[0].mxu0 %v763
      %v803 = vpop.f32.mrb[0].mxu0
      %v804 = vadd.f32 0.0, %v803
      %v805 = vpop.f32.mrb[0].mxu0
      %v806 = vpop.f32.mrb[0].mxu0
      %v807 = vadd.f32 0.0, %v806
      %v808 = vpop.f32.mrb[0].mxu0
      %809 = vdwg.mxu0
      %v810 = vpack.c.bf16 %v807, %v804
      %v811 = vld [vmem:[%s9] sm:$0xf]
      %s812 = scalar_lea.vmem %s3, 16
      %v813 = vld [vmem:[%s812] sm:$0xf]
      %v814 = vld [vmem:[%s812 + $0x4] sm:$0xf]
      %v815 = vld [vmem:[%s812 + $0x8] sm:$0xf]
      %v816 = vld [vmem:[%s812 + $0xc] sm:$0xf]
      %s817 = scalar_lea.vmem %s6, 1
      %v818 = vld [vmem:[%s817] sm:$0x1]
      %v820 = vlaneseq
      %v821 = vshrl.u32 %v820, 7
      %v822 = vsub.s32 0, %v821
      %v823 = vrot.slane %v818, %v822
      %v829 = vunpack.c.l.b16 %v813
      %v830 = vunpack.c.l.b16 %v814
      %v831 = vunpack.c.l.b16 %v815
      %v832 = vunpack.c.l.b16 %v816
      %v833 = vpack.c.b16 %v830, %v829
      %v834 = vpack.c.b16 %v832, %v831
      %837 = vmatprep.subr.bf16.mxu0 0
      %838 = vmatpush1.bf16.msra.mxu0 %v833
      %839 = vmatprep.subr.bf16.mxu0 0
      %840 = vmatpush1.bf16.msra.mxu0 %v834
      %841 = vmatprep.subr.bf16.mxu0 0
      %842 = vmatpush1.bf16.msra.mxu0 0
      %843 = vmatprep.subr.bf16.mxu0 0
      %844 = vmatpush1.bf16.msra.mxu0 0
      %845 = vmatprep.subr.bf16.mxu0 0
      %846 = vmatpush1.bf16.msra.mxu0 0
      %847 = vmatprep.subr.bf16.mxu0 0
      %848 = vmatpush1.bf16.msra.mxu0 0
      %849 = vmatprep.subr.bf16.mxu0 0
      %850 = vmatpush1.bf16.msra.mxu0 0
      %851 = vmatprep.subr.bf16.mxu0 0
      %852 = vmatpush1.bf16.msra.mxu0 0
      %853 = vmatprep.subr.bf16.mxu0 0
      %854 = vmatpush1.bf16.msra.mxu0 0
      %855 = vmatprep.subr.bf16.mxu0 0
      %856 = vmatpush1.bf16.msra.mxu0 0
      %857 = vmatprep.subr.bf16.mxu0 0
      %858 = vmatpush1.bf16.msra.mxu0 0
      %859 = vmatprep.subr.bf16.mxu0 0
      %860 = vmatpush1.bf16.msra.mxu0 0
      %861 = vmatprep.subr.bf16.mxu0 0
      %862 = vmatpush1.bf16.msra.mxu0 0
      %863 = vmatprep.subr.bf16.mxu0 0
      %864 = vmatpush1.bf16.msra.mxu0 0
      %865 = vmatprep.subr.bf16.mxu0 0
      %866 = vmatpush1.bf16.msra.mxu0 0
      %867 = vmatprep.subr.bf16.mxu0 0
      %868 = vmatpush1.bf16.msra.mxu0 0
      %869 = vmatprep.mubr.bf16.mxu0 0
      %870 = vmatmul.mubr.bf16.gmra.mrb[0].mxu0 %v506
      %v871 = vpop.f32.mrb[0].mxu0
      %v872 = vadd.f32 %v823, %v871
      %v873 = vpop.f32.mrb[0].mxu0
      %v874 = vpop.f32.mrb[0].mxu0
      %v875 = vadd.f32 %v823, %v874
      %v876 = vpop.f32.mrb[0].mxu0
      %877 = vdwg.mxu0
      %s878 = scalar_lea.vmem %s4, 16
      %v879 = vld [vmem:[%s878] sm:$0xf]
      %v880 = vld [vmem:[%s878 + $0x4] sm:$0xf]
      %v881 = vld [vmem:[%s878 + $0x8] sm:$0xf]
      %v882 = vld [vmem:[%s878 + $0xc] sm:$0xf]
      %s883 = scalar_lea.vmem %s7, 1
      %v884 = vld [vmem:[%s883] sm:$0x1]
      %v886 = vlaneseq
      %v887 = vshrl.u32 %v886, 7
      %v888 = vsub.s32 0, %v887
      %v889 = vrot.slane %v884, %v888
      %v895 = vunpack.c.l.b16 %v879
      %v896 = vunpack.c.l.b16 %v880
      %v897 = vunpack.c.l.b16 %v881
      %v898 = vunpack.c.l.b16 %v882
      %v899 = vpack.c.b16 %v896, %v895
      %v900 = vpack.c.b16 %v898, %v897
      %903 = vmatprep.subr.bf16.mxu0 0
      %904 = vmatpush1.bf16.msra.mxu0 %v899
      %905 = vmatprep.subr.bf16.mxu0 0
      %906 = vmatpush1.bf16.msra.mxu0 %v900
      %907 = vmatprep.subr.bf16.mxu0 0
      %908 = vmatpush1.bf16.msra.mxu0 0
      %909 = vmatprep.subr.bf16.mxu0 0
      %910 = vmatpush1.bf16.msra.mxu0 0
      %911 = vmatprep.subr.bf16.mxu0 0
      %912 = vmatpush1.bf16.msra.mxu0 0
      %913 = vmatprep.subr.bf16.mxu0 0
      %914 = vmatpush1.bf16.msra.mxu0 0
      %915 = vmatprep.subr.bf16.mxu0 0
      %916 = vmatpush1.bf16.msra.mxu0 0
      %917 = vmatprep.subr.bf16.mxu0 0
      %918 = vmatpush1.bf16.msra.mxu0 0
      %919 = vmatprep.subr.bf16.mxu0 0
      %920 = vmatpush1.bf16.msra.mxu0 0
      %921 = vmatprep.subr.bf16.mxu0 0
      %922 = vmatpush1.bf16.msra.mxu0 0
      %923 = vmatprep.subr.bf16.mxu0 0
      %924 = vmatpush1.bf16.msra.mxu0 0
      %925 = vmatprep.subr.bf16.mxu0 0
      %926 = vmatpush1.bf16.msra.mxu0 0
      %927 = vmatprep.subr.bf16.mxu0 0
      %928 = vmatpush1.bf16.msra.mxu0 0
      %929 = vmatprep.subr.bf16.mxu0 0
      %930 = vmatpush1.bf16.msra.mxu0 0
      %931 = vmatprep.subr.bf16.mxu0 0
      %932 = vmatpush1.bf16.msra.mxu0 0
      %933 = vmatprep.subr.bf16.mxu0 0
      %934 = vmatpush1.bf16.msra.mxu0 0
      %935 = vmatprep.mubr.bf16.mxu0 0
      %936 = vmatmul.mubr.bf16.gmra.mrb[0].mxu0 %v573
      %v937 = vpop.f32.mrb[0].mxu0
      %v938 = vadd.f32 %v889, %v937
      %v939 = vpop.f32.mrb[0].mxu0
      %v940 = vpop.f32.mrb[0].mxu0
      %v941 = vpop.f32.mrb[0].mxu0
      %942 = vdwg.mxu0
      %s943 = scalar_lea.vmem %s5, 16
      %v944 = vld [vmem:[%s943] sm:$0xf]
      %v945 = vld [vmem:[%s943 + $0x4] sm:$0xf]
      %v946 = vld [vmem:[%s943 + $0x8] sm:$0xf]
      %v947 = vld [vmem:[%s943 + $0xc] sm:$0xf]
      %s948 = scalar_lea.vmem %s8, 1
      %v949 = vld [vmem:[%s948] sm:$0x1]
      %v951 = vlaneseq
      %v952 = vshrl.u32 %v951, 7
      %v953 = vsub.s32 0, %v952
      %v954 = vrot.slane %v949, %v953
      %v960 = vunpack.c.l.b16 %v944
      %v961 = vunpack.c.l.b16 %v945
      %v962 = vunpack.c.l.b16 %v946
      %v963 = vunpack.c.l.b16 %v947
      %v964 = vpack.c.b16 %v961, %v960
      %v965 = vpack.c.b16 %v963, %v962
      %968 = vmatprep.subr.bf16.mxu0 0
      %969 = vmatpush1.bf16.msra.mxu0 %v964
      %970 = vmatprep.subr.bf16.mxu0 0
      %971 = vmatpush1.bf16.msra.mxu0 %v965
      %972 = vmatprep.subr.bf16.mxu0 0
      %973 = vmatpush1.bf16.msra.mxu0 0
      %974 = vmatprep.subr.bf16.mxu0 0
      %975 = vmatpush1.bf16.msra.mxu0 0
      %976 = vmatprep.subr.bf16.mxu0 0
      %977 = vmatpush1.bf16.msra.mxu0 0
      %978 = vmatprep.subr.bf16.mxu0 0
      %979 = vmatpush1.bf16.msra.mxu0 0
      %980 = vmatprep.subr.bf16.mxu0 0
      %981 = vmatpush1.bf16.msra.mxu0 0
      %982 = vmatprep.subr.bf16.mxu0 0
      %983 = vmatpush1.bf16.msra.mxu0 0
      %984 = vmatprep.subr.bf16.mxu0 0
      %985 = vmatpush1.bf16.msra.mxu0 0
      %986 = vmatprep.subr.bf16.mxu0 0
      %987 = vmatpush1.bf16.msra.mxu0 0
      %988 = vmatprep.subr.bf16.mxu0 0
      %989 = vmatpush1.bf16.msra.mxu0 0
      %990 = vmatprep.subr.bf16.mxu0 0
      %991 = vmatpush1.bf16.msra.mxu0 0
      %992 = vmatprep.subr.bf16.mxu0 0
      %993 = vmatpush1.bf16.msra.mxu0 0
      %994 = vmatprep.subr.bf16.mxu0 0
      %995 = vmatpush1.bf16.msra.mxu0 0
      %996 = vmatprep.subr.bf16.mxu0 0
      %997 = vmatpush1.bf16.msra.mxu0 0
      %998 = vmatprep.subr.bf16.mxu0 0
      %999 = vmatpush1.bf16.msra.mxu0 0
      %1000 = vmatprep.mubr.bf16.mxu0 0
      %1001 = vmatmul.mubr.bf16.gmra.mrb[0].mxu0 %v573
      %v1002 = vpop.f32.mrb[0].mxu0
      %v1003 = vadd.f32 %v954, %v1002
      %v1004 = vpop.f32.mrb[0].mxu0
      %v1005 = vpop.f32.mrb[0].mxu0
      %v1006 = vpop.f32.mrb[0].mxu0
      %1007 = vdwg.mxu0
      %v1008 = vpack.c.bf16 %v875, %v872
      %v1009 = vpack.c.bf16 %v938, %v938
      %v1011 = vsel %vm680, %v1008, 0
      %v1014 = vsel %vm680, %v1009, 0
      %1016 = vmatprep.subr.bf16.mxu0 0
      %1017 = vmatpush1.bf16.xpose.msra.mxu0 %v1014
      %1018 = vmatprep.subr.bf16.mxu0 0
      %1019 = vmatpush1.bf16.xpose.msra.mxu0 0
      %1020 = vmatprep.subr.bf16.mxu0 0
      %1021 = vmatpush1.bf16.xpose.msra.mxu0 0
      %1022 = vmatprep.subr.bf16.mxu0 0
      %1023 = vmatpush1.bf16.xpose.msra.mxu0 0
      %1024 = vmatprep.subr.bf16.mxu0 0
      %1025 = vmatpush1.bf16.xpose.msra.mxu0 0
      %1026 = vmatprep.subr.bf16.mxu0 0
      %1027 = vmatpush1.bf16.xpose.msra.mxu0 0
      %1028 = vmatprep.subr.bf16.mxu0 0
      %1029 = vmatpush1.bf16.xpose.msra.mxu0 0
      %1030 = vmatprep.subr.bf16.mxu0 0
      %1031 = vmatpush1.bf16.xpose.msra.mxu0 0
      %1032 = vmatprep.subr.bf16.mxu0 0
      %1033 = vmatpush1.bf16.xpose.msra.mxu0 0
      %1034 = vmatprep.subr.bf16.mxu0 0
      %1035 = vmatpush1.bf16.xpose.msra.mxu0 0
      %1036 = vmatprep.subr.bf16.mxu0 0
      %1037 = vmatpush1.bf16.xpose.msra.mxu0 0
      %1038 = vmatprep.subr.bf16.mxu0 0
      %1039 = vmatpush1.bf16.xpose.msra.mxu0 0
      %1040 = vmatprep.subr.bf16.mxu0 0
      %1041 = vmatpush1.bf16.xpose.msra.mxu0 0
      %1042 = vmatprep.subr.bf16.mxu0 0
      %1043 = vmatpush1.bf16.xpose.msra.mxu0 0
      %1044 = vmatprep.subr.bf16.mxu0 0
      %1045 = vmatpush1.bf16.xpose.msra.mxu0 0
      %1046 = vmatprep.subr.bf16.mxu0 0
      %1047 = vmatpush1.bf16.xpose.msra.mxu0 0
      %1048 = vmatprep.mubr.bf16.mxu0 0
      %1049 = vmatmul.mubr.bf16.gmra.mrb[0].mxu0 %v1011
      %v1050 = vpop.f32.mrb[0].mxu0
      %v1051 = vadd.f32 0.0, %v1050
      %v1052 = vpop.f32.mrb[0].mxu0
      %v1053 = vpop.f32.mrb[0].mxu0
      %v1054 = vadd.f32 0.0, %v1053
      %v1055 = vpop.f32.mrb[0].mxu0
      %1056 = vdwg.mxu0
      %v1057 = vmul.f32 %v1051, 0.35355338
      %v1058 = vmul.f32 %v1054, 0.35355338
      %v1059 = vadd.f32 %v1057, %v734
      %v1060 = vadd.f32 %v1058, %v734
      %v1061 = vsel %vm680, %v1059, -inf
      %1062 = vmax.xlane.f32.xlu0 %v1061
      %v1063 = vpop.xlane.xlu0 %1062
      %v1064 = vsel %vm680, %v1060, -inf
      %1065 = vmax.xlane.f32.xlu0 %v1064
      %v1066 = vpop.xlane.xlu0 %1065
      %v1067 = vsub.f32 %v1059, %v1063
      %v1068 = vsub.f32 %v1060, %v1066
      %v1069 = vmul.f32 %v1067, 1.442695
      %v1070 = vpow.pop %v1069
      %v1071 = vmul.f32 %v1068, 1.442695
      %v1072 = vpow.pop %v1071
      %v1073 = vsel %vm680, %v1070, 0.0
      %1074 = vadd.xlane.f32.xlu0 %v1073
      %v1075 = vpop.xlane.xlu0 %1074
      %v1076 = vsel %vm680, %v1072, 0.0
      %1077 = vadd.xlane.f32.xlu0 %v1076
      %v1078 = vpop.xlane.xlu0 %1077
      %v1079 = vrcp.pop %v1075
      %v1080 = vrcp.pop %v1078
      %v1081 = vmul.f32 %v1070, %v1079
      %v1082 = vmul.f32 %v1072, %v1080
      %v1083 = vpack.c.bf16 %v1082, %v1081
      %v1084 = vpack.c.bf16 %v1003, %v1003
      %v1086 = vsel %vm680, %v1083, 0
      %v1089 = vsel %vm765, %v1084, 0
      %1091 = vmatprep.subr.bf16.mxu0 0
      %1092 = vmatpush1.bf16.msra.mxu0 %v1089
      %1093 = vmatprep.subr.bf16.mxu0 0
      %1094 = vmatpush1.bf16.msra.mxu0 0
      %1095 = vmatprep.subr.bf16.mxu0 0
      %1096 = vmatpush1.bf16.msra.mxu0 0
      %1097 = vmatprep.subr.bf16.mxu0 0
      %1098 = vmatpush1.bf16.msra.mxu0 0
      %1099 = vmatprep.subr.bf16.mxu0 0
      %1100 = vmatpush1.bf16.msra.mxu0 0
      %1101 = vmatprep.subr.bf16.mxu0 0
      %1102 = vmatpush1.bf16.msra.mxu0 0
      %1103 = vmatprep.subr.bf16.mxu0 0
      %1104 = vmatpush1.bf16.msra.mxu0 0
      %1105 = vmatprep.subr.bf16.mxu0 0
      %1106 = vmatpush1.bf16.msra.mxu0 0
      %1107 = vmatprep.subr.bf16.mxu0 0
      %1108 = vmatpush1.bf16.msra.mxu0 0
      %1109 = vmatprep.subr.bf16.mxu0 0
      %1110 = vmatpush1.bf16.msra.mxu0 0
      %1111 = vmatprep.subr.bf16.mxu0 0
      %1112 = vmatpush1.bf16.msra.mxu0 0
      %1113 = vmatprep.subr.bf16.mxu0 0
      %1114 = vmatpush1.bf16.msra.mxu0 0
      %1115 = vmatprep.subr.bf16.mxu0 0
      %1116 = vmatpush1.bf16.msra.mxu0 0
      %1117 = vmatprep.subr.bf16.mxu0 0
      %1118 = vmatpush1.bf16.msra.mxu0 0
      %1119 = vmatprep.subr.bf16.mxu0 0
      %1120 = vmatpush1.bf16.msra.mxu0 0
      %1121 = vmatprep.subr.bf16.mxu0 0
      %1122 = vmatpush1.bf16.msra.mxu0 0
      %1123 = vmatprep.mubr.bf16.mxu0 0
      %1124 = vmatmul.mubr.bf16.gmra.mrb[0].mxu0 %v1086
      %v1125 = vpop.f32.mrb[0].mxu0
      %v1126 = vadd.f32 0.0, %v1125
      %v1127 = vpop.f32.mrb[0].mxu0
      %v1128 = vpop.f32.mrb[0].mxu0
      %v1129 = vadd.f32 0.0, %v1128
      %v1130 = vpop.f32.mrb[0].mxu0
      %1131 = vdwg.mxu0
      %v1132 = vpack.c.bf16 %v1129, %v1126
      %s1133 = scalar_lea.vmem %s9, 4
      %v1134 = vld [vmem:[%s1133] sm:$0xf]
      %v1136 = vsel %vm680, %v1132, 0
      %v1139 = vsel %vm765, %v1134, 0
      %1141 = vmatprep.subr.bf16.mxu0 0
      %1142 = vmatpush1.bf16.msra.mxu0 %v1139
      %1143 = vmatprep.subr.bf16.mxu0 0
      %1144 = vmatpush1.bf16.msra.mxu0 0
      %1145 = vmatprep.subr.bf16.mxu0 0
      %1146 = vmatpush1.bf16.msra.mxu0 0
      %1147 = vmatprep.subr.bf16.mxu0 0
      %1148 = vmatpush1.bf16.msra.mxu0 0
      %1149 = vmatprep.subr.bf16.mxu0 0
      %1150 = vmatpush1.bf16.msra.mxu0 0
      %1151 = vmatprep.subr.bf16.mxu0 0
      %1152 = vmatpush1.bf16.msra.mxu0 0
      %1153 = vmatprep.subr.bf16.mxu0 0
      %1154 = vmatpush1.bf16.msra.mxu0 0
      %1155 = vmatprep.subr.bf16.mxu0 0
      %1156 = vmatpush1.bf16.msra.mxu0 0
      %1157 = vmatprep.subr.bf16.mxu0 0
      %1158 = vmatpush1.bf16.msra.mxu0 0
      %1159 = vmatprep.subr.bf16.mxu0 0
      %1160 = vmatpush1.bf16.msra.mxu0 0
      %1161 = vmatprep.subr.bf16.mxu0 0
      %1162 = vmatpush1.bf16.msra.mxu0 0
      %1163 = vmatprep.subr.bf16.mxu0 0
      %1164 = vmatpush1.bf16.msra.mxu0 0
      %1165 = vmatprep.subr.bf16.mxu0 0
      %1166 = vmatpush1.bf16.msra.mxu0 0
      %1167 = vmatprep.subr.bf16.mxu0 0
      %1168 = vmatpush1.bf16.msra.mxu0 0
      %1169 = vmatprep.subr.bf16.mxu0 0
      %1170 = vmatpush1.bf16.msra.mxu0 0
      %1171 = vmatprep.subr.bf16.mxu0 0
      %1172 = vmatpush1.bf16.msra.mxu0 0
      %1173 = vmatprep.mubr.bf16.mxu0 0
      %1174 = vmatmul.mubr.bf16.gmra.mrb[0].mxu0 %v1136
      %v1175 = vpop.f32.mrb[0].mxu0
      %v1176 = vadd.f32 0.0, %v1175
      %v1177 = vpop.f32.mrb[0].mxu0
      %v1178 = vpop.f32.mrb[0].mxu0
      %v1179 = vadd.f32 0.0, %v1178
      %v1180 = vpop.f32.mrb[0].mxu0
      %1181 = vdwg.mxu0
      %v1183 = vsel %vm680, %v810, 0
      %v1186 = vsel %vm765, %v811, 0
      %1188 = vmatprep.subr.bf16.mxu0 0
      %1189 = vmatpush1.bf16.msra.mxu0 %v1186
      %1190 = vmatprep.subr.bf16.mxu0 0
      %1191 = vmatpush1.bf16.msra.mxu0 0
      %1192 = vmatprep.subr.bf16.mxu0 0
      %1193 = vmatpush1.bf16.msra.mxu0 0
      %1194 = vmatprep.subr.bf16.mxu0 0
      %1195 = vmatpush1.bf16.msra.mxu0 0
      %1196 = vmatprep.subr.bf16.mxu0 0
      %1197 = vmatpush1.bf16.msra.mxu0 0
      %1198 = vmatprep.subr.bf16.mxu0 0
      %1199 = vmatpush1.bf16.msra.mxu0 0
      %1200 = vmatprep.subr.bf16.mxu0 0
      %1201 = vmatpush1.bf16.msra.mxu0 0
      %1202 = vmatprep.subr.bf16.mxu0 0
      %1203 = vmatpush1.bf16.msra.mxu0 0
      %1204 = vmatprep.subr.bf16.mxu0 0
      %1205 = vmatpush1.bf16.msra.mxu0 0
      %1206 = vmatprep.subr.bf16.mxu0 0
      %1207 = vmatpush1.bf16.msra.mxu0 0
      %1208 = vmatprep.subr.bf16.mxu0 0
      %1209 = vmatpush1.bf16.msra.mxu0 0
      %1210 = vmatprep.subr.bf16.mxu0 0
      %1211 = vmatpush1.bf16.msra.mxu0 0
      %1212 = vmatprep.subr.bf16.mxu0 0
      %1213 = vmatpush1.bf16.msra.mxu0 0
      %1214 = vmatprep.subr.bf16.mxu0 0
      %1215 = vmatpush1.bf16.msra.mxu0 0
      %1216 = vmatprep.subr.bf16.mxu0 0
      %1217 = vmatpush1.bf16.msra.mxu0 0
      %1218 = vmatprep.subr.bf16.mxu0 0
      %1219 = vmatpush1.bf16.msra.mxu0 0
      %1220 = vmatprep.mubr.bf16.mxu0 0
      %1221 = vmatmul.mubr.bf16.gmra.mrb[0].mxu0 %v1183
      %v1222 = vpop.f32.mrb[0].mxu0
      %v1223 = vadd.f32 %v1176, %v1222
      %v1224 = vpop.f32.mrb[0].mxu0
      %v1225 = vpop.f32.mrb[0].mxu0
      %v1226 = vadd.f32 %v1179, %v1225
      %v1227 = vpop.f32.mrb[0].mxu0
      %1228 = vdwg.mxu0
      %s1229 = scalar_lea.vmem %s3, 32
      %v1230 = vld [vmem:[%s1229] sm:$0xf]
      %v1231 = vld [vmem:[%s1229 + $0x4] sm:$0xf]
      %v1232 = vld [vmem:[%s1229 + $0x8] sm:$0xf]
      %v1233 = vld [vmem:[%s1229 + $0xc] sm:$0xf]
      %s1234 = scalar_lea.vmem %s6, 2
      %v1235 = vld [vmem:[%s1234] sm:$0x1]
      %v1237 = vlaneseq
      %v1238 = vshrl.u32 %v1237, 7
      %v1239 = vsub.s32 0, %v1238
      %v1240 = vrot.slane %v1235, %v1239
      %v1246 = vunpack.c.l.b16 %v1230
      %v1247 = vunpack.c.l.b16 %v1231
      %v1248 = vunpack.c.l.b16 %v1232
      %v1249 = vunpack.c.l.b16 %v1233
      %v1250 = vpack.c.b16 %v1247, %v1246
      %v1251 = vpack.c.b16 %v1249, %v1248
      %1254 = vmatprep.subr.bf16.mxu0 0
      %1255 = vmatpush1.bf16.msra.mxu0 %v1250
      %1256 = vmatprep.subr.bf16.mxu0 0
      %1257 = vmatpush1.bf16.msra.mxu0 %v1251
      %1258 = vmatprep.subr.bf16.mxu0 0
      %1259 = vmatpush1.bf16.msra.mxu0 0
      %1260 = vmatprep.subr.bf16.mxu0 0
      %1261 = vmatpush1.bf16.msra.mxu0 0
      %1262 = vmatprep.subr.bf16.mxu0 0
      %1263 = vmatpush1.bf16.msra.mxu0 0
      %1264 = vmatprep.subr.bf16.mxu0 0
      %1265 = vmatpush1.bf16.msra.mxu0 0
      %1266 = vmatprep.subr.bf16.mxu0 0
      %1267 = vmatpush1.bf16.msra.mxu0 0
      %1268 = vmatprep.subr.bf16.mxu0 0
      %1269 = vmatpush1.bf16.msra.mxu0 0
      %1270 = vmatprep.subr.bf16.mxu0 0
      %1271 = vmatpush1.bf16.msra.mxu0 0
      %1272 = vmatprep.subr.bf16.mxu0 0
      %1273 = vmatpush1.bf16.msra.mxu0 0
      %1274 = vmatprep.subr.bf16.mxu0 0
      %1275 = vmatpush1.bf16.msra.mxu0 0
      %1276 = vmatprep.subr.bf16.mxu0 0
      %1277 = vmatpush1.bf16.msra.mxu0 0
      %1278 = vmatprep.subr.bf16.mxu0 0
      %1279 = vmatpush1.bf16.msra.mxu0 0
      %1280 = vmatprep.subr.bf16.mxu0 0
      %1281 = vmatpush1.bf16.msra.mxu0 0
      %1282 = vmatprep.subr.bf16.mxu0 0
      %1283 = vmatpush1.bf16.msra.mxu0 0
      %1284 = vmatprep.subr.bf16.mxu0 0
      %1285 = vmatpush1.bf16.msra.mxu0 0
      %1286 = vmatprep.mubr.bf16.mxu0 0
      %1287 = vmatmul.mubr.bf16.gmra.mrb[0].mxu0 %v506
      %v1288 = vpop.f32.mrb[0].mxu0
      %v1289 = vadd.f32 %v1240, %v1288
      %v1290 = vpop.f32.mrb[0].mxu0
      %v1291 = vpop.f32.mrb[0].mxu0
      %v1292 = vadd.f32 %v1240, %v1291
      %v1293 = vpop.f32.mrb[0].mxu0
      %1294 = vdwg.mxu0
      %s1295 = scalar_lea.vmem %s4, 32
      %v1296 = vld [vmem:[%s1295] sm:$0xf]
      %v1297 = vld [vmem:[%s1295 + $0x4] sm:$0xf]
      %v1298 = vld [vmem:[%s1295 + $0x8] sm:$0xf]
      %v1299 = vld [vmem:[%s1295 + $0xc] sm:$0xf]
      %s1300 = scalar_lea.vmem %s7, 2
      %v1301 = vld [vmem:[%s1300] sm:$0x1]
      %v1303 = vlaneseq
      %v1304 = vshrl.u32 %v1303, 7
      %v1305 = vsub.s32 0, %v1304
      %v1306 = vrot.slane %v1301, %v1305
      %v1312 = vunpack.c.l.b16 %v1296
      %v1313 = vunpack.c.l.b16 %v1297
      %v1314 = vunpack.c.l.b16 %v1298
      %v1315 = vunpack.c.l.b16 %v1299
      %v1316 = vpack.c.b16 %v1313, %v1312
      %v1317 = vpack.c.b16 %v1315, %v1314
      %1320 = vmatprep.subr.bf16.mxu0 0
      %1321 = vmatpush1.bf16.msra.mxu0 %v1316
      %1322 = vmatprep.subr.bf16.mxu0 0
      %1323 = vmatpush1.bf16.msra.mxu0 %v1317
      %1324 = vmatprep.subr.bf16.mxu0 0
      %1325 = vmatpush1.bf16.msra.mxu0 0
      %1326 = vmatprep.subr.bf16.mxu0 0
      %1327 = vmatpush1.bf16.msra.mxu0 0
      %1328 = vmatprep.subr.bf16.mxu0 0
      %1329 = vmatpush1.bf16.msra.mxu0 0
      %1330 = vmatprep.subr.bf16.mxu0 0
      %1331 = vmatpush1.bf16.msra.mxu0 0
      %1332 = vmatprep.subr.bf16.mxu0 0
      %1333 = vmatpush1.bf16.msra.mxu0 0
      %1334 = vmatprep.subr.bf16.mxu0 0
      %1335 = vmatpush1.bf16.msra.mxu0 0
      %1336 = vmatprep.subr.bf16.mxu0 0
      %1337 = vmatpush1.bf16.msra.mxu0 0
      %1338 = vmatprep.subr.bf16.mxu0 0
      %1339 = vmatpush1.bf16.msra.mxu0 0
      %1340 = vmatprep.subr.bf16.mxu0 0
      %1341 = vmatpush1.bf16.msra.mxu0 0
      %1342 = vmatprep.subr.bf16.mxu0 0
      %1343 = vmatpush1.bf16.msra.mxu0 0
      %1344 = vmatprep.subr.bf16.mxu0 0
      %1345 = vmatpush1.bf16.msra.mxu0 0
      %1346 = vmatprep.subr.bf16.mxu0 0
      %1347 = vmatpush1.bf16.msra.mxu0 0
      %1348 = vmatprep.subr.bf16.mxu0 0
      %1349 = vmatpush1.bf16.msra.mxu0 0
      %1350 = vmatprep.subr.bf16.mxu0 0
      %1351 = vmatpush1.bf16.msra.mxu0 0
      %1352 = vmatprep.mubr.bf16.mxu0 0
      %1353 = vmatmul.mubr.bf16.gmra.mrb[0].mxu0 %v573
      %v1354 = vpop.f32.mrb[0].mxu0
      %v1355 = vadd.f32 %v1306, %v1354
      %v1356 = vpop.f32.mrb[0].mxu0
      %v1357 = vpop.f32.mrb[0].mxu0
      %v1358 = vpop.f32.mrb[0].mxu0
      %1359 = vdwg.mxu0
      %s1360 = scalar_lea.vmem %s5, 32
      %v1361 = vld [vmem:[%s1360] sm:$0xf]
      %v1362 = vld [vmem:[%s1360 + $0x4] sm:$0xf]
      %v1363 = vld [vmem:[%s1360 + $0x8] sm:$0xf]
      %v1364 = vld [vmem:[%s1360 + $0xc] sm:$0xf]
      %s1365 = scalar_lea.vmem %s8, 2
      %v1366 = vld [vmem:[%s1365] sm:$0x1]
      %v1368 = vlaneseq
      %v1369 = vshrl.u32 %v1368, 7
      %v1370 = vsub.s32 0, %v1369
      %v1371 = vrot.slane %v1366, %v1370
      %v1377 = vunpack.c.l.b16 %v1361
      %v1378 = vunpack.c.l.b16 %v1362
      %v1379 = vunpack.c.l.b16 %v1363
      %v1380 = vunpack.c.l.b16 %v1364
      %v1381 = vpack.c.b16 %v1378, %v1377
      %v1382 = vpack.c.b16 %v1380, %v1379
      %1385 = vmatprep.subr.bf16.mxu0 0
      %1386 = vmatpush1.bf16.msra.mxu0 %v1381
      %1387 = vmatprep.subr.bf16.mxu0 0
      %1388 = vmatpush1.bf16.msra.mxu0 %v1382
      %1389 = vmatprep.subr.bf16.mxu0 0
      %1390 = vmatpush1.bf16.msra.mxu0 0
      %1391 = vmatprep.subr.bf16.mxu0 0
      %1392 = vmatpush1.bf16.msra.mxu0 0
      %1393 = vmatprep.subr.bf16.mxu0 0
      %1394 = vmatpush1.bf16.msra.mxu0 0
      %1395 = vmatprep.subr.bf16.mxu0 0
      %1396 = vmatpush1.bf16.msra.mxu0 0
      %1397 = vmatprep.subr.bf16.mxu0 0
      %1398 = vmatpush1.bf16.msra.mxu0 0
      %1399 = vmatprep.subr.bf16.mxu0 0
      %1400 = vmatpush1.bf16.msra.mxu0 0
      %1401 = vmatprep.subr.bf16.mxu0 0
      %1402 = vmatpush1.bf16.msra.mxu0 0
      %1403 = vmatprep.subr.bf16.mxu0 0
      %1404 = vmatpush1.bf16.msra.mxu0 0
      %1405 = vmatprep.subr.bf16.mxu0 0
      %1406 = vmatpush1.bf16.msra.mxu0 0
      %1407 = vmatprep.subr.bf16.mxu0 0
      %1408 = vmatpush1.bf16.msra.mxu0 0
      %1409 = vmatprep.subr.bf16.mxu0 0
      %1410 = vmatpush1.bf16.msra.mxu0 0
      %1411 = vmatprep.subr.bf16.mxu0 0
      %1412 = vmatpush1.bf16.msra.mxu0 0
      %1413 = vmatprep.subr.bf16.mxu0 0
      %1414 = vmatpush1.bf16.msra.mxu0 0
      %1415 = vmatprep.subr.bf16.mxu0 0
      %1416 = vmatpush1.bf16.msra.mxu0 0
      %1417 = vmatprep.mubr.bf16.mxu0 0
      %1418 = vmatmul.mubr.bf16.gmra.mrb[0].mxu0 %v573
      %v1419 = vpop.f32.mrb[0].mxu0
      %v1420 = vadd.f32 %v1371, %v1419
      %v1421 = vpop.f32.mrb[0].mxu0
      %v1422 = vpop.f32.mrb[0].mxu0
      %v1423 = vpop.f32.mrb[0].mxu0
      %1424 = vdwg.mxu0
      %v1425 = vpack.c.bf16 %v1292, %v1289
      %v1426 = vpack.c.bf16 %v1355, %v1355
      %v1428 = vsel %vm680, %v1425, 0
      %v1431 = vsel %vm680, %v1426, 0
      %1433 = vmatprep.subr.bf16.mxu0 0
      %1434 = vmatpush1.bf16.xpose.msra.mxu0 %v1431
      %1435 = vmatprep.subr.bf16.mxu0 0
      %1436 = vmatpush1.bf16.xpose.msra.mxu0 0
      %1437 = vmatprep.subr.bf16.mxu0 0
      %1438 = vmatpush1.bf16.xpose.msra.mxu0 0
      %1439 = vmatprep.subr.bf16.mxu0 0
      %1440 = vmatpush1.bf16.xpose.msra.mxu0 0
      %1441 = vmatprep.subr.bf16.mxu0 0
      %1442 = vmatpush1.bf16.xpose.msra.mxu0 0
      %1443 = vmatprep.subr.bf16.mxu0 0
      %1444 = vmatpush1.bf16.xpose.msra.mxu0 0
      %1445 = vmatprep.subr.bf16.mxu0 0
      %1446 = vmatpush1.bf16.xpose.msra.mxu0 0
      %1447 = vmatprep.subr.bf16.mxu0 0
      %1448 = vmatpush1.bf16.xpose.msra.mxu0 0
      %1449 = vmatprep.subr.bf16.mxu0 0
      %1450 = vmatpush1.bf16.xpose.msra.mxu0 0
      %1451 = vmatprep.subr.bf16.mxu0 0
      %1452 = vmatpush1.bf16.xpose.msra.mxu0 0
      %1453 = vmatprep.subr.bf16.mxu0 0
      %1454 = vmatpush1.bf16.xpose.msra.mxu0 0
      %1455 = vmatprep.subr.bf16.mxu0 0
      %1456 = vmatpush1.bf16.xpose.msra.mxu0 0
      %1457 = vmatprep.subr.bf16.mxu0 0
      %1458 = vmatpush1.bf16.xpose.msra.mxu0 0
      %1459 = vmatprep.subr.bf16.mxu0 0
      %1460 = vmatpush1.bf16.xpose.msra.mxu0 0
      %1461 = vmatprep.subr.bf16.mxu0 0
      %1462 = vmatpush1.bf16.xpose.msra.mxu0 0
      %1463 = vmatprep.subr.bf16.mxu0 0
      %1464 = vmatpush1.bf16.xpose.msra.mxu0 0
      %1465 = vmatprep.mubr.bf16.mxu0 0
      %1466 = vmatmul.mubr.bf16.gmra.mrb[0].mxu0 %v1428
      %v1467 = vpop.f32.mrb[0].mxu0
      %v1468 = vadd.f32 0.0, %v1467
      %v1469 = vpop.f32.mrb[0].mxu0
      %v1470 = vpop.f32.mrb[0].mxu0
      %v1471 = vadd.f32 0.0, %v1470
      %v1472 = vpop.f32.mrb[0].mxu0
      %1473 = vdwg.mxu0
      %v1474 = vmul.f32 %v1468, 0.35355338
      %v1475 = vmul.f32 %v1471, 0.35355338
      %v1476 = vadd.f32 %v1474, %v734
      %v1477 = vadd.f32 %v1475, %v734
      %v1478 = vsel %vm680, %v1476, -inf
      %1479 = vmax.xlane.f32.xlu0 %v1478
      %v1480 = vpop.xlane.xlu0 %1479
      %v1481 = vsel %vm680, %v1477, -inf
      %1482 = vmax.xlane.f32.xlu0 %v1481
      %v1483 = vpop.xlane.xlu0 %1482
      %v1484 = vsub.f32 %v1476, %v1480
      %v1485 = vsub.f32 %v1477, %v1483
      %v1486 = vmul.f32 %v1484, 1.442695
      %v1487 = vpow.pop %v1486
      %v1488 = vmul.f32 %v1485, 1.442695
      %v1489 = vpow.pop %v1488
      %v1490 = vsel %vm680, %v1487, 0.0
      %1491 = vadd.xlane.f32.xlu0 %v1490
      %v1492 = vpop.xlane.xlu0 %1491
      %v1493 = vsel %vm680, %v1489, 0.0
      %1494 = vadd.xlane.f32.xlu0 %v1493
      %v1495 = vpop.xlane.xlu0 %1494
      %v1496 = vrcp.pop %v1492
      %v1497 = vrcp.pop %v1495
      %v1498 = vmul.f32 %v1487, %v1496
      %v1499 = vmul.f32 %v1489, %v1497
      %v1500 = vpack.c.bf16 %v1499, %v1498
      %v1501 = vpack.c.bf16 %v1420, %v1420
      %v1503 = vsel %vm680, %v1500, 0
      %v1506 = vsel %vm765, %v1501, 0
      %1508 = vmatprep.subr.bf16.mxu0 0
      %1509 = vmatpush1.bf16.msra.mxu0 %v1506
      %1510 = vmatprep.subr.bf16.mxu0 0
      %1511 = vmatpush1.bf16.msra.mxu0 0
      %1512 = vmatprep.subr.bf16.mxu0 0
      %1513 = vmatpush1.bf16.msra.mxu0 0
      %1514 = vmatprep.subr.bf16.mxu0 0
      %1515 = vmatpush1.bf16.msra.mxu0 0
      %1516 = vmatprep.subr.bf16.mxu0 0
      %1517 = vmatpush1.bf16.msra.mxu0 0
      %1518 = vmatprep.subr.bf16.mxu0 0
      %1519 = vmatpush1.bf16.msra.mxu0 0
      %1520 = vmatprep.subr.bf16.mxu0 0
      %1521 = vmatpush1.bf16.msra.mxu0 0
      %1522 = vmatprep.subr.bf16.mxu0 0
      %1523 = vmatpush1.bf16.msra.mxu0 0
      %1524 = vmatprep.subr.bf16.mxu0 0
      %1525 = vmatpush1.bf16.msra.mxu0 0
      %1526 = vmatprep.subr.bf16.mxu0 0
      %1527 = vmatpush1.bf16.msra.mxu0 0
      %1528 = vmatprep.subr.bf16.mxu0 0
      %1529 = vmatpush1.bf16.msra.mxu0 0
      %1530 = vmatprep.subr.bf16.mxu0 0
      %1531 = vmatpush1.bf16.msra.mxu0 0
      %1532 = vmatprep.subr.bf16.mxu0 0
      %1533 = vmatpush1.bf16.msra.mxu0 0
      %1534 = vmatprep.subr.bf16.mxu0 0
      %1535 = vmatpush1.bf16.msra.mxu0 0
      %1536 = vmatprep.subr.bf16.mxu0 0
      %1537 = vmatpush1.bf16.msra.mxu0 0
      %1538 = vmatprep.subr.bf16.mxu0 0
      %1539 = vmatpush1.bf16.msra.mxu0 0
      %1540 = vmatprep.mubr.bf16.mxu0 0
      %1541 = vmatmul.mubr.bf16.gmra.mrb[0].mxu0 %v1503
      %v1542 = vpop.f32.mrb[0].mxu0
      %v1543 = vadd.f32 0.0, %v1542
      %v1544 = vpop.f32.mrb[0].mxu0
      %v1545 = vpop.f32.mrb[0].mxu0
      %v1546 = vadd.f32 0.0, %v1545
      %v1547 = vpop.f32.mrb[0].mxu0
      %1548 = vdwg.mxu0
      %v1549 = vpack.c.bf16 %v1546, %v1543
      %s1550 = scalar_lea.vmem %s9, 8
      %v1551 = vld [vmem:[%s1550] sm:$0xf]
      %v1553 = vsel %vm680, %v1549, 0
      %v1556 = vsel %vm765, %v1551, 0
      %1558 = vmatprep.subr.bf16.mxu0 0
      %1559 = vmatpush1.bf16.msra.mxu0 %v1556
      %1560 = vmatprep.subr.bf16.mxu0 0
      %1561 = vmatpush1.bf16.msra.mxu0 0
      %1562 = vmatprep.subr.bf16.mxu0 0
      %1563 = vmatpush1.bf16.msra.mxu0 0
      %1564 = vmatprep.subr.bf16.mxu0 0
      %1565 = vmatpush1.bf16.msra.mxu0 0
      %1566 = vmatprep.subr.bf16.mxu0 0
      %1567 = vmatpush1.bf16.msra.mxu0 0
      %1568 = vmatprep.subr.bf16.mxu0 0
      %1569 = vmatpush1.bf16.msra.mxu0 0
      %1570 = vmatprep.subr.bf16.mxu0 0
      %1571 = vmatpush1.bf16.msra.mxu0 0
      %1572 = vmatprep.subr.bf16.mxu0 0
      %1573 = vmatpush1.bf16.msra.mxu0 0
      %1574 = vmatprep.subr.bf16.mxu0 0
      %1575 = vmatpush1.bf16.msra.mxu0 0
      %1576 = vmatprep.subr.bf16.mxu0 0
      %1577 = vmatpush1.bf16.msra.mxu0 0
      %1578 = vmatprep.subr.bf16.mxu0 0
      %1579 = vmatpush1.bf16.msra.mxu0 0
      %1580 = vmatprep.subr.bf16.mxu0 0
      %1581 = vmatpush1.bf16.msra.mxu0 0
      %1582 = vmatprep.subr.bf16.mxu0 0
      %1583 = vmatpush1.bf16.msra.mxu0 0
      %1584 = vmatprep.subr.bf16.mxu0 0
      %1585 = vmatpush1.bf16.msra.mxu0 0
      %1586 = vmatprep.subr.bf16.mxu0 0
      %1587 = vmatpush1.bf16.msra.mxu0 0
      %1588 = vmatprep.subr.bf16.mxu0 0
      %1589 = vmatpush1.bf16.msra.mxu0 0
      %1590 = vmatprep.mubr.bf16.mxu0 0
      %1591 = vmatmul.mubr.bf16.gmra.mrb[0].mxu0 %v1553
      %v1592 = vpop.f32.mrb[0].mxu0
      %v1593 = vadd.f32 0.0, %v1592
      %v1594 = vpop.f32.mrb[0].mxu0
      %v1595 = vpop.f32.mrb[0].mxu0
      %v1596 = vadd.f32 0.0, %v1595
      %v1597 = vpop.f32.mrb[0].mxu0
      %1598 = vdwg.mxu0
      %v1599 = vadd.f32 %v1223, %v1593
      %v1600 = vadd.f32 %v1226, %v1596
      %s1601 = scalar_lea.vmem %s3, 48
      %v1602 = vld [vmem:[%s1601] sm:$0xf]
      %v1603 = vld [vmem:[%s1601 + $0x4] sm:$0xf]
      %v1604 = vld [vmem:[%s1601 + $0x8] sm:$0xf]
      %v1605 = vld [vmem:[%s1601 + $0xc] sm:$0xf]
      %s1606 = scalar_lea.vmem %s6, 3
      %v1607 = vld [vmem:[%s1606] sm:$0x1]
      %v1609 = vlaneseq
      %v1610 = vshrl.u32 %v1609, 7
      %v1611 = vsub.s32 0, %v1610
      %v1612 = vrot.slane %v1607, %v1611
      %v1618 = vunpack.c.l.b16 %v1602
      %v1619 = vunpack.c.l.b16 %v1603
      %v1620 = vunpack.c.l.b16 %v1604
      %v1621 = vunpack.c.l.b16 %v1605
      %v1622 = vpack.c.b16 %v1619, %v1618
      %v1623 = vpack.c.b16 %v1621, %v1620
      %1626 = vmatprep.subr.bf16.mxu0 0
      %1627 = vmatpush1.bf16.msra.mxu0 %v1622
      %1628 = vmatprep.subr.bf16.mxu0 0
      %1629 = vmatpush1.bf16.msra.mxu0 %v1623
      %1630 = vmatprep.subr.bf16.mxu0 0
      %1631 = vmatpush1.bf16.msra.mxu0 0
      %1632 = vmatprep.subr.bf16.mxu0 0
      %1633 = vmatpush1.bf16.msra.mxu0 0
      %1634 = vmatprep.subr.bf16.mxu0 0
      %1635 = vmatpush1.bf16.msra.mxu0 0
      %1636 = vmatprep.subr.bf16.mxu0 0
      %1637 = vmatpush1.bf16.msra.mxu0 0
      %1638 = vmatprep.subr.bf16.mxu0 0
      %1639 = vmatpush1.bf16.msra.mxu0 0
      %1640 = vmatprep.subr.bf16.mxu0 0
      %1641 = vmatpush1.bf16.msra.mxu0 0
      %1642 = vmatprep.subr.bf16.mxu0 0
      %1643 = vmatpush1.bf16.msra.mxu0 0
      %1644 = vmatprep.subr.bf16.mxu0 0
      %1645 = vmatpush1.bf16.msra.mxu0 0
      %1646 = vmatprep.subr.bf16.mxu0 0
      %1647 = vmatpush1.bf16.msra.mxu0 0
      %1648 = vmatprep.subr.bf16.mxu0 0
      %1649 = vmatpush1.bf16.msra.mxu0 0
      %1650 = vmatprep.subr.bf16.mxu0 0
      %1651 = vmatpush1.bf16.msra.mxu0 0
      %1652 = vmatprep.subr.bf16.mxu0 0
      %1653 = vmatpush1.bf16.msra.mxu0 0
      %1654 = vmatprep.subr.bf16.mxu0 0
      %1655 = vmatpush1.bf16.msra.mxu0 0
      %1656 = vmatprep.subr.bf16.mxu0 0
      %1657 = vmatpush1.bf16.msra.mxu0 0
      %1658 = vmatprep.mubr.bf16.mxu0 0
      %1659 = vmatmul.mubr.bf16.gmra.mrb[0].mxu0 %v506
      %v1660 = vpop.f32.mrb[0].mxu0
      %v1661 = vadd.f32 %v1612, %v1660
      %v1662 = vpop.f32.mrb[0].mxu0
      %v1663 = vpop.f32.mrb[0].mxu0
      %v1664 = vadd.f32 %v1612, %v1663
      %v1665 = vpop.f32.mrb[0].mxu0
      %1666 = vdwg.mxu0
      %s1667 = scalar_lea.vmem %s4, 48
      %v1668 = vld [vmem:[%s1667] sm:$0xf]
      %v1669 = vld [vmem:[%s1667 + $0x4] sm:$0xf]
      %v1670 = vld [vmem:[%s1667 + $0x8] sm:$0xf]
      %v1671 = vld [vmem:[%s1667 + $0xc] sm:$0xf]
      %s1672 = scalar_lea.vmem %s7, 3
      %v1673 = vld [vmem:[%s1672] sm:$0x1]
      %v1675 = vlaneseq
      %v1676 = vshrl.u32 %v1675, 7
      %v1677 = vsub.s32 0, %v1676
      %v1678 = vrot.slane %v1673, %v1677
      %v1684 = vunpack.c.l.b16 %v1668
      %v1685 = vunpack.c.l.b16 %v1669
      %v1686 = vunpack.c.l.b16 %v1670
      %v1687 = vunpack.c.l.b16 %v1671
      %v1688 = vpack.c.b16 %v1685, %v1684
      %v1689 = vpack.c.b16 %v1687, %v1686
      %1692 = vmatprep.subr.bf16.mxu0 0
      %1693 = vmatpush1.bf16.msra.mxu0 %v1688
      %1694 = vmatprep.subr.bf16.mxu0 0
      %1695 = vmatpush1.bf16.msra.mxu0 %v1689
      %1696 = vmatprep.subr.bf16.mxu0 0
      %1697 = vmatpush1.bf16.msra.mxu0 0
      %1698 = vmatprep.subr.bf16.mxu0 0
      %1699 = vmatpush1.bf16.msra.mxu0 0
      %1700 = vmatprep.subr.bf16.mxu0 0
      %1701 = vmatpush1.bf16.msra.mxu0 0
      %1702 = vmatprep.subr.bf16.mxu0 0
      %1703 = vmatpush1.bf16.msra.mxu0 0
      %1704 = vmatprep.subr.bf16.mxu0 0
      %1705 = vmatpush1.bf16.msra.mxu0 0
      %1706 = vmatprep.subr.bf16.mxu0 0
      %1707 = vmatpush1.bf16.msra.mxu0 0
      %1708 = vmatprep.subr.bf16.mxu0 0
      %1709 = vmatpush1.bf16.msra.mxu0 0
      %1710 = vmatprep.subr.bf16.mxu0 0
      %1711 = vmatpush1.bf16.msra.mxu0 0
      %1712 = vmatprep.subr.bf16.mxu0 0
      %1713 = vmatpush1.bf16.msra.mxu0 0
      %1714 = vmatprep.subr.bf16.mxu0 0
      %1715 = vmatpush1.bf16.msra.mxu0 0
      %1716 = vmatprep.subr.bf16.mxu0 0
      %1717 = vmatpush1.bf16.msra.mxu0 0
      %1718 = vmatprep.subr.bf16.mxu0 0
      %1719 = vmatpush1.bf16.msra.mxu0 0
      %1720 = vmatprep.subr.bf16.mxu0 0
      %1721 = vmatpush1.bf16.msra.mxu0 0
      %1722 = vmatprep.subr.bf16.mxu0 0
      %1723 = vmatpush1.bf16.msra.mxu0 0
      %1724 = vmatprep.mubr.bf16.mxu0 0
      %1725 = vmatmul.mubr.bf16.gmra.mrb[0].mxu0 %v573
      %v1726 = vpop.f32.mrb[0].mxu0
      %v1727 = vadd.f32 %v1678, %v1726
      %v1728 = vpop.f32.mrb[0].mxu0
      %v1729 = vpop.f32.mrb[0].mxu0
      %v1730 = vpop.f32.mrb[0].mxu0
      %1731 = vdwg.mxu0
      %s1732 = scalar_lea.vmem %s5, 48
      %v1733 = vld [vmem:[%s1732] sm:$0xf]
      %v1734 = vld [vmem:[%s1732 + $0x4] sm:$0xf]
      %v1735 = vld [vmem:[%s1732 + $0x8] sm:$0xf]
      %v1736 = vld [vmem:[%s1732 + $0xc] sm:$0xf]
      %s1737 = scalar_lea.vmem %s8, 3
      %v1738 = vld [vmem:[%s1737] sm:$0x1]
      %v1740 = vlaneseq
      %v1741 = vshrl.u32 %v1740, 7
      %v1742 = vsub.s32 0, %v1741
      %v1743 = vrot.slane %v1738, %v1742
      %v1749 = vunpack.c.l.b16 %v1733
      %v1750 = vunpack.c.l.b16 %v1734
      %v1751 = vunpack.c.l.b16 %v1735
      %v1752 = vunpack.c.l.b16 %v1736
      %v1753 = vpack.c.b16 %v1750, %v1749
      %v1754 = vpack.c.b16 %v1752, %v1751
      %1757 = vmatprep.subr.bf16.mxu0 0
      %1758 = vmatpush1.bf16.msra.mxu0 %v1753
      %1759 = vmatprep.subr.bf16.mxu0 0
      %1760 = vmatpush1.bf16.msra.mxu0 %v1754
      %1761 = vmatprep.subr.bf16.mxu0 0
      %1762 = vmatpush1.bf16.msra.mxu0 0
      %1763 = vmatprep.subr.bf16.mxu0 0
      %1764 = vmatpush1.bf16.msra.mxu0 0
      %1765 = vmatprep.subr.bf16.mxu0 0
      %1766 = vmatpush1.bf16.msra.mxu0 0
      %1767 = vmatprep.subr.bf16.mxu0 0
      %1768 = vmatpush1.bf16.msra.mxu0 0
      %1769 = vmatprep.subr.bf16.mxu0 0
      %1770 = vmatpush1.bf16.msra.mxu0 0
      %1771 = vmatprep.subr.bf16.mxu0 0
      %1772 = vmatpush1.bf16.msra.mxu0 0
      %1773 = vmatprep.subr.bf16.mxu0 0
      %1774 = vmatpush1.bf16.msra.mxu0 0
      %1775 = vmatprep.subr.bf16.mxu0 0
      %1776 = vmatpush1.bf16.msra.mxu0 0
      %1777 = vmatprep.subr.bf16.mxu0 0
      %1778 = vmatpush1.bf16.msra.mxu0 0
      %1779 = vmatprep.subr.bf16.mxu0 0
      %1780 = vmatpush1.bf16.msra.mxu0 0
      %1781 = vmatprep.subr.bf16.mxu0 0
      %1782 = vmatpush1.bf16.msra.mxu0 0
      %1783 = vmatprep.subr.bf16.mxu0 0
      %1784 = vmatpush1.bf16.msra.mxu0 0
      %1785 = vmatprep.subr.bf16.mxu0 0
      %1786 = vmatpush1.bf16.msra.mxu0 0
      %1787 = vmatprep.subr.bf16.mxu0 0
      %1788 = vmatpush1.bf16.msra.mxu0 0
      %1789 = vmatprep.mubr.bf16.mxu0 0
      %1790 = vmatmul.mubr.bf16.gmra.mrb[0].mxu0 %v573
      %v1791 = vpop.f32.mrb[0].mxu0
      %v1792 = vadd.f32 %v1743, %v1791
      %v1793 = vpop.f32.mrb[0].mxu0
      %v1794 = vpop.f32.mrb[0].mxu0
      %v1795 = vpop.f32.mrb[0].mxu0
      %1796 = vdwg.mxu0
      %v1797 = vpack.c.bf16 %v1664, %v1661
      %v1798 = vpack.c.bf16 %v1727, %v1727
      %v1800 = vsel %vm680, %v1797, 0
      %v1803 = vsel %vm680, %v1798, 0
      %1805 = vmatprep.subr.bf16.mxu0 0
      %1806 = vmatpush1.bf16.xpose.msra.mxu0 %v1803
      %1807 = vmatprep.subr.bf16.mxu0 0
      %1808 = vmatpush1.bf16.xpose.msra.mxu0 0
      %1809 = vmatprep.subr.bf16.mxu0 0
      %1810 = vmatpush1.bf16.xpose.msra.mxu0 0
      %1811 = vmatprep.subr.bf16.mxu0 0
      %1812 = vmatpush1.bf16.xpose.msra.mxu0 0
      %1813 = vmatprep.subr.bf16.mxu0 0
      %1814 = vmatpush1.bf16.xpose.msra.mxu0 0
      %1815 = vmatprep.subr.bf16.mxu0 0
      %1816 = vmatpush1.bf16.xpose.msra.mxu0 0
      %1817 = vmatprep.subr.bf16.mxu0 0
      %1818 = vmatpush1.bf16.xpose.msra.mxu0 0
      %1819 = vmatprep.subr.bf16.mxu0 0
      %1820 = vmatpush1.bf16.xpose.msra.mxu0 0
      %1821 = vmatprep.subr.bf16.mxu0 0
      %1822 = vmatpush1.bf16.xpose.msra.mxu0 0
      %1823 = vmatprep.subr.bf16.mxu0 0
      %1824 = vmatpush1.bf16.xpose.msra.mxu0 0
      %1825 = vmatprep.subr.bf16.mxu0 0
      %1826 = vmatpush1.bf16.xpose.msra.mxu0 0
      %1827 = vmatprep.subr.bf16.mxu0 0
      %1828 = vmatpush1.bf16.xpose.msra.mxu0 0
      %1829 = vmatprep.subr.bf16.mxu0 0
      %1830 = vmatpush1.bf16.xpose.msra.mxu0 0
      %1831 = vmatprep.subr.bf16.mxu0 0
      %1832 = vmatpush1.bf16.xpose.msra.mxu0 0
      %1833 = vmatprep.subr.bf16.mxu0 0
      %1834 = vmatpush1.bf16.xpose.msra.mxu0 0
      %1835 = vmatprep.subr.bf16.mxu0 0
      %1836 = vmatpush1.bf16.xpose.msra.mxu0 0
      %1837 = vmatprep.mubr.bf16.mxu0 0
      %1838 = vmatmul.mubr.bf16.gmra.mrb[0].mxu0 %v1800
      %v1839 = vpop.f32.mrb[0].mxu0
      %v1840 = vadd.f32 0.0, %v1839
      %v1841 = vpop.f32.mrb[0].mxu0
      %v1842 = vpop.f32.mrb[0].mxu0
      %v1843 = vadd.f32 0.0, %v1842
      %v1844 = vpop.f32.mrb[0].mxu0
      %1845 = vdwg.mxu0
      %v1846 = vmul.f32 %v1840, 0.35355338
      %v1847 = vmul.f32 %v1843, 0.35355338
      %v1848 = vadd.f32 %v1846, %v734
      %v1849 = vadd.f32 %v1847, %v734
      %v1850 = vsel %vm680, %v1848, -inf
      %1851 = vmax.xlane.f32.xlu0 %v1850
      %v1852 = vpop.xlane.xlu0 %1851
      %v1853 = vsel %vm680, %v1849, -inf
      %1854 = vmax.xlane.f32.xlu0 %v1853
      %v1855 = vpop.xlane.xlu0 %1854
      %v1856 = vsub.f32 %v1848, %v1852
      %v1857 = vsub.f32 %v1849, %v1855
      %v1858 = vmul.f32 %v1856, 1.442695
      %v1859 = vpow.pop %v1858
      %v1860 = vmul.f32 %v1857, 1.442695
      %v1861 = vpow.pop %v1860
      %v1862 = vsel %vm680, %v1859, 0.0
      %1863 = vadd.xlane.f32.xlu0 %v1862
      %v1864 = vpop.xlane.xlu0 %1863
      %v1865 = vsel %vm680, %v1861, 0.0
      %1866 = vadd.xlane.f32.xlu0 %v1865
      %v1867 = vpop.xlane.xlu0 %1866
      %v1868 = vrcp.pop %v1864
      %v1869 = vrcp.pop %v1867
      %v1870 = vmul.f32 %v1859, %v1868
      %v1871 = vmul.f32 %v1861, %v1869
      %v1872 = vpack.c.bf16 %v1871, %v1870
      %v1873 = vpack.c.bf16 %v1792, %v1792
      %v1875 = vsel %vm680, %v1872, 0
      %v1878 = vsel %vm765, %v1873, 0
      %1880 = vmatprep.subr.bf16.mxu0 0
      %1881 = vmatpush1.bf16.msra.mxu0 %v1878
      %1882 = vmatprep.subr.bf16.mxu0 0
      %1883 = vmatpush1.bf16.msra.mxu0 0
      %1884 = vmatprep.subr.bf16.mxu0 0
      %1885 = vmatpush1.bf16.msra.mxu0 0
      %1886 = vmatprep.subr.bf16.mxu0 0
      %1887 = vmatpush1.bf16.msra.mxu0 0
      %1888 = vmatprep.subr.bf16.mxu0 0
      %1889 = vmatpush1.bf16.msra.mxu0 0
      %1890 = vmatprep.subr.bf16.mxu0 0
      %1891 = vmatpush1.bf16.msra.mxu0 0
      %1892 = vmatprep.subr.bf16.mxu0 0
      %1893 = vmatpush1.bf16.msra.mxu0 0
      %1894 = vmatprep.subr.bf16.mxu0 0
      %1895 = vmatpush1.bf16.msra.mxu0 0
      %1896 = vmatprep.subr.bf16.mxu0 0
      %1897 = vmatpush1.bf16.msra.mxu0 0
      %1898 = vmatprep.subr.bf16.mxu0 0
      %1899 = vmatpush1.bf16.msra.mxu0 0
      %1900 = vmatprep.subr.bf16.mxu0 0
      %1901 = vmatpush1.bf16.msra.mxu0 0
      %1902 = vmatprep.subr.bf16.mxu0 0
      %1903 = vmatpush1.bf16.msra.mxu0 0
      %1904 = vmatprep.subr.bf16.mxu0 0
      %1905 = vmatpush1.bf16.msra.mxu0 0
      %1906 = vmatprep.subr.bf16.mxu0 0
      %1907 = vmatpush1.bf16.msra.mxu0 0
      %1908 = vmatprep.subr.bf16.mxu0 0
      %1909 = vmatpush1.bf16.msra.mxu0 0
      %1910 = vmatprep.subr.bf16.mxu0 0
      %1911 = vmatpush1.bf16.msra.mxu0 0
      %1912 = vmatprep.mubr.bf16.mxu0 0
      %1913 = vmatmul.mubr.bf16.gmra.mrb[0].mxu0 %v1875
      %v1914 = vpop.f32.mrb[0].mxu0
      %v1915 = vadd.f32 0.0, %v1914
      %v1916 = vpop.f32.mrb[0].mxu0
      %v1917 = vpop.f32.mrb[0].mxu0
      %v1918 = vadd.f32 0.0, %v1917
      %v1919 = vpop.f32.mrb[0].mxu0
      %1920 = vdwg.mxu0
      %v1921 = vpack.c.bf16 %v1918, %v1915
      %s1922 = scalar_lea.vmem %s9, 12
      %v1923 = vld [vmem:[%s1922] sm:$0xf]
      %v1925 = vsel %vm680, %v1921, 0
      %v1928 = vsel %vm765, %v1923, 0
      %1930 = vmatprep.subr.bf16.mxu0 0
      %1931 = vmatpush1.bf16.msra.mxu0 %v1928
      %1932 = vmatprep.subr.bf16.mxu0 0
      %1933 = vmatpush1.bf16.msra.mxu0 0
      %1934 = vmatprep.subr.bf16.mxu0 0
      %1935 = vmatpush1.bf16.msra.mxu0 0
      %1936 = vmatprep.subr.bf16.mxu0 0
      %1937 = vmatpush1.bf16.msra.mxu0 0
      %1938 = vmatprep.subr.bf16.mxu0 0
      %1939 = vmatpush1.bf16.msra.mxu0 0
      %1940 = vmatprep.subr.bf16.mxu0 0
      %1941 = vmatpush1.bf16.msra.mxu0 0
      %1942 = vmatprep.subr.bf16.mxu0 0
      %1943 = vmatpush1.bf16.msra.mxu0 0
      %1944 = vmatprep.subr.bf16.mxu0 0
      %1945 = vmatpush1.bf16.msra.mxu0 0
      %1946 = vmatprep.subr.bf16.mxu0 0
      %1947 = vmatpush1.bf16.msra.mxu0 0
      %1948 = vmatprep.subr.bf16.mxu0 0
      %1949 = vmatpush1.bf16.msra.mxu0 0
      %1950 = vmatprep.subr.bf16.mxu0 0
      %1951 = vmatpush1.bf16.msra.mxu0 0
      %1952 = vmatprep.subr.bf16.mxu0 0
      %1953 = vmatpush1.bf16.msra.mxu0 0
      %1954 = vmatprep.subr.bf16.mxu0 0
      %1955 = vmatpush1.bf16.msra.mxu0 0
      %1956 = vmatprep.subr.bf16.mxu0 0
      %1957 = vmatpush1.bf16.msra.mxu0 0
      %1958 = vmatprep.subr.bf16.mxu0 0
      %1959 = vmatpush1.bf16.msra.mxu0 0
      %1960 = vmatprep.subr.bf16.mxu0 0
      %1961 = vmatpush1.bf16.msra.mxu0 0
      %1962 = vmatprep.mubr.bf16.mxu0 0
      %1963 = vmatmul.mubr.bf16.gmra.mrb[0].mxu0 %v1925
      %v1964 = vpop.f32.mrb[0].mxu0
      %v1965 = vadd.f32 0.0, %v1964
      %v1966 = vpop.f32.mrb[0].mxu0
      %v1967 = vpop.f32.mrb[0].mxu0
      %v1968 = vadd.f32 0.0, %v1967
      %v1969 = vpop.f32.mrb[0].mxu0
      %1970 = vdwg.mxu0
      %v1971 = vadd.f32 %v1599, %v1965
      %v1972 = vadd.f32 %v1600, %v1968
      %v1973 = vadd.f32 %v473, %v1971
      %v1974 = vadd.f32 %v474, %v1972
      %v1975 = vld [vmem:[%s10] sm:$0x1]
      %v1977 = vlaneseq
      %v1978 = vshrl.u32 %v1977, 7
      %v1979 = vsub.s32 0, %v1978
      %v1980 = vrot.slane %v1975, %v1979
      %v1982 = vadd.f32 %v1973, %v1980
      %v1983 = vadd.f32 %v1974, %v1980
      %v1984 = vsel %vm504, %v1982, 0.0
      %1985 = vadd.xlane.f32.xlu0 %v1984
      %v1986 = vpop.xlane.xlu0 %1985
      %v1987 = vsel %vm504, %v1983, 0.0
      %1988 = vadd.xlane.f32.xlu0 %v1987
      %v1989 = vpop.xlane.xlu0 %1988
      %v1990 = vrcp.pop 32.0
      %v1991 = vmul.f32 %v1986, %v1990
      %v1992 = vmul.f32 %v1989, %v1990
      %v1993 = vsub.f32 %v1982, %v1991
      %v1994 = vsub.f32 %v1983, %v1992
      %v1995 = vmul.f32 %v1993, %v1993
      %v1996 = vmul.f32 %v1994, %v1994
      %v1997 = vsel %vm504, %v1995, 0.0
      %1998 = vadd.xlane.f32.xlu0 %v1997
      %v1999 = vpop.xlane.xlu0 %1998
      %v2000 = vsel %vm504, %v1996, 0.0
      %2001 = vadd.xlane.f32.xlu0 %v2000
      %v2002 = vpop.xlane.xlu0 %2001
      %v2003 = vmul.f32 %v1999, %v1990
      %v2004 = vmul.f32 %v2002, %v1990
      %v2005 = vadd.f32 %v2003, 1e-06
      %v2006 = vadd.f32 %v2004, 1e-06
      %v2007 = vrsqrt.pop %v2005
      %v2008 = vrsqrt.pop %v2006
      %v2009 = vmul.f32 %v1993, %v2007
      %v2010 = vmul.f32 %v1994, %v2008
      %v2011 = vld [vmem:[%s11] sm:$0x1]
      %v2013 = vlaneseq
      %v2014 = vshrl.u32 %v2013, 7
      %v2015 = vsub.s32 0, %v2014
      %v2016 = vrot.slane %v2011, %v2015
      %v2018 = vmul.f32 %v2009, %v2016
      %v2019 = vmul.f32 %v2010, %v2016
      %v2020 = vld [vmem:[%s12] sm:$0x1]
      %v2022 = vlaneseq
      %v2023 = vshrl.u32 %v2022, 7
      %v2024 = vsub.s32 0, %v2023
      %v2025 = vrot.slane %v2020, %v2024
      %v2027 = vadd.f32 %v2018, %v2025
      %v2028 = vadd.f32 %v2019, %v2025
      %2029 = vst.msk [vmem:[%s471] sm:$0xff] %vm504, %v2027
      %2030 = vst.msk [vmem:[%s471 + $0x8] sm:$0xff] %vm504, %v2028
      %p2031 = scmp.lt.s32.totalorder %s24, 1
      %s2032 = scalar_select %p2031, %s24, 1
      %s2033 = smul.addr %s2032, 2
      %s2034 = smul.addr %s2033, 8
      %s2035 = scalar_lea.vmem %s13, %s2034
      // Predicated region
      $region73: #{forward.14} parent=71 // pred_check
        %p2036 = pneg %p330
      $region74: #{forward.14} parent=71 // pred_check_branch
        %2038 = sbr.rel (%p2036) target = $region76
      $region75: #{forward.14} parent=71 // pred_region
        _
      $region76: #{forward.14} parent=71 // pred_fallthru
        _
    $region72: #{forward.14} parent=5 // pred_fallthru
      _
    %p2039 = scmp.le.s32.totalorder 2, %s19
    // Predicated region
    $region77: #{forward.14} parent=5 // pred_check
      %p2040 = pneg %p2039
    $region78: #{forward.14} parent=5 // pred_check_branch
      %2042 = sbr.rel (%p2040) target = $region80
    $region79: #{forward.14} parent=5 // pred_region
      %s2043 = ssub.s32 %s19, 2
      // Predicated region
      $region81: #{forward.14} parent=79 // pred_check
        %p2044 = pneg %p336
      $region82: #{forward.14} parent=79 // pred_check_branch
        %2046 = sbr.rel (%p2044) target = $region84
      $region83: #{forward.14} parent=79 // pred_region
        %p2047 = scmp.lt.s32.totalorder %s25, 1
        %s2048 = scalar_select %p2047, %s25, 1
        %s2049 = smul.addr %s2048, 2
        %s2050 = smul.addr %s2049, 8
        %s2051 = scalar_lea.vmem %s13, %s2050
      $region84: #{forward.14} parent=79 // pred_fallthru
        _
    $region80: #{forward.14} parent=5 // pred_fallthru
      _
  $region6: #{forward.14} parent=0 // loop_footer
    %s23 = sadd.s32 1, %s19
  $region7: #{forward.14} parent=0 // loop_footer_branch
    %18 = sbr.rel target = $region3
  $region8: #{forward.14} parent=0 // loop_exit
    _

// kernel: forward.19
$region0: #{forward.19}
  #allocation0 [shape = 'u32[]', space=smem, size = 0x4, offset = 0x4, fixed_abs, tag = 'smem constant byte address 0x4 - core index']
  #allocation1 [shape = 'u32[144,128]{1,0:T(1,128)}', space=vmem, size = 0x12000, scoped, tag = 'internal scratch']
  %s0 = inlined_call_operand.vmem [shape: f32[2,16,32], index: 0, kind: input, shape index: {}]
  %s1 = inlined_call_operand.vmem [shape: f32[2,32], index: 1, kind: input, shape index: {}]
  %s2 = inlined_call_operand.vmem [shape: f32[64,3], index: 2, kind: input, shape index: {}]
  %s3 = inlined_call_operand.vmem [shape: f32[1,3], index: 3, kind: input, shape index: {}]
  %s4 = inlined_call_operand.vmem [shape: f32[64,8], index: 4, kind: input, shape index: {}]
  %s5 = inlined_call_operand.vmem [shape: f32[1,8], index: 5, kind: input, shape index: {}]
  %s6 = inlined_call_operand.hbm [shape: f32[2,3], index: 6, kind: output, shape index: {0}]
  %s7 = inlined_call_operand.hbm [shape: f32[2,8], index: 7, kind: output, shape index: {1}]
  %8 = xla_tuple %s6, %s7
  %s9 = sld [smem:[#allocation0]]
  $region42: #{forward.19} parent=0
    _
  %s11 = ssub.s32 1, %s9
  %s12 = scalar_select 0, %s11, %s9
  $region1: #{forward.19} parent=0
    #allocation2 [shape = 'u8[1024]{0}', space=vmem, size = 0x400, scoped, tag = 'output window, operand 0, single buffered']
    #allocation3 [shape = 's32[1]{0}', space=sflag, size = 0x4, scoped, tag = 'scoped memory for forward.19']
    #allocation4 [shape = 'u8[1024]{0}', space=vmem, size = 0x400, scoped, tag = 'output window, operand 1, single buffered']
    #allocation5 [shape = 's32[1]{0}', space=sflag, size = 0x4, scoped, tag = 'scoped memory for forward.19']
    %13 = vsyncpa [#allocation3], 0
    %14 = vsyncpa [#allocation5], 0
    // Predicated region
    $region2: #{forward.19} parent=1 // pred_check
      _
    $region3: #{forward.19} parent=1 // pred_check_branch
      %16 = sbr.rel (0) target = $region5
    $region4: #{forward.19} parent=1 // pred_region
      _
    $region5: #{forward.19} parent=1 // pred_fallthru
      _
    // Predicated region
    $region6: #{forward.19} parent=1 // pred_check
      _
    $region7: #{forward.19} parent=1 // pred_check_branch
      %18 = sbr.rel (0) target = $region9
    $region8: #{forward.19} parent=1 // pred_region
      _
    $region9: #{forward.19} parent=1 // pred_fallthru
      _
    // Predicated region
    $region10: #{forward.19} parent=1 // pred_check
      _
    $region11: #{forward.19} parent=1 // pred_check_branch
      %20 = sbr.rel (0) target = $region13
    $region12: #{forward.19} parent=1 // pred_region
      _
    $region13: #{forward.19} parent=1 // pred_fallthru
      _
    // Predicated region
    $region14: #{forward.19} parent=1 // pred_check
      _
    $region15: #{forward.19} parent=1 // pred_check_branch
      %22 = sbr.rel (0) target = $region17
    $region16: #{forward.19} parent=1 // pred_region
      _
    $region17: #{forward.19} parent=1 // pred_fallthru
      _
    // Predicated region
    $region18: #{forward.19} parent=1 // pred_check
      _
    $region19: #{forward.19} parent=1 // pred_check_branch
      %24 = sbr.rel (0) target = $region21
    $region20: #{forward.19} parent=1 // pred_region
      _
    $region21: #{forward.19} parent=1 // pred_fallthru
      _
    // Predicated region
    $region22: #{forward.19} parent=1 // pred_check
      _
    $region23: #{forward.19} parent=1 // pred_check_branch
      %26 = sbr.rel (0) target = $region25
    $region24: #{forward.19} parent=1 // pred_region
      _
    $region25: #{forward.19} parent=1 // pred_fallthru
      _
    %v27 = vld [vmem:[%s0] sm:$0xff]
    %v28 = vld [vmem:[%s0 + $0x8] sm:$0xff]
    %v29 = vld [vmem:[%s0 + $0x10] sm:$0xff]
    %v30 = vld [vmem:[%s0 + $0x18] sm:$0xff]
    %vm31 = vcmask 261120
    %v32 = vsel %vm31, %v27, 0.0
    %v33 = vsel %vm31, %v28, 0.0
    %v34 = vadd.f32 %v32, %v33
    %v35 = vrot.slane %v34, 4
    %v36 = vadd.f32 %v34, %v35
    %v37 = vrot.slane %v36, 2
    %v38 = vadd.f32 %v36, %v37
    %v39 = vrot.slane %v38, 1
    %v40 = vadd.f32 %v38, %v39
    %v41 = vsel %vm31, %v29, 0.0
    %v42 = vsel %vm31, %v30, 0.0
    %v43 = vadd.f32 %v41, %v42
    %v44 = vrot.slane %v43, 4
    %v45 = vadd.f32 %v43, %v44
    %v46 = vrot.slane %v45, 2
    %v47 = vadd.f32 %v45, %v46
    %v48 = vrot.slane %v47, 1
    %v49 = vadd.f32 %v47, %v48
    %v50 = vrcp.pop 16.0
    %v51 = vmul.f32 %v40, %v50
    %v52 = vmul.f32 %v49, %v50
    %v53 = vld [vmem:[%s1] sm:$0x3]
    %v54 = vld [vmem:[%s2] sm:$0xff]
    %v55 = vld [vmem:[%s2 + $0x8] sm:$0xff]
    %v56 = vld [vmem:[%s2 + $0x10] sm:$0xff]
    %v57 = vld [vmem:[%s2 + $0x18] sm:$0xff]
    %v58 = vld [vmem:[%s2 + $0x20] sm:$0xff]
    %v59 = vld [vmem:[%s2 + $0x28] sm:$0xff]
    %v60 = vld [vmem:[%s2 + $0x30] sm:$0xff]
    %v61 = vld [vmem:[%s2 + $0x38] sm:$0xff]
    %v63 = vsel %vm31, %v53, 0
    %65 = vmatprep.subr.mxu0 0.0
    %66 = vmatpush1.msra.mxu0 %v58
    %67 = vmatprep.subr.mxu0 0.0
    %68 = vmatpush1.msra.mxu0 %v59
    %69 = vmatprep.subr.mxu0 0.0
    %70 = vmatpush1.msra.mxu0 %v60
    %71 = vmatprep.subr.mxu0 0.0
    %72 = vmatpush1.msra.mxu0 %v61
    %73 = vmatprep.subr.mxu0 0.0
    %74 = vmatpush1.msra.mxu0 0.0
    %75 = vmatprep.subr.mxu0 0.0
    %76 = vmatpush1.msra.mxu0 0.0
    %77 = vmatprep.subr.mxu0 0.0
    %78 = vmatpush1.msra.mxu0 0.0
    %79 = vmatprep.subr.mxu0 0.0
    %80 = vmatpush1.msra.mxu0 0.0
    %81 = vmatprep.subr.mxu0 0.0
    %82 = vmatpush1.msra.mxu0 0.0
    %83 = vmatprep.subr.mxu0 0.0
    %84 = vmatpush1.msra.mxu0 0.0
    %85 = vmatprep.subr.mxu0 0.0
    %86 = vmatpush1.msra.mxu0 0.0
    %87 = vmatprep.subr.mxu0 0.0
    %88 = vmatpush1.msra.mxu0 0.0
    %89 = vmatprep.subr.mxu0 0.0
    %90 = vmatpush1.msra.mxu0 0.0
    %91 = vmatprep.subr.mxu0 0.0
    %92 = vmatpush1.msra.mxu0 0.0
    %93 = vmatprep.subr.mxu0 0.0
    %94 = vmatpush1.msra.mxu0 0.0
    %95 = vmatprep.subr.mxu0 0.0
    %96 = vmatpush1.msra.mxu0 0.0
    %97 = vmatprep.subr.mxu0 0.0
    %98 = vmatpush1.msra.mxu0 0.0
    %99 = vmatprep.subr.mxu0 0.0
    %100 = vmatpush1.msra.mxu0 0.0
    %101 = vmatprep.subr.mxu0 0.0
    %102 = vmatpush1.msra.mxu0 0.0
    %103 = vmatprep.subr.mxu0 0.0
    %104 = vmatpush1.msra.mxu0 0.0
    %105 = vmatprep.subr.mxu0 0.0
    %106 = vmatpush1.msra.mxu0 0.0
    %107 = vmatprep.subr.mxu0 0.0
    %108 = vmatpush1.msra.mxu0 0.0
    %109 = vmatprep.subr.mxu0 0.0
    %110 = vmatpush1.msra.mxu0 0.0
    %111 = vmatprep.subr.mxu0 0.0
    %112 = vmatpush1.msra.mxu0 0.0
    %113 = vmatprep.subr.mxu0 0.0
    %114 = vmatpush1.msra.mxu0 0.0
    %115 = vmatprep.subr.mxu0 0.0
    %116 = vmatpush1.msra.mxu0 0.0
    %117 = vmatprep.subr.mxu0 0.0
    %118 = vmatpush1.msra.mxu0 0.0
    %119 = vmatprep.subr.mxu0 0.0
    %120 = vmatpush1.msra.mxu0 0.0
    %121 = vmatprep.subr.mxu0 0.0
    %122 = vmatpush1.msra.mxu0 0.0
    %123 = vmatprep.subr.mxu0 0.0
    %124 = vmatpush1.msra.mxu0 0.0
    %125 = vmatprep.subr.mxu0 0.0
    %126 = vmatpush1.msra.mxu0 0.0
    %127 = vmatprep.subr.mxu0 0.0
    %128 = vmatpush1.msra.mxu0 0.0
    %129 = vmatprep.mubr.f32.mxu0 0.0
    %130 = vmatmul.mubr.f32.gmra.mrb[0].mxu0 %v63
    %v131 = vpop.f32.mrb[0].mxu0
    %v132 = vadd.f32 0.0, %v131
    %v133 = vpop.f32.mrb[0].mxu0
    %134 = vdwg.mxu0
    %vm137 = vcmask 1041409
    %v138 = vsel %vm137, %v52, %v51
    %v139 = vsel %vm31, %v138, 0
    %141 = vmatprep.subr.mxu0 0.0
    %142 = vmatpush1.msra.mxu0 %v54
    %143 = vmatprep.subr.mxu0 0.0
    %144 = vmatpush1.msra.mxu0 %v55
    %145 = vmatprep.subr.mxu0 0.0
    %146 = vmatpush1.msra.mxu0 %v56
    %147 = vmatprep.subr.mxu0 0.0
    %148 = vmatpush1.msra.mxu0 %v57
    %149 = vmatprep.subr.mxu0 0.0
    %150 = vmatpush1.msra.mxu0 0.0
    %151 = vmatprep.subr.mxu0 0.0
    %152 = vmatpush1.msra.mxu0 0.0
    %153 = vmatprep.subr.mxu0 0.0
    %154 = vmatpush1.msra.mxu0 0.0
    %155 = vmatprep.subr.mxu0 0.0
    %156 = vmatpush1.msra.mxu0 0.0
    %157 = vmatprep.subr.mxu0 0.0
    %158 = vmatpush1.msra.mxu0 0.0
    %159 = vmatprep.subr.mxu0 0.0
    %160 = vmatpush1.msra.mxu0 0.0
    %161 = vmatprep.subr.mxu0 0.0
    %162 = vmatpush1.msra.mxu0 0.0
    %163 = vmatprep.subr.mxu0 0.0
    %164 = vmatpush1.msra.mxu0 0.0
    %165 = vmatprep.subr.mxu0 0.0
    %166 = vmatpush1.msra.mxu0 0.0
    %167 = vmatprep.subr.mxu0 0.0
    %168 = vmatpush1.msra.mxu0 0.0
    %169 = vmatprep.subr.mxu0 0.0
    %170 = vmatpush1.msra.mxu0 0.0
    %171 = vmatprep.subr.mxu0 0.0
    %172 = vmatpush1.msra.mxu0 0.0
    %173 = vmatprep.subr.mxu0 0.0
    %174 = vmatpush1.msra.mxu0 0.0
    %175 = vmatprep.subr.mxu0 0.0
    %176 = vmatpush1.msra.mxu0 0.0
    %177 = vmatprep.subr.mxu0 0.0
    %178 = vmatpush1.msra.mxu0 0.0
    %179 = vmatprep.subr.mxu0 0.0
    %180 = vmatpush1.msra.mxu0 0.0
    %181 = vmatprep.subr.mxu0 0.0
    %182 = vmatpush1.msra.mxu0 0.0
    %183 = vmatprep.subr.mxu0 0.0
    %184 = vmatpush1.msra.mxu0 0.0
    %185 = vmatprep.subr.mxu0 0.0
    %186 = vmatpush1.msra.mxu0 0.0
    %187 = vmatprep.subr.mxu0 0.0
    %188 = vmatpush1.msra.mxu0 0.0
    %189 = vmatprep.subr.mxu0 0.0
    %190 = vmatpush1.msra.mxu0 0.0
    %191 = vmatprep.subr.mxu0 0.0
    %192 = vmatpush1.msra.mxu0 0.0
    %193 = vmatprep.subr.mxu0 0.0
    %194 = vmatpush1.msra.mxu0 0.0
    %195 = vmatprep.subr.mxu0 0.0
    %196 = vmatpush1.msra.mxu0 0.0
    %197 = vmatprep.subr.mxu0 0.0
    %198 = vmatpush1.msra.mxu0 0.0
    %199 = vmatprep.subr.mxu0 0.0
    %200 = vmatpush1.msra.mxu0 0.0
    %201 = vmatprep.subr.mxu0 0.0
    %202 = vmatpush1.msra.mxu0 0.0
    %203 = vmatprep.subr.mxu0 0.0
    %204 = vmatpush1.msra.mxu0 0.0
    %205 = vmatprep.mubr.f32.mxu0 0.0
    %206 = vmatmul.mubr.f32.gmra.mrb[0].mxu0 %v139
    %v207 = vpop.f32.mrb[0].mxu0
    %v208 = vadd.f32 %v132, %v207
    %v209 = vpop.f32.mrb[0].mxu0
    %210 = vdwg.mxu0
    %v211 = vld [vmem:[%s3] sm:$0x1]
    %v213 = vlaneseq
    %v214 = vshrl.u32 %v213, 7
    %v215 = vsub.s32 0, %v214
    %v216 = vrot.slane %v211, %v215
    %v218 = vadd.f32 %v208, %v216
    %v219 = vld [vmem:[%s4] sm:$0xff]
    %v220 = vld [vmem:[%s4 + $0x8] sm:$0xff]
    %v221 = vld [vmem:[%s4 + $0x10] sm:$0xff]
    %v222 = vld [vmem:[%s4 + $0x18] sm:$0xff]
    %v223 = vld [vmem:[%s4 + $0x20] sm:$0xff]
    %v224 = vld [vmem:[%s4 + $0x28] sm:$0xff]
    %v225 = vld [vmem:[%s4 + $0x30] sm:$0xff]
    %v226 = vld [vmem:[%s4 + $0x38] sm:$0xff]
    %227 = vmatprep.subr.mxu0 0.0
    %228 = vmatpush1.msra.mxu0 %v223
    %229 = vmatprep.subr.mxu0 0.0
    %230 = vmatpush1.msra.mxu0 %v224
    %231 = vmatprep.subr.mxu0 0.0
    %232 = vmatpush1.msra.mxu0 %v225
    %233 = vmatprep.subr.mxu0 0.0
    %234 = vmatpush1.msra.mxu0 %v226
    %235 = vmatprep.subr.mxu0 0.0
    %236 = vmatpush1.msra.mxu0 0.0
    %237 = vmatprep.subr.mxu0 0.0
    %238 = vmatpush1.msra.mxu0 0.0
    %239 = vmatprep.subr.mxu0 0.0
    %240 = vmatpush1.msra.mxu0 0.0
    %241 = vmatprep.subr.mxu0 0.0
    %242 = vmatpush1.msra.mxu0 0.0
    %243 = vmatprep.subr.mxu0 0.0
    %244 = vmatpush1.msra.mxu0 0.0
    %245 = vmatprep.subr.mxu0 0.0
    %246 = vmatpush1.msra.mxu0 0.0
    %247 = vmatprep.subr.mxu0 0.0
    %248 = vmatpush1.msra.mxu0 0.0
    %249 = vmatprep.subr.mxu0 0.0
    %250 = vmatpush1.msra.mxu0 0.0
    %251 = vmatprep.subr.mxu0 0.0
    %252 = vmatpush1.msra.mxu0 0.0
    %253 = vmatprep.subr.mxu0 0.0
    %254 = vmatpush1.msra.mxu0 0.0
    %255 = vmatprep.subr.mxu0 0.0
    %256 = vmatpush1.msra.mxu0 0.0
    %257 = vmatprep.subr.mxu0 0.0
    %258 = vmatpush1.msra.mxu0 0.0
    %259 = vmatprep.subr.mxu0 0.0
    %260 = vmatpush1.msra.mxu0 0.0
    %261 = vmatprep.subr.mxu0 0.0
    %262 = vmatpush1.msra.mxu0 0.0
    %263 = vmatprep.subr.mxu0 0.0
    %264 = vmatpush1.msra.mxu0 0.0
    %265 = vmatprep.subr.mxu0 0.0
    %266 = vmatpush1.msra.mxu0 0.0
    %267 = vmatprep.subr.mxu0 0.0
    %268 = vmatpush1.msra.mxu0 0.0
    %269 = vmatprep.subr.mxu0 0.0
    %270 = vmatpush1.msra.mxu0 0.0
    %271 = vmatprep.subr.mxu0 0.0
    %272 = vmatpush1.msra.mxu0 0.0
    %273 = vmatprep.subr.mxu0 0.0
    %274 = vmatpush1.msra.mxu0 0.0
    %275 = vmatprep.subr.mxu0 0.0
    %276 = vmatpush1.msra.mxu0 0.0
    %277 = vmatprep.subr.mxu0 0.0
    %278 = vmatpush1.msra.mxu0 0.0
    %279 = vmatprep.subr.mxu0 0.0
    %280 = vmatpush1.msra.mxu0 0.0
    %281 = vmatprep.subr.mxu0 0.0
    %282 = vmatpush1.msra.mxu0 0.0
    %283 = vmatprep.subr.mxu0 0.0
    %284 = vmatpush1.msra.mxu0 0.0
    %285 = vmatprep.subr.mxu0 0.0
    %286 = vmatpush1.msra.mxu0 0.0
    %287 = vmatprep.subr.mxu0 0.0
    %288 = vmatpush1.msra.mxu0 0.0
    %289 = vmatprep.subr.mxu0 0.0
    %290 = vmatpush1.msra.mxu0 0.0
    %291 = vmatprep.mubr.f32.mxu0 0.0
    %292 = vmatmul.mubr.f32.gmra.mrb[0].mxu0 %v63
    %v293 = vpop.f32.mrb[0].mxu0
    %v294 = vadd.f32 0.0, %v293
    %v295 = vpop.f32.mrb[0].mxu0
    %296 = vdwg.mxu0
    %297 = vmatprep.subr.mxu0 0.0
    %298 = vmatpush1.msra.mxu0 %v219
    %299 = vmatprep.subr.mxu0 0.0
    %300 = vmatpush1.msra.mxu0 %v220
    %301 = vmatprep.subr.mxu0 0.0
    %302 = vmatpush1.msra.mxu0 %v221
    %303 = vmatprep.subr.mxu0 0.0
    %304 = vmatpush1.msra.mxu0 %v222
    %305 = vmatprep.subr.mxu0 0.0
    %306 = vmatpush1.msra.mxu0 0.0
    %307 = vmatprep.subr.mxu0 0.0
    %308 = vmatpush1.msra.mxu0 0.0
    %309 = vmatprep.subr.mxu0 0.0
    %310 = vmatpush1.msra.mxu0 0.0
    %311 = vmatprep.subr.mxu0 0.0
    %312 = vmatpush1.msra.mxu0 0.0
    %313 = vmatprep.subr.mxu0 0.0
    %314 = vmatpush1.msra.mxu0 0.0
    %315 = vmatprep.subr.mxu0 0.0
    %316 = vmatpush1.msra.mxu0 0.0
    %317 = vmatprep.subr.mxu0 0.0
    %318 = vmatpush1.msra.mxu0 0.0
    %319 = vmatprep.subr.mxu0 0.0
    %320 = vmatpush1.msra.mxu0 0.0
    %321 = vmatprep.subr.mxu0 0.0
    %322 = vmatpush1.msra.mxu0 0.0
    %323 = vmatprep.subr.mxu0 0.0
    %324 = vmatpush1.msra.mxu0 0.0
    %325 = vmatprep.subr.mxu0 0.0
    %326 = vmatpush1.msra.mxu0 0.0
    %327 = vmatprep.subr.mxu0 0.0
    %328 = vmatpush1.msra.mxu0 0.0
    %329 = vmatprep.subr.mxu0 0.0
    %330 = vmatpush1.msra.mxu0 0.0
    %331 = vmatprep.subr.mxu0 0.0
    %332 = vmatpush1.msra.mxu0 0.0
    %333 = vmatprep.subr.mxu0 0.0
    %334 = vmatpush1.msra.mxu0 0.0
    %335 = vmatprep.subr.mxu0 0.0
    %336 = vmatpush1.msra.mxu0 0.0
    %337 = vmatprep.subr.mxu0 0.0
    %338 = vmatpush1.msra.mxu0 0.0
    %339 = vmatprep.subr.mxu0 0.0
    %340 = vmatpush1.msra.mxu0 0.0
    %341 = vmatprep.subr.mxu0 0.0
    %342 = vmatpush1.msra.mxu0 0.0
    %343 = vmatprep.subr.mxu0 0.0
    %344 = vmatpush1.msra.mxu0 0.0
    %345 = vmatprep.subr.mxu0 0.0
    %346 = vmatpush1.msra.mxu0 0.0
    %347 = vmatprep.subr.mxu0 0.0
    %348 = vmatpush1.msra.mxu0 0.0
    %349 = vmatprep.subr.mxu0 0.0
    %350 = vmatpush1.msra.mxu0 0.0
    %351 = vmatprep.subr.mxu0 0.0
    %352 = vmatpush1.msra.mxu0 0.0
    %353 = vmatprep.subr.mxu0 0.0
    %354 = vmatpush1.msra.mxu0 0.0
    %355 = vmatprep.subr.mxu0 0.0
    %356 = vmatpush1.msra.mxu0 0.0
    %357 = vmatprep.subr.mxu0 0.0
    %358 = vmatpush1.msra.mxu0 0.0
    %359 = vmatprep.subr.mxu0 0.0
    %360 = vmatpush1.msra.mxu0 0.0
    %361 = vmatprep.mubr.f32.mxu0 0.0
    %362 = vmatmul.mubr.f32.gmra.mrb[0].mxu0 %v139
    %v363 = vpop.f32.mrb[0].mxu0
    %v364 = vadd.f32 %v294, %v363
    %v365 = vpop.f32.mrb[0].mxu0
    %366 = vdwg.mxu0
    %v367 = vld [vmem:[%s5] sm:$0x1]
    %v369 = vlaneseq
    %v370 = vshrl.u32 %v369, 7
    %v371 = vsub.s32 0, %v370
    %v372 = vrot.slane %v367, %v371
    %v374 = vadd.f32 %v364, %v372
    %v375 = vxor.u32 %v218, 2147483648
    %v376 = vmul.f32 %v375, 1.442695
    %v377 = vpow.pop %v376
    %v378 = vadd.f32 %v377, 1.0
    %v379 = vrcp.pop %v378
    %v380 = vmul.f32 1.0, %v379
    %vm381 = vcmask 17408
    %382 = vst.msk [vmem:[#allocation2] sm:$0x3] %vm381, %v380
    %vm383 = vcmask 58368
    %384 = vst.msk [vmem:[#allocation4] sm:$0x3] %vm383, %v374
    // Predicated region
    $region26: #{forward.19} parent=1 // pred_check
      _
    $region27: #{forward.19} parent=1 // pred_check_branch
      %386 = sbr.rel (0) target = $region29
    $region28: #{forward.19} parent=1 // pred_region
      %s388 = ssub.s32 32, 32
      %389 = vsyncadd [#allocation3], %s388
      %s391 = sshll.u32 [#allocation2], 4
      %s392 = int_to_ptr.vmem [resolvable:$true] %s391
      %394 = dma.vmem_to_hbm [thread:$0]  %s392, 32, %s6, [#allocation3]
    $region29: #{forward.19} parent=1 // pred_fallthru
      _
    // Predicated region
    $region30: #{forward.19} parent=1 // pred_check
      _
    $region31: #{forward.19} parent=1 // pred_check_branch
      %396 = sbr.rel (0) target = $region33
    $region32: #{forward.19} parent=1 // pred_region
      %s398 = ssub.s32 32, 32
      %399 = vsyncadd [#allocation5], %s398
      %s401 = sshll.u32 [#allocation4], 4
      %s402 = int_to_ptr.vmem [resolvable:$true] %s401
      %404 = dma.vmem_to_hbm [thread:$0]  %s402, 32, %s7, [#allocation5]
    $region33: #{forward.19} parent=1 // pred_fallthru
      _
    // Predicated region
    $region34: #{forward.19} parent=1 // pred_check
      _
    $region35: #{forward.19} parent=1 // pred_check_branch
      %406 = sbr.rel (0) target = $region37
    $region36: #{forward.19} parent=1 // pred_region
      %407 = dma.done [#allocation3], 32
    $region37: #{forward.19} parent=1 // pred_fallthru
      _
    // Predicated region
    $region38: #{forward.19} parent=1 // pred_check
      _
    $region39: #{forward.19} parent=1 // pred_check_branch
      %409 = sbr.rel (0) target = $region41
    $region40: #{forward.19} parent=1 // pred_region
      %410 = dma.done [#allocation5], 32
    $region41: #{forward.19} parent=1 // pred_fallthru
      _
    %411 = vsyncpa [#allocation3], 1
    %412 = vsyncpa [#allocation5], 1

</llo_original>
